<compile_context>
chip_gen: v5e
topology: v5e:2x2
jax: 0.10.0
libtpu: 0.0.40
codegen_flags: <defaults>
</compile_context>

<pallas_src>
import functools

import jax
import jax.numpy as jnp
from jax.experimental import pallas as pl
from jax.experimental.pallas import tpu as pltpu

_LN_EPS = 1e-5
_SQRT_HALF = 0.7071067811865476


def _gelu_exact(x):
    # nn.GELU() default = exact erf variant.
    return 0.5 * x * (1.0 + jax.lax.erf(x * _SQRT_HALF))


# --------------------------------------------------------------------------
# VMEM-budget-aware tile selection
# --------------------------------------------------------------------------
def _vmem_limit_bytes():
    cap = 64 * 1024 * 1024                      # conservative fallback (v7x per-core)
    try:
        cap = int(pltpu.get_tpu_info().vmem_capacity_bytes)
    except Exception:
        pass
    # Leave headroom for Mosaic internal scratch; never request more than 100 MiB.
    return min((cap * 3) // 4, 100 * 1024 * 1024)


def _pass2_bytes(B, P, td, H):
    f32, bf16 = 4, 2
    io = 2 * 2 * B * P * td * f32                     # x in + x1 out, double-buffered
    inter = B * P * td * (3 * f32 + 2 * bf16)         # yhat, tok_t, tok, ybn, ybn_t
    inter += B * td * H * (2 * f32 + bf16)            # u, u3, ubn
    weights = 2 * 2 * P * H * bf16                    # W1 + W2, double-buffered
    return io + inter + weights + (1 << 20)           # + slack for stats / vectors


def _pass3_bytes(B, tp, D, H):
    f32, bf16 = 4, 2
    io = 2 * 2 * B * tp * D * f32                     # x1 in + out, double-buffered
    inter = B * tp * D * (3 * f32 + bf16)             # xc, z, ch, zbn
    inter += B * tp * H * (2 * f32 + bf16)            # c, c3, cbn
    weights = 2 * 2 * D * H * bf16
    return io + inter + weights + (1 << 20)


def _choose_tile(n, align, fits):
    """Largest divisor of n that is a multiple of `align` and fits the budget."""
    if n % align != 0:
        # TODO(synk): pad + mask ragged dims instead of falling back to one full block.
        return n
    cands = [t for t in range(n, 0, -align) if n % t == 0]
    for t in cands:
        if fits(t):
            return t
    return cands[-1]


def _resolve_tile(n, align, hint, fits):
    if hint is not None and n % hint == 0 and (hint == n or hint % align == 0):
        return hint
    return _choose_tile(n, align, fits)


# --------------------------------------------------------------------------
# pass 1: per-(b, p) LayerNorm statistics of x (two-pass mean / rstd)
# --------------------------------------------------------------------------
def _ln_stats_kernel(x_ref, stats_ref):
    x = x_ref[...]                                        # (B, tp, D) f32
    mu = jnp.mean(x, axis=-1, keepdims=True)
    xc = x - mu                                           # centered -> stable variance
    var = jnp.mean(xc * xc, axis=-1, keepdims=True)
    rstd = jax.lax.rsqrt(var + _LN_EPS)
    stats_ref[...] = jnp.concatenate([mu, rstd], axis=-1)  # (B, tp, 2)


# --------------------------------------------------------------------------
# pass 2: token mix (tiled over dim).  Works on the 'b d p' view internally.
# --------------------------------------------------------------------------
def _token_mix_kernel(x_ref, stats_ref, ln1w_ref,
                      bn1g_ref, bn1b_ref, w1_ref, b1_ref,
                      bn2g_ref, bn2b_ref, w2_ref, b2_ref,
                      x1_ref, *, eps_bn1, eps_bn2):
    x = x_ref[...]                                        # (B, P, td) f32
    B, P, td = x.shape
    H = w1_ref.shape[-1]                                  # token_dim

    st = stats_ref[...]                                   # (B, 2, P) lane-dense
    mu = jnp.swapaxes(st[:, 0:1, :], 1, 2)                # (B, P, 1)
    rstd = jnp.swapaxes(st[:, 1:2, :], 1, 2)              # (B, P, 1)

    # LayerNorm: normalize only; the affine is folded into the BN scale/shift.
    yhat = (x - mu) * rstd

    # Fused LN-affine + BatchNorm1d (channel = dim, stats over (B, P)).
    #   y = yhat*w + b  ->  BN(y) = yhat*scale + shift  (the LN bias cancels).
    m = jnp.mean(yhat, axis=(0, 1), keepdims=True)        # (1, 1, td)
    v = jnp.mean(yhat * yhat, axis=(0, 1), keepdims=True) - m * m
    w = ln1w_ref[...]
    scale = w * bn1g_ref[...] * jax.lax.rsqrt(w * w * v + eps_bn1)
    shift = bn1b_ref[...] - m * scale
    ybn = (yhat * scale + shift).astype(jnp.bfloat16)     # early bf16 cast

    # 'b p d -> b d p' on the bf16 tile, then ONE folded-batch 2-D MXU matmul.
    ybn_t = jnp.swapaxes(ybn, 1, 2).reshape(B * td, P)    # (B*td, P) bf16
    u = jnp.dot(ybn_t, w1_ref[...],
                preferred_element_type=jnp.float32) + b1_ref[...]   # (B*td, H) f32
    u = _gelu_exact(u)

    # BatchNorm1d (channel = dim again; stats over (B, token_dim)).
    u3 = u.reshape(B, td, H)
    m2 = jnp.mean(u3, axis=(0, 2), keepdims=True)         # (1, td, 1)
    v2 = jnp.mean(u3 * u3, axis=(0, 2), keepdims=True) - m2 * m2
    ubn = ((u3 - m2) * (jax.lax.rsqrt(v2 + eps_bn2) * bn2g_ref[...])
           + bn2b_ref[...]).astype(jnp.bfloat16)          # early bf16 cast

    tok_t = jnp.dot(ubn.reshape(B * td, H), w2_ref[...],
                    preferred_element_type=jnp.float32) + b2_ref[...]  # (B*td, P)
    tok = jnp.swapaxes(tok_t.reshape(B, td, P), 1, 2)     # 'b d p -> b p d'

    x1_ref[...] = x + tok


# --------------------------------------------------------------------------
# pass 3: channel mix (tiled over patches).
# --------------------------------------------------------------------------
def _channel_mix_kernel(x1_ref, ln2w_ref, ln2b_ref,
                        bn1g_ref, bn1b_ref, w1_ref, b1_ref,
                        bn2g_ref, bn2b_ref, w2_ref, b2_ref,
                        o_ref, *, eps_bn1, eps_bn2):
    x1 = x1_ref[...]                                      # (B, tp, D) f32
    B, tp, D = x1.shape
    H = w1_ref.shape[-1]                                  # channel_dim

    # LayerNorm over dim (full D resident), two-pass (centered) variance.
    mu = jnp.mean(x1, axis=-1, keepdims=True)
    xc = x1 - mu
    var = jnp.mean(xc * xc, axis=-1, keepdims=True)
    z = xc * jax.lax.rsqrt(var + _LN_EPS) * ln2w_ref[...] + ln2b_ref[...]

    # BatchNorm1d: LazyBatchNorm1d infers features from size(1) = num_patch,
    # so the channel axis is the *patch* axis; stats over (B, D).
    m1 = jnp.mean(z, axis=(0, 2), keepdims=True)          # (1, tp, 1)
    v1 = jnp.mean(z * z, axis=(0, 2), keepdims=True) - m1 * m1
    zbn = ((z - m1) * (jax.lax.rsqrt(v1 + eps_bn1) * bn1g_ref[...])
           + bn1b_ref[...]).astype(jnp.bfloat16)          # early bf16 cast

    c = jnp.dot(zbn.reshape(B * tp, D), w1_ref[...],
                preferred_element_type=jnp.float32) + b1_ref[...]    # (B*tp, H)
    c = _gelu_exact(c)

    c3 = c.reshape(B, tp, H)
    m2 = jnp.mean(c3, axis=(0, 2), keepdims=True)
    v2 = jnp.mean(c3 * c3, axis=(0, 2), keepdims=True) - m2 * m2
    cbn = ((c3 - m2) * (jax.lax.rsqrt(v2 + eps_bn2) * bn2g_ref[...])
           + bn2b_ref[...]).astype(jnp.bfloat16)          # early bf16 cast

    ch = jnp.dot(cbn.reshape(B * tp, H), w2_ref[...],
                 preferred_element_type=jnp.float32) + b2_ref[...]   # (B*tp, D)
    o_ref[...] = x1 + ch.reshape(B, tp, D)


# --------------------------------------------------------------------------
# wrapper
# --------------------------------------------------------------------------
def mixer_block(x, p, *, token_dim, channel_dim, d_tile=None, p_tile=None):
    B, P, D = x.shape
    f32 = jnp.float32

    # nn.LazyBatchNorm1d(first_arg): the first positional arg is eps (quirk).
    eps_t1, eps_t2 = float(P), float(token_dim)
    eps_c1, eps_c2 = float(D), float(channel_dim)

    # Generation-aware VMEM limit and budget-derived tiles.
    vmem_limit = _vmem_limit_bytes()
    budget = (vmem_limit * 3) // 4
    td = _resolve_tile(D, 128, d_tile,
                       lambda t: _pass2_bytes(B, P, t, token_dim) <= budget)
    tp = _resolve_tile(P, 8, p_tile,
                       lambda t: _pass3_bytes(B, t, D, channel_dim) <= budget)

    cparams = pltpu.CompilerParams(
        dimension_semantics=("parallel",),          # megacore on v7x; no-op on v5e/v6e
        vmem_limit_bytes=int(vmem_limit))

    # ---- pass 1: LN row statistics (needed because pass 2 tiles the dim axis)
    stats_pd = pl.pallas_call(
        _ln_stats_kernel,
        grid=(P // tp,),
        in_specs=[pl.BlockSpec((B, tp, D), lambda i: (0, i, 0))],
        out_specs=pl.BlockSpec((B, tp, 2), lambda i: (0, i, 0)),
        out_shape=jax.ShapeDtypeStruct((B, P, 2), f32),
        compiler_params=cparams,
        cost_estimate=pl.CostEstimate(
            flops=4 * B * P * D, transcendentals=B * P,
            bytes_accessed=4 * (B * P * D + 2 * B * P)),
    )(x)
    # Lane-dense view for pass 2: (B, 2, P) keeps P on the lane dimension, so the
    # grid-constant stats block is not padded 1 -> 128 lanes in VMEM.
    stats = jnp.transpose(stats_pd, (0, 2, 1))

    # ---- pass 2: token mix, x1 = x + token_mix(x)  (grid over dim tiles)
    x1 = pl.pallas_call(
        functools.partial(_token_mix_kernel, eps_bn1=eps_t1, eps_bn2=eps_t2),
        grid=(D // td,),
        in_specs=[
            pl.BlockSpec((B, P, td), lambda i: (0, 0, i)),      # x
            pl.BlockSpec((B, 2, P), lambda i: (0, 0, 0)),       # LN stats (lane-dense)
            pl.BlockSpec((1, 1, td), lambda i: (0, 0, i)),      # ln1 weight
            pl.BlockSpec((1, 1, td), lambda i: (0, 0, i)),      # bn1 gamma (dim channel)
            pl.BlockSpec((1, 1, td), lambda i: (0, 0, i)),      # bn1 beta
            pl.BlockSpec((P, token_dim), lambda i: (0, 0)),     # W1^T (bf16)
            pl.BlockSpec((1, token_dim), lambda i: (0, 0)),     # b1
            pl.BlockSpec((1, td, 1), lambda i: (0, i, 0)),      # bn2 gamma (dim channel)
            pl.BlockSpec((1, td, 1), lambda i: (0, i, 0)),      # bn2 beta
            pl.BlockSpec((token_dim, P), lambda i: (0, 0)),     # W2^T (bf16)
            pl.BlockSpec((1, P), lambda i: (0, 0)),             # b2
        ],
        out_specs=pl.BlockSpec((B, P, td), lambda i: (0, 0, i)),
        out_shape=jax.ShapeDtypeStruct((B, P, D), f32),
        compiler_params=cparams,
        cost_estimate=pl.CostEstimate(
            flops=4 * B * D * P * token_dim + 16 * B * P * D,
            transcendentals=B * D * token_dim,
            bytes_accessed=4 * 2 * B * P * D + 2 * 2 * P * token_dim),
    )(x, stats,
      p["ln1_w"], p["tbn1_w"], p["tbn1_b"], p["tW1t"], p["tb1"],
      p["tbn2_w"], p["tbn2_b"], p["tW2t"], p["tb2"])

    # ---- pass 3: channel mix, out = x1 + channel_mix(x1)  (grid over patch tiles)
    out = pl.pallas_call(
        functools.partial(_channel_mix_kernel, eps_bn1=eps_c1, eps_bn2=eps_c2),
        grid=(P // tp,),
        in_specs=[
            pl.BlockSpec((B, tp, D), lambda i: (0, i, 0)),      # x1 (aliased to output)
            pl.BlockSpec((1, 1, D), lambda i: (0, 0, 0)),       # ln2 weight
            pl.BlockSpec((1, 1, D), lambda i: (0, 0, 0)),       # ln2 bias
            pl.BlockSpec((1, tp, 1), lambda i: (0, i, 0)),      # bn1 gamma (patch channel)
            pl.BlockSpec((1, tp, 1), lambda i: (0, i, 0)),      # bn1 beta
            pl.BlockSpec((D, channel_dim), lambda i: (0, 0)),   # W1^T (bf16)
            pl.BlockSpec((1, channel_dim), lambda i: (0, 0)),   # b1
            pl.BlockSpec((1, tp, 1), lambda i: (0, i, 0)),      # bn2 gamma (patch channel)
            pl.BlockSpec((1, tp, 1), lambda i: (0, i, 0)),      # bn2 beta
            pl.BlockSpec((channel_dim, D), lambda i: (0, 0)),   # W2^T (bf16)
            pl.BlockSpec((1, D), lambda i: (0, 0)),             # b2
        ],
        out_specs=pl.BlockSpec((B, tp, D), lambda i: (0, i, 0)),
        out_shape=jax.ShapeDtypeStruct((B, P, D), f32),
        input_output_aliases={0: 0},                            # reuse x1's HBM buffer
        compiler_params=cparams,
        cost_estimate=pl.CostEstimate(
            flops=4 * B * P * D * channel_dim + 16 * B * P * D,
            transcendentals=B * P * channel_dim,
            bytes_accessed=4 * 2 * B * P * D + 2 * 2 * D * channel_dim),
    )(x1, p["ln2_w"], p["ln2_b"],
      p["cbn1_w"], p["cbn1_b"], p["cW1t"], p["cb1"],
      p["cbn2_w"], p["cbn2_b"], p["cW2t"], p["cb2"])
    return out


# --------------------------------------------------------------------------
# params / reference
# --------------------------------------------------------------------------
def init_params(key, dim, num_patch, token_dim, channel_dim):
    ks = jax.random.split(key, 20)
    bf16 = jnp.bfloat16

    def nrm(k, shape, scale=0.05):
        return (scale * jax.random.normal(k, shape)).astype(jnp.float32)

    def aff_w(k, shape):           # non-trivial affine weights (exercise the fusion)
        return (1.0 + 0.1 * jax.random.normal(k, shape)).astype(jnp.float32)

    def aff_b(k, shape):
        return (0.1 * jax.random.normal(k, shape)).astype(jnp.float32)

    p = {}
    # token_mix: LayerNorm(dim); FeedForward(num_patch, token_dim) on the 'b d p' view
    p["ln1_w"] = aff_w(ks[8], (1, 1, dim));   p["ln1_b"] = aff_b(ks[9], (1, 1, dim))
    p["tbn1_w"] = aff_w(ks[10], (1, 1, dim)); p["tbn1_b"] = aff_b(ks[11], (1, 1, dim))
    p["tW1t"] = nrm(ks[0], (num_patch, token_dim)).astype(bf16)  # Linear(P, token_dim).weight.T
    p["tb1"] = nrm(ks[1], (1, token_dim))
    p["tbn2_w"] = aff_w(ks[12], (1, dim, 1)); p["tbn2_b"] = aff_b(ks[13], (1, dim, 1))
    p["tW2t"] = nrm(ks[2], (token_dim, num_patch)).astype(bf16)  # Linear(token_dim, P).weight.T
    p["tb2"] = nrm(ks[3], (1, num_patch))
    # channel_mix: LayerNorm(dim); FeedForward(dim, channel_dim) on 'b p d'
    p["ln2_w"] = aff_w(ks[14], (1, 1, dim));  p["ln2_b"] = aff_b(ks[15], (1, 1, dim))
    p["cbn1_w"] = aff_w(ks[16], (1, num_patch, 1)); p["cbn1_b"] = aff_b(ks[17], (1, num_patch, 1))
    p["cW1t"] = nrm(ks[4], (dim, channel_dim)).astype(bf16)      # Linear(dim, channel_dim).weight.T
    p["cb1"] = nrm(ks[5], (1, channel_dim))
    p["cbn2_w"] = aff_w(ks[18], (1, num_patch, 1)); p["cbn2_b"] = aff_b(ks[19], (1, num_patch, 1))
    p["cW2t"] = nrm(ks[6], (channel_dim, dim)).astype(bf16)      # Linear(channel_dim, dim).weight.T
    p["cb2"] = nrm(ks[7], (1, dim))
    return p


def mixer_block_reference(x, p, *, token_dim, channel_dim):
    """Pure-JAX fp32 reference of the same math (for a tolerance check)."""
    B, P, D = x.shape
    eps_t1, eps_t2 = float(P), float(token_dim)
    eps_c1, eps_c2 = float(D), float(channel_dim)

    def ln(v, w, b):
        mu = v.mean(-1, keepdims=True)
        var = ((v - mu) ** 2).mean(-1, keepdims=True)
        return (v - mu) / jnp.sqrt(var + _LN_EPS) * w + b

    def bn(v, g, b, eps, axes):
        mu = v.mean(axes, keepdims=True)
        var = ((v - mu) ** 2).mean(axes, keepdims=True)
        return (v - mu) / jnp.sqrt(var + eps) * g + b

    gelu = lambda v: 0.5 * v * (1.0 + jax.lax.erf(v * _SQRT_HALF))

    # token mix ('b d p' view kept with dim last: tok[b,p,d] == torch[b,d,p])
    y = ln(x, p["ln1_w"], p["ln1_b"])
    ybn = bn(y, p["tbn1_w"], p["tbn1_b"], eps_t1, (0, 1))          # BN channel = dim
    u = jnp.einsum("bpd,ph->bhd", ybn, p["tW1t"]) + p["tb1"].reshape(1, token_dim, 1)
    u = gelu(u)
    ubn = bn(u, p["tbn2_w"].reshape(1, 1, D), p["tbn2_b"].reshape(1, 1, D), eps_t2, (0, 1))
    tok = jnp.einsum("bhd,hp->bpd", ubn, p["tW2t"]) + p["tb2"].reshape(1, P, 1)
    x1 = x + tok

    # channel mix
    z = ln(x1, p["ln2_w"], p["ln2_b"])
    zbn = bn(z, p["cbn1_w"], p["cbn1_b"], eps_c1, (0, 2))          # BN channel = num_patch
    c = jnp.einsum("bpd,dh->bph", zbn, p["cW1t"]) + p["cb1"][None]
    c = gelu(c)
    cbn = bn(c, p["cbn2_w"], p["cbn2_b"], eps_c2, (0, 2))
    ch = jnp.einsum("bph,hd->bpd", cbn, p["cW2t"]) + p["cb2"][None]
    return x1 + ch


if __name__ == "__main__":
    B, P, D = 2, 16, 256            # batch, num_patch, dim
    token_dim, channel_dim = 32, 64

    key = jax.random.PRNGKey(0)
    kx, kp = jax.random.split(key)
    x = jax.random.normal(kx, (B, P, D), dtype=jnp.float32)
    params = init_params(kp, D, P, token_dim, channel_dim)

    ref = mixer_block_reference(x, params, token_dim=token_dim, channel_dim=channel_dim)

    # Two variants: budget-derived tiles (single block per pass at this size) and
    # an explicitly tiled variant that exercises multi-step grids in every pass.
    fwd_auto = jax.jit(functools.partial(
        mixer_block, token_dim=token_dim, channel_dim=channel_dim))
    fwd_tiled = jax.jit(functools.partial(
        mixer_block, token_dim=token_dim, channel_dim=channel_dim,
        d_tile=128, p_tile=8))

    for fwd in (fwd_auto, fwd_tiled):
        out = jax.block_until_ready(fwd(x, params))
        assert out.shape == (B, P, D)
        max_diff = float(jnp.max(jnp.abs(out - ref)))
        # bf16 MXU operands (f32 accumulation) + fused single-pass BN statistics
        # -> slightly looser tolerance than a bit-for-bit f32 comparison.
        assert jnp.allclose(out, ref, rtol=5e-3, atol=5e-3), (
            "mismatch vs JAX reference, max|diff|=%g" % max_diff)

    print("KERNEL_OK")
</pallas_src>

<mosaic_0001>
module attributes {stable_mosaic.version = 11 : i64} {
  func.func @_ln_stats_kernel(%arg0: i32, %arg1: memref<2x16x256xf32, #tpu.memory_space<vmem>>, %arg2: memref<2x16x2xf32, #tpu.memory_space<vmem>>) attributes {dimension_semantics = [#tpu.dimension_semantics<parallel>], iteration_bounds = array<i64: 1>, scalar_prefetch = 0 : i64, scratch_operands = 0 : i64, tpu.core_type = #tpu.core_type<tc>, window_params = [{transform_indices = @transform_0, window_bounds = array<i64: 2, 16, 256>}, {transform_indices = @transform_1, window_bounds = array<i64: 2, 16, 2>}]} {
    %c0 = arith.constant 0 : index
    %c0_0 = arith.constant 0 : index
    %c0_1 = arith.constant 0 : index
    %0 = vector.load %arg1[%c0, %c0_0, %c0_1] : memref<2x16x256xf32, #tpu.memory_space<vmem>>, vector<2x16x256xf32>
    %cst = arith.constant dense<0.000000e+00> : vector<2x16xf32>
    %1 = vector.multi_reduction <add>, %0, %cst [2] : vector<2x16x256xf32> to vector<2x16xf32>
    %2 = vector.shape_cast %1 : vector<2x16xf32> to vector<2x16x1xf32>
    %cst_2 = arith.constant 2.560000e+02 : f32
    %3 = vector.broadcast %cst_2 : f32 to vector<2x16x1xf32>
    %4 = arith.divf %2, %3 : vector<2x16x1xf32>
    %5 = vector.broadcast %4 : vector<2x16x1xf32> to vector<2x16x256xf32>
    %6 = arith.subf %0, %5 : vector<2x16x256xf32>
    %7 = arith.mulf %6, %6 : vector<2x16x256xf32>
    %cst_3 = arith.constant dense<0.000000e+00> : vector<2x16xf32>
    %8 = vector.multi_reduction <add>, %7, %cst_3 [2] : vector<2x16x256xf32> to vector<2x16xf32>
    %9 = vector.shape_cast %8 : vector<2x16xf32> to vector<2x16x1xf32>
    %cst_4 = arith.constant 2.560000e+02 : f32
    %10 = vector.broadcast %cst_4 : f32 to vector<2x16x1xf32>
    %11 = arith.divf %9, %10 : vector<2x16x1xf32>
    %cst_5 = arith.constant 9.99999974E-6 : f32
    %12 = vector.broadcast %cst_5 : f32 to vector<2x16x1xf32>
    %13 = arith.addf %11, %12 : vector<2x16x1xf32>
    %14 = math.rsqrt %13 : vector<2x16x1xf32>
    %15 = tpu.concatenate %4, %14 in 2 : vector<2x16x1xf32>, vector<2x16x1xf32> -> vector<2x16x2xf32>
    %c0_6 = arith.constant 0 : index
    %c0_7 = arith.constant 0 : index
    %c0_8 = arith.constant 0 : index
    %16 = vector.load %arg2[%c0_6, %c0_7, %c0_8] : memref<2x16x2xf32, #tpu.memory_space<vmem>>, vector<2x16x2xf32>
    tpu.vector_store %arg2[%c0_6, %c0_7, %c0_8], %15 {strides = array<i32>} : memref<2x16x2xf32, #tpu.memory_space<vmem>>, vector<2x16x2xf32>,
    return
  }
  func.func @transform_0(%arg0: i32) -> (i32, i32, i32) {
    %c0_i32 = arith.constant 0 : i32
    %c0_i32_0 = arith.constant 0 : i32
    %c0_i32_1 = arith.constant 0 : i32
    return %c0_i32, %arg0, %c0_i32_0 : i32, i32, i32
  }
  func.func @transform_1(%arg0: i32) -> (i32, i32, i32) {
    %c0_i32 = arith.constant 0 : i32
    %c0_i32_0 = arith.constant 0 : i32
    %c0_i32_1 = arith.constant 0 : i32
    return %c0_i32, %arg0, %c0_i32_0 : i32, i32, i32
  }
}

module attributes {stable_mosaic.version = 11 : i64} {
  func.func @_token_mix_kernel(%arg0: i32, %arg1: memref<2x16x256xf32, #tpu.memory_space<vmem>>, %arg2: memref<2x2x16xf32, #tpu.memory_space<vmem>>, %arg3: memref<1x1x256xf32, #tpu.memory_space<vmem>>, %arg4: memref<1x1x256xf32, #tpu.memory_space<vmem>>, %arg5: memref<1x1x256xf32, #tpu.memory_space<vmem>>, %arg6: memref<16x32xbf16, #tpu.memory_space<vmem>>, %arg7: memref<1x32xf32, #tpu.memory_space<vmem>>, %arg8: memref<1x256x1xf32, #tpu.memory_space<vmem>>, %arg9: memref<1x256x1xf32, #tpu.memory_space<vmem>>, %arg10: memref<32x16xbf16, #tpu.memory_space<vmem>>, %arg11: memref<1x16xf32, #tpu.memory_space<vmem>>, %arg12: memref<2x16x256xf32, #tpu.memory_space<vmem>>) attributes {dimension_semantics = [#tpu.dimension_semantics<parallel>], iteration_bounds = array<i64: 1>, scalar_prefetch = 0 : i64, scratch_operands = 0 : i64, tpu.core_type = #tpu.core_type<tc>, window_params = [{transform_indices = @transform_0, window_bounds = array<i64: 2, 16, 256>}, {pipeline_mode = #tpu.pipeline_mode<synchronous>, transform_indices = @transform_1, window_bounds = array<i64: 2, 2, 16>}, {transform_indices = @transform_2, window_bounds = array<i64: 1, 1, 256>}, {transform_indices = @transform_3, window_bounds = array<i64: 1, 1, 256>}, {transform_indices = @transform_4, window_bounds = array<i64: 1, 1, 256>}, {pipeline_mode = #tpu.pipeline_mode<synchronous>, transform_indices = @transform_5, window_bounds = array<i64: 16, 32>}, {pipeline_mode = #tpu.pipeline_mode<synchronous>, transform_indices = @transform_6, window_bounds = array<i64: 1, 32>}, {transform_indices = @transform_7, window_bounds = array<i64: 1, 256, 1>}, {transform_indices = @transform_8, window_bounds = array<i64: 1, 256, 1>}, {pipeline_mode = #tpu.pipeline_mode<synchronous>, transform_indices = @transform_9, window_bounds = array<i64: 32, 16>}, {pipeline_mode = #tpu.pipeline_mode<synchronous>, transform_indices = @transform_10, window_bounds = array<i64: 1, 16>}, {transform_indices = @transform_11, window_bounds = array<i64: 2, 16, 256>}]} {
    %c0 = arith.constant 0 : index
    %c0_0 = arith.constant 0 : index
    %c0_1 = arith.constant 0 : index
    %0 = vector.load %arg1[%c0, %c0_0, %c0_1] : memref<2x16x256xf32, #tpu.memory_space<vmem>>, vector<2x16x256xf32>
    %c0_2 = arith.constant 0 : index
    %c0_3 = arith.constant 0 : index
    %c0_4 = arith.constant 0 : index
    %1 = vector.load %arg2[%c0_2, %c0_3, %c0_4] : memref<2x2x16xf32, #tpu.memory_space<vmem>>, vector<2x2x16xf32>
    %2 = vector.extract_strided_slice %1 {offsets = [0, 0, 0], sizes = [2, 1, 16], strides = [1, 1, 1]} : vector<2x2x16xf32> to vector<2x1x16xf32>
    %3 = tpu.transpose %2, [0, 2, 1] : vector<2x1x16xf32> -> vector<2x16x1xf32>
    %4 = vector.extract_strided_slice %1 {offsets = [0, 1, 0], sizes = [2, 1, 16], strides = [1, 1, 1]} : vector<2x2x16xf32> to vector<2x1x16xf32>
    %5 = tpu.transpose %4, [0, 2, 1] : vector<2x1x16xf32> -> vector<2x16x1xf32>
    %6 = vector.broadcast %3 : vector<2x16x1xf32> to vector<2x16x256xf32>
    %7 = arith.subf %0, %6 : vector<2x16x256xf32>
    %8 = vector.broadcast %5 : vector<2x16x1xf32> to vector<2x16x256xf32>
    %9 = arith.mulf %7, %8 : vector<2x16x256xf32>
    %cst = arith.constant dense<0.000000e+00> : vector<256xf32>
    %10 = vector.multi_reduction <add>, %9, %cst [0, 1] : vector<2x16x256xf32> to vector<256xf32>
    %11 = vector.shape_cast %10 : vector<256xf32> to vector<1x1x256xf32>
    %cst_5 = arith.constant 3.200000e+01 : f32
    %12 = vector.broadcast %cst_5 : f32 to vector<1x1x256xf32>
    %13 = arith.divf %11, %12 : vector<1x1x256xf32>
    %14 = arith.mulf %9, %9 : vector<2x16x256xf32>
    %cst_6 = arith.constant dense<0.000000e+00> : vector<256xf32>
    %15 = vector.multi_reduction <add>, %14, %cst_6 [0, 1] : vector<2x16x256xf32> to vector<256xf32>
    %16 = vector.shape_cast %15 : vector<256xf32> to vector<1x1x256xf32>
    %cst_7 = arith.constant 3.200000e+01 : f32
    %17 = vector.broadcast %cst_7 : f32 to vector<1x1x256xf32>
    %18 = arith.divf %16, %17 : vector<1x1x256xf32>
    %19 = arith.mulf %13, %13 : vector<1x1x256xf32>
    %20 = arith.subf %18, %19 : vector<1x1x256xf32>
    %c0_8 = arith.constant 0 : index
    %c0_9 = arith.constant 0 : index
    %c0_10 = arith.constant 0 : index
    %21 = vector.load %arg3[%c0_8, %c0_9, %c0_10] : memref<1x1x256xf32, #tpu.memory_space<vmem>>, vector<1x1x256xf32>
    %c0_11 = arith.constant 0 : index
    %c0_12 = arith.constant 0 : index
    %c0_13 = arith.constant 0 : index
    %22 = vector.load %arg4[%c0_11, %c0_12, %c0_13] : memref<1x1x256xf32, #tpu.memory_space<vmem>>, vector<1x1x256xf32>
    %23 = arith.mulf %21, %22 : vector<1x1x256xf32>
    %24 = arith.mulf %21, %21 : vector<1x1x256xf32>
    %25 = arith.mulf %24, %20 : vector<1x1x256xf32>
    %cst_14 = arith.constant 1.600000e+01 : f32
    %26 = vector.broadcast %cst_14 : f32 to vector<1x1x256xf32>
    %27 = arith.addf %25, %26 : vector<1x1x256xf32>
    %28 = math.rsqrt %27 : vector<1x1x256xf32>
    %29 = arith.mulf %23, %28 : vector<1x1x256xf32>
    %c0_15 = arith.constant 0 : index
    %c0_16 = arith.constant 0 : index
    %c0_17 = arith.constant 0 : index
    %30 = vector.load %arg5[%c0_15, %c0_16, %c0_17] : memref<1x1x256xf32, #tpu.memory_space<vmem>>, vector<1x1x256xf32>
    %31 = arith.mulf %13, %29 : vector<1x1x256xf32>
    %32 = arith.subf %30, %31 : vector<1x1x256xf32>
    %33 = vector.broadcast %29 : vector<1x1x256xf32> to vector<2x16x256xf32>
    %34 = arith.mulf %9, %33 : vector<2x16x256xf32>
    %35 = vector.broadcast %32 : vector<1x1x256xf32> to vector<2x16x256xf32>
    %36 = arith.addf %34, %35 : vector<2x16x256xf32>
    %37 = arith.truncf %36 : vector<2x16x256xf32> to vector<2x16x256xbf16>
    %38 = tpu.transpose %37, [0, 2, 1] : vector<2x16x256xbf16> -> vector<2x256x16xbf16>
    %39 = vector.shape_cast %38 : vector<2x256x16xbf16> to vector<512x16xbf16>
    %c0_18 = arith.constant 0 : index
    %c0_19 = arith.constant 0 : index
    %40 = vector.load %arg6[%c0_18, %c0_19] : memref<16x32xbf16, #tpu.memory_space<vmem>>, vector<16x32xbf16>
    %cst_20 = arith.constant dense<0.000000e+00> : vector<512x32xf32>
    %41 = tpu.matmul %39, %40, %cst_20 {dimension_numbers = #tpu.dot_dimension_numbers<[1], [0], [0], [1], [0, 0, 1, 1], [], []>} : vector<512x16xbf16>, vector<16x32xbf16>, vector<512x32xf32> -> vector<512x32xf32>
    %c0_21 = arith.constant 0 : index
    %c0_22 = arith.constant 0 : index
    %42 = vector.load %arg7[%c0_21, %c0_22] : memref<1x32xf32, #tpu.memory_space<vmem>>, vector<1x32xf32>
    %43 = vector.broadcast %42 : vector<1x32xf32> to vector<512x32xf32>
    %44 = arith.addf %41, %43 : vector<512x32xf32>
    %cst_23 = arith.constant 5.000000e-01 : f32
    %45 = vector.broadcast %cst_23 : f32 to vector<512x32xf32>
    %46 = arith.mulf %45, %44 : vector<512x32xf32>
    %cst_24 = arith.constant 0.707106769 : f32
    %47 = vector.broadcast %cst_24 : f32 to vector<512x32xf32>
    %48 = arith.mulf %44, %47 : vector<512x32xf32>
    %49 = math.erf %48 : vector<512x32xf32>
    %cst_25 = arith.constant 1.000000e+00 : f32
    %50 = vector.broadcast %cst_25 : f32 to vector<512x32xf32>
    %51 = arith.addf %50, %49 : vector<512x32xf32>
    %52 = arith.mulf %46, %51 : vector<512x32xf32>
    %53 = vector.shape_cast %52 : vector<512x32xf32> to vector<2x256x32xf32>
    %cst_26 = arith.constant dense<0.000000e+00> : vector<256xf32>
    %54 = vector.multi_reduction <add>, %53, %cst_26 [0, 2] : vector<2x256x32xf32> to vector<256xf32>
    %55 = vector.shape_cast %54 : vector<256xf32> to vector<1x256x1xf32>
    %cst_27 = arith.constant 6.400000e+01 : f32
    %56 = vector.broadcast %cst_27 : f32 to vector<1x256x1xf32>
    %57 = arith.divf %55, %56 : vector<1x256x1xf32>
    %58 = arith.mulf %53, %53 : vector<2x256x32xf32>
    %cst_28 = arith.constant dense<0.000000e+00> : vector<256xf32>
    %59 = vector.multi_reduction <add>, %58, %cst_28 [0, 2] : vector<2x256x32xf32> to vector<256xf32>
    %60 = vector.shape_cast %59 : vector<256xf32> to vector<1x256x1xf32>
    %cst_29 = arith.constant 6.400000e+01 : f32
    %61 = vector.broadcast %cst_29 : f32 to vector<1x256x1xf32>
    %62 = arith.divf %60, %61 : vector<1x256x1xf32>
    %63 = arith.mulf %57, %57 : vector<1x256x1xf32>
    %64 = arith.subf %62, %63 : vector<1x256x1xf32>
    %65 = vector.broadcast %57 : vector<1x256x1xf32> to vector<2x256x32xf32>
    %66 = arith.subf %53, %65 : vector<2x256x32xf32>
    %cst_30 = arith.constant 3.200000e+01 : f32
    %67 = vector.broadcast %cst_30 : f32 to vector<1x256x1xf32>
    %68 = arith.addf %64, %67 : vector<1x256x1xf32>
    %69 = math.rsqrt %68 : vector<1x256x1xf32>
    %c0_31 = arith.constant 0 : index
    %c0_32 = arith.constant 0 : index
    %c0_33 = arith.constant 0 : index
    %70 = vector.load %arg8[%c0_31, %c0_32, %c0_33] : memref<1x256x1xf32, #tpu.memory_space<vmem>>, vector<1x256x1xf32>
    %71 = arith.mulf %69, %70 : vector<1x256x1xf32>
    %72 = vector.broadcast %71 : vector<1x256x1xf32> to vector<2x256x32xf32>
    %73 = arith.mulf %66, %72 : vector<2x256x32xf32>
    %c0_34 = arith.constant 0 : index
    %c0_35 = arith.constant 0 : index
    %c0_36 = arith.constant 0 : index
    %74 = vector.load %arg9[%c0_34, %c0_35, %c0_36] : memref<1x256x1xf32, #tpu.memory_space<vmem>>, vector<1x256x1xf32>
    %75 = vector.broadcast %74 : vector<1x256x1xf32> to vector<2x256x32xf32>
    %76 = arith.addf %73, %75 : vector<2x256x32xf32>
    %77 = arith.truncf %76 : vector<2x256x32xf32> to vector<2x256x32xbf16>
    %78 = vector.shape_cast %77 : vector<2x256x32xbf16> to vector<512x32xbf16>
    %c0_37 = arith.constant 0 : index
    %c0_38 = arith.constant 0 : index
    %79 = vector.load %arg10[%c0_37, %c0_38] : memref<32x16xbf16, #tpu.memory_space<vmem>>, vector<32x16xbf16>
    %cst_39 = arith.constant dense<0.000000e+00> : vector<512x16xf32>
    %80 = tpu.matmul %78, %79, %cst_39 {dimension_numbers = #tpu.dot_dimension_numbers<[1], [0], [0], [1], [0, 0, 1, 1], [], []>} : vector<512x32xbf16>, vector<32x16xbf16>, vector<512x16xf32> -> vector<512x16xf32>
    %c0_40 = arith.constant 0 : index
    %c0_41 = arith.constant 0 : index
    %81 = vector.load %arg11[%c0_40, %c0_41] : memref<1x16xf32, #tpu.memory_space<vmem>>, vector<1x16xf32>
    %82 = vector.broadcast %81 : vector<1x16xf32> to vector<512x16xf32>
    %83 = arith.addf %80, %82 : vector<512x16xf32>
    %84 = vector.shape_cast %83 : vector<512x16xf32> to vector<2x256x16xf32>
    %85 = tpu.transpose %84, [0, 2, 1] : vector<2x256x16xf32> -> vector<2x16x256xf32>
    %86 = arith.addf %0, %85 : vector<2x16x256xf32>
    %c0_42 = arith.constant 0 : index
    %c0_43 = arith.constant 0 : index
    %c0_44 = arith.constant 0 : index
    %87 = vector.load %arg12[%c0_42, %c0_43, %c0_44] : memref<2x16x256xf32, #tpu.memory_space<vmem>>, vector<2x16x256xf32>
    tpu.vector_store %arg12[%c0_42, %c0_43, %c0_44], %86 {strides = array<i32>} : memref<2x16x256xf32, #tpu.memory_space<vmem>>, vector<2x16x256xf32>,
    return
  }
  func.func @transform_0(%arg0: i32) -> (i32, i32, i32) {
    %c0_i32 = arith.constant 0 : i32
    %c0_i32_0 = arith.constant 0 : i32
    %c0_i32_1 = arith.constant 0 : i32
    return %c0_i32, %c0_i32_0, %arg0 : i32, i32, i32
  }
  func.func @transform_1(%arg0: i32) -> (i32, i32, i32) {
    %c0_i32 = arith.constant 0 : i32
    %c0_i32_0 = arith.constant 0 : i32
    %c0_i32_1 = arith.constant 0 : i32
    %c0_i32_2 = arith.constant 0 : i32
    return %c0_i32, %c0_i32_0, %c0_i32_1 : i32, i32, i32
  }
  func.func @transform_2(%arg0: i32) -> (i32, i32, i32) {
    %c0_i32 = arith.constant 0 : i32
    %c0_i32_0 = arith.constant 0 : i32
    %c0_i32_1 = arith.constant 0 : i32
    return %c0_i32, %c0_i32_0, %arg0 : i32, i32, i32
  }
  func.func @transform_3(%arg0: i32) -> (i32, i32, i32) {
    %c0_i32 = arith.constant 0 : i32
    %c0_i32_0 = arith.constant 0 : i32
    %c0_i32_1 = arith.constant 0 : i32
    return %c0_i32, %c0_i32_0, %arg0 : i32, i32, i32
  }
  func.func @transform_4(%arg0: i32) -> (i32, i32, i32) {
    %c0_i32 = arith.constant 0 : i32
    %c0_i32_0 = arith.constant 0 : i32
    %c0_i32_1 = arith.constant 0 : i32
    return %c0_i32, %c0_i32_0, %arg0 : i32, i32, i32
  }
  func.func @transform_5(%arg0: i32) -> (i32, i32) {
    %c0_i32 = arith.constant 0 : i32
    %c0_i32_0 = arith.constant 0 : i32
    %c0_i32_1 = arith.constant 0 : i32
    return %c0_i32, %c0_i32_0 : i32, i32
  }
  func.func @transform_6(%arg0: i32) -> (i32, i32) {
    %c0_i32 = arith.constant 0 : i32
    %c0_i32_0 = arith.constant 0 : i32
    %c0_i32_1 = arith.constant 0 : i32
    return %c0_i32, %c0_i32_0 : i32, i32
  }
  func.func @transform_7(%arg0: i32) -> (i32, i32, i32) {
    %c0_i32 = arith.constant 0 : i32
    %c0_i32_0 = arith.constant 0 : i32
    %c0_i32_1 = arith.constant 0 : i32
    return %c0_i32, %arg0, %c0_i32_0 : i32, i32, i32
  }
  func.func @transform_8(%arg0: i32) -> (i32, i32, i32) {
    %c0_i32 = arith.constant 0 : i32
    %c0_i32_0 = arith.constant 0 : i32
    %c0_i32_1 = arith.constant 0 : i32
    return %c0_i32, %arg0, %c0_i32_0 : i32, i32, i32
  }
  func.func @transform_9(%arg0: i32) -> (i32, i32) {
    %c0_i32 = arith.constant 0 : i32
    %c0_i32_0 = arith.constant 0 : i32
    %c0_i32_1 = arith.constant 0 : i32
    return %c0_i32, %c0_i32_0 : i32, i32
  }
  func.func @transform_10(%arg0: i32) -> (i32, i32) {
    %c0_i32 = arith.constant 0 : i32
    %c0_i32_0 = arith.constant 0 : i32
    %c0_i32_1 = arith.constant 0 : i32
    return %c0_i32, %c0_i32_0 : i32, i32
  }
  func.func @transform_11(%arg0: i32) -> (i32, i32, i32) {
    %c0_i32 = arith.constant 0 : i32
    %c0_i32_0 = arith.constant 0 : i32
    %c0_i32_1 = arith.constant 0 : i32
    return %c0_i32, %c0_i32_0, %arg0 : i32, i32, i32
  }
}

module attributes {stable_mosaic.version = 11 : i64} {
  func.func @_channel_mix_kernel(%arg0: i32, %arg1: memref<2x16x256xf32, #tpu.memory_space<vmem>>, %arg2: memref<1x1x256xf32, #tpu.memory_space<vmem>>, %arg3: memref<1x1x256xf32, #tpu.memory_space<vmem>>, %arg4: memref<1x16x1xf32, #tpu.memory_space<vmem>>, %arg5: memref<1x16x1xf32, #tpu.memory_space<vmem>>, %arg6: memref<256x64xbf16, #tpu.memory_space<vmem>>, %arg7: memref<1x64xf32, #tpu.memory_space<vmem>>, %arg8: memref<1x16x1xf32, #tpu.memory_space<vmem>>, %arg9: memref<1x16x1xf32, #tpu.memory_space<vmem>>, %arg10: memref<64x256xbf16, #tpu.memory_space<vmem>>, %arg11: memref<1x256xf32, #tpu.memory_space<vmem>>, %arg12: memref<2x16x256xf32, #tpu.memory_space<vmem>>) attributes {dimension_semantics = [#tpu.dimension_semantics<parallel>], iteration_bounds = array<i64: 1>, scalar_prefetch = 0 : i64, scratch_operands = 0 : i64, tpu.core_type = #tpu.core_type<tc>, window_params = [{transform_indices = @transform_0, window_bounds = array<i64: 2, 16, 256>}, {pipeline_mode = #tpu.pipeline_mode<synchronous>, transform_indices = @transform_1, window_bounds = array<i64: 1, 1, 256>}, {pipeline_mode = #tpu.pipeline_mode<synchronous>, transform_indices = @transform_2, window_bounds = array<i64: 1, 1, 256>}, {transform_indices = @transform_3, window_bounds = array<i64: 1, 16, 1>}, {transform_indices = @transform_4, window_bounds = array<i64: 1, 16, 1>}, {pipeline_mode = #tpu.pipeline_mode<synchronous>, transform_indices = @transform_5, window_bounds = array<i64: 256, 64>}, {pipeline_mode = #tpu.pipeline_mode<synchronous>, transform_indices = @transform_6, window_bounds = array<i64: 1, 64>}, {transform_indices = @transform_7, window_bounds = array<i64: 1, 16, 1>}, {transform_indices = @transform_8, window_bounds = array<i64: 1, 16, 1>}, {pipeline_mode = #tpu.pipeline_mode<synchronous>, transform_indices = @transform_9, window_bounds = array<i64: 64, 256>}, {pipeline_mode = #tpu.pipeline_mode<synchronous>, transform_indices = @transform_10, window_bounds = array<i64: 1, 256>}, {transform_indices = @transform_11, window_bounds = array<i64: 2, 16, 256>}]} {
    %c0 = arith.constant 0 : index
    %c0_0 = arith.constant 0 : index
    %c0_1 = arith.constant 0 : index
    %0 = vector.load %arg1[%c0, %c0_0, %c0_1] : memref<2x16x256xf32, #tpu.memory_space<vmem>>, vector<2x16x256xf32>
    %cst = arith.constant dense<0.000000e+00> : vector<2x16xf32>
    %1 = vector.multi_reduction <add>, %0, %cst [2] : vector<2x16x256xf32> to vector<2x16xf32>
    %2 = vector.shape_cast %1 : vector<2x16xf32> to vector<2x16x1xf32>
    %cst_2 = arith.constant 2.560000e+02 : f32
    %3 = vector.broadcast %cst_2 : f32 to vector<2x16x1xf32>
    %4 = arith.divf %2, %3 : vector<2x16x1xf32>
    %5 = vector.broadcast %4 : vector<2x16x1xf32> to vector<2x16x256xf32>
    %6 = arith.subf %0, %5 : vector<2x16x256xf32>
    %7 = arith.mulf %6, %6 : vector<2x16x256xf32>
    %cst_3 = arith.constant dense<0.000000e+00> : vector<2x16xf32>
    %8 = vector.multi_reduction <add>, %7, %cst_3 [2] : vector<2x16x256xf32> to vector<2x16xf32>
    %9 = vector.shape_cast %8 : vector<2x16xf32> to vector<2x16x1xf32>
    %cst_4 = arith.constant 2.560000e+02 : f32
    %10 = vector.broadcast %cst_4 : f32 to vector<2x16x1xf32>
    %11 = arith.divf %9, %10 : vector<2x16x1xf32>
    %cst_5 = arith.constant 9.99999974E-6 : f32
    %12 = vector.broadcast %cst_5 : f32 to vector<2x16x1xf32>
    %13 = arith.addf %11, %12 : vector<2x16x1xf32>
    %14 = math.rsqrt %13 : vector<2x16x1xf32>
    %15 = vector.broadcast %14 : vector<2x16x1xf32> to vector<2x16x256xf32>
    %16 = arith.mulf %6, %15 : vector<2x16x256xf32>
    %c0_6 = arith.constant 0 : index
    %c0_7 = arith.constant 0 : index
    %c0_8 = arith.constant 0 : index
    %17 = vector.load %arg2[%c0_6, %c0_7, %c0_8] : memref<1x1x256xf32, #tpu.memory_space<vmem>>, vector<1x1x256xf32>
    %18 = vector.broadcast %17 : vector<1x1x256xf32> to vector<2x16x256xf32>
    %19 = arith.mulf %16, %18 : vector<2x16x256xf32>
    %c0_9 = arith.constant 0 : index
    %c0_10 = arith.constant 0 : index
    %c0_11 = arith.constant 0 : index
    %20 = vector.load %arg3[%c0_9, %c0_10, %c0_11] : memref<1x1x256xf32, #tpu.memory_space<vmem>>, vector<1x1x256xf32>
    %21 = vector.broadcast %20 : vector<1x1x256xf32> to vector<2x16x256xf32>
    %22 = arith.addf %19, %21 : vector<2x16x256xf32>
    %cst_12 = arith.constant dense<0.000000e+00> : vector<16xf32>
    %23 = vector.multi_reduction <add>, %22, %cst_12 [0, 2] : vector<2x16x256xf32> to vector<16xf32>
    %24 = vector.shape_cast %23 : vector<16xf32> to vector<1x16x1xf32>
    %cst_13 = arith.constant 5.120000e+02 : f32
    %25 = vector.broadcast %cst_13 : f32 to vector<1x16x1xf32>
    %26 = arith.divf %24, %25 : vector<1x16x1xf32>
    %27 = arith.mulf %22, %22 : vector<2x16x256xf32>
    %cst_14 = arith.constant dense<0.000000e+00> : vector<16xf32>
    %28 = vector.multi_reduction <add>, %27, %cst_14 [0, 2] : vector<2x16x256xf32> to vector<16xf32>
    %29 = vector.shape_cast %28 : vector<16xf32> to vector<1x16x1xf32>
    %cst_15 = arith.constant 5.120000e+02 : f32
    %30 = vector.broadcast %cst_15 : f32 to vector<1x16x1xf32>
    %31 = arith.divf %29, %30 : vector<1x16x1xf32>
    %32 = arith.mulf %26, %26 : vector<1x16x1xf32>
    %33 = arith.subf %31, %32 : vector<1x16x1xf32>
    %34 = vector.broadcast %26 : vector<1x16x1xf32> to vector<2x16x256xf32>
    %35 = arith.subf %22, %34 : vector<2x16x256xf32>
    %cst_16 = arith.constant 2.560000e+02 : f32
    %36 = vector.broadcast %cst_16 : f32 to vector<1x16x1xf32>
    %37 = arith.addf %33, %36 : vector<1x16x1xf32>
    %38 = math.rsqrt %37 : vector<1x16x1xf32>
    %c0_17 = arith.constant 0 : index
    %c0_18 = arith.constant 0 : index
    %c0_19 = arith.constant 0 : index
    %39 = vector.load %arg4[%c0_17, %c0_18, %c0_19] : memref<1x16x1xf32, #tpu.memory_space<vmem>>, vector<1x16x1xf32>
    %40 = arith.mulf %38, %39 : vector<1x16x1xf32>
    %41 = vector.broadcast %40 : vector<1x16x1xf32> to vector<2x16x256xf32>
    %42 = arith.mulf %35, %41 : vector<2x16x256xf32>
    %c0_20 = arith.constant 0 : index
    %c0_21 = arith.constant 0 : index
    %c0_22 = arith.constant 0 : index
    %43 = vector.load %arg5[%c0_20, %c0_21, %c0_22] : memref<1x16x1xf32, #tpu.memory_space<vmem>>, vector<1x16x1xf32>
    %44 = vector.broadcast %43 : vector<1x16x1xf32> to vector<2x16x256xf32>
    %45 = arith.addf %42, %44 : vector<2x16x256xf32>
    %46 = arith.truncf %45 : vector<2x16x256xf32> to vector<2x16x256xbf16>
    %47 = vector.shape_cast %46 : vector<2x16x256xbf16> to vector<32x256xbf16>
    %c0_23 = arith.constant 0 : index
    %c0_24 = arith.constant 0 : index
    %48 = vector.load %arg6[%c0_23, %c0_24] : memref<256x64xbf16, #tpu.memory_space<vmem>>, vector<256x64xbf16>
    %cst_25 = arith.constant dense<0.000000e+00> : vector<32x64xf32>
    %49 = tpu.matmul %47, %48, %cst_25 {dimension_numbers = #tpu.dot_dimension_numbers<[1], [0], [0], [1], [0, 0, 1, 1], [], []>} : vector<32x256xbf16>, vector<256x64xbf16>, vector<32x64xf32> -> vector<32x64xf32>
    %c0_26 = arith.constant 0 : index
    %c0_27 = arith.constant 0 : index
    %50 = vector.load %arg7[%c0_26, %c0_27] : memref<1x64xf32, #tpu.memory_space<vmem>>, vector<1x64xf32>
    %51 = vector.broadcast %50 : vector<1x64xf32> to vector<32x64xf32>
    %52 = arith.addf %49, %51 : vector<32x64xf32>
    %cst_28 = arith.constant 5.000000e-01 : f32
    %53 = vector.broadcast %cst_28 : f32 to vector<32x64xf32>
    %54 = arith.mulf %53, %52 : vector<32x64xf32>
    %cst_29 = arith.constant 0.707106769 : f32
    %55 = vector.broadcast %cst_29 : f32 to vector<32x64xf32>
    %56 = arith.mulf %52, %55 : vector<32x64xf32>
    %57 = math.erf %56 : vector<32x64xf32>
    %cst_30 = arith.constant 1.000000e+00 : f32
    %58 = vector.broadcast %cst_30 : f32 to vector<32x64xf32>
    %59 = arith.addf %58, %57 : vector<32x64xf32>
    %60 = arith.mulf %54, %59 : vector<32x64xf32>
    %61 = vector.shape_cast %60 : vector<32x64xf32> to vector<2x16x64xf32>
    %cst_31 = arith.constant dense<0.000000e+00> : vector<16xf32>
    %62 = vector.multi_reduction <add>, %61, %cst_31 [0, 2] : vector<2x16x64xf32> to vector<16xf32>
    %63 = vector.shape_cast %62 : vector<16xf32> to vector<1x16x1xf32>
    %cst_32 = arith.constant 1.280000e+02 : f32
    %64 = vector.broadcast %cst_32 : f32 to vector<1x16x1xf32>
    %65 = arith.divf %63, %64 : vector<1x16x1xf32>
    %66 = arith.mulf %61, %61 : vector<2x16x64xf32>
    %cst_33 = arith.constant dense<0.000000e+00> : vector<16xf32>
    %67 = vector.multi_reduction <add>, %66, %cst_33 [0, 2] : vector<2x16x64xf32> to vector<16xf32>
    %68 = vector.shape_cast %67 : vector<16xf32> to vector<1x16x1xf32>
    %cst_34 = arith.constant 1.280000e+02 : f32
    %69 = vector.broadcast %cst_34 : f32 to vector<1x16x1xf32>
    %70 = arith.divf %68, %69 : vector<1x16x1xf32>
    %71 = arith.mulf %65, %65 : vector<1x16x1xf32>
    %72 = arith.subf %70, %71 : vector<1x16x1xf32>
    %73 = vector.broadcast %65 : vector<1x16x1xf32> to vector<2x16x64xf32>
    %74 = arith.subf %61, %73 : vector<2x16x64xf32>
    %cst_35 = arith.constant 6.400000e+01 : f32
    %75 = vector.broadcast %cst_35 : f32 to vector<1x16x1xf32>
    %76 = arith.addf %72, %75 : vector<1x16x1xf32>
    %77 = math.rsqrt %76 : vector<1x16x1xf32>
    %c0_36 = arith.constant 0 : index
    %c0_37 = arith.constant 0 : index
    %c0_38 = arith.constant 0 : index
    %78 = vector.load %arg8[%c0_36, %c0_37, %c0_38] : memref<1x16x1xf32, #tpu.memory_space<vmem>>, vector<1x16x1xf32>
    %79 = arith.mulf %77, %78 : vector<1x16x1xf32>
    %80 = vector.broadcast %79 : vector<1x16x1xf32> to vector<2x16x64xf32>
    %81 = arith.mulf %74, %80 : vector<2x16x64xf32>
    %c0_39 = arith.constant 0 : index
    %c0_40 = arith.constant 0 : index
    %c0_41 = arith.constant 0 : index
    %82 = vector.load %arg9[%c0_39, %c0_40, %c0_41] : memref<1x16x1xf32, #tpu.memory_space<vmem>>, vector<1x16x1xf32>
    %83 = vector.broadcast %82 : vector<1x16x1xf32> to vector<2x16x64xf32>
    %84 = arith.addf %81, %83 : vector<2x16x64xf32>
    %85 = arith.truncf %84 : vector<2x16x64xf32> to vector<2x16x64xbf16>
    %86 = vector.shape_cast %85 : vector<2x16x64xbf16> to vector<32x64xbf16>
    %c0_42 = arith.constant 0 : index
    %c0_43 = arith.constant 0 : index
    %87 = vector.load %arg10[%c0_42, %c0_43] : memref<64x256xbf16, #tpu.memory_space<vmem>>, vector<64x256xbf16>
    %cst_44 = arith.constant dense<0.000000e+00> : vector<32x256xf32>
    %88 = tpu.matmul %86, %87, %cst_44 {dimension_numbers = #tpu.dot_dimension_numbers<[1], [0], [0], [1], [0, 0, 1, 1], [], []>} : vector<32x64xbf16>, vector<64x256xbf16>, vector<32x256xf32> -> vector<32x256xf32>
    %c0_45 = arith.constant 0 : index
    %c0_46 = arith.constant 0 : index
    %89 = vector.load %arg11[%c0_45, %c0_46] : memref<1x256xf32, #tpu.memory_space<vmem>>, vector<1x256xf32>
    %90 = vector.broadcast %89 : vector<1x256xf32> to vector<32x256xf32>
    %91 = arith.addf %88, %90 : vector<32x256xf32>
    %92 = vector.shape_cast %91 : vector<32x256xf32> to vector<2x16x256xf32>
    %93 = arith.addf %0, %92 : vector<2x16x256xf32>
    %c0_47 = arith.constant 0 : index
    %c0_48 = arith.constant 0 : index
    %c0_49 = arith.constant 0 : index
    %94 = vector.load %arg12[%c0_47, %c0_48, %c0_49] : memref<2x16x256xf32, #tpu.memory_space<vmem>>, vector<2x16x256xf32>
    tpu.vector_store %arg12[%c0_47, %c0_48, %c0_49], %93 {strides = array<i32>} : memref<2x16x256xf32, #tpu.memory_space<vmem>>, vector<2x16x256xf32>,
    return
  }
  func.func @transform_0(%arg0: i32) -> (i32, i32, i32) {
    %c0_i32 = arith.constant 0 : i32
    %c0_i32_0 = arith.constant 0 : i32
    %c0_i32_1 = arith.constant 0 : i32
    return %c0_i32, %arg0, %c0_i32_0 : i32, i32, i32
  }
  func.func @transform_1(%arg0: i32) -> (i32, i32, i32) {
    %c0_i32 = arith.constant 0 : i32
    %c0_i32_0 = arith.constant 0 : i32
    %c0_i32_1 = arith.constant 0 : i32
    %c0_i32_2 = arith.constant 0 : i32
    return %c0_i32, %c0_i32_0, %c0_i32_1 : i32, i32, i32
  }
  func.func @transform_2(%arg0: i32) -> (i32, i32, i32) {
    %c0_i32 = arith.constant 0 : i32
    %c0_i32_0 = arith.constant 0 : i32
    %c0_i32_1 = arith.constant 0 : i32
    %c0_i32_2 = arith.constant 0 : i32
    return %c0_i32, %c0_i32_0, %c0_i32_1 : i32, i32, i32
  }
  func.func @transform_3(%arg0: i32) -> (i32, i32, i32) {
    %c0_i32 = arith.constant 0 : i32
    %c0_i32_0 = arith.constant 0 : i32
    %c0_i32_1 = arith.constant 0 : i32
    return %c0_i32, %arg0, %c0_i32_0 : i32, i32, i32
  }
  func.func @transform_4(%arg0: i32) -> (i32, i32, i32) {
    %c0_i32 = arith.constant 0 : i32
    %c0_i32_0 = arith.constant 0 : i32
    %c0_i32_1 = arith.constant 0 : i32
    return %c0_i32, %arg0, %c0_i32_0 : i32, i32, i32
  }
  func.func @transform_5(%arg0: i32) -> (i32, i32) {
    %c0_i32 = arith.constant 0 : i32
    %c0_i32_0 = arith.constant 0 : i32
    %c0_i32_1 = arith.constant 0 : i32
    return %c0_i32, %c0_i32_0 : i32, i32
  }
  func.func @transform_6(%arg0: i32) -> (i32, i32) {
    %c0_i32 = arith.constant 0 : i32
    %c0_i32_0 = arith.constant 0 : i32
    %c0_i32_1 = arith.constant 0 : i32
    return %c0_i32, %c0_i32_0 : i32, i32
  }
  func.func @transform_7(%arg0: i32) -> (i32, i32, i32) {
    %c0_i32 = arith.constant 0 : i32
    %c0_i32_0 = arith.constant 0 : i32
    %c0_i32_1 = arith.constant 0 : i32
    return %c0_i32, %arg0, %c0_i32_0 : i32, i32, i32
  }
  func.func @transform_8(%arg0: i32) -> (i32, i32, i32) {
    %c0_i32 = arith.constant 0 : i32
    %c0_i32_0 = arith.constant 0 : i32
    %c0_i32_1 = arith.constant 0 : i32
    return %c0_i32, %arg0, %c0_i32_0 : i32, i32, i32
  }
  func.func @transform_9(%arg0: i32) -> (i32, i32) {
    %c0_i32 = arith.constant 0 : i32
    %c0_i32_0 = arith.constant 0 : i32
    %c0_i32_1 = arith.constant 0 : i32
    return %c0_i32, %c0_i32_0 : i32, i32
  }
  func.func @transform_10(%arg0: i32) -> (i32, i32) {
    %c0_i32 = arith.constant 0 : i32
    %c0_i32_0 = arith.constant 0 : i32
    %c0_i32_1 = arith.constant 0 : i32
    return %c0_i32, %c0_i32_0 : i32, i32
  }
  func.func @transform_11(%arg0: i32) -> (i32, i32, i32) {
    %c0_i32 = arith.constant 0 : i32
    %c0_i32_0 = arith.constant 0 : i32
    %c0_i32_1 = arith.constant 0 : i32
    return %c0_i32, %arg0, %c0_i32_0 : i32, i32, i32
  }
}

</mosaic_0001>

<llo_original>
// kernel: mixer_block.3
$region0: #{mixer_block.3}
  #allocation0 [shape = 'u32[]', space=smem, size = 0x4, offset = 0x4, fixed_abs, tag = 'smem constant byte address 0x4 - core index']
  #allocation1 [shape = 'u32[72,128]{1,0:T(1,128)}', space=vmem, size = 0x9000, scoped, tag = 'internal scratch']
  %s0 = inlined_call_operand.vmem [shape: f32[2,16,256], index: 0, kind: input, shape index: {}]
  %s1 = inlined_call_operand.vmem [shape: f32[2,16,2], index: 1, kind: output, shape index: {}]
  %s2 = sld [smem:[#allocation0]]
  $region14: #{mixer_block.3} parent=0
    _
  %s4 = ssub.s32 1, %s2
  %s5 = scalar_select 0, %s4, %s2
  // Predicated region
  $region2: #{mixer_block.3} parent=0 // pred_check
    _
  $region3: #{mixer_block.3} parent=0 // pred_check_branch
    %7 = sbr.rel (0) target = $region5
  $region4: #{mixer_block.3} parent=0 // pred_region
    _
  $region5: #{mixer_block.3} parent=0 // pred_fallthru
    _
  %v8 = vld [vmem:[%s0] sm:$0xff]
  %v9 = vld [vmem:[%s0 + $0x8] sm:$0xff]
  %v10 = vld [vmem:[%s0 + $0x10] sm:$0xff]
  %v11 = vld [vmem:[%s0 + $0x18] sm:$0xff]
  %v12 = vld [vmem:[%s0 + $0x20] sm:$0xff]
  %v13 = vld [vmem:[%s0 + $0x28] sm:$0xff]
  %v14 = vld [vmem:[%s0 + $0x30] sm:$0xff]
  %v15 = vld [vmem:[%s0 + $0x38] sm:$0xff]
  %v16 = vadd.f32 %v8, %v9
  %17 = vadd.xlane.f32.xlu0 %v16
  %v18 = vpop.xlane.xlu0 %17
  %v19 = vadd.f32 %v10, %v11
  %20 = vadd.xlane.f32.xlu0 %v19
  %v21 = vpop.xlane.xlu0 %20
  %v22 = vadd.f32 %v12, %v13
  %23 = vadd.xlane.f32.xlu0 %v22
  %v24 = vpop.xlane.xlu0 %23
  %v25 = vadd.f32 %v14, %v15
  %26 = vadd.xlane.f32.xlu0 %v25
  %v27 = vpop.xlane.xlu0 %26
  %v28 = vrcp.pop 256.0
  %v29 = vmul.f32 256.0, %v28
  %v30 = vsub.f32 1.0, %v29
  %v31 = vmul.f32 %v28, %v30
  %v32 = vadd.f32 %v28, %v31
  %vm33 = vweird.f32 %v28
  %v34 = vsel %vm33, %v28, %v32
  %v35 = vmul.f32 %v18, %v34
  %v36 = vmul.f32 %v21, %v34
  %v37 = vmul.f32 %v24, %v34
  %v38 = vmul.f32 %v27, %v34
  %v39 = vsub.f32 %v8, %v35
  %v40 = vsub.f32 %v9, %v35
  %v41 = vsub.f32 %v10, %v36
  %v42 = vsub.f32 %v11, %v36
  %v43 = vsub.f32 %v12, %v37
  %v44 = vsub.f32 %v13, %v37
  %v45 = vsub.f32 %v14, %v38
  %v46 = vsub.f32 %v15, %v38
  %v47 = vmul.f32 %v39, %v39
  %v48 = vmul.f32 %v40, %v40
  %v49 = vmul.f32 %v41, %v41
  %v50 = vmul.f32 %v42, %v42
  %v51 = vmul.f32 %v43, %v43
  %v52 = vmul.f32 %v44, %v44
  %v53 = vmul.f32 %v45, %v45
  %v54 = vmul.f32 %v46, %v46
  %v55 = vadd.f32 %v47, %v48
  %56 = vadd.xlane.f32.xlu0 %v55
  %v57 = vpop.xlane.xlu0 %56
  %v58 = vadd.f32 %v49, %v50
  %59 = vadd.xlane.f32.xlu0 %v58
  %v60 = vpop.xlane.xlu0 %59
  %v61 = vadd.f32 %v51, %v52
  %62 = vadd.xlane.f32.xlu0 %v61
  %v63 = vpop.xlane.xlu0 %62
  %v64 = vadd.f32 %v53, %v54
  %65 = vadd.xlane.f32.xlu0 %v64
  %v66 = vpop.xlane.xlu0 %65
  %v67 = vmul.f32 %v57, %v34
  %v68 = vmul.f32 %v60, %v34
  %v69 = vmul.f32 %v63, %v34
  %v70 = vmul.f32 %v66, %v34
  %v71 = vadd.f32 %v67, 1e-05
  %v72 = vadd.f32 %v68, 1e-05
  %v73 = vadd.f32 %v69, 1e-05
  %v74 = vadd.f32 %v70, 1e-05
  %v75 = vrsqrt.pop %v71
  %v76 = vmul.f32 %v75, %v71
  %v77 = vmul.f32 %v76, %v75
  %v78 = vmul.f32 0.5, %v77
  %v79 = vsub.f32 1.5, %v78
  %v80 = vmul.f32 %v75, %v79
  %vm81 = vweird.f32 %v71
  %vm82 = vweird.f32 %v75
  %vm83 = vmor %vm81, %vm82
  %v84 = vsel %vm83, %v75, %v80
  %v85 = vrsqrt.pop %v72
  %v86 = vmul.f32 %v85, %v72
  %v87 = vmul.f32 %v86, %v85
  %v88 = vmul.f32 0.5, %v87
  %v89 = vsub.f32 1.5, %v88
  %v90 = vmul.f32 %v85, %v89
  %vm91 = vweird.f32 %v72
  %vm92 = vweird.f32 %v85
  %vm93 = vmor %vm91, %vm92
  %v94 = vsel %vm93, %v85, %v90
  %v95 = vrsqrt.pop %v73
  %v96 = vmul.f32 %v95, %v73
  %v97 = vmul.f32 %v96, %v95
  %v98 = vmul.f32 0.5, %v97
  %v99 = vsub.f32 1.5, %v98
  %v100 = vmul.f32 %v95, %v99
  %vm101 = vweird.f32 %v73
  %vm102 = vweird.f32 %v95
  %vm103 = vmor %vm101, %vm102
  %v104 = vsel %vm103, %v95, %v100
  %v105 = vrsqrt.pop %v74
  %v106 = vmul.f32 %v105, %v74
  %v107 = vmul.f32 %v106, %v105
  %v108 = vmul.f32 0.5, %v107
  %v109 = vsub.f32 1.5, %v108
  %v110 = vmul.f32 %v105, %v109
  %vm111 = vweird.f32 %v74
  %vm112 = vweird.f32 %v105
  %vm113 = vmor %vm111, %vm112
  %v114 = vsel %vm113, %v105, %v110
  %vm115 = vcmask 7168
  %v116 = vsel %vm115, %v35, %v84
  %v117 = vsel %vm115, %v36, %v94
  %v118 = vsel %vm115, %v37, %v104
  %v119 = vsel %vm115, %v38, %v114
  %vm120 = vcmask 15360
  %121 = vst.msk [vmem:[%s1] sm:$0xff] %vm120, %v116
  %122 = vst.msk [vmem:[%s1 + $0x8] sm:$0xff] %vm120, %v117
  %123 = vst.msk [vmem:[%s1 + $0x10] sm:$0xff] %vm120, %v118
  %124 = vst.msk [vmem:[%s1 + $0x18] sm:$0xff] %vm120, %v119
  // Predicated region
  $region6: #{mixer_block.3} parent=0 // pred_check
    _
  $region7: #{mixer_block.3} parent=0 // pred_check_branch
    %126 = sbr.rel (0) target = $region9
  $region8: #{mixer_block.3} parent=0 // pred_region
    _
  $region9: #{mixer_block.3} parent=0 // pred_fallthru
    _
  // Predicated region
  $region10: #{mixer_block.3} parent=0 // pred_check
    _
  $region11: #{mixer_block.3} parent=0 // pred_check_branch
    %128 = sbr.rel (0) target = $region13
  $region12: #{mixer_block.3} parent=0 // pred_region
    _
  $region13: #{mixer_block.3} parent=0 // pred_fallthru
    _

// kernel: mixer_block.5
$region0: #{mixer_block.5}
  #allocation0 [shape = 'u32[]', space=smem, size = 0x4, offset = 0x4, fixed_abs, tag = 'smem constant byte address 0x4 - core index']
  #allocation1 [shape = 'u32[72,128]{1,0:T(1,128)}', space=vmem, size = 0x9000, scoped, tag = 'internal scratch']
  %s0 = inlined_call_operand.hbm [shape: f32[2,16,256], index: 0, kind: input, shape index: {}, may-alias: {0,11}]
  %s1 = inlined_call_operand.vmem [shape: f32[1,1,256], index: 1, kind: input, shape index: {}]
  %s2 = inlined_call_operand.vmem [shape: f32[1,1,256], index: 2, kind: input, shape index: {}]
  %s3 = inlined_call_operand.vmem [shape: f32[1,16,1], index: 3, kind: input, shape index: {}]
  %s4 = inlined_call_operand.vmem [shape: f32[1,16,1], index: 4, kind: input, shape index: {}]
  %s5 = inlined_call_operand.vmem [shape: bf16[256,64], index: 5, kind: input, shape index: {}]
  %s6 = inlined_call_operand.vmem [shape: f32[1,64], index: 6, kind: input, shape index: {}]
  %s7 = inlined_call_operand.vmem [shape: f32[1,16,1], index: 7, kind: input, shape index: {}]
  %s8 = inlined_call_operand.vmem [shape: f32[1,16,1], index: 8, kind: input, shape index: {}]
  %s9 = inlined_call_operand.vmem [shape: bf16[64,256], index: 9, kind: input, shape index: {}]
  %s10 = inlined_call_operand.vmem [shape: f32[1,256], index: 10, kind: input, shape index: {}]
  %s11 = inlined_call_operand.hbm [shape: f32[2,16,256], index: 11, kind: output, shape index: {}, may-alias: {0,11}]
  %s12 = sld [smem:[#allocation0]]
  $region58: #{mixer_block.5} parent=0
    _
  %s14 = ssub.s32 1, %s12
  %s15 = scalar_select 0, %s14, %s12
  $region1: #{mixer_block.5} parent=0
    #allocation2 [shape = 'u8[32768]{0}', space=vmem, size = 0x8000, scoped, tag = 'input window, operand 0, single buffered']
    #allocation3 [shape = 's32[1]{0}', space=sflag, size = 0x4, scoped, tag = 'scoped memory for mixer_block.5']
    #allocation4 [shape = 's32[1]{0}', space=sflag, size = 0x4, scoped, tag = 'scoped memory for mixer_block.5']
    #allocation5 [shape = 'u8[32768]{0}', space=vmem, size = 0x8000, scoped, tag = 'output window, operand 0, single buffered']
    %16 = vsyncpa [#allocation3], 0
    %17 = vsyncpa [#allocation4], 0
    // Predicated region
    $region2: #{mixer_block.5} parent=1 // pred_check
      _
    $region3: #{mixer_block.5} parent=1 // pred_check_branch
      %19 = sbr.rel (0) target = $region5
    $region4: #{mixer_block.5} parent=1 // pred_region
      %21 = vsyncadd [#allocation3], 0
      %s22 = sshll.u32 %s0, 4
      %s23 = int_to_ptr.hbm [resolvable:$true] %s22
      %s24 = sshll.u32 [#allocation2], 4
      %s25 = int_to_ptr.vmem [resolvable:$true] %s24
      %30 = dma.hbm_to_vmem [thread:$0]  %s23, 1024, %s25, [#allocation3], 256, 256, 16
    $region5: #{mixer_block.5} parent=1 // pred_fallthru
      _
    // Predicated region
    $region6: #{mixer_block.5} parent=1 // pred_check
      _
    $region7: #{mixer_block.5} parent=1 // pred_check_branch
      %32 = sbr.rel (0) target = $region9
    $region8: #{mixer_block.5} parent=1 // pred_region
      _
    $region9: #{mixer_block.5} parent=1 // pred_fallthru
      _
    // Predicated region
    $region10: #{mixer_block.5} parent=1 // pred_check
      _
    $region11: #{mixer_block.5} parent=1 // pred_check_branch
      %34 = sbr.rel (0) target = $region13
    $region12: #{mixer_block.5} parent=1 // pred_region
      _
    $region13: #{mixer_block.5} parent=1 // pred_fallthru
      _
    // Predicated region
    $region14: #{mixer_block.5} parent=1 // pred_check
      _
    $region15: #{mixer_block.5} parent=1 // pred_check_branch
      %36 = sbr.rel (0) target = $region17
    $region16: #{mixer_block.5} parent=1 // pred_region
      _
    $region17: #{mixer_block.5} parent=1 // pred_fallthru
      _
    // Predicated region
    $region18: #{mixer_block.5} parent=1 // pred_check
      _
    $region19: #{mixer_block.5} parent=1 // pred_check_branch
      %38 = sbr.rel (0) target = $region21
    $region20: #{mixer_block.5} parent=1 // pred_region
      _
    $region21: #{mixer_block.5} parent=1 // pred_fallthru
      _
    // Predicated region
    $region22: #{mixer_block.5} parent=1 // pred_check
      _
    $region23: #{mixer_block.5} parent=1 // pred_check_branch
      %40 = sbr.rel (0) target = $region25
    $region24: #{mixer_block.5} parent=1 // pred_region
      _
    $region25: #{mixer_block.5} parent=1 // pred_fallthru
      _
    // Predicated region
    $region26: #{mixer_block.5} parent=1 // pred_check
      _
    $region27: #{mixer_block.5} parent=1 // pred_check_branch
      %42 = sbr.rel (0) target = $region29
    $region28: #{mixer_block.5} parent=1 // pred_region
      _
    $region29: #{mixer_block.5} parent=1 // pred_fallthru
      _
    // Predicated region
    $region30: #{mixer_block.5} parent=1 // pred_check
      _
    $region31: #{mixer_block.5} parent=1 // pred_check_branch
      %44 = sbr.rel (0) target = $region33
    $region32: #{mixer_block.5} parent=1 // pred_region
      _
    $region33: #{mixer_block.5} parent=1 // pred_fallthru
      _
    // Predicated region
    $region34: #{mixer_block.5} parent=1 // pred_check
      _
    $region35: #{mixer_block.5} parent=1 // pred_check_branch
      %46 = sbr.rel (0) target = $region37
    $region36: #{mixer_block.5} parent=1 // pred_region
      _
    $region37: #{mixer_block.5} parent=1 // pred_fallthru
      _
    // Predicated region
    $region38: #{mixer_block.5} parent=1 // pred_check
      _
    $region39: #{mixer_block.5} parent=1 // pred_check_branch
      %48 = sbr.rel (0) target = $region41
    $region40: #{mixer_block.5} parent=1 // pred_region
      _
    $region41: #{mixer_block.5} parent=1 // pred_fallthru
      _
    // Predicated region
    $region42: #{mixer_block.5} parent=1 // pred_check
      _
    $region43: #{mixer_block.5} parent=1 // pred_check_branch
      %50 = sbr.rel (0) target = $region45
    $region44: #{mixer_block.5} parent=1 // pred_region
      _
    $region45: #{mixer_block.5} parent=1 // pred_fallthru
      _
    // Predicated region
    $region46: #{mixer_block.5} parent=1 // pred_check
      _
    $region47: #{mixer_block.5} parent=1 // pred_check_branch
      %52 = sbr.rel (0) target = $region49
    $region48: #{mixer_block.5} parent=1 // pred_region
      %54 = dma.done [#allocation3], 1024
    $region49: #{mixer_block.5} parent=1 // pred_fallthru
      _
    %v56 = vld [vmem:[#allocation2] sm:$0xff]
    %v57 = vld [vmem:[#allocation2 + $0x8] sm:$0xff]
    %v58 = vld [vmem:[#allocation2 + $0x10] sm:$0xff]
    %v59 = vld [vmem:[#allocation2 + $0x18] sm:$0xff]
    %v60 = vld [vmem:[#allocation2 + $0x20] sm:$0xff]
    %v61 = vld [vmem:[#allocation2 + $0x28] sm:$0xff]
    %v62 = vld [vmem:[#allocation2 + $0x30] sm:$0xff]
    %v63 = vld [vmem:[#allocation2 + $0x38] sm:$0xff]
    %v64 = vadd.f32 %v56, %v57
    %65 = vadd.xlane.f32.xlu0 %v64
    %v66 = vpop.xlane.xlu0 %65
    %v67 = vadd.f32 %v58, %v59
    %68 = vadd.xlane.f32.xlu0 %v67
    %v69 = vpop.xlane.xlu0 %68
    %v70 = vadd.f32 %v60, %v61
    %71 = vadd.xlane.f32.xlu0 %v70
    %v72 = vpop.xlane.xlu0 %71
    %v73 = vadd.f32 %v62, %v63
    %74 = vadd.xlane.f32.xlu0 %v73
    %v75 = vpop.xlane.xlu0 %74
    %v76 = vrcp.pop 256.0
    %v77 = vmul.f32 256.0, %v76
    %v78 = vsub.f32 1.0, %v77
    %v79 = vmul.f32 %v76, %v78
    %v80 = vadd.f32 %v76, %v79
    %vm81 = vweird.f32 %v76
    %v82 = vsel %vm81, %v76, %v80
    %v83 = vmul.f32 %v66, %v82
    %v84 = vmul.f32 %v69, %v82
    %v85 = vmul.f32 %v72, %v82
    %v86 = vmul.f32 %v75, %v82
    %v87 = vsub.f32 %v56, %v83
    %v88 = vsub.f32 %v57, %v83
    %v89 = vsub.f32 %v58, %v84
    %v90 = vsub.f32 %v59, %v84
    %v91 = vsub.f32 %v60, %v85
    %v92 = vsub.f32 %v61, %v85
    %v93 = vsub.f32 %v62, %v86
    %v94 = vsub.f32 %v63, %v86
    %v95 = vmul.f32 %v87, %v87
    %v96 = vmul.f32 %v88, %v88
    %v97 = vmul.f32 %v89, %v89
    %v98 = vmul.f32 %v90, %v90
    %v99 = vmul.f32 %v91, %v91
    %v100 = vmul.f32 %v92, %v92
    %v101 = vmul.f32 %v93, %v93
    %v102 = vmul.f32 %v94, %v94
    %v103 = vadd.f32 %v95, %v96
    %104 = vadd.xlane.f32.xlu0 %v103
    %v105 = vpop.xlane.xlu0 %104
    %v106 = vadd.f32 %v97, %v98
    %107 = vadd.xlane.f32.xlu0 %v106
    %v108 = vpop.xlane.xlu0 %107
    %v109 = vadd.f32 %v99, %v100
    %110 = vadd.xlane.f32.xlu0 %v109
    %v111 = vpop.xlane.xlu0 %110
    %v112 = vadd.f32 %v101, %v102
    %113 = vadd.xlane.f32.xlu0 %v112
    %v114 = vpop.xlane.xlu0 %113
    %v115 = vmul.f32 %v105, %v82
    %v116 = vmul.f32 %v108, %v82
    %v117 = vmul.f32 %v111, %v82
    %v118 = vmul.f32 %v114, %v82
    %v119 = vadd.f32 %v115, 1e-05
    %v120 = vadd.f32 %v116, 1e-05
    %v121 = vadd.f32 %v117, 1e-05
    %v122 = vadd.f32 %v118, 1e-05
    %v123 = vrsqrt.pop %v119
    %v124 = vmul.f32 %v123, %v119
    %v125 = vmul.f32 %v124, %v123
    %v126 = vmul.f32 0.5, %v125
    %v127 = vsub.f32 1.5, %v126
    %v128 = vmul.f32 %v123, %v127
    %vm129 = vweird.f32 %v119
    %vm130 = vweird.f32 %v123
    %vm131 = vmor %vm129, %vm130
    %v132 = vsel %vm131, %v123, %v128
    %v133 = vrsqrt.pop %v120
    %v134 = vmul.f32 %v133, %v120
    %v135 = vmul.f32 %v134, %v133
    %v136 = vmul.f32 0.5, %v135
    %v137 = vsub.f32 1.5, %v136
    %v138 = vmul.f32 %v133, %v137
    %vm139 = vweird.f32 %v120
    %vm140 = vweird.f32 %v133
    %vm141 = vmor %vm139, %vm140
    %v142 = vsel %vm141, %v133, %v138
    %v143 = vrsqrt.pop %v121
    %v144 = vmul.f32 %v143, %v121
    %v145 = vmul.f32 %v144, %v143
    %v146 = vmul.f32 0.5, %v145
    %v147 = vsub.f32 1.5, %v146
    %v148 = vmul.f32 %v143, %v147
    %vm149 = vweird.f32 %v121
    %vm150 = vweird.f32 %v143
    %vm151 = vmor %vm149, %vm150
    %v152 = vsel %vm151, %v143, %v148
    %v153 = vrsqrt.pop %v122
    %v154 = vmul.f32 %v153, %v122
    %v155 = vmul.f32 %v154, %v153
    %v156 = vmul.f32 0.5, %v155
    %v157 = vsub.f32 1.5, %v156
    %v158 = vmul.f32 %v153, %v157
    %vm159 = vweird.f32 %v122
    %vm160 = vweird.f32 %v153
    %vm161 = vmor %vm159, %vm160
    %v162 = vsel %vm161, %v153, %v158
    %v163 = vmul.f32 %v87, %v132
    %v164 = vmul.f32 %v88, %v132
    %v165 = vmul.f32 %v89, %v142
    %v166 = vmul.f32 %v90, %v142
    %v167 = vmul.f32 %v91, %v152
    %v168 = vmul.f32 %v92, %v152
    %v169 = vmul.f32 %v93, %v162
    %v170 = vmul.f32 %v94, %v162
    %v171 = vld [vmem:[%s1] sm:$0x3]
    %v173 = vperm.slane %v171, 0
    %v174 = vperm.slane %v171, 1
    %v177 = vmul.f32 %v163, %v173
    %v178 = vmul.f32 %v164, %v174
    %v179 = vmul.f32 %v165, %v173
    %v180 = vmul.f32 %v166, %v174
    %v181 = vmul.f32 %v167, %v173
    %v182 = vmul.f32 %v168, %v174
    %v183 = vmul.f32 %v169, %v173
    %v184 = vmul.f32 %v170, %v174
    %v185 = vld [vmem:[%s2] sm:$0x3]
    %v187 = vperm.slane %v185, 0
    %v188 = vperm.slane %v185, 1
    %v191 = vadd.f32 %v177, %v187
    %v192 = vadd.f32 %v178, %v188
    %v193 = vadd.f32 %v179, %v187
    %v194 = vadd.f32 %v180, %v188
    %v195 = vadd.f32 %v181, %v187
    %v196 = vadd.f32 %v182, %v188
    %v197 = vadd.f32 %v183, %v187
    %v198 = vadd.f32 %v184, %v188
    %v199 = vadd.f32 %v191, %v192
    %v200 = vadd.f32 %v199, %v195
    %v201 = vadd.f32 %v200, %v196
    %202 = vadd.xlane.f32.xlu0 %v201
    %v203 = vpop.xlane.xlu0 %202
    %v204 = vadd.f32 %v193, %v194
    %v205 = vadd.f32 %v204, %v197
    %v206 = vadd.f32 %v205, %v198
    %207 = vadd.xlane.f32.xlu0 %v206
    %v208 = vpop.xlane.xlu0 %207
    %v209 = vrcp.pop 512.0
    %v210 = vmul.f32 512.0, %v209
    %v211 = vsub.f32 1.0, %v210
    %v212 = vmul.f32 %v209, %v211
    %v213 = vadd.f32 %v209, %v212
    %vm214 = vweird.f32 %v209
    %v215 = vsel %vm214, %v209, %v213
    %v216 = vmul.f32 %v203, %v215
    %v217 = vmul.f32 %v208, %v215
    %v218 = vmul.f32 %v191, %v191
    %v219 = vmul.f32 %v192, %v192
    %v220 = vmul.f32 %v193, %v193
    %v221 = vmul.f32 %v194, %v194
    %v222 = vmul.f32 %v195, %v195
    %v223 = vmul.f32 %v196, %v196
    %v224 = vmul.f32 %v197, %v197
    %v225 = vmul.f32 %v198, %v198
    %v226 = vadd.f32 %v218, %v219
    %v227 = vadd.f32 %v226, %v222
    %v228 = vadd.f32 %v227, %v223
    %229 = vadd.xlane.f32.xlu0 %v228
    %v230 = vpop.xlane.xlu0 %229
    %v231 = vadd.f32 %v220, %v221
    %v232 = vadd.f32 %v231, %v224
    %v233 = vadd.f32 %v232, %v225
    %234 = vadd.xlane.f32.xlu0 %v233
    %v235 = vpop.xlane.xlu0 %234
    %v236 = vmul.f32 %v230, %v215
    %v237 = vmul.f32 %v235, %v215
    %v238 = vmul.f32 %v216, %v216
    %v239 = vmul.f32 %v217, %v217
    %v240 = vsub.f32 %v236, %v238
    %v241 = vsub.f32 %v237, %v239
    %v242 = vsub.f32 %v191, %v216
    %v243 = vsub.f32 %v192, %v216
    %v244 = vsub.f32 %v193, %v217
    %v245 = vsub.f32 %v194, %v217
    %v246 = vsub.f32 %v195, %v216
    %v247 = vsub.f32 %v196, %v216
    %v248 = vsub.f32 %v197, %v217
    %v249 = vsub.f32 %v198, %v217
    %v250 = vadd.f32 %v240, 256.0
    %v251 = vadd.f32 %v241, 256.0
    %v252 = vrsqrt.pop %v250
    %v253 = vmul.f32 %v252, %v250
    %v254 = vmul.f32 %v253, %v252
    %v255 = vmul.f32 0.5, %v254
    %v256 = vsub.f32 1.5, %v255
    %v257 = vmul.f32 %v252, %v256
    %vm258 = vweird.f32 %v250
    %vm259 = vweird.f32 %v252
    %vm260 = vmor %vm258, %vm259
    %v261 = vsel %vm260, %v252, %v257
    %v262 = vrsqrt.pop %v251
    %v263 = vmul.f32 %v262, %v251
    %v264 = vmul.f32 %v263, %v262
    %v265 = vmul.f32 0.5, %v264
    %v266 = vsub.f32 1.5, %v265
    %v267 = vmul.f32 %v262, %v266
    %vm268 = vweird.f32 %v251
    %vm269 = vweird.f32 %v262
    %vm270 = vmor %vm268, %vm269
    %v271 = vsel %vm270, %v262, %v267
    %v272 = vld [vmem:[%s3] sm:$0xff]
    %v273 = vld [vmem:[%s3 + $0x8] sm:$0xff]
    %v274 = vmul.f32 %v261, %v272
    %v275 = vmul.f32 %v271, %v273
    %277 = vset.pattern.permute.xlu0 0
    %278 = vperm.xlu0 %277, %v274
    %v279 = vpop.permute.xlu0 %278
    %282 = vset.pattern.permute.xlu0 0
    %283 = vperm.xlu0 %282, %v275
    %v284 = vpop.permute.xlu0 %283
    %v286 = vmul.f32 %v242, %v279
    %v287 = vmul.f32 %v243, %v279
    %v288 = vmul.f32 %v244, %v284
    %v289 = vmul.f32 %v245, %v284
    %v290 = vmul.f32 %v246, %v279
    %v291 = vmul.f32 %v247, %v279
    %v292 = vmul.f32 %v248, %v284
    %v293 = vmul.f32 %v249, %v284
    %v294 = vld [vmem:[%s4] sm:$0xff]
    %v295 = vld [vmem:[%s4 + $0x8] sm:$0xff]
    %297 = vset.pattern.permute.xlu0 0
    %298 = vperm.xlu0 %297, %v294
    %v299 = vpop.permute.xlu0 %298
    %302 = vset.pattern.permute.xlu0 0
    %303 = vperm.xlu0 %302, %v295
    %v304 = vpop.permute.xlu0 %303
    %v306 = vadd.f32 %v286, %v299
    %v307 = vadd.f32 %v287, %v299
    %v308 = vadd.f32 %v288, %v304
    %v309 = vadd.f32 %v289, %v304
    %v310 = vadd.f32 %v290, %v299
    %v311 = vadd.f32 %v291, %v299
    %v312 = vadd.f32 %v292, %v304
    %v313 = vadd.f32 %v293, %v304
    %v314 = vpack.c.bf16 %v307, %v306
    %v315 = vpack.c.bf16 %v309, %v308
    %v316 = vpack.c.bf16 %v311, %v310
    %v317 = vpack.c.bf16 %v313, %v312
    %v318 = vld [vmem:[%s5] sm:$0xf]
    %v319 = vld [vmem:[%s5 + $0x4] sm:$0xf]
    %v320 = vld [vmem:[%s5 + $0x8] sm:$0xf]
    %v321 = vld [vmem:[%s5 + $0xc] sm:$0xf]
    %v322 = vld [vmem:[%s5 + $0x10] sm:$0xf]
    %v323 = vld [vmem:[%s5 + $0x14] sm:$0xf]
    %v324 = vld [vmem:[%s5 + $0x18] sm:$0xf]
    %v325 = vld [vmem:[%s5 + $0x1c] sm:$0xf]
    %v326 = vld [vmem:[%s5 + $0x20] sm:$0xf]
    %v327 = vld [vmem:[%s5 + $0x24] sm:$0xf]
    %v328 = vld [vmem:[%s5 + $0x28] sm:$0xf]
    %v329 = vld [vmem:[%s5 + $0x2c] sm:$0xf]
    %v330 = vld [vmem:[%s5 + $0x30] sm:$0xf]
    %v331 = vld [vmem:[%s5 + $0x34] sm:$0xf]
    %v332 = vld [vmem:[%s5 + $0x38] sm:$0xf]
    %v333 = vld [vmem:[%s5 + $0x3c] sm:$0xf]
    %v334 = vld [vmem:[%s5 + $0x40] sm:$0xf]
    %v335 = vld [vmem:[%s5 + $0x44] sm:$0xf]
    %v336 = vld [vmem:[%s5 + $0x48] sm:$0xf]
    %v337 = vld [vmem:[%s5 + $0x4c] sm:$0xf]
    %v338 = vld [vmem:[%s5 + $0x50] sm:$0xf]
    %v339 = vld [vmem:[%s5 + $0x54] sm:$0xf]
    %v340 = vld [vmem:[%s5 + $0x58] sm:$0xf]
    %v341 = vld [vmem:[%s5 + $0x5c] sm:$0xf]
    %v342 = vld [vmem:[%s5 + $0x60] sm:$0xf]
    %v343 = vld [vmem:[%s5 + $0x64] sm:$0xf]
    %v344 = vld [vmem:[%s5 + $0x68] sm:$0xf]
    %v345 = vld [vmem:[%s5 + $0x6c] sm:$0xf]
    %v346 = vld [vmem:[%s5 + $0x70] sm:$0xf]
    %v347 = vld [vmem:[%s5 + $0x74] sm:$0xf]
    %v348 = vld [vmem:[%s5 + $0x78] sm:$0xf]
    %v349 = vld [vmem:[%s5 + $0x7c] sm:$0xf]
    %v350 = vld [vmem:[%s6] sm:$0x1]
    %v352 = vperm.slane %v350, 0
    %v358 = vunpack.c.l.b16 %v314
    %v359 = vunpack.c.h.b16 %v314
    %v360 = vunpack.c.l.b16 %v315
    %v361 = vunpack.c.h.b16 %v315
    %v362 = vunpack.c.l.b16 %v316
    %v363 = vunpack.c.h.b16 %v316
    %v364 = vunpack.c.l.b16 %v317
    %v365 = vunpack.c.h.b16 %v317
    %v366 = vpack.c.b16 %v360, %v358
    %v367 = vpack.c.b16 %v361, %v359
    %v368 = vpack.c.b16 %v364, %v362
    %v369 = vpack.c.b16 %v365, %v363
    %v406 = vunpack.c.l.b16 %v318
    %v407 = vunpack.c.l.b16 %v319
    %v408 = vunpack.c.l.b16 %v320
    %v409 = vunpack.c.l.b16 %v321
    %v410 = vunpack.c.l.b16 %v322
    %v411 = vunpack.c.l.b16 %v323
    %v412 = vunpack.c.l.b16 %v324
    %v413 = vunpack.c.l.b16 %v325
    %v414 = vunpack.c.l.b16 %v326
    %v415 = vunpack.c.l.b16 %v327
    %v416 = vunpack.c.l.b16 %v328
    %v417 = vunpack.c.l.b16 %v329
    %v418 = vunpack.c.l.b16 %v330
    %v419 = vunpack.c.l.b16 %v331
    %v420 = vunpack.c.l.b16 %v332
    %v421 = vunpack.c.l.b16 %v333
    %v422 = vunpack.c.l.b16 %v334
    %v423 = vunpack.c.l.b16 %v335
    %v424 = vunpack.c.l.b16 %v336
    %v425 = vunpack.c.l.b16 %v337
    %v426 = vunpack.c.l.b16 %v338
    %v427 = vunpack.c.l.b16 %v339
    %v428 = vunpack.c.l.b16 %v340
    %v429 = vunpack.c.l.b16 %v341
    %v430 = vunpack.c.l.b16 %v342
    %v431 = vunpack.c.l.b16 %v343
    %v432 = vunpack.c.l.b16 %v344
    %v433 = vunpack.c.l.b16 %v345
    %v434 = vunpack.c.l.b16 %v346
    %v435 = vunpack.c.l.b16 %v347
    %v436 = vunpack.c.l.b16 %v348
    %v437 = vunpack.c.l.b16 %v349
    %v438 = vpack.c.b16 %v407, %v406
    %v439 = vpack.c.b16 %v409, %v408
    %v440 = vpack.c.b16 %v411, %v410
    %v441 = vpack.c.b16 %v413, %v412
    %v442 = vpack.c.b16 %v415, %v414
    %v443 = vpack.c.b16 %v417, %v416
    %v444 = vpack.c.b16 %v419, %v418
    %v445 = vpack.c.b16 %v421, %v420
    %v446 = vpack.c.b16 %v423, %v422
    %v447 = vpack.c.b16 %v425, %v424
    %v448 = vpack.c.b16 %v427, %v426
    %v449 = vpack.c.b16 %v429, %v428
    %v450 = vpack.c.b16 %v431, %v430
    %v451 = vpack.c.b16 %v433, %v432
    %v452 = vpack.c.b16 %v435, %v434
    %v453 = vpack.c.b16 %v437, %v436
    %470 = vmatpush.bf16.msra.mxu0 %v445
    %471 = vmatpush.bf16.msra.mxu0 %v444
    %472 = vmatpush.bf16.msra.mxu0 %v443
    %473 = vmatpush.bf16.msra.mxu0 %v442
    %474 = vmatpush.bf16.msra.mxu0 %v441
    %475 = vmatpush.bf16.msra.mxu0 %v440
    %476 = vmatpush.bf16.msra.mxu0 %v439
    %477 = vmatpush.bf16.msra.mxu0 %v438
    %478 = vmatmul.bf16.gmra.mxu0 %v366
    %v479 = vpop.f32.mrf.mxu0
    %v480 = vadd.f32 %v352, %v479
    %v481 = vpop.f32.mrf.mxu0
    %v482 = vadd.f32 %v352, %v481
    %483 = vmatmul.bf16.gmra.mxu0 %v368
    %v484 = vpop.f32.mrf.mxu0
    %v485 = vadd.f32 %v352, %v484
    %v486 = vpop.f32.mrf.mxu0
    %v487 = vadd.f32 %v352, %v486
    %488 = vdwg.mxu0
    %489 = vmatpush.bf16.msra.mxu0 %v453
    %490 = vmatpush.bf16.msra.mxu0 %v452
    %491 = vmatpush.bf16.msra.mxu0 %v451
    %492 = vmatpush.bf16.msra.mxu0 %v450
    %493 = vmatpush.bf16.msra.mxu0 %v449
    %494 = vmatpush.bf16.msra.mxu0 %v448
    %495 = vmatpush.bf16.msra.mxu0 %v447
    %496 = vmatpush.bf16.msra.mxu0 %v446
    %497 = vmatmul.bf16.gmra.mxu0 %v367
    %v498 = vpop.f32.mrf.mxu0
    %v499 = vadd.f32 %v480, %v498
    %v500 = vpop.f32.mrf.mxu0
    %v501 = vadd.f32 %v482, %v500
    %502 = vmatmul.bf16.gmra.mxu0 %v369
    %v503 = vpop.f32.mrf.mxu0
    %v504 = vadd.f32 %v485, %v503
    %v505 = vpop.f32.mrf.mxu0
    %v506 = vadd.f32 %v487, %v505
    %507 = vdwg.mxu0
    %v508 = vmul.f32 %v499, 0.5
    %v509 = vmul.f32 %v501, 0.5
    %v510 = vmul.f32 %v504, 0.5
    %v511 = vmul.f32 %v506, 0.5
    %v512 = vmul.f32 %v499, 0.70710677
    %v513 = vmul.f32 %v501, 0.70710677
    %v514 = vmul.f32 %v504, 0.70710677
    %v515 = vmul.f32 %v506, 0.70710677
    %v516 = vmul.f32 %v512, %v512
    %v517 = vmin.f32 16.0, %v516
    %v518 = vmul.f32 %v517, 2.1237322e-06
    %v519 = vadd.f32 %v518, 0.00028619796
    %v520 = vmul.f32 %v517, %v519
    %v521 = vadd.f32 %v520, 0.0036580483
    %v522 = vmul.f32 %v517, %v521
    %v523 = vadd.f32 %v522, 0.05243302
    %v524 = vmul.f32 %v517, %v523
    %v525 = vadd.f32 %v524, 0.18741608
    %v526 = vmul.f32 %v517, %v525
    %v527 = vadd.f32 %v526, 1.1283791
    %v528 = vmul.f32 %v512, %v527
    %v529 = vmul.f32 %v517, 3.8918573e-05
    %v530 = vadd.f32 %v529, 0.001143296
    %v531 = vmul.f32 %v517, %v530
    %v532 = vadd.f32 %v531, 0.014752088
    %v533 = vmul.f32 %v517, %v532
    %v534 = vadd.f32 %v533, 0.112945676
    %v535 = vmul.f32 %v517, %v534
    %v536 = vadd.f32 %v535, 0.4994258
    %v537 = vmul.f32 %v517, %v536
    %v538 = vadd.f32 %v537, 1.0
    %v539 = vrcp.pop %v538
    %v540 = vmul.f32 %v538, %v539
    %v541 = vsub.f32 1.0, %v540
    %v542 = vmul.f32 %v539, %v541
    %v543 = vadd.f32 %v539, %v542
    %vm544 = vweird.f32 %v538
    %vm545 = vweird.f32 %v539
    %vm546 = vmor %vm544, %vm545
    %v547 = vsel %vm546, %v539, %v543
    %v548 = vand.u32 2147483647, %v538
    %vm549 = vcmp.eq.f32.partialorder %v548, 8.507059e+37
    %v550 = vand.u32 %v538, 2147483648
    %v551 = vor.u32 1.1754944e-38, %v550
    %v552 = vsel %vm549, %v551, %v547
    %v553 = vmul.f32 %v528, %v552
    %v554 = vmin.f32 %v553, 1.0
    %v555 = vmax.f32 %v554, -1.0
    %v556 = vmul.f32 %v513, %v513
    %v557 = vmin.f32 16.0, %v556
    %v558 = vmul.f32 %v557, 2.1237322e-06
    %v559 = vadd.f32 %v558, 0.00028619796
    %v560 = vmul.f32 %v557, %v559
    %v561 = vadd.f32 %v560, 0.0036580483
    %v562 = vmul.f32 %v557, %v561
    %v563 = vadd.f32 %v562, 0.05243302
    %v564 = vmul.f32 %v557, %v563
    %v565 = vadd.f32 %v564, 0.18741608
    %v566 = vmul.f32 %v557, %v565
    %v567 = vadd.f32 %v566, 1.1283791
    %v568 = vmul.f32 %v513, %v567
    %v569 = vmul.f32 %v557, 3.8918573e-05
    %v570 = vadd.f32 %v569, 0.001143296
    %v571 = vmul.f32 %v557, %v570
    %v572 = vadd.f32 %v571, 0.014752088
    %v573 = vmul.f32 %v557, %v572
    %v574 = vadd.f32 %v573, 0.112945676
    %v575 = vmul.f32 %v557, %v574
    %v576 = vadd.f32 %v575, 0.4994258
    %v577 = vmul.f32 %v557, %v576
    %v578 = vadd.f32 %v577, 1.0
    %v579 = vrcp.pop %v578
    %v580 = vmul.f32 %v578, %v579
    %v581 = vsub.f32 1.0, %v580
    %v582 = vmul.f32 %v579, %v581
    %v583 = vadd.f32 %v579, %v582
    %vm584 = vweird.f32 %v578
    %vm585 = vweird.f32 %v579
    %vm586 = vmor %vm584, %vm585
    %v587 = vsel %vm586, %v579, %v583
    %v588 = vand.u32 2147483647, %v578
    %vm589 = vcmp.eq.f32.partialorder %v588, 8.507059e+37
    %v590 = vand.u32 %v578, 2147483648
    %v591 = vor.u32 1.1754944e-38, %v590
    %v592 = vsel %vm589, %v591, %v587
    %v593 = vmul.f32 %v568, %v592
    %v594 = vmin.f32 %v593, 1.0
    %v595 = vmax.f32 %v594, -1.0
    %v596 = vmul.f32 %v514, %v514
    %v597 = vmin.f32 16.0, %v596
    %v598 = vmul.f32 %v597, 2.1237322e-06
    %v599 = vadd.f32 %v598, 0.00028619796
    %v600 = vmul.f32 %v597, %v599
    %v601 = vadd.f32 %v600, 0.0036580483
    %v602 = vmul.f32 %v597, %v601
    %v603 = vadd.f32 %v602, 0.05243302
    %v604 = vmul.f32 %v597, %v603
    %v605 = vadd.f32 %v604, 0.18741608
    %v606 = vmul.f32 %v597, %v605
    %v607 = vadd.f32 %v606, 1.1283791
    %v608 = vmul.f32 %v514, %v607
    %v609 = vmul.f32 %v597, 3.8918573e-05
    %v610 = vadd.f32 %v609, 0.001143296
    %v611 = vmul.f32 %v597, %v610
    %v612 = vadd.f32 %v611, 0.014752088
    %v613 = vmul.f32 %v597, %v612
    %v614 = vadd.f32 %v613, 0.112945676
    %v615 = vmul.f32 %v597, %v614
    %v616 = vadd.f32 %v615, 0.4994258
    %v617 = vmul.f32 %v597, %v616
    %v618 = vadd.f32 %v617, 1.0
    %v619 = vrcp.pop %v618
    %v620 = vmul.f32 %v618, %v619
    %v621 = vsub.f32 1.0, %v620
    %v622 = vmul.f32 %v619, %v621
    %v623 = vadd.f32 %v619, %v622
    %vm624 = vweird.f32 %v618
    %vm625 = vweird.f32 %v619
    %vm626 = vmor %vm624, %vm625
    %v627 = vsel %vm626, %v619, %v623
    %v628 = vand.u32 2147483647, %v618
    %vm629 = vcmp.eq.f32.partialorder %v628, 8.507059e+37
    %v630 = vand.u32 %v618, 2147483648
    %v631 = vor.u32 1.1754944e-38, %v630
    %v632 = vsel %vm629, %v631, %v627
    %v633 = vmul.f32 %v608, %v632
    %v634 = vmin.f32 %v633, 1.0
    %v635 = vmax.f32 %v634, -1.0
    %v636 = vmul.f32 %v515, %v515
    %v637 = vmin.f32 16.0, %v636
    %v638 = vmul.f32 %v637, 2.1237322e-06
    %v639 = vadd.f32 %v638, 0.00028619796
    %v640 = vmul.f32 %v637, %v639
    %v641 = vadd.f32 %v640, 0.0036580483
    %v642 = vmul.f32 %v637, %v641
    %v643 = vadd.f32 %v642, 0.05243302
    %v644 = vmul.f32 %v637, %v643
    %v645 = vadd.f32 %v644, 0.18741608
    %v646 = vmul.f32 %v637, %v645
    %v647 = vadd.f32 %v646, 1.1283791
    %v648 = vmul.f32 %v515, %v647
    %v649 = vmul.f32 %v637, 3.8918573e-05
    %v650 = vadd.f32 %v649, 0.001143296
    %v651 = vmul.f32 %v637, %v650
    %v652 = vadd.f32 %v651, 0.014752088
    %v653 = vmul.f32 %v637, %v652
    %v654 = vadd.f32 %v653, 0.112945676
    %v655 = vmul.f32 %v637, %v654
    %v656 = vadd.f32 %v655, 0.4994258
    %v657 = vmul.f32 %v637, %v656
    %v658 = vadd.f32 %v657, 1.0
    %v659 = vrcp.pop %v658
    %v660 = vmul.f32 %v658, %v659
    %v661 = vsub.f32 1.0, %v660
    %v662 = vmul.f32 %v659, %v661
    %v663 = vadd.f32 %v659, %v662
    %vm664 = vweird.f32 %v658
    %vm665 = vweird.f32 %v659
    %vm666 = vmor %vm664, %vm665
    %v667 = vsel %vm666, %v659, %v663
    %v668 = vand.u32 2147483647, %v658
    %vm669 = vcmp.eq.f32.partialorder %v668, 8.507059e+37
    %v670 = vand.u32 %v658, 2147483648
    %v671 = vor.u32 1.1754944e-38, %v670
    %v672 = vsel %vm669, %v671, %v667
    %v673 = vmul.f32 %v648, %v672
    %v674 = vmin.f32 %v673, 1.0
    %v675 = vmax.f32 %v674, -1.0
    %v676 = vadd.f32 %v555, 1.0
    %v677 = vadd.f32 %v595, 1.0
    %v678 = vadd.f32 %v635, 1.0
    %v679 = vadd.f32 %v675, 1.0
    %v680 = vmul.f32 %v508, %v676
    %v681 = vmul.f32 %v509, %v677
    %v682 = vmul.f32 %v510, %v678
    %v683 = vmul.f32 %v511, %v679
    %vm684 = vcmask 523264
    %v685 = vsel %vm684, %v680, 0.0
    %v686 = vsel %vm684, %v682, 0.0
    %v687 = vadd.f32 %v685, %v686
    %688 = vadd.xlane.f32.xlu0 %v687
    %v689 = vpop.xlane.xlu0 %688
    %v690 = vsel %vm684, %v681, 0.0
    %v691 = vsel %vm684, %v683, 0.0
    %v692 = vadd.f32 %v690, %v691
    %693 = vadd.xlane.f32.xlu0 %v692
    %v694 = vpop.xlane.xlu0 %693
    %v695 = vrcp.pop 128.0
    %v696 = vmul.f32 128.0, %v695
    %v697 = vsub.f32 1.0, %v696
    %v698 = vmul.f32 %v695, %v697
    %v699 = vadd.f32 %v695, %v698
    %vm700 = vweird.f32 %v695
    %v701 = vsel %vm700, %v695, %v699
    %v702 = vmul.f32 %v689, %v701
    %v703 = vmul.f32 %v694, %v701
    %v704 = vmul.f32 %v680, %v680
    %v705 = vmul.f32 %v681, %v681
    %v706 = vmul.f32 %v682, %v682
    %v707 = vmul.f32 %v683, %v683
    %v708 = vsel %vm684, %v704, 0.0
    %v709 = vsel %vm684, %v706, 0.0
    %v710 = vadd.f32 %v708, %v709
    %711 = vadd.xlane.f32.xlu0 %v710
    %v712 = vpop.xlane.xlu0 %711
    %v713 = vsel %vm684, %v705, 0.0
    %v714 = vsel %vm684, %v707, 0.0
    %v715 = vadd.f32 %v713, %v714
    %716 = vadd.xlane.f32.xlu0 %v715
    %v717 = vpop.xlane.xlu0 %716
    %v718 = vmul.f32 %v712, %v701
    %v719 = vmul.f32 %v717, %v701
    %v720 = vmul.f32 %v702, %v702
    %v721 = vmul.f32 %v703, %v703
    %v722 = vsub.f32 %v718, %v720
    %v723 = vsub.f32 %v719, %v721
    %v724 = vsub.f32 %v680, %v702
    %v725 = vsub.f32 %v681, %v703
    %v726 = vsub.f32 %v682, %v702
    %v727 = vsub.f32 %v683, %v703
    %v728 = vadd.f32 %v722, 64.0
    %v729 = vadd.f32 %v723, 64.0
    %v730 = vrsqrt.pop %v728
    %v731 = vmul.f32 %v730, %v728
    %v732 = vmul.f32 %v731, %v730
    %v733 = vmul.f32 0.5, %v732
    %v734 = vsub.f32 1.5, %v733
    %v735 = vmul.f32 %v730, %v734
    %vm736 = vweird.f32 %v728
    %vm737 = vweird.f32 %v730
    %vm738 = vmor %vm736, %vm737
    %v739 = vsel %vm738, %v730, %v735
    %v740 = vrsqrt.pop %v729
    %v741 = vmul.f32 %v740, %v729
    %v742 = vmul.f32 %v741, %v740
    %v743 = vmul.f32 0.5, %v742
    %v744 = vsub.f32 1.5, %v743
    %v745 = vmul.f32 %v740, %v744
    %vm746 = vweird.f32 %v729
    %vm747 = vweird.f32 %v740
    %vm748 = vmor %vm746, %vm747
    %v749 = vsel %vm748, %v740, %v745
    %v750 = vld [vmem:[%s7] sm:$0xff]
    %v751 = vld [vmem:[%s7 + $0x8] sm:$0xff]
    %v752 = vmul.f32 %v739, %v750
    %v753 = vmul.f32 %v749, %v751
    %755 = vset.pattern.permute.xlu0 0
    %756 = vperm.xlu0 %755, %v752
    %v757 = vpop.permute.xlu0 %756
    %760 = vset.pattern.permute.xlu0 0
    %761 = vperm.xlu0 %760, %v753
    %v762 = vpop.permute.xlu0 %761
    %v764 = vmul.f32 %v724, %v757
    %v765 = vmul.f32 %v725, %v762
    %v766 = vmul.f32 %v726, %v757
    %v767 = vmul.f32 %v727, %v762
    %v768 = vld [vmem:[%s8] sm:$0xff]
    %v769 = vld [vmem:[%s8 + $0x8] sm:$0xff]
    %771 = vset.pattern.permute.xlu0 0
    %772 = vperm.xlu0 %771, %v768
    %v773 = vpop.permute.xlu0 %772
    %776 = vset.pattern.permute.xlu0 0
    %777 = vperm.xlu0 %776, %v769
    %v778 = vpop.permute.xlu0 %777
    %v780 = vadd.f32 %v764, %v773
    %v781 = vadd.f32 %v765, %v778
    %v782 = vadd.f32 %v766, %v773
    %v783 = vadd.f32 %v767, %v778
    %v784 = vpack.c.bf16 %v780, %v780
    %v785 = vpack.c.bf16 %v781, %v781
    %v786 = vpack.c.bf16 %v782, %v782
    %v787 = vpack.c.bf16 %v783, %v783
    %v788 = vld [vmem:[%s9] sm:$0xff]
    %v789 = vld [vmem:[%s9 + $0x8] sm:$0xff]
    %v790 = vld [vmem:[%s9 + $0x10] sm:$0xff]
    %v791 = vld [vmem:[%s9 + $0x18] sm:$0xff]
    %v792 = vld [vmem:[%s9 + $0x20] sm:$0xff]
    %v793 = vld [vmem:[%s9 + $0x28] sm:$0xff]
    %v794 = vld [vmem:[%s9 + $0x30] sm:$0xff]
    %v795 = vld [vmem:[%s9 + $0x38] sm:$0xff]
    %v796 = vld [vmem:[%s10] sm:$0x3]
    %v798 = vperm.slane %v796, 0
    %v799 = vperm.slane %v796, 1
    %v806 = vunpack.c.l.b16 %v784
    %v807 = vunpack.c.l.b16 %v785
    %v808 = vunpack.c.l.b16 %v786
    %v809 = vunpack.c.l.b16 %v787
    %v810 = vpack.c.b16 %v807, %v806
    %v811 = vpack.c.b16 %v809, %v808
    %v820 = vunpack.c.l.b16 %v788
    %v821 = vunpack.c.h.b16 %v788
    %v822 = vunpack.c.l.b16 %v789
    %v823 = vunpack.c.h.b16 %v789
    %v824 = vunpack.c.l.b16 %v790
    %v825 = vunpack.c.h.b16 %v790
    %v826 = vunpack.c.l.b16 %v791
    %v827 = vunpack.c.h.b16 %v791
    %v828 = vunpack.c.l.b16 %v792
    %v829 = vunpack.c.h.b16 %v792
    %v830 = vunpack.c.l.b16 %v793
    %v831 = vunpack.c.h.b16 %v793
    %v832 = vunpack.c.l.b16 %v794
    %v833 = vunpack.c.h.b16 %v794
    %v834 = vunpack.c.l.b16 %v795
    %v835 = vunpack.c.h.b16 %v795
    %v836 = vpack.c.b16 %v822, %v820
    %v837 = vpack.c.b16 %v823, %v821
    %v838 = vpack.c.b16 %v826, %v824
    %v839 = vpack.c.b16 %v827, %v825
    %v840 = vpack.c.b16 %v830, %v828
    %v841 = vpack.c.b16 %v831, %v829
    %v842 = vpack.c.b16 %v834, %v832
    %v843 = vpack.c.b16 %v835, %v833
    %v853 = vsel %vm684, %v810, 0
    %v856 = vsel %vm684, %v811, 0
    %858 = vmatpush.bf16.msra.mxu0 0
    %859 = vmatpush.bf16.msra.mxu0 0
    %860 = vmatpush.bf16.msra.mxu0 0
    %861 = vmatpush.bf16.msra.mxu0 0
    %862 = vmatpush.bf16.msra.mxu0 %v842
    %863 = vmatpush.bf16.msra.mxu0 %v840
    %864 = vmatpush.bf16.msra.mxu0 %v838
    %865 = vmatpush.bf16.msra.mxu0 %v836
    %866 = vmatmul.bf16.gmra.mxu0 %v853
    %v867 = vpop.f32.mrf.mxu0
    %v868 = vadd.f32 %v798, %v867
    %v869 = vpop.f32.mrf.mxu0
    %v870 = vadd.f32 %v798, %v869
    %871 = vmatmul.bf16.gmra.mxu0 %v856
    %v872 = vpop.f32.mrf.mxu0
    %v873 = vadd.f32 %v798, %v872
    %v874 = vpop.f32.mrf.mxu0
    %v875 = vadd.f32 %v798, %v874
    %876 = vdwg.mxu0
    %877 = vmatpush.bf16.msra.mxu0 0
    %878 = vmatpush.bf16.msra.mxu0 0
    %879 = vmatpush.bf16.msra.mxu0 0
    %880 = vmatpush.bf16.msra.mxu0 0
    %881 = vmatpush.bf16.msra.mxu0 %v843
    %882 = vmatpush.bf16.msra.mxu0 %v841
    %883 = vmatpush.bf16.msra.mxu0 %v839
    %884 = vmatpush.bf16.msra.mxu0 %v837
    %885 = vmatmul.bf16.gmra.mxu0 %v853
    %v886 = vpop.f32.mrf.mxu0
    %v887 = vadd.f32 %v799, %v886
    %v888 = vpop.f32.mrf.mxu0
    %v889 = vadd.f32 %v799, %v888
    %890 = vmatmul.bf16.gmra.mxu0 %v856
    %v891 = vpop.f32.mrf.mxu0
    %v892 = vadd.f32 %v799, %v891
    %v893 = vpop.f32.mrf.mxu0
    %v894 = vadd.f32 %v799, %v893
    %895 = vdwg.mxu0
    %v896 = vadd.f32 %v56, %v868
    %v897 = vadd.f32 %v57, %v887
    %v898 = vadd.f32 %v58, %v870
    %v899 = vadd.f32 %v59, %v889
    %v900 = vadd.f32 %v60, %v873
    %v901 = vadd.f32 %v61, %v892
    %v902 = vadd.f32 %v62, %v875
    %v903 = vadd.f32 %v63, %v894
    %904 = vst [vmem:[#allocation5] sm:$0xff] %v896
    %905 = vst [vmem:[#allocation5 + $0x8] sm:$0xff] %v897
    %906 = vst [vmem:[#allocation5 + $0x10] sm:$0xff] %v898
    %907 = vst [vmem:[#allocation5 + $0x18] sm:$0xff] %v899
    %908 = vst [vmem:[#allocation5 + $0x20] sm:$0xff] %v900
    %909 = vst [vmem:[#allocation5 + $0x28] sm:$0xff] %v901
    %910 = vst [vmem:[#allocation5 + $0x30] sm:$0xff] %v902
    %911 = vst [vmem:[#allocation5 + $0x38] sm:$0xff] %v903
    // Predicated region
    $region50: #{mixer_block.5} parent=1 // pred_check
      _
    $region51: #{mixer_block.5} parent=1 // pred_check_branch
      %913 = sbr.rel (0) target = $region53
    $region52: #{mixer_block.5} parent=1 // pred_region
      %915 = vsyncadd [#allocation4], 0
      %s916 = sshll.u32 [#allocation5], 4
      %s917 = int_to_ptr.vmem [resolvable:$true] %s916
      %s918 = sshll.u32 %s11, 4
      %s919 = int_to_ptr.hbm [resolvable:$true] %s918
      %924 = dma.vmem_to_hbm [thread:$0]  %s917, 1024, %s919, [#allocation4], 256, 256, 16
    $region53: #{mixer_block.5} parent=1 // pred_fallthru
      _
    // Predicated region
    $region54: #{mixer_block.5} parent=1 // pred_check
      _
    $region55: #{mixer_block.5} parent=1 // pred_check_branch
      %926 = sbr.rel (0) target = $region57
    $region56: #{mixer_block.5} parent=1 // pred_region
      %928 = dma.done [#allocation4], 1024
    $region57: #{mixer_block.5} parent=1 // pred_fallthru
      _
    %929 = vsyncpa [#allocation3], 1
    %930 = vsyncpa [#allocation4], 1

// kernel: mixer_block.4
$region0: #{mixer_block.4}
  #allocation0 [shape = 'u32[]', space=smem, size = 0x4, offset = 0x4, fixed_abs, tag = 'smem constant byte address 0x4 - core index']
  #allocation1 [shape = 'u32[72,128]{1,0:T(1,128)}', space=vmem, size = 0x9000, scoped, tag = 'internal scratch']
  %s0 = inlined_call_operand.vmem [shape: f32[2,16,256], index: 0, kind: input, shape index: {}]
  %s1 = inlined_call_operand.vmem [shape: f32[2,2,16], index: 1, kind: input, shape index: {}]
  %s2 = inlined_call_operand.vmem [shape: f32[1,1,256], index: 2, kind: input, shape index: {}]
  %s3 = inlined_call_operand.vmem [shape: f32[1,1,256], index: 3, kind: input, shape index: {}]
  %s4 = inlined_call_operand.vmem [shape: f32[1,1,256], index: 4, kind: input, shape index: {}]
  %s5 = inlined_call_operand.vmem [shape: bf16[16,32], index: 5, kind: input, shape index: {}]
  %s6 = inlined_call_operand.vmem [shape: f32[1,32], index: 6, kind: input, shape index: {}]
  %s7 = inlined_call_operand.vmem [shape: f32[1,256,1], index: 7, kind: input, shape index: {}]
  %s8 = inlined_call_operand.vmem [shape: f32[1,256,1], index: 8, kind: input, shape index: {}]
  %s9 = inlined_call_operand.vmem [shape: bf16[32,16], index: 9, kind: input, shape index: {}]
  %s10 = inlined_call_operand.vmem [shape: f32[1,16], index: 10, kind: input, shape index: {}]
  %s11 = inlined_call_operand.hbm [shape: f32[2,16,256], index: 11, kind: output, shape index: {}]
  %s12 = sld [smem:[#allocation0]]
  $region54: #{mixer_block.4} parent=0
    _
  %s14 = ssub.s32 1, %s12
  %s15 = scalar_select 0, %s14, %s12
  $region1: #{mixer_block.4} parent=0
    #allocation2 [shape = 'u8[32768]{0}', space=vmem, size = 0x8000, scoped, tag = 'output window, operand 0, single buffered']
    #allocation3 [shape = 's32[1]{0}', space=sflag, size = 0x4, scoped, tag = 'scoped memory for mixer_block.4']
    %16 = vsyncpa [#allocation3], 0
    // Predicated region
    $region2: #{mixer_block.4} parent=1 // pred_check
      _
    $region3: #{mixer_block.4} parent=1 // pred_check_branch
      %18 = sbr.rel (0) target = $region5
    $region4: #{mixer_block.4} parent=1 // pred_region
      _
    $region5: #{mixer_block.4} parent=1 // pred_fallthru
      _
    // Predicated region
    $region6: #{mixer_block.4} parent=1 // pred_check
      _
    $region7: #{mixer_block.4} parent=1 // pred_check_branch
      %20 = sbr.rel (0) target = $region9
    $region8: #{mixer_block.4} parent=1 // pred_region
      _
    $region9: #{mixer_block.4} parent=1 // pred_fallthru
      _
    // Predicated region
    $region10: #{mixer_block.4} parent=1 // pred_check
      _
    $region11: #{mixer_block.4} parent=1 // pred_check_branch
      %22 = sbr.rel (0) target = $region13
    $region12: #{mixer_block.4} parent=1 // pred_region
      _
    $region13: #{mixer_block.4} parent=1 // pred_fallthru
      _
    // Predicated region
    $region14: #{mixer_block.4} parent=1 // pred_check
      _
    $region15: #{mixer_block.4} parent=1 // pred_check_branch
      %24 = sbr.rel (0) target = $region17
    $region16: #{mixer_block.4} parent=1 // pred_region
      _
    $region17: #{mixer_block.4} parent=1 // pred_fallthru
      _
    // Predicated region
    $region18: #{mixer_block.4} parent=1 // pred_check
      _
    $region19: #{mixer_block.4} parent=1 // pred_check_branch
      %26 = sbr.rel (0) target = $region21
    $region20: #{mixer_block.4} parent=1 // pred_region
      _
    $region21: #{mixer_block.4} parent=1 // pred_fallthru
      _
    // Predicated region
    $region22: #{mixer_block.4} parent=1 // pred_check
      _
    $region23: #{mixer_block.4} parent=1 // pred_check_branch
      %28 = sbr.rel (0) target = $region25
    $region24: #{mixer_block.4} parent=1 // pred_region
      _
    $region25: #{mixer_block.4} parent=1 // pred_fallthru
      _
    // Predicated region
    $region26: #{mixer_block.4} parent=1 // pred_check
      _
    $region27: #{mixer_block.4} parent=1 // pred_check_branch
      %30 = sbr.rel (0) target = $region29
    $region28: #{mixer_block.4} parent=1 // pred_region
      _
    $region29: #{mixer_block.4} parent=1 // pred_fallthru
      _
    // Predicated region
    $region30: #{mixer_block.4} parent=1 // pred_check
      _
    $region31: #{mixer_block.4} parent=1 // pred_check_branch
      %32 = sbr.rel (0) target = $region33
    $region32: #{mixer_block.4} parent=1 // pred_region
      _
    $region33: #{mixer_block.4} parent=1 // pred_fallthru
      _
    // Predicated region
    $region34: #{mixer_block.4} parent=1 // pred_check
      _
    $region35: #{mixer_block.4} parent=1 // pred_check_branch
      %34 = sbr.rel (0) target = $region37
    $region36: #{mixer_block.4} parent=1 // pred_region
      _
    $region37: #{mixer_block.4} parent=1 // pred_fallthru
      _
    // Predicated region
    $region38: #{mixer_block.4} parent=1 // pred_check
      _
    $region39: #{mixer_block.4} parent=1 // pred_check_branch
      %36 = sbr.rel (0) target = $region41
    $region40: #{mixer_block.4} parent=1 // pred_region
      _
    $region41: #{mixer_block.4} parent=1 // pred_fallthru
      _
    // Predicated region
    $region42: #{mixer_block.4} parent=1 // pred_check
      _
    $region43: #{mixer_block.4} parent=1 // pred_check_branch
      %38 = sbr.rel (0) target = $region45
    $region44: #{mixer_block.4} parent=1 // pred_region
      _
    $region45: #{mixer_block.4} parent=1 // pred_fallthru
      _
    %v40 = vld [vmem:[%s0] sm:$0xff]
    %v41 = vld [vmem:[%s0 + $0x8] sm:$0xff]
    %v42 = vld [vmem:[%s0 + $0x10] sm:$0xff]
    %v43 = vld [vmem:[%s0 + $0x18] sm:$0xff]
    %v44 = vld [vmem:[%s0 + $0x20] sm:$0xff]
    %v45 = vld [vmem:[%s0 + $0x28] sm:$0xff]
    %v46 = vld [vmem:[%s0 + $0x30] sm:$0xff]
    %v47 = vld [vmem:[%s0 + $0x38] sm:$0xff]
    %v48 = vld [vmem:[%s1] sm:$0x3]
    %v49 = vld [vmem:[%s1 + $0x2] sm:$0x3]
    %50 = vxpose.xlu0.b32.start [1/16] %v48, 128
    %51 = vxpose.xlu0.b32.cont [2/16] 0.0, 128
    %52 = vxpose.xlu0.b32.cont [3/16] 0.0, 128
    %53 = vxpose.xlu0.b32.cont [4/16] 0.0, 128
    %54 = vxpose.xlu0.b32.cont [5/16] 0.0, 128
    %55 = vxpose.xlu0.b32.cont [6/16] 0.0, 128
    %56 = vxpose.xlu0.b32.cont [7/16] 0.0, 128
    %57 = vxpose.xlu0.b32.cont [8/16] 0.0, 128
    %58 = vxpose.xlu0.b32.cont [9/16] 0.0, 128
    %59 = vxpose.xlu0.b32.cont [10/16] 0.0, 128
    %60 = vxpose.xlu0.b32.cont [11/16] 0.0, 128
    %61 = vxpose.xlu0.b32.cont [12/16] 0.0, 128
    %62 = vxpose.xlu0.b32.cont [13/16] 0.0, 128
    %63 = vxpose.xlu0.b32.cont [14/16] 0.0, 128
    %64 = vxpose.xlu0.b32.cont [15/16] 0.0, 128
    %65 = vxpose.xlu0.b32.end [16/16] 0.0, 128
    %v66 = vpop.trf.xlu0
    %v67 = vpop.trf.xlu0
    %v68 = vpop.trf.xlu0
    %v69 = vpop.trf.xlu0
    %v70 = vpop.trf.xlu0
    %v71 = vpop.trf.xlu0
    %v72 = vpop.trf.xlu0
    %v73 = vpop.trf.xlu0
    %v74 = vpop.trf.xlu0
    %v75 = vpop.trf.xlu0
    %v76 = vpop.trf.xlu0
    %v77 = vpop.trf.xlu0
    %v78 = vpop.trf.xlu0
    %v79 = vpop.trf.xlu0
    %v80 = vpop.trf.xlu0
    %v81 = vpop.trf.xlu0
    %82 = vxpose.xlu0.b32.start [1/16] %v49, 128
    %83 = vxpose.xlu0.b32.cont [2/16] 0.0, 128
    %84 = vxpose.xlu0.b32.cont [3/16] 0.0, 128
    %85 = vxpose.xlu0.b32.cont [4/16] 0.0, 128
    %86 = vxpose.xlu0.b32.cont [5/16] 0.0, 128
    %87 = vxpose.xlu0.b32.cont [6/16] 0.0, 128
    %88 = vxpose.xlu0.b32.cont [7/16] 0.0, 128
    %89 = vxpose.xlu0.b32.cont [8/16] 0.0, 128
    %90 = vxpose.xlu0.b32.cont [9/16] 0.0, 128
    %91 = vxpose.xlu0.b32.cont [10/16] 0.0, 128
    %92 = vxpose.xlu0.b32.cont [11/16] 0.0, 128
    %93 = vxpose.xlu0.b32.cont [12/16] 0.0, 128
    %94 = vxpose.xlu0.b32.cont [13/16] 0.0, 128
    %95 = vxpose.xlu0.b32.cont [14/16] 0.0, 128
    %96 = vxpose.xlu0.b32.cont [15/16] 0.0, 128
    %97 = vxpose.xlu0.b32.end [16/16] 0.0, 128
    %v98 = vpop.trf.xlu0
    %v99 = vpop.trf.xlu0
    %v100 = vpop.trf.xlu0
    %v101 = vpop.trf.xlu0
    %v102 = vpop.trf.xlu0
    %v103 = vpop.trf.xlu0
    %v104 = vpop.trf.xlu0
    %v105 = vpop.trf.xlu0
    %v106 = vpop.trf.xlu0
    %v107 = vpop.trf.xlu0
    %v108 = vpop.trf.xlu0
    %v109 = vpop.trf.xlu0
    %v110 = vpop.trf.xlu0
    %v111 = vpop.trf.xlu0
    %v112 = vpop.trf.xlu0
    %v113 = vpop.trf.xlu0
    %v116 = vrot.slane %v48, 1
    %v117 = vrot.slane %v49, 1
    %120 = vxpose.xlu0.b32.start [1/16] %v116, 128
    %121 = vxpose.xlu0.b32.cont [2/16] 0.0, 128
    %122 = vxpose.xlu0.b32.cont [3/16] 0.0, 128
    %123 = vxpose.xlu0.b32.cont [4/16] 0.0, 128
    %124 = vxpose.xlu0.b32.cont [5/16] 0.0, 128
    %125 = vxpose.xlu0.b32.cont [6/16] 0.0, 128
    %126 = vxpose.xlu0.b32.cont [7/16] 0.0, 128
    %127 = vxpose.xlu0.b32.cont [8/16] 0.0, 128
    %128 = vxpose.xlu0.b32.cont [9/16] 0.0, 128
    %129 = vxpose.xlu0.b32.cont [10/16] 0.0, 128
    %130 = vxpose.xlu0.b32.cont [11/16] 0.0, 128
    %131 = vxpose.xlu0.b32.cont [12/16] 0.0, 128
    %132 = vxpose.xlu0.b32.cont [13/16] 0.0, 128
    %133 = vxpose.xlu0.b32.cont [14/16] 0.0, 128
    %134 = vxpose.xlu0.b32.cont [15/16] 0.0, 128
    %135 = vxpose.xlu0.b32.end [16/16] 0.0, 128
    %v136 = vpop.trf.xlu0
    %v137 = vpop.trf.xlu0
    %v138 = vpop.trf.xlu0
    %v139 = vpop.trf.xlu0
    %v140 = vpop.trf.xlu0
    %v141 = vpop.trf.xlu0
    %v142 = vpop.trf.xlu0
    %v143 = vpop.trf.xlu0
    %v144 = vpop.trf.xlu0
    %v145 = vpop.trf.xlu0
    %v146 = vpop.trf.xlu0
    %v147 = vpop.trf.xlu0
    %v148 = vpop.trf.xlu0
    %v149 = vpop.trf.xlu0
    %v150 = vpop.trf.xlu0
    %v151 = vpop.trf.xlu0
    %152 = vxpose.xlu0.b32.start [1/16] %v117, 128
    %153 = vxpose.xlu0.b32.cont [2/16] 0.0, 128
    %154 = vxpose.xlu0.b32.cont [3/16] 0.0, 128
    %155 = vxpose.xlu0.b32.cont [4/16] 0.0, 128
    %156 = vxpose.xlu0.b32.cont [5/16] 0.0, 128
    %157 = vxpose.xlu0.b32.cont [6/16] 0.0, 128
    %158 = vxpose.xlu0.b32.cont [7/16] 0.0, 128
    %159 = vxpose.xlu0.b32.cont [8/16] 0.0, 128
    %160 = vxpose.xlu0.b32.cont [9/16] 0.0, 128
    %161 = vxpose.xlu0.b32.cont [10/16] 0.0, 128
    %162 = vxpose.xlu0.b32.cont [11/16] 0.0, 128
    %163 = vxpose.xlu0.b32.cont [12/16] 0.0, 128
    %164 = vxpose.xlu0.b32.cont [13/16] 0.0, 128
    %165 = vxpose.xlu0.b32.cont [14/16] 0.0, 128
    %166 = vxpose.xlu0.b32.cont [15/16] 0.0, 128
    %167 = vxpose.xlu0.b32.end [16/16] 0.0, 128
    %v168 = vpop.trf.xlu0
    %v169 = vpop.trf.xlu0
    %v170 = vpop.trf.xlu0
    %v171 = vpop.trf.xlu0
    %v172 = vpop.trf.xlu0
    %v173 = vpop.trf.xlu0
    %v174 = vpop.trf.xlu0
    %v175 = vpop.trf.xlu0
    %v176 = vpop.trf.xlu0
    %v177 = vpop.trf.xlu0
    %v178 = vpop.trf.xlu0
    %v179 = vpop.trf.xlu0
    %v180 = vpop.trf.xlu0
    %v181 = vpop.trf.xlu0
    %v182 = vpop.trf.xlu0
    %v183 = vpop.trf.xlu0
    %185 = vset.pattern.permute.xlu0 0
    %186 = vperm.xlu0 %185, %v66
    %v187 = vpop.permute.xlu0 %186
    %190 = vset.pattern.permute.xlu0 0
    %191 = vperm.xlu0 %190, %v67
    %v192 = vpop.permute.xlu0 %191
    %195 = vset.pattern.permute.xlu0 0
    %196 = vperm.xlu0 %195, %v98
    %v197 = vpop.permute.xlu0 %196
    %200 = vset.pattern.permute.xlu0 0
    %201 = vperm.xlu0 %200, %v99
    %v202 = vpop.permute.xlu0 %201
    %v204 = vsub.f32 %v40, %v187
    %v205 = vsub.f32 %v41, %v187
    %v206 = vsub.f32 %v42, %v192
    %v207 = vsub.f32 %v43, %v192
    %v208 = vsub.f32 %v44, %v197
    %v209 = vsub.f32 %v45, %v197
    %v210 = vsub.f32 %v46, %v202
    %v211 = vsub.f32 %v47, %v202
    %213 = vset.pattern.permute.xlu0 0
    %214 = vperm.xlu0 %213, %v136
    %v215 = vpop.permute.xlu0 %214
    %218 = vset.pattern.permute.xlu0 0
    %219 = vperm.xlu0 %218, %v137
    %v220 = vpop.permute.xlu0 %219
    %223 = vset.pattern.permute.xlu0 0
    %224 = vperm.xlu0 %223, %v168
    %v225 = vpop.permute.xlu0 %224
    %228 = vset.pattern.permute.xlu0 0
    %229 = vperm.xlu0 %228, %v169
    %v230 = vpop.permute.xlu0 %229
    %v232 = vmul.f32 %v204, %v215
    %v233 = vmul.f32 %v205, %v215
    %v234 = vmul.f32 %v206, %v220
    %v235 = vmul.f32 %v207, %v220
    %v236 = vmul.f32 %v208, %v225
    %v237 = vmul.f32 %v209, %v225
    %v238 = vmul.f32 %v210, %v230
    %v239 = vmul.f32 %v211, %v230
    %v240 = vadd.f32 %v232, %v234
    %v241 = vadd.f32 %v240, %v236
    %v242 = vadd.f32 %v241, %v238
    %v243 = vrot.slane %v242, 4
    %v244 = vadd.f32 %v242, %v243
    %v245 = vrot.slane %v244, 2
    %v246 = vadd.f32 %v244, %v245
    %v247 = vrot.slane %v246, 1
    %v248 = vadd.f32 %v246, %v247
    %v249 = vadd.f32 %v233, %v235
    %v250 = vadd.f32 %v249, %v237
    %v251 = vadd.f32 %v250, %v239
    %v252 = vrot.slane %v251, 4
    %v253 = vadd.f32 %v251, %v252
    %v254 = vrot.slane %v253, 2
    %v255 = vadd.f32 %v253, %v254
    %v256 = vrot.slane %v255, 1
    %v257 = vadd.f32 %v255, %v256
    %v258 = vrcp.pop 32.0
    %v259 = vmul.f32 32.0, %v258
    %v260 = vsub.f32 1.0, %v259
    %v261 = vmul.f32 %v258, %v260
    %v262 = vadd.f32 %v258, %v261
    %vm263 = vweird.f32 %v258
    %v264 = vsel %vm263, %v258, %v262
    %v265 = vmul.f32 %v248, %v264
    %v266 = vmul.f32 %v257, %v264
    %v267 = vmul.f32 %v232, %v232
    %v268 = vmul.f32 %v233, %v233
    %v269 = vmul.f32 %v234, %v234
    %v270 = vmul.f32 %v235, %v235
    %v271 = vmul.f32 %v236, %v236
    %v272 = vmul.f32 %v237, %v237
    %v273 = vmul.f32 %v238, %v238
    %v274 = vmul.f32 %v239, %v239
    %v275 = vadd.f32 %v267, %v269
    %v276 = vadd.f32 %v275, %v271
    %v277 = vadd.f32 %v276, %v273
    %v278 = vrot.slane %v277, 4
    %v279 = vadd.f32 %v277, %v278
    %v280 = vrot.slane %v279, 2
    %v281 = vadd.f32 %v279, %v280
    %v282 = vrot.slane %v281, 1
    %v283 = vadd.f32 %v281, %v282
    %v284 = vadd.f32 %v268, %v270
    %v285 = vadd.f32 %v284, %v272
    %v286 = vadd.f32 %v285, %v274
    %v287 = vrot.slane %v286, 4
    %v288 = vadd.f32 %v286, %v287
    %v289 = vrot.slane %v288, 2
    %v290 = vadd.f32 %v288, %v289
    %v291 = vrot.slane %v290, 1
    %v292 = vadd.f32 %v290, %v291
    %v293 = vmul.f32 %v283, %v264
    %v294 = vmul.f32 %v292, %v264
    %v295 = vmul.f32 %v265, %v265
    %v296 = vmul.f32 %v266, %v266
    %v297 = vsub.f32 %v293, %v295
    %v298 = vsub.f32 %v294, %v296
    %v299 = vld [vmem:[%s2] sm:$0x3]
    %v300 = vld [vmem:[%s3] sm:$0x3]
    %v301 = vmul.f32 %v299, %v300
    %v302 = vmul.f32 %v299, %v299
    %v305 = vrot.slane %v298, 7
    %vm306 = vcmask 1040384
    %v307 = vsel %vm306, %v297, %v305
    %v309 = vmul.f32 %v302, %v307
    %v310 = vadd.f32 %v309, 16.0
    %v311 = vrsqrt.pop %v310
    %v312 = vmul.f32 %v311, %v310
    %v313 = vmul.f32 %v312, %v311
    %v314 = vmul.f32 0.5, %v313
    %v315 = vsub.f32 1.5, %v314
    %v316 = vmul.f32 %v311, %v315
    %vm317 = vweird.f32 %v310
    %vm318 = vweird.f32 %v311
    %vm319 = vmor %vm317, %vm318
    %v320 = vsel %vm319, %v311, %v316
    %v321 = vmul.f32 %v301, %v320
    %v322 = vld [vmem:[%s4] sm:$0x3]
    %v324 = vperm.slane %v321, 0
    %v325 = vperm.slane %v321, 1
    %v328 = vmul.f32 %v265, %v324
    %v329 = vmul.f32 %v266, %v325
    %v332 = vrot.slane %v329, 7
    %v333 = vsel %vm306, %v328, %v332
    %v335 = vsub.f32 %v322, %v333
    %v336 = vmul.f32 %v232, %v324
    %v337 = vmul.f32 %v233, %v325
    %v338 = vmul.f32 %v234, %v324
    %v339 = vmul.f32 %v235, %v325
    %v340 = vmul.f32 %v236, %v324
    %v341 = vmul.f32 %v237, %v325
    %v342 = vmul.f32 %v238, %v324
    %v343 = vmul.f32 %v239, %v325
    %v345 = vperm.slane %v335, 0
    %v346 = vperm.slane %v335, 1
    %v349 = vadd.f32 %v336, %v345
    %v350 = vadd.f32 %v337, %v346
    %v351 = vadd.f32 %v338, %v345
    %v352 = vadd.f32 %v339, %v346
    %v353 = vadd.f32 %v340, %v345
    %v354 = vadd.f32 %v341, %v346
    %v355 = vadd.f32 %v342, %v345
    %v356 = vadd.f32 %v343, %v346
    %v357 = vpack.c.bf16 %v351, %v349
    %v358 = vpack.c.bf16 %v352, %v350
    %v359 = vpack.c.bf16 %v355, %v353
    %v360 = vpack.c.bf16 %v356, %v354
    %361 = vxpose.binary.xlu0.c.b16.start [1/16] %v358, %v357, 128
    %362 = vxpose.binary.xlu0.c.b16.cont [2/16] 0, 0, 128
    %363 = vxpose.binary.xlu0.c.b16.cont [3/16] 0, 0, 128
    %364 = vxpose.binary.xlu0.c.b16.cont [4/16] 0, 0, 128
    %365 = vxpose.binary.xlu0.c.b16.cont [5/16] 0, 0, 128
    %366 = vxpose.binary.xlu0.c.b16.cont [6/16] 0, 0, 128
    %367 = vxpose.binary.xlu0.c.b16.cont [7/16] 0, 0, 128
    %368 = vxpose.binary.xlu0.c.b16.end [8/16] 0, 0, 128
    %v369 = vpop.trf.xlu0
    %v370 = vpop.trf.xlu0
    %v371 = vpop.trf.xlu0
    %v372 = vpop.trf.xlu0
    %v373 = vpop.trf.xlu0
    %v374 = vpop.trf.xlu0
    %v375 = vpop.trf.xlu0
    %v376 = vpop.trf.xlu0
    %v377 = vpop.trf.xlu0
    %v378 = vpop.trf.xlu0
    %v379 = vpop.trf.xlu0
    %v380 = vpop.trf.xlu0
    %v381 = vpop.trf.xlu0
    %v382 = vpop.trf.xlu0
    %v383 = vpop.trf.xlu0
    %v384 = vpop.trf.xlu0
    %385 = vxpose.binary.xlu0.c.b16.start [1/16] %v360, %v359, 128
    %386 = vxpose.binary.xlu0.c.b16.cont [2/16] 0, 0, 128
    %387 = vxpose.binary.xlu0.c.b16.cont [3/16] 0, 0, 128
    %388 = vxpose.binary.xlu0.c.b16.cont [4/16] 0, 0, 128
    %389 = vxpose.binary.xlu0.c.b16.cont [5/16] 0, 0, 128
    %390 = vxpose.binary.xlu0.c.b16.cont [6/16] 0, 0, 128
    %391 = vxpose.binary.xlu0.c.b16.cont [7/16] 0, 0, 128
    %392 = vxpose.binary.xlu0.c.b16.end [8/16] 0, 0, 128
    %v393 = vpop.trf.xlu0
    %v394 = vpop.trf.xlu0
    %v395 = vpop.trf.xlu0
    %v396 = vpop.trf.xlu0
    %v397 = vpop.trf.xlu0
    %v398 = vpop.trf.xlu0
    %v399 = vpop.trf.xlu0
    %v400 = vpop.trf.xlu0
    %v401 = vpop.trf.xlu0
    %v402 = vpop.trf.xlu0
    %v403 = vpop.trf.xlu0
    %v404 = vpop.trf.xlu0
    %v405 = vpop.trf.xlu0
    %v406 = vpop.trf.xlu0
    %v407 = vpop.trf.xlu0
    %v408 = vpop.trf.xlu0
    %v409 = vld [vmem:[%s5] sm:$0xf]
    %v410 = vld [vmem:[%s5 + $0x4] sm:$0xf]
    %v411 = vld [vmem:[%s6] sm:$0x1]
    %v413 = vperm.slane %v411, 0
    %v417 = vunpack.c.l.b16 %v409
    %v418 = vunpack.c.l.b16 %v410
    %v419 = vpack.c.b16 %v418, %v417
    %vm421 = vcmask 130048
    %v423 = vsel %vm421, %v369, 0
    %v426 = vsel %vm421, %v371, 0
    %v429 = vsel %vm421, %v373, 0
    %v432 = vsel %vm421, %v375, 0
    %v435 = vsel %vm421, %v377, 0
    %v438 = vsel %vm421, %v379, 0
    %v441 = vsel %vm421, %v381, 0
    %v444 = vsel %vm421, %v383, 0
    %v447 = vsel %vm421, %v370, 0
    %v450 = vsel %vm421, %v372, 0
    %v453 = vsel %vm421, %v374, 0
    %v456 = vsel %vm421, %v376, 0
    %v459 = vsel %vm421, %v378, 0
    %v462 = vsel %vm421, %v380, 0
    %v465 = vsel %vm421, %v382, 0
    %v468 = vsel %vm421, %v384, 0
    %v471 = vsel %vm421, %v393, 0
    %v474 = vsel %vm421, %v395, 0
    %v477 = vsel %vm421, %v397, 0
    %v480 = vsel %vm421, %v399, 0
    %v483 = vsel %vm421, %v401, 0
    %v486 = vsel %vm421, %v403, 0
    %v489 = vsel %vm421, %v405, 0
    %v492 = vsel %vm421, %v407, 0
    %v495 = vsel %vm421, %v394, 0
    %v498 = vsel %vm421, %v396, 0
    %v501 = vsel %vm421, %v398, 0
    %v504 = vsel %vm421, %v400, 0
    %v507 = vsel %vm421, %v402, 0
    %v510 = vsel %vm421, %v404, 0
    %v513 = vsel %vm421, %v406, 0
    %v516 = vsel %vm421, %v408, 0
    %518 = vmatpush.bf16.msra.mxu0 0
    %519 = vmatpush.bf16.msra.mxu0 0
    %520 = vmatpush.bf16.msra.mxu0 0
    %521 = vmatpush.bf16.msra.mxu0 0
    %522 = vmatpush.bf16.msra.mxu0 0
    %523 = vmatpush.bf16.msra.mxu0 0
    %524 = vmatpush.bf16.msra.mxu0 0
    %525 = vmatpush.bf16.msra.mxu0 %v419
    %526 = vmatmul.bf16.gmra.mxu0 %v423
    %v527 = vpop.f32.mrf.mxu0
    %v528 = vadd.f32 %v413, %v527
    %v529 = vpop.f32.mrf.mxu0
    %v530 = vadd.f32 %v413, %v529
    %531 = vmatmul.bf16.gmra.mxu0 %v426
    %v532 = vpop.f32.mrf.mxu0
    %v533 = vadd.f32 %v413, %v532
    %v534 = vpop.f32.mrf.mxu0
    %v535 = vadd.f32 %v413, %v534
    %536 = vmatmul.bf16.gmra.mxu0 %v429
    %v537 = vpop.f32.mrf.mxu0
    %v538 = vadd.f32 %v413, %v537
    %v539 = vpop.f32.mrf.mxu0
    %v540 = vadd.f32 %v413, %v539
    %541 = vmatmul.bf16.gmra.mxu0 %v432
    %v542 = vpop.f32.mrf.mxu0
    %v543 = vadd.f32 %v413, %v542
    %v544 = vpop.f32.mrf.mxu0
    %v545 = vadd.f32 %v413, %v544
    %546 = vmatmul.bf16.gmra.mxu0 %v435
    %v547 = vpop.f32.mrf.mxu0
    %v548 = vadd.f32 %v413, %v547
    %v549 = vpop.f32.mrf.mxu0
    %v550 = vadd.f32 %v413, %v549
    %551 = vmatmul.bf16.gmra.mxu0 %v438
    %v552 = vpop.f32.mrf.mxu0
    %v553 = vadd.f32 %v413, %v552
    %v554 = vpop.f32.mrf.mxu0
    %v555 = vadd.f32 %v413, %v554
    %556 = vmatmul.bf16.gmra.mxu0 %v441
    %v557 = vpop.f32.mrf.mxu0
    %v558 = vadd.f32 %v413, %v557
    %v559 = vpop.f32.mrf.mxu0
    %v560 = vadd.f32 %v413, %v559
    %561 = vmatmul.bf16.gmra.mxu0 %v444
    %v562 = vpop.f32.mrf.mxu0
    %v563 = vadd.f32 %v413, %v562
    %v564 = vpop.f32.mrf.mxu0
    %v565 = vadd.f32 %v413, %v564
    %566 = vmatmul.bf16.gmra.mxu0 %v447
    %v567 = vpop.f32.mrf.mxu0
    %v568 = vadd.f32 %v413, %v567
    %v569 = vpop.f32.mrf.mxu0
    %v570 = vadd.f32 %v413, %v569
    %571 = vmatmul.bf16.gmra.mxu0 %v450
    %v572 = vpop.f32.mrf.mxu0
    %v573 = vadd.f32 %v413, %v572
    %v574 = vpop.f32.mrf.mxu0
    %v575 = vadd.f32 %v413, %v574
    %576 = vmatmul.bf16.gmra.mxu0 %v453
    %v577 = vpop.f32.mrf.mxu0
    %v578 = vadd.f32 %v413, %v577
    %v579 = vpop.f32.mrf.mxu0
    %v580 = vadd.f32 %v413, %v579
    %581 = vmatmul.bf16.gmra.mxu0 %v456
    %v582 = vpop.f32.mrf.mxu0
    %v583 = vadd.f32 %v413, %v582
    %v584 = vpop.f32.mrf.mxu0
    %v585 = vadd.f32 %v413, %v584
    %586 = vmatmul.bf16.gmra.mxu0 %v459
    %v587 = vpop.f32.mrf.mxu0
    %v588 = vadd.f32 %v413, %v587
    %v589 = vpop.f32.mrf.mxu0
    %v590 = vadd.f32 %v413, %v589
    %591 = vmatmul.bf16.gmra.mxu0 %v462
    %v592 = vpop.f32.mrf.mxu0
    %v593 = vadd.f32 %v413, %v592
    %v594 = vpop.f32.mrf.mxu0
    %v595 = vadd.f32 %v413, %v594
    %596 = vmatmul.bf16.gmra.mxu0 %v465
    %v597 = vpop.f32.mrf.mxu0
    %v598 = vadd.f32 %v413, %v597
    %v599 = vpop.f32.mrf.mxu0
    %v600 = vadd.f32 %v413, %v599
    %601 = vmatmul.bf16.gmra.mxu0 %v468
    %v602 = vpop.f32.mrf.mxu0
    %v603 = vadd.f32 %v413, %v602
    %v604 = vpop.f32.mrf.mxu0
    %v605 = vadd.f32 %v413, %v604
    %606 = vmatmul.bf16.gmra.mxu0 %v471
    %v607 = vpop.f32.mrf.mxu0
    %v608 = vadd.f32 %v413, %v607
    %v609 = vpop.f32.mrf.mxu0
    %v610 = vadd.f32 %v413, %v609
    %611 = vmatmul.bf16.gmra.mxu0 %v474
    %v612 = vpop.f32.mrf.mxu0
    %v613 = vadd.f32 %v413, %v612
    %v614 = vpop.f32.mrf.mxu0
    %v615 = vadd.f32 %v413, %v614
    %616 = vmatmul.bf16.gmra.mxu0 %v477
    %v617 = vpop.f32.mrf.mxu0
    %v618 = vadd.f32 %v413, %v617
    %v619 = vpop.f32.mrf.mxu0
    %v620 = vadd.f32 %v413, %v619
    %621 = vmatmul.bf16.gmra.mxu0 %v480
    %v622 = vpop.f32.mrf.mxu0
    %v623 = vadd.f32 %v413, %v622
    %v624 = vpop.f32.mrf.mxu0
    %v625 = vadd.f32 %v413, %v624
    %626 = vmatmul.bf16.gmra.mxu0 %v483
    %v627 = vpop.f32.mrf.mxu0
    %v628 = vadd.f32 %v413, %v627
    %v629 = vpop.f32.mrf.mxu0
    %v630 = vadd.f32 %v413, %v629
    %631 = vmatmul.bf16.gmra.mxu0 %v486
    %v632 = vpop.f32.mrf.mxu0
    %v633 = vadd.f32 %v413, %v632
    %v634 = vpop.f32.mrf.mxu0
    %v635 = vadd.f32 %v413, %v634
    %636 = vmatmul.bf16.gmra.mxu0 %v489
    %v637 = vpop.f32.mrf.mxu0
    %v638 = vadd.f32 %v413, %v637
    %v639 = vpop.f32.mrf.mxu0
    %v640 = vadd.f32 %v413, %v639
    %641 = vmatmul.bf16.gmra.mxu0 %v492
    %v642 = vpop.f32.mrf.mxu0
    %v643 = vadd.f32 %v413, %v642
    %v644 = vpop.f32.mrf.mxu0
    %v645 = vadd.f32 %v413, %v644
    %646 = vmatmul.bf16.gmra.mxu0 %v495
    %v647 = vpop.f32.mrf.mxu0
    %v648 = vadd.f32 %v413, %v647
    %v649 = vpop.f32.mrf.mxu0
    %v650 = vadd.f32 %v413, %v649
    %651 = vmatmul.bf16.gmra.mxu0 %v498
    %v652 = vpop.f32.mrf.mxu0
    %v653 = vadd.f32 %v413, %v652
    %v654 = vpop.f32.mrf.mxu0
    %v655 = vadd.f32 %v413, %v654
    %656 = vmatmul.bf16.gmra.mxu0 %v501
    %v657 = vpop.f32.mrf.mxu0
    %v658 = vadd.f32 %v413, %v657
    %v659 = vpop.f32.mrf.mxu0
    %v660 = vadd.f32 %v413, %v659
    %661 = vmatmul.bf16.gmra.mxu0 %v504
    %v662 = vpop.f32.mrf.mxu0
    %v663 = vadd.f32 %v413, %v662
    %v664 = vpop.f32.mrf.mxu0
    %v665 = vadd.f32 %v413, %v664
    %666 = vmatmul.bf16.gmra.mxu0 %v507
    %v667 = vpop.f32.mrf.mxu0
    %v668 = vadd.f32 %v413, %v667
    %v669 = vpop.f32.mrf.mxu0
    %v670 = vadd.f32 %v413, %v669
    %671 = vmatmul.bf16.gmra.mxu0 %v510
    %v672 = vpop.f32.mrf.mxu0
    %v673 = vadd.f32 %v413, %v672
    %v674 = vpop.f32.mrf.mxu0
    %v675 = vadd.f32 %v413, %v674
    %676 = vmatmul.bf16.gmra.mxu0 %v513
    %v677 = vpop.f32.mrf.mxu0
    %v678 = vadd.f32 %v413, %v677
    %v679 = vpop.f32.mrf.mxu0
    %v680 = vadd.f32 %v413, %v679
    %681 = vmatmul.bf16.gmra.mxu0 %v516
    %v682 = vpop.f32.mrf.mxu0
    %v683 = vadd.f32 %v413, %v682
    %v684 = vpop.f32.mrf.mxu0
    %v685 = vadd.f32 %v413, %v684
    %686 = vdwg.mxu0
    %v687 = vmul.f32 %v528, 0.5
    %v688 = vmul.f32 %v530, 0.5
    %v689 = vmul.f32 %v533, 0.5
    %v690 = vmul.f32 %v535, 0.5
    %v691 = vmul.f32 %v538, 0.5
    %v692 = vmul.f32 %v540, 0.5
    %v693 = vmul.f32 %v543, 0.5
    %v694 = vmul.f32 %v545, 0.5
    %v695 = vmul.f32 %v548, 0.5
    %v696 = vmul.f32 %v550, 0.5
    %v697 = vmul.f32 %v553, 0.5
    %v698 = vmul.f32 %v555, 0.5
    %v699 = vmul.f32 %v558, 0.5
    %v700 = vmul.f32 %v560, 0.5
    %v701 = vmul.f32 %v563, 0.5
    %v702 = vmul.f32 %v565, 0.5
    %v703 = vmul.f32 %v568, 0.5
    %v704 = vmul.f32 %v570, 0.5
    %v705 = vmul.f32 %v573, 0.5
    %v706 = vmul.f32 %v575, 0.5
    %v707 = vmul.f32 %v578, 0.5
    %v708 = vmul.f32 %v580, 0.5
    %v709 = vmul.f32 %v583, 0.5
    %v710 = vmul.f32 %v585, 0.5
    %v711 = vmul.f32 %v588, 0.5
    %v712 = vmul.f32 %v590, 0.5
    %v713 = vmul.f32 %v593, 0.5
    %v714 = vmul.f32 %v595, 0.5
    %v715 = vmul.f32 %v598, 0.5
    %v716 = vmul.f32 %v600, 0.5
    %v717 = vmul.f32 %v603, 0.5
    %v718 = vmul.f32 %v605, 0.5
    %v719 = vmul.f32 %v608, 0.5
    %v720 = vmul.f32 %v610, 0.5
    %v721 = vmul.f32 %v613, 0.5
    %v722 = vmul.f32 %v615, 0.5
    %v723 = vmul.f32 %v618, 0.5
    %v724 = vmul.f32 %v620, 0.5
    %v725 = vmul.f32 %v623, 0.5
    %v726 = vmul.f32 %v625, 0.5
    %v727 = vmul.f32 %v628, 0.5
    %v728 = vmul.f32 %v630, 0.5
    %v729 = vmul.f32 %v633, 0.5
    %v730 = vmul.f32 %v635, 0.5
    %v731 = vmul.f32 %v638, 0.5
    %v732 = vmul.f32 %v640, 0.5
    %v733 = vmul.f32 %v643, 0.5
    %v734 = vmul.f32 %v645, 0.5
    %v735 = vmul.f32 %v648, 0.5
    %v736 = vmul.f32 %v650, 0.5
    %v737 = vmul.f32 %v653, 0.5
    %v738 = vmul.f32 %v655, 0.5
    %v739 = vmul.f32 %v658, 0.5
    %v740 = vmul.f32 %v660, 0.5
    %v741 = vmul.f32 %v663, 0.5
    %v742 = vmul.f32 %v665, 0.5
    %v743 = vmul.f32 %v668, 0.5
    %v744 = vmul.f32 %v670, 0.5
    %v745 = vmul.f32 %v673, 0.5
    %v746 = vmul.f32 %v675, 0.5
    %v747 = vmul.f32 %v678, 0.5
    %v748 = vmul.f32 %v680, 0.5
    %v749 = vmul.f32 %v683, 0.5
    %v750 = vmul.f32 %v685, 0.5
    %v751 = vmul.f32 %v528, 0.70710677
    %v752 = vmul.f32 %v530, 0.70710677
    %v753 = vmul.f32 %v533, 0.70710677
    %v754 = vmul.f32 %v535, 0.70710677
    %v755 = vmul.f32 %v538, 0.70710677
    %v756 = vmul.f32 %v540, 0.70710677
    %v757 = vmul.f32 %v543, 0.70710677
    %v758 = vmul.f32 %v545, 0.70710677
    %v759 = vmul.f32 %v548, 0.70710677
    %v760 = vmul.f32 %v550, 0.70710677
    %v761 = vmul.f32 %v553, 0.70710677
    %v762 = vmul.f32 %v555, 0.70710677
    %v763 = vmul.f32 %v558, 0.70710677
    %v764 = vmul.f32 %v560, 0.70710677
    %v765 = vmul.f32 %v563, 0.70710677
    %v766 = vmul.f32 %v565, 0.70710677
    %v767 = vmul.f32 %v568, 0.70710677
    %v768 = vmul.f32 %v570, 0.70710677
    %v769 = vmul.f32 %v573, 0.70710677
    %v770 = vmul.f32 %v575, 0.70710677
    %v771 = vmul.f32 %v578, 0.70710677
    %v772 = vmul.f32 %v580, 0.70710677
    %v773 = vmul.f32 %v583, 0.70710677
    %v774 = vmul.f32 %v585, 0.70710677
    %v775 = vmul.f32 %v588, 0.70710677
    %v776 = vmul.f32 %v590, 0.70710677
    %v777 = vmul.f32 %v593, 0.70710677
    %v778 = vmul.f32 %v595, 0.70710677
    %v779 = vmul.f32 %v598, 0.70710677
    %v780 = vmul.f32 %v600, 0.70710677
    %v781 = vmul.f32 %v603, 0.70710677
    %v782 = vmul.f32 %v605, 0.70710677
    %v783 = vmul.f32 %v608, 0.70710677
    %v784 = vmul.f32 %v610, 0.70710677
    %v785 = vmul.f32 %v613, 0.70710677
    %v786 = vmul.f32 %v615, 0.70710677
    %v787 = vmul.f32 %v618, 0.70710677
    %v788 = vmul.f32 %v620, 0.70710677
    %v789 = vmul.f32 %v623, 0.70710677
    %v790 = vmul.f32 %v625, 0.70710677
    %v791 = vmul.f32 %v628, 0.70710677
    %v792 = vmul.f32 %v630, 0.70710677
    %v793 = vmul.f32 %v633, 0.70710677
    %v794 = vmul.f32 %v635, 0.70710677
    %v795 = vmul.f32 %v638, 0.70710677
    %v796 = vmul.f32 %v640, 0.70710677
    %v797 = vmul.f32 %v643, 0.70710677
    %v798 = vmul.f32 %v645, 0.70710677
    %v799 = vmul.f32 %v648, 0.70710677
    %v800 = vmul.f32 %v650, 0.70710677
    %v801 = vmul.f32 %v653, 0.70710677
    %v802 = vmul.f32 %v655, 0.70710677
    %v803 = vmul.f32 %v658, 0.70710677
    %v804 = vmul.f32 %v660, 0.70710677
    %v805 = vmul.f32 %v663, 0.70710677
    %v806 = vmul.f32 %v665, 0.70710677
    %v807 = vmul.f32 %v668, 0.70710677
    %v808 = vmul.f32 %v670, 0.70710677
    %v809 = vmul.f32 %v673, 0.70710677
    %v810 = vmul.f32 %v675, 0.70710677
    %v811 = vmul.f32 %v678, 0.70710677
    %v812 = vmul.f32 %v680, 0.70710677
    %v813 = vmul.f32 %v683, 0.70710677
    %v814 = vmul.f32 %v685, 0.70710677
    %v815 = vmul.f32 %v751, %v751
    %v816 = vmin.f32 16.0, %v815
    %v817 = vmul.f32 %v816, 2.1237322e-06
    %v818 = vadd.f32 %v817, 0.00028619796
    %v819 = vmul.f32 %v816, %v818
    %v820 = vadd.f32 %v819, 0.0036580483
    %v821 = vmul.f32 %v816, %v820
    %v822 = vadd.f32 %v821, 0.05243302
    %v823 = vmul.f32 %v816, %v822
    %v824 = vadd.f32 %v823, 0.18741608
    %v825 = vmul.f32 %v816, %v824
    %v826 = vadd.f32 %v825, 1.1283791
    %v827 = vmul.f32 %v751, %v826
    %v828 = vmul.f32 %v816, 3.8918573e-05
    %v829 = vadd.f32 %v828, 0.001143296
    %v830 = vmul.f32 %v816, %v829
    %v831 = vadd.f32 %v830, 0.014752088
    %v832 = vmul.f32 %v816, %v831
    %v833 = vadd.f32 %v832, 0.112945676
    %v834 = vmul.f32 %v816, %v833
    %v835 = vadd.f32 %v834, 0.4994258
    %v836 = vmul.f32 %v816, %v835
    %v837 = vadd.f32 %v836, 1.0
    %v838 = vrcp.pop %v837
    %v839 = vmul.f32 %v837, %v838
    %v840 = vsub.f32 1.0, %v839
    %v841 = vmul.f32 %v838, %v840
    %v842 = vadd.f32 %v838, %v841
    %vm843 = vweird.f32 %v837
    %vm844 = vweird.f32 %v838
    %vm845 = vmor %vm843, %vm844
    %v846 = vsel %vm845, %v838, %v842
    %v847 = vand.u32 2147483647, %v837
    %vm848 = vcmp.eq.f32.partialorder %v847, 8.507059e+37
    %v849 = vand.u32 %v837, 2147483648
    %v850 = vor.u32 1.1754944e-38, %v849
    %v851 = vsel %vm848, %v850, %v846
    %v852 = vmul.f32 %v827, %v851
    %v853 = vmin.f32 %v852, 1.0
    %v854 = vmax.f32 %v853, -1.0
    %v855 = vmul.f32 %v752, %v752
    %v856 = vmin.f32 16.0, %v855
    %v857 = vmul.f32 %v856, 2.1237322e-06
    %v858 = vadd.f32 %v857, 0.00028619796
    %v859 = vmul.f32 %v856, %v858
    %v860 = vadd.f32 %v859, 0.0036580483
    %v861 = vmul.f32 %v856, %v860
    %v862 = vadd.f32 %v861, 0.05243302
    %v863 = vmul.f32 %v856, %v862
    %v864 = vadd.f32 %v863, 0.18741608
    %v865 = vmul.f32 %v856, %v864
    %v866 = vadd.f32 %v865, 1.1283791
    %v867 = vmul.f32 %v752, %v866
    %v868 = vmul.f32 %v856, 3.8918573e-05
    %v869 = vadd.f32 %v868, 0.001143296
    %v870 = vmul.f32 %v856, %v869
    %v871 = vadd.f32 %v870, 0.014752088
    %v872 = vmul.f32 %v856, %v871
    %v873 = vadd.f32 %v872, 0.112945676
    %v874 = vmul.f32 %v856, %v873
    %v875 = vadd.f32 %v874, 0.4994258
    %v876 = vmul.f32 %v856, %v875
    %v877 = vadd.f32 %v876, 1.0
    %v878 = vrcp.pop %v877
    %v879 = vmul.f32 %v877, %v878
    %v880 = vsub.f32 1.0, %v879
    %v881 = vmul.f32 %v878, %v880
    %v882 = vadd.f32 %v878, %v881
    %vm883 = vweird.f32 %v877
    %vm884 = vweird.f32 %v878
    %vm885 = vmor %vm883, %vm884
    %v886 = vsel %vm885, %v878, %v882
    %v887 = vand.u32 2147483647, %v877
    %vm888 = vcmp.eq.f32.partialorder %v887, 8.507059e+37
    %v889 = vand.u32 %v877, 2147483648
    %v890 = vor.u32 1.1754944e-38, %v889
    %v891 = vsel %vm888, %v890, %v886
    %v892 = vmul.f32 %v867, %v891
    %v893 = vmin.f32 %v892, 1.0
    %v894 = vmax.f32 %v893, -1.0
    %v895 = vmul.f32 %v753, %v753
    %v896 = vmin.f32 16.0, %v895
    %v897 = vmul.f32 %v896, 2.1237322e-06
    %v898 = vadd.f32 %v897, 0.00028619796
    %v899 = vmul.f32 %v896, %v898
    %v900 = vadd.f32 %v899, 0.0036580483
    %v901 = vmul.f32 %v896, %v900
    %v902 = vadd.f32 %v901, 0.05243302
    %v903 = vmul.f32 %v896, %v902
    %v904 = vadd.f32 %v903, 0.18741608
    %v905 = vmul.f32 %v896, %v904
    %v906 = vadd.f32 %v905, 1.1283791
    %v907 = vmul.f32 %v753, %v906
    %v908 = vmul.f32 %v896, 3.8918573e-05
    %v909 = vadd.f32 %v908, 0.001143296
    %v910 = vmul.f32 %v896, %v909
    %v911 = vadd.f32 %v910, 0.014752088
    %v912 = vmul.f32 %v896, %v911
    %v913 = vadd.f32 %v912, 0.112945676
    %v914 = vmul.f32 %v896, %v913
    %v915 = vadd.f32 %v914, 0.4994258
    %v916 = vmul.f32 %v896, %v915
    %v917 = vadd.f32 %v916, 1.0
    %v918 = vrcp.pop %v917
    %v919 = vmul.f32 %v917, %v918
    %v920 = vsub.f32 1.0, %v919
    %v921 = vmul.f32 %v918, %v920
    %v922 = vadd.f32 %v918, %v921
    %vm923 = vweird.f32 %v917
    %vm924 = vweird.f32 %v918
    %vm925 = vmor %vm923, %vm924
    %v926 = vsel %vm925, %v918, %v922
    %v927 = vand.u32 2147483647, %v917
    %vm928 = vcmp.eq.f32.partialorder %v927, 8.507059e+37
    %v929 = vand.u32 %v917, 2147483648
    %v930 = vor.u32 1.1754944e-38, %v929
    %v931 = vsel %vm928, %v930, %v926
    %v932 = vmul.f32 %v907, %v931
    %v933 = vmin.f32 %v932, 1.0
    %v934 = vmax.f32 %v933, -1.0
    %v935 = vmul.f32 %v754, %v754
    %v936 = vmin.f32 16.0, %v935
    %v937 = vmul.f32 %v936, 2.1237322e-06
    %v938 = vadd.f32 %v937, 0.00028619796
    %v939 = vmul.f32 %v936, %v938
    %v940 = vadd.f32 %v939, 0.0036580483
    %v941 = vmul.f32 %v936, %v940
    %v942 = vadd.f32 %v941, 0.05243302
    %v943 = vmul.f32 %v936, %v942
    %v944 = vadd.f32 %v943, 0.18741608
    %v945 = vmul.f32 %v936, %v944
    %v946 = vadd.f32 %v945, 1.1283791
    %v947 = vmul.f32 %v754, %v946
    %v948 = vmul.f32 %v936, 3.8918573e-05
    %v949 = vadd.f32 %v948, 0.001143296
    %v950 = vmul.f32 %v936, %v949
    %v951 = vadd.f32 %v950, 0.014752088
    %v952 = vmul.f32 %v936, %v951
    %v953 = vadd.f32 %v952, 0.112945676
    %v954 = vmul.f32 %v936, %v953
    %v955 = vadd.f32 %v954, 0.4994258
    %v956 = vmul.f32 %v936, %v955
    %v957 = vadd.f32 %v956, 1.0
    %v958 = vrcp.pop %v957
    %v959 = vmul.f32 %v957, %v958
    %v960 = vsub.f32 1.0, %v959
    %v961 = vmul.f32 %v958, %v960
    %v962 = vadd.f32 %v958, %v961
    %vm963 = vweird.f32 %v957
    %vm964 = vweird.f32 %v958
    %vm965 = vmor %vm963, %vm964
    %v966 = vsel %vm965, %v958, %v962
    %v967 = vand.u32 2147483647, %v957
    %vm968 = vcmp.eq.f32.partialorder %v967, 8.507059e+37
    %v969 = vand.u32 %v957, 2147483648
    %v970 = vor.u32 1.1754944e-38, %v969
    %v971 = vsel %vm968, %v970, %v966
    %v972 = vmul.f32 %v947, %v971
    %v973 = vmin.f32 %v972, 1.0
    %v974 = vmax.f32 %v973, -1.0
    %v975 = vmul.f32 %v755, %v755
    %v976 = vmin.f32 16.0, %v975
    %v977 = vmul.f32 %v976, 2.1237322e-06
    %v978 = vadd.f32 %v977, 0.00028619796
    %v979 = vmul.f32 %v976, %v978
    %v980 = vadd.f32 %v979, 0.0036580483
    %v981 = vmul.f32 %v976, %v980
    %v982 = vadd.f32 %v981, 0.05243302
    %v983 = vmul.f32 %v976, %v982
    %v984 = vadd.f32 %v983, 0.18741608
    %v985 = vmul.f32 %v976, %v984
    %v986 = vadd.f32 %v985, 1.1283791
    %v987 = vmul.f32 %v755, %v986
    %v988 = vmul.f32 %v976, 3.8918573e-05
    %v989 = vadd.f32 %v988, 0.001143296
    %v990 = vmul.f32 %v976, %v989
    %v991 = vadd.f32 %v990, 0.014752088
    %v992 = vmul.f32 %v976, %v991
    %v993 = vadd.f32 %v992, 0.112945676
    %v994 = vmul.f32 %v976, %v993
    %v995 = vadd.f32 %v994, 0.4994258
    %v996 = vmul.f32 %v976, %v995
    %v997 = vadd.f32 %v996, 1.0
    %v998 = vrcp.pop %v997
    %v999 = vmul.f32 %v997, %v998
    %v1000 = vsub.f32 1.0, %v999
    %v1001 = vmul.f32 %v998, %v1000
    %v1002 = vadd.f32 %v998, %v1001
    %vm1003 = vweird.f32 %v997
    %vm1004 = vweird.f32 %v998
    %vm1005 = vmor %vm1003, %vm1004
    %v1006 = vsel %vm1005, %v998, %v1002
    %v1007 = vand.u32 2147483647, %v997
    %vm1008 = vcmp.eq.f32.partialorder %v1007, 8.507059e+37
    %v1009 = vand.u32 %v997, 2147483648
    %v1010 = vor.u32 1.1754944e-38, %v1009
    %v1011 = vsel %vm1008, %v1010, %v1006
    %v1012 = vmul.f32 %v987, %v1011
    %v1013 = vmin.f32 %v1012, 1.0
    %v1014 = vmax.f32 %v1013, -1.0
    %v1015 = vmul.f32 %v756, %v756
    %v1016 = vmin.f32 16.0, %v1015
    %v1017 = vmul.f32 %v1016, 2.1237322e-06
    %v1018 = vadd.f32 %v1017, 0.00028619796
    %v1019 = vmul.f32 %v1016, %v1018
    %v1020 = vadd.f32 %v1019, 0.0036580483
    %v1021 = vmul.f32 %v1016, %v1020
    %v1022 = vadd.f32 %v1021, 0.05243302
    %v1023 = vmul.f32 %v1016, %v1022
    %v1024 = vadd.f32 %v1023, 0.18741608
    %v1025 = vmul.f32 %v1016, %v1024
    %v1026 = vadd.f32 %v1025, 1.1283791
    %v1027 = vmul.f32 %v756, %v1026
    %v1028 = vmul.f32 %v1016, 3.8918573e-05
    %v1029 = vadd.f32 %v1028, 0.001143296
    %v1030 = vmul.f32 %v1016, %v1029
    %v1031 = vadd.f32 %v1030, 0.014752088
    %v1032 = vmul.f32 %v1016, %v1031
    %v1033 = vadd.f32 %v1032, 0.112945676
    %v1034 = vmul.f32 %v1016, %v1033
    %v1035 = vadd.f32 %v1034, 0.4994258
    %v1036 = vmul.f32 %v1016, %v1035
    %v1037 = vadd.f32 %v1036, 1.0
    %v1038 = vrcp.pop %v1037
    %v1039 = vmul.f32 %v1037, %v1038
    %v1040 = vsub.f32 1.0, %v1039
    %v1041 = vmul.f32 %v1038, %v1040
    %v1042 = vadd.f32 %v1038, %v1041
    %vm1043 = vweird.f32 %v1037
    %vm1044 = vweird.f32 %v1038
    %vm1045 = vmor %vm1043, %vm1044
    %v1046 = vsel %vm1045, %v1038, %v1042
    %v1047 = vand.u32 2147483647, %v1037
    %vm1048 = vcmp.eq.f32.partialorder %v1047, 8.507059e+37
    %v1049 = vand.u32 %v1037, 2147483648
    %v1050 = vor.u32 1.1754944e-38, %v1049
    %v1051 = vsel %vm1048, %v1050, %v1046
    %v1052 = vmul.f32 %v1027, %v1051
    %v1053 = vmin.f32 %v1052, 1.0
    %v1054 = vmax.f32 %v1053, -1.0
    %v1055 = vmul.f32 %v757, %v757
    %v1056 = vmin.f32 16.0, %v1055
    %v1057 = vmul.f32 %v1056, 2.1237322e-06
    %v1058 = vadd.f32 %v1057, 0.00028619796
    %v1059 = vmul.f32 %v1056, %v1058
    %v1060 = vadd.f32 %v1059, 0.0036580483
    %v1061 = vmul.f32 %v1056, %v1060
    %v1062 = vadd.f32 %v1061, 0.05243302
    %v1063 = vmul.f32 %v1056, %v1062
    %v1064 = vadd.f32 %v1063, 0.18741608
    %v1065 = vmul.f32 %v1056, %v1064
    %v1066 = vadd.f32 %v1065, 1.1283791
    %v1067 = vmul.f32 %v757, %v1066
    %v1068 = vmul.f32 %v1056, 3.8918573e-05
    %v1069 = vadd.f32 %v1068, 0.001143296
    %v1070 = vmul.f32 %v1056, %v1069
    %v1071 = vadd.f32 %v1070, 0.014752088
    %v1072 = vmul.f32 %v1056, %v1071
    %v1073 = vadd.f32 %v1072, 0.112945676
    %v1074 = vmul.f32 %v1056, %v1073
    %v1075 = vadd.f32 %v1074, 0.4994258
    %v1076 = vmul.f32 %v1056, %v1075
    %v1077 = vadd.f32 %v1076, 1.0
    %v1078 = vrcp.pop %v1077
    %v1079 = vmul.f32 %v1077, %v1078
    %v1080 = vsub.f32 1.0, %v1079
    %v1081 = vmul.f32 %v1078, %v1080
    %v1082 = vadd.f32 %v1078, %v1081
    %vm1083 = vweird.f32 %v1077
    %vm1084 = vweird.f32 %v1078
    %vm1085 = vmor %vm1083, %vm1084
    %v1086 = vsel %vm1085, %v1078, %v1082
    %v1087 = vand.u32 2147483647, %v1077
    %vm1088 = vcmp.eq.f32.partialorder %v1087, 8.507059e+37
    %v1089 = vand.u32 %v1077, 2147483648
    %v1090 = vor.u32 1.1754944e-38, %v1089
    %v1091 = vsel %vm1088, %v1090, %v1086
    %v1092 = vmul.f32 %v1067, %v1091
    %v1093 = vmin.f32 %v1092, 1.0
    %v1094 = vmax.f32 %v1093, -1.0
    %v1095 = vmul.f32 %v758, %v758
    %v1096 = vmin.f32 16.0, %v1095
    %v1097 = vmul.f32 %v1096, 2.1237322e-06
    %v1098 = vadd.f32 %v1097, 0.00028619796
    %v1099 = vmul.f32 %v1096, %v1098
    %v1100 = vadd.f32 %v1099, 0.0036580483
    %v1101 = vmul.f32 %v1096, %v1100
    %v1102 = vadd.f32 %v1101, 0.05243302
    %v1103 = vmul.f32 %v1096, %v1102
    %v1104 = vadd.f32 %v1103, 0.18741608
    %v1105 = vmul.f32 %v1096, %v1104
    %v1106 = vadd.f32 %v1105, 1.1283791
    %v1107 = vmul.f32 %v758, %v1106
    %v1108 = vmul.f32 %v1096, 3.8918573e-05
    %v1109 = vadd.f32 %v1108, 0.001143296
    %v1110 = vmul.f32 %v1096, %v1109
    %v1111 = vadd.f32 %v1110, 0.014752088
    %v1112 = vmul.f32 %v1096, %v1111
    %v1113 = vadd.f32 %v1112, 0.112945676
    %v1114 = vmul.f32 %v1096, %v1113
    %v1115 = vadd.f32 %v1114, 0.4994258
    %v1116 = vmul.f32 %v1096, %v1115
    %v1117 = vadd.f32 %v1116, 1.0
    %v1118 = vrcp.pop %v1117
    %v1119 = vmul.f32 %v1117, %v1118
    %v1120 = vsub.f32 1.0, %v1119
    %v1121 = vmul.f32 %v1118, %v1120
    %v1122 = vadd.f32 %v1118, %v1121
    %vm1123 = vweird.f32 %v1117
    %vm1124 = vweird.f32 %v1118
    %vm1125 = vmor %vm1123, %vm1124
    %v1126 = vsel %vm1125, %v1118, %v1122
    %v1127 = vand.u32 2147483647, %v1117
    %vm1128 = vcmp.eq.f32.partialorder %v1127, 8.507059e+37
    %v1129 = vand.u32 %v1117, 2147483648
    %v1130 = vor.u32 1.1754944e-38, %v1129
    %v1131 = vsel %vm1128, %v1130, %v1126
    %v1132 = vmul.f32 %v1107, %v1131
    %v1133 = vmin.f32 %v1132, 1.0
    %v1134 = vmax.f32 %v1133, -1.0
    %v1135 = vmul.f32 %v759, %v759
    %v1136 = vmin.f32 16.0, %v1135
    %v1137 = vmul.f32 %v1136, 2.1237322e-06
    %v1138 = vadd.f32 %v1137, 0.00028619796
    %v1139 = vmul.f32 %v1136, %v1138
    %v1140 = vadd.f32 %v1139, 0.0036580483
    %v1141 = vmul.f32 %v1136, %v1140
    %v1142 = vadd.f32 %v1141, 0.05243302
    %v1143 = vmul.f32 %v1136, %v1142
    %v1144 = vadd.f32 %v1143, 0.18741608
    %v1145 = vmul.f32 %v1136, %v1144
    %v1146 = vadd.f32 %v1145, 1.1283791
    %v1147 = vmul.f32 %v759, %v1146
    %v1148 = vmul.f32 %v1136, 3.8918573e-05
    %v1149 = vadd.f32 %v1148, 0.001143296
    %v1150 = vmul.f32 %v1136, %v1149
    %v1151 = vadd.f32 %v1150, 0.014752088
    %v1152 = vmul.f32 %v1136, %v1151
    %v1153 = vadd.f32 %v1152, 0.112945676
    %v1154 = vmul.f32 %v1136, %v1153
    %v1155 = vadd.f32 %v1154, 0.4994258
    %v1156 = vmul.f32 %v1136, %v1155
    %v1157 = vadd.f32 %v1156, 1.0
    %v1158 = vrcp.pop %v1157
    %v1159 = vmul.f32 %v1157, %v1158
    %v1160 = vsub.f32 1.0, %v1159
    %v1161 = vmul.f32 %v1158, %v1160
    %v1162 = vadd.f32 %v1158, %v1161
    %vm1163 = vweird.f32 %v1157
    %vm1164 = vweird.f32 %v1158
    %vm1165 = vmor %vm1163, %vm1164
    %v1166 = vsel %vm1165, %v1158, %v1162
    %v1167 = vand.u32 2147483647, %v1157
    %vm1168 = vcmp.eq.f32.partialorder %v1167, 8.507059e+37
    %v1169 = vand.u32 %v1157, 2147483648
    %v1170 = vor.u32 1.1754944e-38, %v1169
    %v1171 = vsel %vm1168, %v1170, %v1166
    %v1172 = vmul.f32 %v1147, %v1171
    %v1173 = vmin.f32 %v1172, 1.0
    %v1174 = vmax.f32 %v1173, -1.0
    %v1175 = vmul.f32 %v760, %v760
    %v1176 = vmin.f32 16.0, %v1175
    %v1177 = vmul.f32 %v1176, 2.1237322e-06
    %v1178 = vadd.f32 %v1177, 0.00028619796
    %v1179 = vmul.f32 %v1176, %v1178
    %v1180 = vadd.f32 %v1179, 0.0036580483
    %v1181 = vmul.f32 %v1176, %v1180
    %v1182 = vadd.f32 %v1181, 0.05243302
    %v1183 = vmul.f32 %v1176, %v1182
    %v1184 = vadd.f32 %v1183, 0.18741608
    %v1185 = vmul.f32 %v1176, %v1184
    %v1186 = vadd.f32 %v1185, 1.1283791
    %v1187 = vmul.f32 %v760, %v1186
    %v1188 = vmul.f32 %v1176, 3.8918573e-05
    %v1189 = vadd.f32 %v1188, 0.001143296
    %v1190 = vmul.f32 %v1176, %v1189
    %v1191 = vadd.f32 %v1190, 0.014752088
    %v1192 = vmul.f32 %v1176, %v1191
    %v1193 = vadd.f32 %v1192, 0.112945676
    %v1194 = vmul.f32 %v1176, %v1193
    %v1195 = vadd.f32 %v1194, 0.4994258
    %v1196 = vmul.f32 %v1176, %v1195
    %v1197 = vadd.f32 %v1196, 1.0
    %v1198 = vrcp.pop %v1197
    %v1199 = vmul.f32 %v1197, %v1198
    %v1200 = vsub.f32 1.0, %v1199
    %v1201 = vmul.f32 %v1198, %v1200
    %v1202 = vadd.f32 %v1198, %v1201
    %vm1203 = vweird.f32 %v1197
    %vm1204 = vweird.f32 %v1198
    %vm1205 = vmor %vm1203, %vm1204
    %v1206 = vsel %vm1205, %v1198, %v1202
    %v1207 = vand.u32 2147483647, %v1197
    %vm1208 = vcmp.eq.f32.partialorder %v1207, 8.507059e+37
    %v1209 = vand.u32 %v1197, 2147483648
    %v1210 = vor.u32 1.1754944e-38, %v1209
    %v1211 = vsel %vm1208, %v1210, %v1206
    %v1212 = vmul.f32 %v1187, %v1211
    %v1213 = vmin.f32 %v1212, 1.0
    %v1214 = vmax.f32 %v1213, -1.0
    %v1215 = vmul.f32 %v761, %v761
    %v1216 = vmin.f32 16.0, %v1215
    %v1217 = vmul.f32 %v1216, 2.1237322e-06
    %v1218 = vadd.f32 %v1217, 0.00028619796
    %v1219 = vmul.f32 %v1216, %v1218
    %v1220 = vadd.f32 %v1219, 0.0036580483
    %v1221 = vmul.f32 %v1216, %v1220
    %v1222 = vadd.f32 %v1221, 0.05243302
    %v1223 = vmul.f32 %v1216, %v1222
    %v1224 = vadd.f32 %v1223, 0.18741608
    %v1225 = vmul.f32 %v1216, %v1224
    %v1226 = vadd.f32 %v1225, 1.1283791
    %v1227 = vmul.f32 %v761, %v1226
    %v1228 = vmul.f32 %v1216, 3.8918573e-05
    %v1229 = vadd.f32 %v1228, 0.001143296
    %v1230 = vmul.f32 %v1216, %v1229
    %v1231 = vadd.f32 %v1230, 0.014752088
    %v1232 = vmul.f32 %v1216, %v1231
    %v1233 = vadd.f32 %v1232, 0.112945676
    %v1234 = vmul.f32 %v1216, %v1233
    %v1235 = vadd.f32 %v1234, 0.4994258
    %v1236 = vmul.f32 %v1216, %v1235
    %v1237 = vadd.f32 %v1236, 1.0
    %v1238 = vrcp.pop %v1237
    %v1239 = vmul.f32 %v1237, %v1238
    %v1240 = vsub.f32 1.0, %v1239
    %v1241 = vmul.f32 %v1238, %v1240
    %v1242 = vadd.f32 %v1238, %v1241
    %vm1243 = vweird.f32 %v1237
    %vm1244 = vweird.f32 %v1238
    %vm1245 = vmor %vm1243, %vm1244
    %v1246 = vsel %vm1245, %v1238, %v1242
    %v1247 = vand.u32 2147483647, %v1237
    %vm1248 = vcmp.eq.f32.partialorder %v1247, 8.507059e+37
    %v1249 = vand.u32 %v1237, 2147483648
    %v1250 = vor.u32 1.1754944e-38, %v1249
    %v1251 = vsel %vm1248, %v1250, %v1246
    %v1252 = vmul.f32 %v1227, %v1251
    %v1253 = vmin.f32 %v1252, 1.0
    %v1254 = vmax.f32 %v1253, -1.0
    %v1255 = vmul.f32 %v762, %v762
    %v1256 = vmin.f32 16.0, %v1255
    %v1257 = vmul.f32 %v1256, 2.1237322e-06
    %v1258 = vadd.f32 %v1257, 0.00028619796
    %v1259 = vmul.f32 %v1256, %v1258
    %v1260 = vadd.f32 %v1259, 0.0036580483
    %v1261 = vmul.f32 %v1256, %v1260
    %v1262 = vadd.f32 %v1261, 0.05243302
    %v1263 = vmul.f32 %v1256, %v1262
    %v1264 = vadd.f32 %v1263, 0.18741608
    %v1265 = vmul.f32 %v1256, %v1264
    %v1266 = vadd.f32 %v1265, 1.1283791
    %v1267 = vmul.f32 %v762, %v1266
    %v1268 = vmul.f32 %v1256, 3.8918573e-05
    %v1269 = vadd.f32 %v1268, 0.001143296
    %v1270 = vmul.f32 %v1256, %v1269
    %v1271 = vadd.f32 %v1270, 0.014752088
    %v1272 = vmul.f32 %v1256, %v1271
    %v1273 = vadd.f32 %v1272, 0.112945676
    %v1274 = vmul.f32 %v1256, %v1273
    %v1275 = vadd.f32 %v1274, 0.4994258
    %v1276 = vmul.f32 %v1256, %v1275
    %v1277 = vadd.f32 %v1276, 1.0
    %v1278 = vrcp.pop %v1277
    %v1279 = vmul.f32 %v1277, %v1278
    %v1280 = vsub.f32 1.0, %v1279
    %v1281 = vmul.f32 %v1278, %v1280
    %v1282 = vadd.f32 %v1278, %v1281
    %vm1283 = vweird.f32 %v1277
    %vm1284 = vweird.f32 %v1278
    %vm1285 = vmor %vm1283, %vm1284
    %v1286 = vsel %vm1285, %v1278, %v1282
    %v1287 = vand.u32 2147483647, %v1277
    %vm1288 = vcmp.eq.f32.partialorder %v1287, 8.507059e+37
    %v1289 = vand.u32 %v1277, 2147483648
    %v1290 = vor.u32 1.1754944e-38, %v1289
    %v1291 = vsel %vm1288, %v1290, %v1286
    %v1292 = vmul.f32 %v1267, %v1291
    %v1293 = vmin.f32 %v1292, 1.0
    %v1294 = vmax.f32 %v1293, -1.0
    %v1295 = vmul.f32 %v763, %v763
    %v1296 = vmin.f32 16.0, %v1295
    %v1297 = vmul.f32 %v1296, 2.1237322e-06
    %v1298 = vadd.f32 %v1297, 0.00028619796
    %v1299 = vmul.f32 %v1296, %v1298
    %v1300 = vadd.f32 %v1299, 0.0036580483
    %v1301 = vmul.f32 %v1296, %v1300
    %v1302 = vadd.f32 %v1301, 0.05243302
    %v1303 = vmul.f32 %v1296, %v1302
    %v1304 = vadd.f32 %v1303, 0.18741608
    %v1305 = vmul.f32 %v1296, %v1304
    %v1306 = vadd.f32 %v1305, 1.1283791
    %v1307 = vmul.f32 %v763, %v1306
    %v1308 = vmul.f32 %v1296, 3.8918573e-05
    %v1309 = vadd.f32 %v1308, 0.001143296
    %v1310 = vmul.f32 %v1296, %v1309
    %v1311 = vadd.f32 %v1310, 0.014752088
    %v1312 = vmul.f32 %v1296, %v1311
    %v1313 = vadd.f32 %v1312, 0.112945676
    %v1314 = vmul.f32 %v1296, %v1313
    %v1315 = vadd.f32 %v1314, 0.4994258
    %v1316 = vmul.f32 %v1296, %v1315
    %v1317 = vadd.f32 %v1316, 1.0
    %v1318 = vrcp.pop %v1317
    %v1319 = vmul.f32 %v1317, %v1318
    %v1320 = vsub.f32 1.0, %v1319
    %v1321 = vmul.f32 %v1318, %v1320
    %v1322 = vadd.f32 %v1318, %v1321
    %vm1323 = vweird.f32 %v1317
    %vm1324 = vweird.f32 %v1318
    %vm1325 = vmor %vm1323, %vm1324
    %v1326 = vsel %vm1325, %v1318, %v1322
    %v1327 = vand.u32 2147483647, %v1317
    %vm1328 = vcmp.eq.f32.partialorder %v1327, 8.507059e+37
    %v1329 = vand.u32 %v1317, 2147483648
    %v1330 = vor.u32 1.1754944e-38, %v1329
    %v1331 = vsel %vm1328, %v1330, %v1326
    %v1332 = vmul.f32 %v1307, %v1331
    %v1333 = vmin.f32 %v1332, 1.0
    %v1334 = vmax.f32 %v1333, -1.0
    %v1335 = vmul.f32 %v764, %v764
    %v1336 = vmin.f32 16.0, %v1335
    %v1337 = vmul.f32 %v1336, 2.1237322e-06
    %v1338 = vadd.f32 %v1337, 0.00028619796
    %v1339 = vmul.f32 %v1336, %v1338
    %v1340 = vadd.f32 %v1339, 0.0036580483
    %v1341 = vmul.f32 %v1336, %v1340
    %v1342 = vadd.f32 %v1341, 0.05243302
    %v1343 = vmul.f32 %v1336, %v1342
    %v1344 = vadd.f32 %v1343, 0.18741608
    %v1345 = vmul.f32 %v1336, %v1344
    %v1346 = vadd.f32 %v1345, 1.1283791
    %v1347 = vmul.f32 %v764, %v1346
    %v1348 = vmul.f32 %v1336, 3.8918573e-05
    %v1349 = vadd.f32 %v1348, 0.001143296
    %v1350 = vmul.f32 %v1336, %v1349
    %v1351 = vadd.f32 %v1350, 0.014752088
    %v1352 = vmul.f32 %v1336, %v1351
    %v1353 = vadd.f32 %v1352, 0.112945676
    %v1354 = vmul.f32 %v1336, %v1353
    %v1355 = vadd.f32 %v1354, 0.4994258
    %v1356 = vmul.f32 %v1336, %v1355
    %v1357 = vadd.f32 %v1356, 1.0
    %v1358 = vrcp.pop %v1357
    %v1359 = vmul.f32 %v1357, %v1358
    %v1360 = vsub.f32 1.0, %v1359
    %v1361 = vmul.f32 %v1358, %v1360
    %v1362 = vadd.f32 %v1358, %v1361
    %vm1363 = vweird.f32 %v1357
    %vm1364 = vweird.f32 %v1358
    %vm1365 = vmor %vm1363, %vm1364
    %v1366 = vsel %vm1365, %v1358, %v1362
    %v1367 = vand.u32 2147483647, %v1357
    %vm1368 = vcmp.eq.f32.partialorder %v1367, 8.507059e+37
    %v1369 = vand.u32 %v1357, 2147483648
    %v1370 = vor.u32 1.1754944e-38, %v1369
    %v1371 = vsel %vm1368, %v1370, %v1366
    %v1372 = vmul.f32 %v1347, %v1371
    %v1373 = vmin.f32 %v1372, 1.0
    %v1374 = vmax.f32 %v1373, -1.0
    %v1375 = vmul.f32 %v765, %v765
    %v1376 = vmin.f32 16.0, %v1375
    %v1377 = vmul.f32 %v1376, 2.1237322e-06
    %v1378 = vadd.f32 %v1377, 0.00028619796
    %v1379 = vmul.f32 %v1376, %v1378
    %v1380 = vadd.f32 %v1379, 0.0036580483
    %v1381 = vmul.f32 %v1376, %v1380
    %v1382 = vadd.f32 %v1381, 0.05243302
    %v1383 = vmul.f32 %v1376, %v1382
    %v1384 = vadd.f32 %v1383, 0.18741608
    %v1385 = vmul.f32 %v1376, %v1384
    %v1386 = vadd.f32 %v1385, 1.1283791
    %v1387 = vmul.f32 %v765, %v1386
    %v1388 = vmul.f32 %v1376, 3.8918573e-05
    %v1389 = vadd.f32 %v1388, 0.001143296
    %v1390 = vmul.f32 %v1376, %v1389
    %v1391 = vadd.f32 %v1390, 0.014752088
    %v1392 = vmul.f32 %v1376, %v1391
    %v1393 = vadd.f32 %v1392, 0.112945676
    %v1394 = vmul.f32 %v1376, %v1393
    %v1395 = vadd.f32 %v1394, 0.4994258
    %v1396 = vmul.f32 %v1376, %v1395
    %v1397 = vadd.f32 %v1396, 1.0
    %v1398 = vrcp.pop %v1397
    %v1399 = vmul.f32 %v1397, %v1398
    %v1400 = vsub.f32 1.0, %v1399
    %v1401 = vmul.f32 %v1398, %v1400
    %v1402 = vadd.f32 %v1398, %v1401
    %vm1403 = vweird.f32 %v1397
    %vm1404 = vweird.f32 %v1398
    %vm1405 = vmor %vm1403, %vm1404
    %v1406 = vsel %vm1405, %v1398, %v1402
    %v1407 = vand.u32 2147483647, %v1397
    %vm1408 = vcmp.eq.f32.partialorder %v1407, 8.507059e+37
    %v1409 = vand.u32 %v1397, 2147483648
    %v1410 = vor.u32 1.1754944e-38, %v1409
    %v1411 = vsel %vm1408, %v1410, %v1406
    %v1412 = vmul.f32 %v1387, %v1411
    %v1413 = vmin.f32 %v1412, 1.0
    %v1414 = vmax.f32 %v1413, -1.0
    %v1415 = vmul.f32 %v766, %v766
    %v1416 = vmin.f32 16.0, %v1415
    %v1417 = vmul.f32 %v1416, 2.1237322e-06
    %v1418 = vadd.f32 %v1417, 0.00028619796
    %v1419 = vmul.f32 %v1416, %v1418
    %v1420 = vadd.f32 %v1419, 0.0036580483
    %v1421 = vmul.f32 %v1416, %v1420
    %v1422 = vadd.f32 %v1421, 0.05243302
    %v1423 = vmul.f32 %v1416, %v1422
    %v1424 = vadd.f32 %v1423, 0.18741608
    %v1425 = vmul.f32 %v1416, %v1424
    %v1426 = vadd.f32 %v1425, 1.1283791
    %v1427 = vmul.f32 %v766, %v1426
    %v1428 = vmul.f32 %v1416, 3.8918573e-05
    %v1429 = vadd.f32 %v1428, 0.001143296
    %v1430 = vmul.f32 %v1416, %v1429
    %v1431 = vadd.f32 %v1430, 0.014752088
    %v1432 = vmul.f32 %v1416, %v1431
    %v1433 = vadd.f32 %v1432, 0.112945676
    %v1434 = vmul.f32 %v1416, %v1433
    %v1435 = vadd.f32 %v1434, 0.4994258
    %v1436 = vmul.f32 %v1416, %v1435
    %v1437 = vadd.f32 %v1436, 1.0
    %v1438 = vrcp.pop %v1437
    %v1439 = vmul.f32 %v1437, %v1438
    %v1440 = vsub.f32 1.0, %v1439
    %v1441 = vmul.f32 %v1438, %v1440
    %v1442 = vadd.f32 %v1438, %v1441
    %vm1443 = vweird.f32 %v1437
    %vm1444 = vweird.f32 %v1438
    %vm1445 = vmor %vm1443, %vm1444
    %v1446 = vsel %vm1445, %v1438, %v1442
    %v1447 = vand.u32 2147483647, %v1437
    %vm1448 = vcmp.eq.f32.partialorder %v1447, 8.507059e+37
    %v1449 = vand.u32 %v1437, 2147483648
    %v1450 = vor.u32 1.1754944e-38, %v1449
    %v1451 = vsel %vm1448, %v1450, %v1446
    %v1452 = vmul.f32 %v1427, %v1451
    %v1453 = vmin.f32 %v1452, 1.0
    %v1454 = vmax.f32 %v1453, -1.0
    %v1455 = vmul.f32 %v767, %v767
    %v1456 = vmin.f32 16.0, %v1455
    %v1457 = vmul.f32 %v1456, 2.1237322e-06
    %v1458 = vadd.f32 %v1457, 0.00028619796
    %v1459 = vmul.f32 %v1456, %v1458
    %v1460 = vadd.f32 %v1459, 0.0036580483
    %v1461 = vmul.f32 %v1456, %v1460
    %v1462 = vadd.f32 %v1461, 0.05243302
    %v1463 = vmul.f32 %v1456, %v1462
    %v1464 = vadd.f32 %v1463, 0.18741608
    %v1465 = vmul.f32 %v1456, %v1464
    %v1466 = vadd.f32 %v1465, 1.1283791
    %v1467 = vmul.f32 %v767, %v1466
    %v1468 = vmul.f32 %v1456, 3.8918573e-05
    %v1469 = vadd.f32 %v1468, 0.001143296
    %v1470 = vmul.f32 %v1456, %v1469
    %v1471 = vadd.f32 %v1470, 0.014752088
    %v1472 = vmul.f32 %v1456, %v1471
    %v1473 = vadd.f32 %v1472, 0.112945676
    %v1474 = vmul.f32 %v1456, %v1473
    %v1475 = vadd.f32 %v1474, 0.4994258
    %v1476 = vmul.f32 %v1456, %v1475
    %v1477 = vadd.f32 %v1476, 1.0
    %v1478 = vrcp.pop %v1477
    %v1479 = vmul.f32 %v1477, %v1478
    %v1480 = vsub.f32 1.0, %v1479
    %v1481 = vmul.f32 %v1478, %v1480
    %v1482 = vadd.f32 %v1478, %v1481
    %vm1483 = vweird.f32 %v1477
    %vm1484 = vweird.f32 %v1478
    %vm1485 = vmor %vm1483, %vm1484
    %v1486 = vsel %vm1485, %v1478, %v1482
    %v1487 = vand.u32 2147483647, %v1477
    %vm1488 = vcmp.eq.f32.partialorder %v1487, 8.507059e+37
    %v1489 = vand.u32 %v1477, 2147483648
    %v1490 = vor.u32 1.1754944e-38, %v1489
    %v1491 = vsel %vm1488, %v1490, %v1486
    %v1492 = vmul.f32 %v1467, %v1491
    %v1493 = vmin.f32 %v1492, 1.0
    %v1494 = vmax.f32 %v1493, -1.0
    %v1495 = vmul.f32 %v768, %v768
    %v1496 = vmin.f32 16.0, %v1495
    %v1497 = vmul.f32 %v1496, 2.1237322e-06
    %v1498 = vadd.f32 %v1497, 0.00028619796
    %v1499 = vmul.f32 %v1496, %v1498
    %v1500 = vadd.f32 %v1499, 0.0036580483
    %v1501 = vmul.f32 %v1496, %v1500
    %v1502 = vadd.f32 %v1501, 0.05243302
    %v1503 = vmul.f32 %v1496, %v1502
    %v1504 = vadd.f32 %v1503, 0.18741608
    %v1505 = vmul.f32 %v1496, %v1504
    %v1506 = vadd.f32 %v1505, 1.1283791
    %v1507 = vmul.f32 %v768, %v1506
    %v1508 = vmul.f32 %v1496, 3.8918573e-05
    %v1509 = vadd.f32 %v1508, 0.001143296
    %v1510 = vmul.f32 %v1496, %v1509
    %v1511 = vadd.f32 %v1510, 0.014752088
    %v1512 = vmul.f32 %v1496, %v1511
    %v1513 = vadd.f32 %v1512, 0.112945676
    %v1514 = vmul.f32 %v1496, %v1513
    %v1515 = vadd.f32 %v1514, 0.4994258
    %v1516 = vmul.f32 %v1496, %v1515
    %v1517 = vadd.f32 %v1516, 1.0
    %v1518 = vrcp.pop %v1517
    %v1519 = vmul.f32 %v1517, %v1518
    %v1520 = vsub.f32 1.0, %v1519
    %v1521 = vmul.f32 %v1518, %v1520
    %v1522 = vadd.f32 %v1518, %v1521
    %vm1523 = vweird.f32 %v1517
    %vm1524 = vweird.f32 %v1518
    %vm1525 = vmor %vm1523, %vm1524
    %v1526 = vsel %vm1525, %v1518, %v1522
    %v1527 = vand.u32 2147483647, %v1517
    %vm1528 = vcmp.eq.f32.partialorder %v1527, 8.507059e+37
    %v1529 = vand.u32 %v1517, 2147483648
    %v1530 = vor.u32 1.1754944e-38, %v1529
    %v1531 = vsel %vm1528, %v1530, %v1526
    %v1532 = vmul.f32 %v1507, %v1531
    %v1533 = vmin.f32 %v1532, 1.0
    %v1534 = vmax.f32 %v1533, -1.0
    %v1535 = vmul.f32 %v769, %v769
    %v1536 = vmin.f32 16.0, %v1535
    %v1537 = vmul.f32 %v1536, 2.1237322e-06
    %v1538 = vadd.f32 %v1537, 0.00028619796
    %v1539 = vmul.f32 %v1536, %v1538
    %v1540 = vadd.f32 %v1539, 0.0036580483
    %v1541 = vmul.f32 %v1536, %v1540
    %v1542 = vadd.f32 %v1541, 0.05243302
    %v1543 = vmul.f32 %v1536, %v1542
    %v1544 = vadd.f32 %v1543, 0.18741608
    %v1545 = vmul.f32 %v1536, %v1544
    %v1546 = vadd.f32 %v1545, 1.1283791
    %v1547 = vmul.f32 %v769, %v1546
    %v1548 = vmul.f32 %v1536, 3.8918573e-05
    %v1549 = vadd.f32 %v1548, 0.001143296
    %v1550 = vmul.f32 %v1536, %v1549
    %v1551 = vadd.f32 %v1550, 0.014752088
    %v1552 = vmul.f32 %v1536, %v1551
    %v1553 = vadd.f32 %v1552, 0.112945676
    %v1554 = vmul.f32 %v1536, %v1553
    %v1555 = vadd.f32 %v1554, 0.4994258
    %v1556 = vmul.f32 %v1536, %v1555
    %v1557 = vadd.f32 %v1556, 1.0
    %v1558 = vrcp.pop %v1557
    %v1559 = vmul.f32 %v1557, %v1558
    %v1560 = vsub.f32 1.0, %v1559
    %v1561 = vmul.f32 %v1558, %v1560
    %v1562 = vadd.f32 %v1558, %v1561
    %vm1563 = vweird.f32 %v1557
    %vm1564 = vweird.f32 %v1558
    %vm1565 = vmor %vm1563, %vm1564
    %v1566 = vsel %vm1565, %v1558, %v1562
    %v1567 = vand.u32 2147483647, %v1557
    %vm1568 = vcmp.eq.f32.partialorder %v1567, 8.507059e+37
    %v1569 = vand.u32 %v1557, 2147483648
    %v1570 = vor.u32 1.1754944e-38, %v1569
    %v1571 = vsel %vm1568, %v1570, %v1566
    %v1572 = vmul.f32 %v1547, %v1571
    %v1573 = vmin.f32 %v1572, 1.0
    %v1574 = vmax.f32 %v1573, -1.0
    %v1575 = vmul.f32 %v770, %v770
    %v1576 = vmin.f32 16.0, %v1575
    %v1577 = vmul.f32 %v1576, 2.1237322e-06
    %v1578 = vadd.f32 %v1577, 0.00028619796
    %v1579 = vmul.f32 %v1576, %v1578
    %v1580 = vadd.f32 %v1579, 0.0036580483
    %v1581 = vmul.f32 %v1576, %v1580
    %v1582 = vadd.f32 %v1581, 0.05243302
    %v1583 = vmul.f32 %v1576, %v1582
    %v1584 = vadd.f32 %v1583, 0.18741608
    %v1585 = vmul.f32 %v1576, %v1584
    %v1586 = vadd.f32 %v1585, 1.1283791
    %v1587 = vmul.f32 %v770, %v1586
    %v1588 = vmul.f32 %v1576, 3.8918573e-05
    %v1589 = vadd.f32 %v1588, 0.001143296
    %v1590 = vmul.f32 %v1576, %v1589
    %v1591 = vadd.f32 %v1590, 0.014752088
    %v1592 = vmul.f32 %v1576, %v1591
    %v1593 = vadd.f32 %v1592, 0.112945676
    %v1594 = vmul.f32 %v1576, %v1593
    %v1595 = vadd.f32 %v1594, 0.4994258
    %v1596 = vmul.f32 %v1576, %v1595
    %v1597 = vadd.f32 %v1596, 1.0
    %v1598 = vrcp.pop %v1597
    %v1599 = vmul.f32 %v1597, %v1598
    %v1600 = vsub.f32 1.0, %v1599
    %v1601 = vmul.f32 %v1598, %v1600
    %v1602 = vadd.f32 %v1598, %v1601
    %vm1603 = vweird.f32 %v1597
    %vm1604 = vweird.f32 %v1598
    %vm1605 = vmor %vm1603, %vm1604
    %v1606 = vsel %vm1605, %v1598, %v1602
    %v1607 = vand.u32 2147483647, %v1597
    %vm1608 = vcmp.eq.f32.partialorder %v1607, 8.507059e+37
    %v1609 = vand.u32 %v1597, 2147483648
    %v1610 = vor.u32 1.1754944e-38, %v1609
    %v1611 = vsel %vm1608, %v1610, %v1606
    %v1612 = vmul.f32 %v1587, %v1611
    %v1613 = vmin.f32 %v1612, 1.0
    %v1614 = vmax.f32 %v1613, -1.0
    %v1615 = vmul.f32 %v771, %v771
    %v1616 = vmin.f32 16.0, %v1615
    %v1617 = vmul.f32 %v1616, 2.1237322e-06
    %v1618 = vadd.f32 %v1617, 0.00028619796
    %v1619 = vmul.f32 %v1616, %v1618
    %v1620 = vadd.f32 %v1619, 0.0036580483
    %v1621 = vmul.f32 %v1616, %v1620
    %v1622 = vadd.f32 %v1621, 0.05243302
    %v1623 = vmul.f32 %v1616, %v1622
    %v1624 = vadd.f32 %v1623, 0.18741608
    %v1625 = vmul.f32 %v1616, %v1624
    %v1626 = vadd.f32 %v1625, 1.1283791
    %v1627 = vmul.f32 %v771, %v1626
    %v1628 = vmul.f32 %v1616, 3.8918573e-05
    %v1629 = vadd.f32 %v1628, 0.001143296
    %v1630 = vmul.f32 %v1616, %v1629
    %v1631 = vadd.f32 %v1630, 0.014752088
    %v1632 = vmul.f32 %v1616, %v1631
    %v1633 = vadd.f32 %v1632, 0.112945676
    %v1634 = vmul.f32 %v1616, %v1633
    %v1635 = vadd.f32 %v1634, 0.4994258
    %v1636 = vmul.f32 %v1616, %v1635
    %v1637 = vadd.f32 %v1636, 1.0
    %v1638 = vrcp.pop %v1637
    %v1639 = vmul.f32 %v1637, %v1638
    %v1640 = vsub.f32 1.0, %v1639
    %v1641 = vmul.f32 %v1638, %v1640
    %v1642 = vadd.f32 %v1638, %v1641
    %vm1643 = vweird.f32 %v1637
    %vm1644 = vweird.f32 %v1638
    %vm1645 = vmor %vm1643, %vm1644
    %v1646 = vsel %vm1645, %v1638, %v1642
    %v1647 = vand.u32 2147483647, %v1637
    %vm1648 = vcmp.eq.f32.partialorder %v1647, 8.507059e+37
    %v1649 = vand.u32 %v1637, 2147483648
    %v1650 = vor.u32 1.1754944e-38, %v1649
    %v1651 = vsel %vm1648, %v1650, %v1646
    %v1652 = vmul.f32 %v1627, %v1651
    %v1653 = vmin.f32 %v1652, 1.0
    %v1654 = vmax.f32 %v1653, -1.0
    %v1655 = vmul.f32 %v772, %v772
    %v1656 = vmin.f32 16.0, %v1655
    %v1657 = vmul.f32 %v1656, 2.1237322e-06
    %v1658 = vadd.f32 %v1657, 0.00028619796
    %v1659 = vmul.f32 %v1656, %v1658
    %v1660 = vadd.f32 %v1659, 0.0036580483
    %v1661 = vmul.f32 %v1656, %v1660
    %v1662 = vadd.f32 %v1661, 0.05243302
    %v1663 = vmul.f32 %v1656, %v1662
    %v1664 = vadd.f32 %v1663, 0.18741608
    %v1665 = vmul.f32 %v1656, %v1664
    %v1666 = vadd.f32 %v1665, 1.1283791
    %v1667 = vmul.f32 %v772, %v1666
    %v1668 = vmul.f32 %v1656, 3.8918573e-05
    %v1669 = vadd.f32 %v1668, 0.001143296
    %v1670 = vmul.f32 %v1656, %v1669
    %v1671 = vadd.f32 %v1670, 0.014752088
    %v1672 = vmul.f32 %v1656, %v1671
    %v1673 = vadd.f32 %v1672, 0.112945676
    %v1674 = vmul.f32 %v1656, %v1673
    %v1675 = vadd.f32 %v1674, 0.4994258
    %v1676 = vmul.f32 %v1656, %v1675
    %v1677 = vadd.f32 %v1676, 1.0
    %v1678 = vrcp.pop %v1677
    %v1679 = vmul.f32 %v1677, %v1678
    %v1680 = vsub.f32 1.0, %v1679
    %v1681 = vmul.f32 %v1678, %v1680
    %v1682 = vadd.f32 %v1678, %v1681
    %vm1683 = vweird.f32 %v1677
    %vm1684 = vweird.f32 %v1678
    %vm1685 = vmor %vm1683, %vm1684
    %v1686 = vsel %vm1685, %v1678, %v1682
    %v1687 = vand.u32 2147483647, %v1677
    %vm1688 = vcmp.eq.f32.partialorder %v1687, 8.507059e+37
    %v1689 = vand.u32 %v1677, 2147483648
    %v1690 = vor.u32 1.1754944e-38, %v1689
    %v1691 = vsel %vm1688, %v1690, %v1686
    %v1692 = vmul.f32 %v1667, %v1691
    %v1693 = vmin.f32 %v1692, 1.0
    %v1694 = vmax.f32 %v1693, -1.0
    %v1695 = vmul.f32 %v773, %v773
    %v1696 = vmin.f32 16.0, %v1695
    %v1697 = vmul.f32 %v1696, 2.1237322e-06
    %v1698 = vadd.f32 %v1697, 0.00028619796
    %v1699 = vmul.f32 %v1696, %v1698
    %v1700 = vadd.f32 %v1699, 0.0036580483
    %v1701 = vmul.f32 %v1696, %v1700
    %v1702 = vadd.f32 %v1701, 0.05243302
    %v1703 = vmul.f32 %v1696, %v1702
    %v1704 = vadd.f32 %v1703, 0.18741608
    %v1705 = vmul.f32 %v1696, %v1704
    %v1706 = vadd.f32 %v1705, 1.1283791
    %v1707 = vmul.f32 %v773, %v1706
    %v1708 = vmul.f32 %v1696, 3.8918573e-05
    %v1709 = vadd.f32 %v1708, 0.001143296
    %v1710 = vmul.f32 %v1696, %v1709
    %v1711 = vadd.f32 %v1710, 0.014752088
    %v1712 = vmul.f32 %v1696, %v1711
    %v1713 = vadd.f32 %v1712, 0.112945676
    %v1714 = vmul.f32 %v1696, %v1713
    %v1715 = vadd.f32 %v1714, 0.4994258
    %v1716 = vmul.f32 %v1696, %v1715
    %v1717 = vadd.f32 %v1716, 1.0
    %v1718 = vrcp.pop %v1717
    %v1719 = vmul.f32 %v1717, %v1718
    %v1720 = vsub.f32 1.0, %v1719
    %v1721 = vmul.f32 %v1718, %v1720
    %v1722 = vadd.f32 %v1718, %v1721
    %vm1723 = vweird.f32 %v1717
    %vm1724 = vweird.f32 %v1718
    %vm1725 = vmor %vm1723, %vm1724
    %v1726 = vsel %vm1725, %v1718, %v1722
    %v1727 = vand.u32 2147483647, %v1717
    %vm1728 = vcmp.eq.f32.partialorder %v1727, 8.507059e+37
    %v1729 = vand.u32 %v1717, 2147483648
    %v1730 = vor.u32 1.1754944e-38, %v1729
    %v1731 = vsel %vm1728, %v1730, %v1726
    %v1732 = vmul.f32 %v1707, %v1731
    %v1733 = vmin.f32 %v1732, 1.0
    %v1734 = vmax.f32 %v1733, -1.0
    %v1735 = vmul.f32 %v774, %v774
    %v1736 = vmin.f32 16.0, %v1735
    %v1737 = vmul.f32 %v1736, 2.1237322e-06
    %v1738 = vadd.f32 %v1737, 0.00028619796
    %v1739 = vmul.f32 %v1736, %v1738
    %v1740 = vadd.f32 %v1739, 0.0036580483
    %v1741 = vmul.f32 %v1736, %v1740
    %v1742 = vadd.f32 %v1741, 0.05243302
    %v1743 = vmul.f32 %v1736, %v1742
    %v1744 = vadd.f32 %v1743, 0.18741608
    %v1745 = vmul.f32 %v1736, %v1744
    %v1746 = vadd.f32 %v1745, 1.1283791
    %v1747 = vmul.f32 %v774, %v1746
    %v1748 = vmul.f32 %v1736, 3.8918573e-05
    %v1749 = vadd.f32 %v1748, 0.001143296
    %v1750 = vmul.f32 %v1736, %v1749
    %v1751 = vadd.f32 %v1750, 0.014752088
    %v1752 = vmul.f32 %v1736, %v1751
    %v1753 = vadd.f32 %v1752, 0.112945676
    %v1754 = vmul.f32 %v1736, %v1753
    %v1755 = vadd.f32 %v1754, 0.4994258
    %v1756 = vmul.f32 %v1736, %v1755
    %v1757 = vadd.f32 %v1756, 1.0
    %v1758 = vrcp.pop %v1757
    %v1759 = vmul.f32 %v1757, %v1758
    %v1760 = vsub.f32 1.0, %v1759
    %v1761 = vmul.f32 %v1758, %v1760
    %v1762 = vadd.f32 %v1758, %v1761
    %vm1763 = vweird.f32 %v1757
    %vm1764 = vweird.f32 %v1758
    %vm1765 = vmor %vm1763, %vm1764
    %v1766 = vsel %vm1765, %v1758, %v1762
    %v1767 = vand.u32 2147483647, %v1757
    %vm1768 = vcmp.eq.f32.partialorder %v1767, 8.507059e+37
    %v1769 = vand.u32 %v1757, 2147483648
    %v1770 = vor.u32 1.1754944e-38, %v1769
    %v1771 = vsel %vm1768, %v1770, %v1766
    %v1772 = vmul.f32 %v1747, %v1771
    %v1773 = vmin.f32 %v1772, 1.0
    %v1774 = vmax.f32 %v1773, -1.0
    %v1775 = vmul.f32 %v775, %v775
    %v1776 = vmin.f32 16.0, %v1775
    %v1777 = vmul.f32 %v1776, 2.1237322e-06
    %v1778 = vadd.f32 %v1777, 0.00028619796
    %v1779 = vmul.f32 %v1776, %v1778
    %v1780 = vadd.f32 %v1779, 0.0036580483
    %v1781 = vmul.f32 %v1776, %v1780
    %v1782 = vadd.f32 %v1781, 0.05243302
    %v1783 = vmul.f32 %v1776, %v1782
    %v1784 = vadd.f32 %v1783, 0.18741608
    %v1785 = vmul.f32 %v1776, %v1784
    %v1786 = vadd.f32 %v1785, 1.1283791
    %v1787 = vmul.f32 %v775, %v1786
    %v1788 = vmul.f32 %v1776, 3.8918573e-05
    %v1789 = vadd.f32 %v1788, 0.001143296
    %v1790 = vmul.f32 %v1776, %v1789
    %v1791 = vadd.f32 %v1790, 0.014752088
    %v1792 = vmul.f32 %v1776, %v1791
    %v1793 = vadd.f32 %v1792, 0.112945676
    %v1794 = vmul.f32 %v1776, %v1793
    %v1795 = vadd.f32 %v1794, 0.4994258
    %v1796 = vmul.f32 %v1776, %v1795
    %v1797 = vadd.f32 %v1796, 1.0
    %v1798 = vrcp.pop %v1797
    %v1799 = vmul.f32 %v1797, %v1798
    %v1800 = vsub.f32 1.0, %v1799
    %v1801 = vmul.f32 %v1798, %v1800
    %v1802 = vadd.f32 %v1798, %v1801
    %vm1803 = vweird.f32 %v1797
    %vm1804 = vweird.f32 %v1798
    %vm1805 = vmor %vm1803, %vm1804
    %v1806 = vsel %vm1805, %v1798, %v1802
    %v1807 = vand.u32 2147483647, %v1797
    %vm1808 = vcmp.eq.f32.partialorder %v1807, 8.507059e+37
    %v1809 = vand.u32 %v1797, 2147483648
    %v1810 = vor.u32 1.1754944e-38, %v1809
    %v1811 = vsel %vm1808, %v1810, %v1806
    %v1812 = vmul.f32 %v1787, %v1811
    %v1813 = vmin.f32 %v1812, 1.0
    %v1814 = vmax.f32 %v1813, -1.0
    %v1815 = vmul.f32 %v776, %v776
    %v1816 = vmin.f32 16.0, %v1815
    %v1817 = vmul.f32 %v1816, 2.1237322e-06
    %v1818 = vadd.f32 %v1817, 0.00028619796
    %v1819 = vmul.f32 %v1816, %v1818
    %v1820 = vadd.f32 %v1819, 0.0036580483
    %v1821 = vmul.f32 %v1816, %v1820
    %v1822 = vadd.f32 %v1821, 0.05243302
    %v1823 = vmul.f32 %v1816, %v1822
    %v1824 = vadd.f32 %v1823, 0.18741608
    %v1825 = vmul.f32 %v1816, %v1824
    %v1826 = vadd.f32 %v1825, 1.1283791
    %v1827 = vmul.f32 %v776, %v1826
    %v1828 = vmul.f32 %v1816, 3.8918573e-05
    %v1829 = vadd.f32 %v1828, 0.001143296
    %v1830 = vmul.f32 %v1816, %v1829
    %v1831 = vadd.f32 %v1830, 0.014752088
    %v1832 = vmul.f32 %v1816, %v1831
    %v1833 = vadd.f32 %v1832, 0.112945676
    %v1834 = vmul.f32 %v1816, %v1833
    %v1835 = vadd.f32 %v1834, 0.4994258
    %v1836 = vmul.f32 %v1816, %v1835
    %v1837 = vadd.f32 %v1836, 1.0
    %v1838 = vrcp.pop %v1837
    %v1839 = vmul.f32 %v1837, %v1838
    %v1840 = vsub.f32 1.0, %v1839
    %v1841 = vmul.f32 %v1838, %v1840
    %v1842 = vadd.f32 %v1838, %v1841
    %vm1843 = vweird.f32 %v1837
    %vm1844 = vweird.f32 %v1838
    %vm1845 = vmor %vm1843, %vm1844
    %v1846 = vsel %vm1845, %v1838, %v1842
    %v1847 = vand.u32 2147483647, %v1837
    %vm1848 = vcmp.eq.f32.partialorder %v1847, 8.507059e+37
    %v1849 = vand.u32 %v1837, 2147483648
    %v1850 = vor.u32 1.1754944e-38, %v1849
    %v1851 = vsel %vm1848, %v1850, %v1846
    %v1852 = vmul.f32 %v1827, %v1851
    %v1853 = vmin.f32 %v1852, 1.0
    %v1854 = vmax.f32 %v1853, -1.0
    %v1855 = vmul.f32 %v777, %v777
    %v1856 = vmin.f32 16.0, %v1855
    %v1857 = vmul.f32 %v1856, 2.1237322e-06
    %v1858 = vadd.f32 %v1857, 0.00028619796
    %v1859 = vmul.f32 %v1856, %v1858
    %v1860 = vadd.f32 %v1859, 0.0036580483
    %v1861 = vmul.f32 %v1856, %v1860
    %v1862 = vadd.f32 %v1861, 0.05243302
    %v1863 = vmul.f32 %v1856, %v1862
    %v1864 = vadd.f32 %v1863, 0.18741608
    %v1865 = vmul.f32 %v1856, %v1864
    %v1866 = vadd.f32 %v1865, 1.1283791
    %v1867 = vmul.f32 %v777, %v1866
    %v1868 = vmul.f32 %v1856, 3.8918573e-05
    %v1869 = vadd.f32 %v1868, 0.001143296
    %v1870 = vmul.f32 %v1856, %v1869
    %v1871 = vadd.f32 %v1870, 0.014752088
    %v1872 = vmul.f32 %v1856, %v1871
    %v1873 = vadd.f32 %v1872, 0.112945676
    %v1874 = vmul.f32 %v1856, %v1873
    %v1875 = vadd.f32 %v1874, 0.4994258
    %v1876 = vmul.f32 %v1856, %v1875
    %v1877 = vadd.f32 %v1876, 1.0
    %v1878 = vrcp.pop %v1877
    %v1879 = vmul.f32 %v1877, %v1878
    %v1880 = vsub.f32 1.0, %v1879
    %v1881 = vmul.f32 %v1878, %v1880
    %v1882 = vadd.f32 %v1878, %v1881
    %vm1883 = vweird.f32 %v1877
    %vm1884 = vweird.f32 %v1878
    %vm1885 = vmor %vm1883, %vm1884
    %v1886 = vsel %vm1885, %v1878, %v1882
    %v1887 = vand.u32 2147483647, %v1877
    %vm1888 = vcmp.eq.f32.partialorder %v1887, 8.507059e+37
    %v1889 = vand.u32 %v1877, 2147483648
    %v1890 = vor.u32 1.1754944e-38, %v1889
    %v1891 = vsel %vm1888, %v1890, %v1886
    %v1892 = vmul.f32 %v1867, %v1891
    %v1893 = vmin.f32 %v1892, 1.0
    %v1894 = vmax.f32 %v1893, -1.0
    %v1895 = vmul.f32 %v778, %v778
    %v1896 = vmin.f32 16.0, %v1895
    %v1897 = vmul.f32 %v1896, 2.1237322e-06
    %v1898 = vadd.f32 %v1897, 0.00028619796
    %v1899 = vmul.f32 %v1896, %v1898
    %v1900 = vadd.f32 %v1899, 0.0036580483
    %v1901 = vmul.f32 %v1896, %v1900
    %v1902 = vadd.f32 %v1901, 0.05243302
    %v1903 = vmul.f32 %v1896, %v1902
    %v1904 = vadd.f32 %v1903, 0.18741608
    %v1905 = vmul.f32 %v1896, %v1904
    %v1906 = vadd.f32 %v1905, 1.1283791
    %v1907 = vmul.f32 %v778, %v1906
    %v1908 = vmul.f32 %v1896, 3.8918573e-05
    %v1909 = vadd.f32 %v1908, 0.001143296
    %v1910 = vmul.f32 %v1896, %v1909
    %v1911 = vadd.f32 %v1910, 0.014752088
    %v1912 = vmul.f32 %v1896, %v1911
    %v1913 = vadd.f32 %v1912, 0.112945676
    %v1914 = vmul.f32 %v1896, %v1913
    %v1915 = vadd.f32 %v1914, 0.4994258
    %v1916 = vmul.f32 %v1896, %v1915
    %v1917 = vadd.f32 %v1916, 1.0
    %v1918 = vrcp.pop %v1917
    %v1919 = vmul.f32 %v1917, %v1918
    %v1920 = vsub.f32 1.0, %v1919
    %v1921 = vmul.f32 %v1918, %v1920
    %v1922 = vadd.f32 %v1918, %v1921
    %vm1923 = vweird.f32 %v1917
    %vm1924 = vweird.f32 %v1918
    %vm1925 = vmor %vm1923, %vm1924
    %v1926 = vsel %vm1925, %v1918, %v1922
    %v1927 = vand.u32 2147483647, %v1917
    %vm1928 = vcmp.eq.f32.partialorder %v1927, 8.507059e+37
    %v1929 = vand.u32 %v1917, 2147483648
    %v1930 = vor.u32 1.1754944e-38, %v1929
    %v1931 = vsel %vm1928, %v1930, %v1926
    %v1932 = vmul.f32 %v1907, %v1931
    %v1933 = vmin.f32 %v1932, 1.0
    %v1934 = vmax.f32 %v1933, -1.0
    %v1935 = vmul.f32 %v779, %v779
    %v1936 = vmin.f32 16.0, %v1935
    %v1937 = vmul.f32 %v1936, 2.1237322e-06
    %v1938 = vadd.f32 %v1937, 0.00028619796
    %v1939 = vmul.f32 %v1936, %v1938
    %v1940 = vadd.f32 %v1939, 0.0036580483
    %v1941 = vmul.f32 %v1936, %v1940
    %v1942 = vadd.f32 %v1941, 0.05243302
    %v1943 = vmul.f32 %v1936, %v1942
    %v1944 = vadd.f32 %v1943, 0.18741608
    %v1945 = vmul.f32 %v1936, %v1944
    %v1946 = vadd.f32 %v1945, 1.1283791
    %v1947 = vmul.f32 %v779, %v1946
    %v1948 = vmul.f32 %v1936, 3.8918573e-05
    %v1949 = vadd.f32 %v1948, 0.001143296
    %v1950 = vmul.f32 %v1936, %v1949
    %v1951 = vadd.f32 %v1950, 0.014752088
    %v1952 = vmul.f32 %v1936, %v1951
    %v1953 = vadd.f32 %v1952, 0.112945676
    %v1954 = vmul.f32 %v1936, %v1953
    %v1955 = vadd.f32 %v1954, 0.4994258
    %v1956 = vmul.f32 %v1936, %v1955
    %v1957 = vadd.f32 %v1956, 1.0
    %v1958 = vrcp.pop %v1957
    %v1959 = vmul.f32 %v1957, %v1958
    %v1960 = vsub.f32 1.0, %v1959
    %v1961 = vmul.f32 %v1958, %v1960
    %v1962 = vadd.f32 %v1958, %v1961
    %vm1963 = vweird.f32 %v1957
    %vm1964 = vweird.f32 %v1958
    %vm1965 = vmor %vm1963, %vm1964
    %v1966 = vsel %vm1965, %v1958, %v1962
    %v1967 = vand.u32 2147483647, %v1957
    %vm1968 = vcmp.eq.f32.partialorder %v1967, 8.507059e+37
    %v1969 = vand.u32 %v1957, 2147483648
    %v1970 = vor.u32 1.1754944e-38, %v1969
    %v1971 = vsel %vm1968, %v1970, %v1966
    %v1972 = vmul.f32 %v1947, %v1971
    %v1973 = vmin.f32 %v1972, 1.0
    %v1974 = vmax.f32 %v1973, -1.0
    %v1975 = vmul.f32 %v780, %v780
    %v1976 = vmin.f32 16.0, %v1975
    %v1977 = vmul.f32 %v1976, 2.1237322e-06
    %v1978 = vadd.f32 %v1977, 0.00028619796
    %v1979 = vmul.f32 %v1976, %v1978
    %v1980 = vadd.f32 %v1979, 0.0036580483
    %v1981 = vmul.f32 %v1976, %v1980
    %v1982 = vadd.f32 %v1981, 0.05243302
    %v1983 = vmul.f32 %v1976, %v1982
    %v1984 = vadd.f32 %v1983, 0.18741608
    %v1985 = vmul.f32 %v1976, %v1984
    %v1986 = vadd.f32 %v1985, 1.1283791
    %v1987 = vmul.f32 %v780, %v1986
    %v1988 = vmul.f32 %v1976, 3.8918573e-05
    %v1989 = vadd.f32 %v1988, 0.001143296
    %v1990 = vmul.f32 %v1976, %v1989
    %v1991 = vadd.f32 %v1990, 0.014752088
    %v1992 = vmul.f32 %v1976, %v1991
    %v1993 = vadd.f32 %v1992, 0.112945676
    %v1994 = vmul.f32 %v1976, %v1993
    %v1995 = vadd.f32 %v1994, 0.4994258
    %v1996 = vmul.f32 %v1976, %v1995
    %v1997 = vadd.f32 %v1996, 1.0
    %v1998 = vrcp.pop %v1997
    %v1999 = vmul.f32 %v1997, %v1998
    %v2000 = vsub.f32 1.0, %v1999
    %v2001 = vmul.f32 %v1998, %v2000
    %v2002 = vadd.f32 %v1998, %v2001
    %vm2003 = vweird.f32 %v1997
    %vm2004 = vweird.f32 %v1998
    %vm2005 = vmor %vm2003, %vm2004
    %v2006 = vsel %vm2005, %v1998, %v2002
    %v2007 = vand.u32 2147483647, %v1997
    %vm2008 = vcmp.eq.f32.partialorder %v2007, 8.507059e+37
    %v2009 = vand.u32 %v1997, 2147483648
    %v2010 = vor.u32 1.1754944e-38, %v2009
    %v2011 = vsel %vm2008, %v2010, %v2006
    %v2012 = vmul.f32 %v1987, %v2011
    %v2013 = vmin.f32 %v2012, 1.0
    %v2014 = vmax.f32 %v2013, -1.0
    %v2015 = vmul.f32 %v781, %v781
    %v2016 = vmin.f32 16.0, %v2015
    %v2017 = vmul.f32 %v2016, 2.1237322e-06
    %v2018 = vadd.f32 %v2017, 0.00028619796
    %v2019 = vmul.f32 %v2016, %v2018
    %v2020 = vadd.f32 %v2019, 0.0036580483
    %v2021 = vmul.f32 %v2016, %v2020
    %v2022 = vadd.f32 %v2021, 0.05243302
    %v2023 = vmul.f32 %v2016, %v2022
    %v2024 = vadd.f32 %v2023, 0.18741608
    %v2025 = vmul.f32 %v2016, %v2024
    %v2026 = vadd.f32 %v2025, 1.1283791
    %v2027 = vmul.f32 %v781, %v2026
    %v2028 = vmul.f32 %v2016, 3.8918573e-05
    %v2029 = vadd.f32 %v2028, 0.001143296
    %v2030 = vmul.f32 %v2016, %v2029
    %v2031 = vadd.f32 %v2030, 0.014752088
    %v2032 = vmul.f32 %v2016, %v2031
    %v2033 = vadd.f32 %v2032, 0.112945676
    %v2034 = vmul.f32 %v2016, %v2033
    %v2035 = vadd.f32 %v2034, 0.4994258
    %v2036 = vmul.f32 %v2016, %v2035
    %v2037 = vadd.f32 %v2036, 1.0
    %v2038 = vrcp.pop %v2037
    %v2039 = vmul.f32 %v2037, %v2038
    %v2040 = vsub.f32 1.0, %v2039
    %v2041 = vmul.f32 %v2038, %v2040
    %v2042 = vadd.f32 %v2038, %v2041
    %vm2043 = vweird.f32 %v2037
    %vm2044 = vweird.f32 %v2038
    %vm2045 = vmor %vm2043, %vm2044
    %v2046 = vsel %vm2045, %v2038, %v2042
    %v2047 = vand.u32 2147483647, %v2037
    %vm2048 = vcmp.eq.f32.partialorder %v2047, 8.507059e+37
    %v2049 = vand.u32 %v2037, 2147483648
    %v2050 = vor.u32 1.1754944e-38, %v2049
    %v2051 = vsel %vm2048, %v2050, %v2046
    %v2052 = vmul.f32 %v2027, %v2051
    %v2053 = vmin.f32 %v2052, 1.0
    %v2054 = vmax.f32 %v2053, -1.0
    %v2055 = vmul.f32 %v782, %v782
    %v2056 = vmin.f32 16.0, %v2055
    %v2057 = vmul.f32 %v2056, 2.1237322e-06
    %v2058 = vadd.f32 %v2057, 0.00028619796
    %v2059 = vmul.f32 %v2056, %v2058
    %v2060 = vadd.f32 %v2059, 0.0036580483
    %v2061 = vmul.f32 %v2056, %v2060
    %v2062 = vadd.f32 %v2061, 0.05243302
    %v2063 = vmul.f32 %v2056, %v2062
    %v2064 = vadd.f32 %v2063, 0.18741608
    %v2065 = vmul.f32 %v2056, %v2064
    %v2066 = vadd.f32 %v2065, 1.1283791
    %v2067 = vmul.f32 %v782, %v2066
    %v2068 = vmul.f32 %v2056, 3.8918573e-05
    %v2069 = vadd.f32 %v2068, 0.001143296
    %v2070 = vmul.f32 %v2056, %v2069
    %v2071 = vadd.f32 %v2070, 0.014752088
    %v2072 = vmul.f32 %v2056, %v2071
    %v2073 = vadd.f32 %v2072, 0.112945676
    %v2074 = vmul.f32 %v2056, %v2073
    %v2075 = vadd.f32 %v2074, 0.4994258
    %v2076 = vmul.f32 %v2056, %v2075
    %v2077 = vadd.f32 %v2076, 1.0
    %v2078 = vrcp.pop %v2077
    %v2079 = vmul.f32 %v2077, %v2078
    %v2080 = vsub.f32 1.0, %v2079
    %v2081 = vmul.f32 %v2078, %v2080
    %v2082 = vadd.f32 %v2078, %v2081
    %vm2083 = vweird.f32 %v2077
    %vm2084 = vweird.f32 %v2078
    %vm2085 = vmor %vm2083, %vm2084
    %v2086 = vsel %vm2085, %v2078, %v2082
    %v2087 = vand.u32 2147483647, %v2077
    %vm2088 = vcmp.eq.f32.partialorder %v2087, 8.507059e+37
    %v2089 = vand.u32 %v2077, 2147483648
    %v2090 = vor.u32 1.1754944e-38, %v2089
    %v2091 = vsel %vm2088, %v2090, %v2086
    %v2092 = vmul.f32 %v2067, %v2091
    %v2093 = vmin.f32 %v2092, 1.0
    %v2094 = vmax.f32 %v2093, -1.0
    %v2095 = vmul.f32 %v783, %v783
    %v2096 = vmin.f32 16.0, %v2095
    %v2097 = vmul.f32 %v2096, 2.1237322e-06
    %v2098 = vadd.f32 %v2097, 0.00028619796
    %v2099 = vmul.f32 %v2096, %v2098
    %v2100 = vadd.f32 %v2099, 0.0036580483
    %v2101 = vmul.f32 %v2096, %v2100
    %v2102 = vadd.f32 %v2101, 0.05243302
    %v2103 = vmul.f32 %v2096, %v2102
    %v2104 = vadd.f32 %v2103, 0.18741608
    %v2105 = vmul.f32 %v2096, %v2104
    %v2106 = vadd.f32 %v2105, 1.1283791
    %v2107 = vmul.f32 %v783, %v2106
    %v2108 = vmul.f32 %v2096, 3.8918573e-05
    %v2109 = vadd.f32 %v2108, 0.001143296
    %v2110 = vmul.f32 %v2096, %v2109
    %v2111 = vadd.f32 %v2110, 0.014752088
    %v2112 = vmul.f32 %v2096, %v2111
    %v2113 = vadd.f32 %v2112, 0.112945676
    %v2114 = vmul.f32 %v2096, %v2113
    %v2115 = vadd.f32 %v2114, 0.4994258
    %v2116 = vmul.f32 %v2096, %v2115
    %v2117 = vadd.f32 %v2116, 1.0
    %v2118 = vrcp.pop %v2117
    %v2119 = vmul.f32 %v2117, %v2118
    %v2120 = vsub.f32 1.0, %v2119
    %v2121 = vmul.f32 %v2118, %v2120
    %v2122 = vadd.f32 %v2118, %v2121
    %vm2123 = vweird.f32 %v2117
    %vm2124 = vweird.f32 %v2118
    %vm2125 = vmor %vm2123, %vm2124
    %v2126 = vsel %vm2125, %v2118, %v2122
    %v2127 = vand.u32 2147483647, %v2117
    %vm2128 = vcmp.eq.f32.partialorder %v2127, 8.507059e+37
    %v2129 = vand.u32 %v2117, 2147483648
    %v2130 = vor.u32 1.1754944e-38, %v2129
    %v2131 = vsel %vm2128, %v2130, %v2126
    %v2132 = vmul.f32 %v2107, %v2131
    %v2133 = vmin.f32 %v2132, 1.0
    %v2134 = vmax.f32 %v2133, -1.0
    %v2135 = vmul.f32 %v784, %v784
    %v2136 = vmin.f32 16.0, %v2135
    %v2137 = vmul.f32 %v2136, 2.1237322e-06
    %v2138 = vadd.f32 %v2137, 0.00028619796
    %v2139 = vmul.f32 %v2136, %v2138
    %v2140 = vadd.f32 %v2139, 0.0036580483
    %v2141 = vmul.f32 %v2136, %v2140
    %v2142 = vadd.f32 %v2141, 0.05243302
    %v2143 = vmul.f32 %v2136, %v2142
    %v2144 = vadd.f32 %v2143, 0.18741608
    %v2145 = vmul.f32 %v2136, %v2144
    %v2146 = vadd.f32 %v2145, 1.1283791
    %v2147 = vmul.f32 %v784, %v2146
    %v2148 = vmul.f32 %v2136, 3.8918573e-05
    %v2149 = vadd.f32 %v2148, 0.001143296
    %v2150 = vmul.f32 %v2136, %v2149
    %v2151 = vadd.f32 %v2150, 0.014752088
    %v2152 = vmul.f32 %v2136, %v2151
    %v2153 = vadd.f32 %v2152, 0.112945676
    %v2154 = vmul.f32 %v2136, %v2153
    %v2155 = vadd.f32 %v2154, 0.4994258
    %v2156 = vmul.f32 %v2136, %v2155
    %v2157 = vadd.f32 %v2156, 1.0
    %v2158 = vrcp.pop %v2157
    %v2159 = vmul.f32 %v2157, %v2158
    %v2160 = vsub.f32 1.0, %v2159
    %v2161 = vmul.f32 %v2158, %v2160
    %v2162 = vadd.f32 %v2158, %v2161
    %vm2163 = vweird.f32 %v2157
    %vm2164 = vweird.f32 %v2158
    %vm2165 = vmor %vm2163, %vm2164
    %v2166 = vsel %vm2165, %v2158, %v2162
    %v2167 = vand.u32 2147483647, %v2157
    %vm2168 = vcmp.eq.f32.partialorder %v2167, 8.507059e+37
    %v2169 = vand.u32 %v2157, 2147483648
    %v2170 = vor.u32 1.1754944e-38, %v2169
    %v2171 = vsel %vm2168, %v2170, %v2166
    %v2172 = vmul.f32 %v2147, %v2171
    %v2173 = vmin.f32 %v2172, 1.0
    %v2174 = vmax.f32 %v2173, -1.0
    %v2175 = vmul.f32 %v785, %v785
    %v2176 = vmin.f32 16.0, %v2175
    %v2177 = vmul.f32 %v2176, 2.1237322e-06
    %v2178 = vadd.f32 %v2177, 0.00028619796
    %v2179 = vmul.f32 %v2176, %v2178
    %v2180 = vadd.f32 %v2179, 0.0036580483
    %v2181 = vmul.f32 %v2176, %v2180
    %v2182 = vadd.f32 %v2181, 0.05243302
    %v2183 = vmul.f32 %v2176, %v2182
    %v2184 = vadd.f32 %v2183, 0.18741608
    %v2185 = vmul.f32 %v2176, %v2184
    %v2186 = vadd.f32 %v2185, 1.1283791
    %v2187 = vmul.f32 %v785, %v2186
    %v2188 = vmul.f32 %v2176, 3.8918573e-05
    %v2189 = vadd.f32 %v2188, 0.001143296
    %v2190 = vmul.f32 %v2176, %v2189
    %v2191 = vadd.f32 %v2190, 0.014752088
    %v2192 = vmul.f32 %v2176, %v2191
    %v2193 = vadd.f32 %v2192, 0.112945676
    %v2194 = vmul.f32 %v2176, %v2193
    %v2195 = vadd.f32 %v2194, 0.4994258
    %v2196 = vmul.f32 %v2176, %v2195
    %v2197 = vadd.f32 %v2196, 1.0
    %v2198 = vrcp.pop %v2197
    %v2199 = vmul.f32 %v2197, %v2198
    %v2200 = vsub.f32 1.0, %v2199
    %v2201 = vmul.f32 %v2198, %v2200
    %v2202 = vadd.f32 %v2198, %v2201
    %vm2203 = vweird.f32 %v2197
    %vm2204 = vweird.f32 %v2198
    %vm2205 = vmor %vm2203, %vm2204
    %v2206 = vsel %vm2205, %v2198, %v2202
    %v2207 = vand.u32 2147483647, %v2197
    %vm2208 = vcmp.eq.f32.partialorder %v2207, 8.507059e+37
    %v2209 = vand.u32 %v2197, 2147483648
    %v2210 = vor.u32 1.1754944e-38, %v2209
    %v2211 = vsel %vm2208, %v2210, %v2206
    %v2212 = vmul.f32 %v2187, %v2211
    %v2213 = vmin.f32 %v2212, 1.0
    %v2214 = vmax.f32 %v2213, -1.0
    %v2215 = vmul.f32 %v786, %v786
    %v2216 = vmin.f32 16.0, %v2215
    %v2217 = vmul.f32 %v2216, 2.1237322e-06
    %v2218 = vadd.f32 %v2217, 0.00028619796
    %v2219 = vmul.f32 %v2216, %v2218
    %v2220 = vadd.f32 %v2219, 0.0036580483
    %v2221 = vmul.f32 %v2216, %v2220
    %v2222 = vadd.f32 %v2221, 0.05243302
    %v2223 = vmul.f32 %v2216, %v2222
    %v2224 = vadd.f32 %v2223, 0.18741608
    %v2225 = vmul.f32 %v2216, %v2224
    %v2226 = vadd.f32 %v2225, 1.1283791
    %v2227 = vmul.f32 %v786, %v2226
    %v2228 = vmul.f32 %v2216, 3.8918573e-05
    %v2229 = vadd.f32 %v2228, 0.001143296
    %v2230 = vmul.f32 %v2216, %v2229
    %v2231 = vadd.f32 %v2230, 0.014752088
    %v2232 = vmul.f32 %v2216, %v2231
    %v2233 = vadd.f32 %v2232, 0.112945676
    %v2234 = vmul.f32 %v2216, %v2233
    %v2235 = vadd.f32 %v2234, 0.4994258
    %v2236 = vmul.f32 %v2216, %v2235
    %v2237 = vadd.f32 %v2236, 1.0
    %v2238 = vrcp.pop %v2237
    %v2239 = vmul.f32 %v2237, %v2238
    %v2240 = vsub.f32 1.0, %v2239
    %v2241 = vmul.f32 %v2238, %v2240
    %v2242 = vadd.f32 %v2238, %v2241
    %vm2243 = vweird.f32 %v2237
    %vm2244 = vweird.f32 %v2238
    %vm2245 = vmor %vm2243, %vm2244
    %v2246 = vsel %vm2245, %v2238, %v2242
    %v2247 = vand.u32 2147483647, %v2237
    %vm2248 = vcmp.eq.f32.partialorder %v2247, 8.507059e+37
    %v2249 = vand.u32 %v2237, 2147483648
    %v2250 = vor.u32 1.1754944e-38, %v2249
    %v2251 = vsel %vm2248, %v2250, %v2246
    %v2252 = vmul.f32 %v2227, %v2251
    %v2253 = vmin.f32 %v2252, 1.0
    %v2254 = vmax.f32 %v2253, -1.0
    %v2255 = vmul.f32 %v787, %v787
    %v2256 = vmin.f32 16.0, %v2255
    %v2257 = vmul.f32 %v2256, 2.1237322e-06
    %v2258 = vadd.f32 %v2257, 0.00028619796
    %v2259 = vmul.f32 %v2256, %v2258
    %v2260 = vadd.f32 %v2259, 0.0036580483
    %v2261 = vmul.f32 %v2256, %v2260
    %v2262 = vadd.f32 %v2261, 0.05243302
    %v2263 = vmul.f32 %v2256, %v2262
    %v2264 = vadd.f32 %v2263, 0.18741608
    %v2265 = vmul.f32 %v2256, %v2264
    %v2266 = vadd.f32 %v2265, 1.1283791
    %v2267 = vmul.f32 %v787, %v2266
    %v2268 = vmul.f32 %v2256, 3.8918573e-05
    %v2269 = vadd.f32 %v2268, 0.001143296
    %v2270 = vmul.f32 %v2256, %v2269
    %v2271 = vadd.f32 %v2270, 0.014752088
    %v2272 = vmul.f32 %v2256, %v2271
    %v2273 = vadd.f32 %v2272, 0.112945676
    %v2274 = vmul.f32 %v2256, %v2273
    %v2275 = vadd.f32 %v2274, 0.4994258
    %v2276 = vmul.f32 %v2256, %v2275
    %v2277 = vadd.f32 %v2276, 1.0
    %v2278 = vrcp.pop %v2277
    %v2279 = vmul.f32 %v2277, %v2278
    %v2280 = vsub.f32 1.0, %v2279
    %v2281 = vmul.f32 %v2278, %v2280
    %v2282 = vadd.f32 %v2278, %v2281
    %vm2283 = vweird.f32 %v2277
    %vm2284 = vweird.f32 %v2278
    %vm2285 = vmor %vm2283, %vm2284
    %v2286 = vsel %vm2285, %v2278, %v2282
    %v2287 = vand.u32 2147483647, %v2277
    %vm2288 = vcmp.eq.f32.partialorder %v2287, 8.507059e+37
    %v2289 = vand.u32 %v2277, 2147483648
    %v2290 = vor.u32 1.1754944e-38, %v2289
    %v2291 = vsel %vm2288, %v2290, %v2286
    %v2292 = vmul.f32 %v2267, %v2291
    %v2293 = vmin.f32 %v2292, 1.0
    %v2294 = vmax.f32 %v2293, -1.0
    %v2295 = vmul.f32 %v788, %v788
    %v2296 = vmin.f32 16.0, %v2295
    %v2297 = vmul.f32 %v2296, 2.1237322e-06
    %v2298 = vadd.f32 %v2297, 0.00028619796
    %v2299 = vmul.f32 %v2296, %v2298
    %v2300 = vadd.f32 %v2299, 0.0036580483
    %v2301 = vmul.f32 %v2296, %v2300
    %v2302 = vadd.f32 %v2301, 0.05243302
    %v2303 = vmul.f32 %v2296, %v2302
    %v2304 = vadd.f32 %v2303, 0.18741608
    %v2305 = vmul.f32 %v2296, %v2304
    %v2306 = vadd.f32 %v2305, 1.1283791
    %v2307 = vmul.f32 %v788, %v2306
    %v2308 = vmul.f32 %v2296, 3.8918573e-05
    %v2309 = vadd.f32 %v2308, 0.001143296
    %v2310 = vmul.f32 %v2296, %v2309
    %v2311 = vadd.f32 %v2310, 0.014752088
    %v2312 = vmul.f32 %v2296, %v2311
    %v2313 = vadd.f32 %v2312, 0.112945676
    %v2314 = vmul.f32 %v2296, %v2313
    %v2315 = vadd.f32 %v2314, 0.4994258
    %v2316 = vmul.f32 %v2296, %v2315
    %v2317 = vadd.f32 %v2316, 1.0
    %v2318 = vrcp.pop %v2317
    %v2319 = vmul.f32 %v2317, %v2318
    %v2320 = vsub.f32 1.0, %v2319
    %v2321 = vmul.f32 %v2318, %v2320
    %v2322 = vadd.f32 %v2318, %v2321
    %vm2323 = vweird.f32 %v2317
    %vm2324 = vweird.f32 %v2318
    %vm2325 = vmor %vm2323, %vm2324
    %v2326 = vsel %vm2325, %v2318, %v2322
    %v2327 = vand.u32 2147483647, %v2317
    %vm2328 = vcmp.eq.f32.partialorder %v2327, 8.507059e+37
    %v2329 = vand.u32 %v2317, 2147483648
    %v2330 = vor.u32 1.1754944e-38, %v2329
    %v2331 = vsel %vm2328, %v2330, %v2326
    %v2332 = vmul.f32 %v2307, %v2331
    %v2333 = vmin.f32 %v2332, 1.0
    %v2334 = vmax.f32 %v2333, -1.0
    %v2335 = vmul.f32 %v789, %v789
    %v2336 = vmin.f32 16.0, %v2335
    %v2337 = vmul.f32 %v2336, 2.1237322e-06
    %v2338 = vadd.f32 %v2337, 0.00028619796
    %v2339 = vmul.f32 %v2336, %v2338
    %v2340 = vadd.f32 %v2339, 0.0036580483
    %v2341 = vmul.f32 %v2336, %v2340
    %v2342 = vadd.f32 %v2341, 0.05243302
    %v2343 = vmul.f32 %v2336, %v2342
    %v2344 = vadd.f32 %v2343, 0.18741608
    %v2345 = vmul.f32 %v2336, %v2344
    %v2346 = vadd.f32 %v2345, 1.1283791
    %v2347 = vmul.f32 %v789, %v2346
    %v2348 = vmul.f32 %v2336, 3.8918573e-05
    %v2349 = vadd.f32 %v2348, 0.001143296
    %v2350 = vmul.f32 %v2336, %v2349
    %v2351 = vadd.f32 %v2350, 0.014752088
    %v2352 = vmul.f32 %v2336, %v2351
    %v2353 = vadd.f32 %v2352, 0.112945676
    %v2354 = vmul.f32 %v2336, %v2353
    %v2355 = vadd.f32 %v2354, 0.4994258
    %v2356 = vmul.f32 %v2336, %v2355
    %v2357 = vadd.f32 %v2356, 1.0
    %v2358 = vrcp.pop %v2357
    %v2359 = vmul.f32 %v2357, %v2358
    %v2360 = vsub.f32 1.0, %v2359
    %v2361 = vmul.f32 %v2358, %v2360
    %v2362 = vadd.f32 %v2358, %v2361
    %vm2363 = vweird.f32 %v2357
    %vm2364 = vweird.f32 %v2358
    %vm2365 = vmor %vm2363, %vm2364
    %v2366 = vsel %vm2365, %v2358, %v2362
    %v2367 = vand.u32 2147483647, %v2357
    %vm2368 = vcmp.eq.f32.partialorder %v2367, 8.507059e+37
    %v2369 = vand.u32 %v2357, 2147483648
    %v2370 = vor.u32 1.1754944e-38, %v2369
    %v2371 = vsel %vm2368, %v2370, %v2366
    %v2372 = vmul.f32 %v2347, %v2371
    %v2373 = vmin.f32 %v2372, 1.0
    %v2374 = vmax.f32 %v2373, -1.0
    %v2375 = vmul.f32 %v790, %v790
    %v2376 = vmin.f32 16.0, %v2375
    %v2377 = vmul.f32 %v2376, 2.1237322e-06
    %v2378 = vadd.f32 %v2377, 0.00028619796
    %v2379 = vmul.f32 %v2376, %v2378
    %v2380 = vadd.f32 %v2379, 0.0036580483
    %v2381 = vmul.f32 %v2376, %v2380
    %v2382 = vadd.f32 %v2381, 0.05243302
    %v2383 = vmul.f32 %v2376, %v2382
    %v2384 = vadd.f32 %v2383, 0.18741608
    %v2385 = vmul.f32 %v2376, %v2384
    %v2386 = vadd.f32 %v2385, 1.1283791
    %v2387 = vmul.f32 %v790, %v2386
    %v2388 = vmul.f32 %v2376, 3.8918573e-05
    %v2389 = vadd.f32 %v2388, 0.001143296
    %v2390 = vmul.f32 %v2376, %v2389
    %v2391 = vadd.f32 %v2390, 0.014752088
    %v2392 = vmul.f32 %v2376, %v2391
    %v2393 = vadd.f32 %v2392, 0.112945676
    %v2394 = vmul.f32 %v2376, %v2393
    %v2395 = vadd.f32 %v2394, 0.4994258
    %v2396 = vmul.f32 %v2376, %v2395
    %v2397 = vadd.f32 %v2396, 1.0
    %v2398 = vrcp.pop %v2397
    %v2399 = vmul.f32 %v2397, %v2398
    %v2400 = vsub.f32 1.0, %v2399
    %v2401 = vmul.f32 %v2398, %v2400
    %v2402 = vadd.f32 %v2398, %v2401
    %vm2403 = vweird.f32 %v2397
    %vm2404 = vweird.f32 %v2398
    %vm2405 = vmor %vm2403, %vm2404
    %v2406 = vsel %vm2405, %v2398, %v2402
    %v2407 = vand.u32 2147483647, %v2397
    %vm2408 = vcmp.eq.f32.partialorder %v2407, 8.507059e+37
    %v2409 = vand.u32 %v2397, 2147483648
    %v2410 = vor.u32 1.1754944e-38, %v2409
    %v2411 = vsel %vm2408, %v2410, %v2406
    %v2412 = vmul.f32 %v2387, %v2411
    %v2413 = vmin.f32 %v2412, 1.0
    %v2414 = vmax.f32 %v2413, -1.0
    %v2415 = vmul.f32 %v791, %v791
    %v2416 = vmin.f32 16.0, %v2415
    %v2417 = vmul.f32 %v2416, 2.1237322e-06
    %v2418 = vadd.f32 %v2417, 0.00028619796
    %v2419 = vmul.f32 %v2416, %v2418
    %v2420 = vadd.f32 %v2419, 0.0036580483
    %v2421 = vmul.f32 %v2416, %v2420
    %v2422 = vadd.f32 %v2421, 0.05243302
    %v2423 = vmul.f32 %v2416, %v2422
    %v2424 = vadd.f32 %v2423, 0.18741608
    %v2425 = vmul.f32 %v2416, %v2424
    %v2426 = vadd.f32 %v2425, 1.1283791
    %v2427 = vmul.f32 %v791, %v2426
    %v2428 = vmul.f32 %v2416, 3.8918573e-05
    %v2429 = vadd.f32 %v2428, 0.001143296
    %v2430 = vmul.f32 %v2416, %v2429
    %v2431 = vadd.f32 %v2430, 0.014752088
    %v2432 = vmul.f32 %v2416, %v2431
    %v2433 = vadd.f32 %v2432, 0.112945676
    %v2434 = vmul.f32 %v2416, %v2433
    %v2435 = vadd.f32 %v2434, 0.4994258
    %v2436 = vmul.f32 %v2416, %v2435
    %v2437 = vadd.f32 %v2436, 1.0
    %v2438 = vrcp.pop %v2437
    %v2439 = vmul.f32 %v2437, %v2438
    %v2440 = vsub.f32 1.0, %v2439
    %v2441 = vmul.f32 %v2438, %v2440
    %v2442 = vadd.f32 %v2438, %v2441
    %vm2443 = vweird.f32 %v2437
    %vm2444 = vweird.f32 %v2438
    %vm2445 = vmor %vm2443, %vm2444
    %v2446 = vsel %vm2445, %v2438, %v2442
    %v2447 = vand.u32 2147483647, %v2437
    %vm2448 = vcmp.eq.f32.partialorder %v2447, 8.507059e+37
    %v2449 = vand.u32 %v2437, 2147483648
    %v2450 = vor.u32 1.1754944e-38, %v2449
    %v2451 = vsel %vm2448, %v2450, %v2446
    %v2452 = vmul.f32 %v2427, %v2451
    %v2453 = vmin.f32 %v2452, 1.0
    %v2454 = vmax.f32 %v2453, -1.0
    %v2455 = vmul.f32 %v792, %v792
    %v2456 = vmin.f32 16.0, %v2455
    %v2457 = vmul.f32 %v2456, 2.1237322e-06
    %v2458 = vadd.f32 %v2457, 0.00028619796
    %v2459 = vmul.f32 %v2456, %v2458
    %v2460 = vadd.f32 %v2459, 0.0036580483
    %v2461 = vmul.f32 %v2456, %v2460
    %v2462 = vadd.f32 %v2461, 0.05243302
    %v2463 = vmul.f32 %v2456, %v2462
    %v2464 = vadd.f32 %v2463, 0.18741608
    %v2465 = vmul.f32 %v2456, %v2464
    %v2466 = vadd.f32 %v2465, 1.1283791
    %v2467 = vmul.f32 %v792, %v2466
    %v2468 = vmul.f32 %v2456, 3.8918573e-05
    %v2469 = vadd.f32 %v2468, 0.001143296
    %v2470 = vmul.f32 %v2456, %v2469
    %v2471 = vadd.f32 %v2470, 0.014752088
    %v2472 = vmul.f32 %v2456, %v2471
    %v2473 = vadd.f32 %v2472, 0.112945676
    %v2474 = vmul.f32 %v2456, %v2473
    %v2475 = vadd.f32 %v2474, 0.4994258
    %v2476 = vmul.f32 %v2456, %v2475
    %v2477 = vadd.f32 %v2476, 1.0
    %v2478 = vrcp.pop %v2477
    %v2479 = vmul.f32 %v2477, %v2478
    %v2480 = vsub.f32 1.0, %v2479
    %v2481 = vmul.f32 %v2478, %v2480
    %v2482 = vadd.f32 %v2478, %v2481
    %vm2483 = vweird.f32 %v2477
    %vm2484 = vweird.f32 %v2478
    %vm2485 = vmor %vm2483, %vm2484
    %v2486 = vsel %vm2485, %v2478, %v2482
    %v2487 = vand.u32 2147483647, %v2477
    %vm2488 = vcmp.eq.f32.partialorder %v2487, 8.507059e+37
    %v2489 = vand.u32 %v2477, 2147483648
    %v2490 = vor.u32 1.1754944e-38, %v2489
    %v2491 = vsel %vm2488, %v2490, %v2486
    %v2492 = vmul.f32 %v2467, %v2491
    %v2493 = vmin.f32 %v2492, 1.0
    %v2494 = vmax.f32 %v2493, -1.0
    %v2495 = vmul.f32 %v793, %v793
    %v2496 = vmin.f32 16.0, %v2495
    %v2497 = vmul.f32 %v2496, 2.1237322e-06
    %v2498 = vadd.f32 %v2497, 0.00028619796
    %v2499 = vmul.f32 %v2496, %v2498
    %v2500 = vadd.f32 %v2499, 0.0036580483
    %v2501 = vmul.f32 %v2496, %v2500
    %v2502 = vadd.f32 %v2501, 0.05243302
    %v2503 = vmul.f32 %v2496, %v2502
    %v2504 = vadd.f32 %v2503, 0.18741608
    %v2505 = vmul.f32 %v2496, %v2504
    %v2506 = vadd.f32 %v2505, 1.1283791
    %v2507 = vmul.f32 %v793, %v2506
    %v2508 = vmul.f32 %v2496, 3.8918573e-05
    %v2509 = vadd.f32 %v2508, 0.001143296
    %v2510 = vmul.f32 %v2496, %v2509
    %v2511 = vadd.f32 %v2510, 0.014752088
    %v2512 = vmul.f32 %v2496, %v2511
    %v2513 = vadd.f32 %v2512, 0.112945676
    %v2514 = vmul.f32 %v2496, %v2513
    %v2515 = vadd.f32 %v2514, 0.4994258
    %v2516 = vmul.f32 %v2496, %v2515
    %v2517 = vadd.f32 %v2516, 1.0
    %v2518 = vrcp.pop %v2517
    %v2519 = vmul.f32 %v2517, %v2518
    %v2520 = vsub.f32 1.0, %v2519
    %v2521 = vmul.f32 %v2518, %v2520
    %v2522 = vadd.f32 %v2518, %v2521
    %vm2523 = vweird.f32 %v2517
    %vm2524 = vweird.f32 %v2518
    %vm2525 = vmor %vm2523, %vm2524
    %v2526 = vsel %vm2525, %v2518, %v2522
    %v2527 = vand.u32 2147483647, %v2517
    %vm2528 = vcmp.eq.f32.partialorder %v2527, 8.507059e+37
    %v2529 = vand.u32 %v2517, 2147483648
    %v2530 = vor.u32 1.1754944e-38, %v2529
    %v2531 = vsel %vm2528, %v2530, %v2526
    %v2532 = vmul.f32 %v2507, %v2531
    %v2533 = vmin.f32 %v2532, 1.0
    %v2534 = vmax.f32 %v2533, -1.0
    %v2535 = vmul.f32 %v794, %v794
    %v2536 = vmin.f32 16.0, %v2535
    %v2537 = vmul.f32 %v2536, 2.1237322e-06
    %v2538 = vadd.f32 %v2537, 0.00028619796
    %v2539 = vmul.f32 %v2536, %v2538
    %v2540 = vadd.f32 %v2539, 0.0036580483
    %v2541 = vmul.f32 %v2536, %v2540
    %v2542 = vadd.f32 %v2541, 0.05243302
    %v2543 = vmul.f32 %v2536, %v2542
    %v2544 = vadd.f32 %v2543, 0.18741608
    %v2545 = vmul.f32 %v2536, %v2544
    %v2546 = vadd.f32 %v2545, 1.1283791
    %v2547 = vmul.f32 %v794, %v2546
    %v2548 = vmul.f32 %v2536, 3.8918573e-05
    %v2549 = vadd.f32 %v2548, 0.001143296
    %v2550 = vmul.f32 %v2536, %v2549
    %v2551 = vadd.f32 %v2550, 0.014752088
    %v2552 = vmul.f32 %v2536, %v2551
    %v2553 = vadd.f32 %v2552, 0.112945676
    %v2554 = vmul.f32 %v2536, %v2553
    %v2555 = vadd.f32 %v2554, 0.4994258
    %v2556 = vmul.f32 %v2536, %v2555
    %v2557 = vadd.f32 %v2556, 1.0
    %v2558 = vrcp.pop %v2557
    %v2559 = vmul.f32 %v2557, %v2558
    %v2560 = vsub.f32 1.0, %v2559
    %v2561 = vmul.f32 %v2558, %v2560
    %v2562 = vadd.f32 %v2558, %v2561
    %vm2563 = vweird.f32 %v2557
    %vm2564 = vweird.f32 %v2558
    %vm2565 = vmor %vm2563, %vm2564
    %v2566 = vsel %vm2565, %v2558, %v2562
    %v2567 = vand.u32 2147483647, %v2557
    %vm2568 = vcmp.eq.f32.partialorder %v2567, 8.507059e+37
    %v2569 = vand.u32 %v2557, 2147483648
    %v2570 = vor.u32 1.1754944e-38, %v2569
    %v2571 = vsel %vm2568, %v2570, %v2566
    %v2572 = vmul.f32 %v2547, %v2571
    %v2573 = vmin.f32 %v2572, 1.0
    %v2574 = vmax.f32 %v2573, -1.0
    %v2575 = vmul.f32 %v795, %v795
    %v2576 = vmin.f32 16.0, %v2575
    %v2577 = vmul.f32 %v2576, 2.1237322e-06
    %v2578 = vadd.f32 %v2577, 0.00028619796
    %v2579 = vmul.f32 %v2576, %v2578
    %v2580 = vadd.f32 %v2579, 0.0036580483
    %v2581 = vmul.f32 %v2576, %v2580
    %v2582 = vadd.f32 %v2581, 0.05243302
    %v2583 = vmul.f32 %v2576, %v2582
    %v2584 = vadd.f32 %v2583, 0.18741608
    %v2585 = vmul.f32 %v2576, %v2584
    %v2586 = vadd.f32 %v2585, 1.1283791
    %v2587 = vmul.f32 %v795, %v2586
    %v2588 = vmul.f32 %v2576, 3.8918573e-05
    %v2589 = vadd.f32 %v2588, 0.001143296
    %v2590 = vmul.f32 %v2576, %v2589
    %v2591 = vadd.f32 %v2590, 0.014752088
    %v2592 = vmul.f32 %v2576, %v2591
    %v2593 = vadd.f32 %v2592, 0.112945676
    %v2594 = vmul.f32 %v2576, %v2593
    %v2595 = vadd.f32 %v2594, 0.4994258
    %v2596 = vmul.f32 %v2576, %v2595
    %v2597 = vadd.f32 %v2596, 1.0
    %v2598 = vrcp.pop %v2597
    %v2599 = vmul.f32 %v2597, %v2598
    %v2600 = vsub.f32 1.0, %v2599
    %v2601 = vmul.f32 %v2598, %v2600
    %v2602 = vadd.f32 %v2598, %v2601
    %vm2603 = vweird.f32 %v2597
    %vm2604 = vweird.f32 %v2598
    %vm2605 = vmor %vm2603, %vm2604
    %v2606 = vsel %vm2605, %v2598, %v2602
    %v2607 = vand.u32 2147483647, %v2597
    %vm2608 = vcmp.eq.f32.partialorder %v2607, 8.507059e+37
    %v2609 = vand.u32 %v2597, 2147483648
    %v2610 = vor.u32 1.1754944e-38, %v2609
    %v2611 = vsel %vm2608, %v2610, %v2606
    %v2612 = vmul.f32 %v2587, %v2611
    %v2613 = vmin.f32 %v2612, 1.0
    %v2614 = vmax.f32 %v2613, -1.0
    %v2615 = vmul.f32 %v796, %v796
    %v2616 = vmin.f32 16.0, %v2615
    %v2617 = vmul.f32 %v2616, 2.1237322e-06
    %v2618 = vadd.f32 %v2617, 0.00028619796
    %v2619 = vmul.f32 %v2616, %v2618
    %v2620 = vadd.f32 %v2619, 0.0036580483
    %v2621 = vmul.f32 %v2616, %v2620
    %v2622 = vadd.f32 %v2621, 0.05243302
    %v2623 = vmul.f32 %v2616, %v2622
    %v2624 = vadd.f32 %v2623, 0.18741608
    %v2625 = vmul.f32 %v2616, %v2624
    %v2626 = vadd.f32 %v2625, 1.1283791
    %v2627 = vmul.f32 %v796, %v2626
    %v2628 = vmul.f32 %v2616, 3.8918573e-05
    %v2629 = vadd.f32 %v2628, 0.001143296
    %v2630 = vmul.f32 %v2616, %v2629
    %v2631 = vadd.f32 %v2630, 0.014752088
    %v2632 = vmul.f32 %v2616, %v2631
    %v2633 = vadd.f32 %v2632, 0.112945676
    %v2634 = vmul.f32 %v2616, %v2633
    %v2635 = vadd.f32 %v2634, 0.4994258
    %v2636 = vmul.f32 %v2616, %v2635
    %v2637 = vadd.f32 %v2636, 1.0
    %v2638 = vrcp.pop %v2637
    %v2639 = vmul.f32 %v2637, %v2638
    %v2640 = vsub.f32 1.0, %v2639
    %v2641 = vmul.f32 %v2638, %v2640
    %v2642 = vadd.f32 %v2638, %v2641
    %vm2643 = vweird.f32 %v2637
    %vm2644 = vweird.f32 %v2638
    %vm2645 = vmor %vm2643, %vm2644
    %v2646 = vsel %vm2645, %v2638, %v2642
    %v2647 = vand.u32 2147483647, %v2637
    %vm2648 = vcmp.eq.f32.partialorder %v2647, 8.507059e+37
    %v2649 = vand.u32 %v2637, 2147483648
    %v2650 = vor.u32 1.1754944e-38, %v2649
    %v2651 = vsel %vm2648, %v2650, %v2646
    %v2652 = vmul.f32 %v2627, %v2651
    %v2653 = vmin.f32 %v2652, 1.0
    %v2654 = vmax.f32 %v2653, -1.0
    %v2655 = vmul.f32 %v797, %v797
    %v2656 = vmin.f32 16.0, %v2655
    %v2657 = vmul.f32 %v2656, 2.1237322e-06
    %v2658 = vadd.f32 %v2657, 0.00028619796
    %v2659 = vmul.f32 %v2656, %v2658
    %v2660 = vadd.f32 %v2659, 0.0036580483
    %v2661 = vmul.f32 %v2656, %v2660
    %v2662 = vadd.f32 %v2661, 0.05243302
    %v2663 = vmul.f32 %v2656, %v2662
    %v2664 = vadd.f32 %v2663, 0.18741608
    %v2665 = vmul.f32 %v2656, %v2664
    %v2666 = vadd.f32 %v2665, 1.1283791
    %v2667 = vmul.f32 %v797, %v2666
    %v2668 = vmul.f32 %v2656, 3.8918573e-05
    %v2669 = vadd.f32 %v2668, 0.001143296
    %v2670 = vmul.f32 %v2656, %v2669
    %v2671 = vadd.f32 %v2670, 0.014752088
    %v2672 = vmul.f32 %v2656, %v2671
    %v2673 = vadd.f32 %v2672, 0.112945676
    %v2674 = vmul.f32 %v2656, %v2673
    %v2675 = vadd.f32 %v2674, 0.4994258
    %v2676 = vmul.f32 %v2656, %v2675
    %v2677 = vadd.f32 %v2676, 1.0
    %v2678 = vrcp.pop %v2677
    %v2679 = vmul.f32 %v2677, %v2678
    %v2680 = vsub.f32 1.0, %v2679
    %v2681 = vmul.f32 %v2678, %v2680
    %v2682 = vadd.f32 %v2678, %v2681
    %vm2683 = vweird.f32 %v2677
    %vm2684 = vweird.f32 %v2678
    %vm2685 = vmor %vm2683, %vm2684
    %v2686 = vsel %vm2685, %v2678, %v2682
    %v2687 = vand.u32 2147483647, %v2677
    %vm2688 = vcmp.eq.f32.partialorder %v2687, 8.507059e+37
    %v2689 = vand.u32 %v2677, 2147483648
    %v2690 = vor.u32 1.1754944e-38, %v2689
    %v2691 = vsel %vm2688, %v2690, %v2686
    %v2692 = vmul.f32 %v2667, %v2691
    %v2693 = vmin.f32 %v2692, 1.0
    %v2694 = vmax.f32 %v2693, -1.0
    %v2695 = vmul.f32 %v798, %v798
    %v2696 = vmin.f32 16.0, %v2695
    %v2697 = vmul.f32 %v2696, 2.1237322e-06
    %v2698 = vadd.f32 %v2697, 0.00028619796
    %v2699 = vmul.f32 %v2696, %v2698
    %v2700 = vadd.f32 %v2699, 0.0036580483
    %v2701 = vmul.f32 %v2696, %v2700
    %v2702 = vadd.f32 %v2701, 0.05243302
    %v2703 = vmul.f32 %v2696, %v2702
    %v2704 = vadd.f32 %v2703, 0.18741608
    %v2705 = vmul.f32 %v2696, %v2704
    %v2706 = vadd.f32 %v2705, 1.1283791
    %v2707 = vmul.f32 %v798, %v2706
    %v2708 = vmul.f32 %v2696, 3.8918573e-05
    %v2709 = vadd.f32 %v2708, 0.001143296
    %v2710 = vmul.f32 %v2696, %v2709
    %v2711 = vadd.f32 %v2710, 0.014752088
    %v2712 = vmul.f32 %v2696, %v2711
    %v2713 = vadd.f32 %v2712, 0.112945676
    %v2714 = vmul.f32 %v2696, %v2713
    %v2715 = vadd.f32 %v2714, 0.4994258
    %v2716 = vmul.f32 %v2696, %v2715
    %v2717 = vadd.f32 %v2716, 1.0
    %v2718 = vrcp.pop %v2717
    %v2719 = vmul.f32 %v2717, %v2718
    %v2720 = vsub.f32 1.0, %v2719
    %v2721 = vmul.f32 %v2718, %v2720
    %v2722 = vadd.f32 %v2718, %v2721
    %vm2723 = vweird.f32 %v2717
    %vm2724 = vweird.f32 %v2718
    %vm2725 = vmor %vm2723, %vm2724
    %v2726 = vsel %vm2725, %v2718, %v2722
    %v2727 = vand.u32 2147483647, %v2717
    %vm2728 = vcmp.eq.f32.partialorder %v2727, 8.507059e+37
    %v2729 = vand.u32 %v2717, 2147483648
    %v2730 = vor.u32 1.1754944e-38, %v2729
    %v2731 = vsel %vm2728, %v2730, %v2726
    %v2732 = vmul.f32 %v2707, %v2731
    %v2733 = vmin.f32 %v2732, 1.0
    %v2734 = vmax.f32 %v2733, -1.0
    %v2735 = vmul.f32 %v799, %v799
    %v2736 = vmin.f32 16.0, %v2735
    %v2737 = vmul.f32 %v2736, 2.1237322e-06
    %v2738 = vadd.f32 %v2737, 0.00028619796
    %v2739 = vmul.f32 %v2736, %v2738
    %v2740 = vadd.f32 %v2739, 0.0036580483
    %v2741 = vmul.f32 %v2736, %v2740
    %v2742 = vadd.f32 %v2741, 0.05243302
    %v2743 = vmul.f32 %v2736, %v2742
    %v2744 = vadd.f32 %v2743, 0.18741608
    %v2745 = vmul.f32 %v2736, %v2744
    %v2746 = vadd.f32 %v2745, 1.1283791
    %v2747 = vmul.f32 %v799, %v2746
    %v2748 = vmul.f32 %v2736, 3.8918573e-05
    %v2749 = vadd.f32 %v2748, 0.001143296
    %v2750 = vmul.f32 %v2736, %v2749
    %v2751 = vadd.f32 %v2750, 0.014752088
    %v2752 = vmul.f32 %v2736, %v2751
    %v2753 = vadd.f32 %v2752, 0.112945676
    %v2754 = vmul.f32 %v2736, %v2753
    %v2755 = vadd.f32 %v2754, 0.4994258
    %v2756 = vmul.f32 %v2736, %v2755
    %v2757 = vadd.f32 %v2756, 1.0
    %v2758 = vrcp.pop %v2757
    %v2759 = vmul.f32 %v2757, %v2758
    %v2760 = vsub.f32 1.0, %v2759
    %v2761 = vmul.f32 %v2758, %v2760
    %v2762 = vadd.f32 %v2758, %v2761
    %vm2763 = vweird.f32 %v2757
    %vm2764 = vweird.f32 %v2758
    %vm2765 = vmor %vm2763, %vm2764
    %v2766 = vsel %vm2765, %v2758, %v2762
    %v2767 = vand.u32 2147483647, %v2757
    %vm2768 = vcmp.eq.f32.partialorder %v2767, 8.507059e+37
    %v2769 = vand.u32 %v2757, 2147483648
    %v2770 = vor.u32 1.1754944e-38, %v2769
    %v2771 = vsel %vm2768, %v2770, %v2766
    %v2772 = vmul.f32 %v2747, %v2771
    %v2773 = vmin.f32 %v2772, 1.0
    %v2774 = vmax.f32 %v2773, -1.0
    %v2775 = vmul.f32 %v800, %v800
    %v2776 = vmin.f32 16.0, %v2775
    %v2777 = vmul.f32 %v2776, 2.1237322e-06
    %v2778 = vadd.f32 %v2777, 0.00028619796
    %v2779 = vmul.f32 %v2776, %v2778
    %v2780 = vadd.f32 %v2779, 0.0036580483
    %v2781 = vmul.f32 %v2776, %v2780
    %v2782 = vadd.f32 %v2781, 0.05243302
    %v2783 = vmul.f32 %v2776, %v2782
    %v2784 = vadd.f32 %v2783, 0.18741608
    %v2785 = vmul.f32 %v2776, %v2784
    %v2786 = vadd.f32 %v2785, 1.1283791
    %v2787 = vmul.f32 %v800, %v2786
    %v2788 = vmul.f32 %v2776, 3.8918573e-05
    %v2789 = vadd.f32 %v2788, 0.001143296
    %v2790 = vmul.f32 %v2776, %v2789
    %v2791 = vadd.f32 %v2790, 0.014752088
    %v2792 = vmul.f32 %v2776, %v2791
    %v2793 = vadd.f32 %v2792, 0.112945676
    %v2794 = vmul.f32 %v2776, %v2793
    %v2795 = vadd.f32 %v2794, 0.4994258
    %v2796 = vmul.f32 %v2776, %v2795
    %v2797 = vadd.f32 %v2796, 1.0
    %v2798 = vrcp.pop %v2797
    %v2799 = vmul.f32 %v2797, %v2798
    %v2800 = vsub.f32 1.0, %v2799
    %v2801 = vmul.f32 %v2798, %v2800
    %v2802 = vadd.f32 %v2798, %v2801
    %vm2803 = vweird.f32 %v2797
    %vm2804 = vweird.f32 %v2798
    %vm2805 = vmor %vm2803, %vm2804
    %v2806 = vsel %vm2805, %v2798, %v2802
    %v2807 = vand.u32 2147483647, %v2797
    %vm2808 = vcmp.eq.f32.partialorder %v2807, 8.507059e+37
    %v2809 = vand.u32 %v2797, 2147483648
    %v2810 = vor.u32 1.1754944e-38, %v2809
    %v2811 = vsel %vm2808, %v2810, %v2806
    %v2812 = vmul.f32 %v2787, %v2811
    %v2813 = vmin.f32 %v2812, 1.0
    %v2814 = vmax.f32 %v2813, -1.0
    %v2815 = vmul.f32 %v801, %v801
    %v2816 = vmin.f32 16.0, %v2815
    %v2817 = vmul.f32 %v2816, 2.1237322e-06
    %v2818 = vadd.f32 %v2817, 0.00028619796
    %v2819 = vmul.f32 %v2816, %v2818
    %v2820 = vadd.f32 %v2819, 0.0036580483
    %v2821 = vmul.f32 %v2816, %v2820
    %v2822 = vadd.f32 %v2821, 0.05243302
    %v2823 = vmul.f32 %v2816, %v2822
    %v2824 = vadd.f32 %v2823, 0.18741608
    %v2825 = vmul.f32 %v2816, %v2824
    %v2826 = vadd.f32 %v2825, 1.1283791
    %v2827 = vmul.f32 %v801, %v2826
    %v2828 = vmul.f32 %v2816, 3.8918573e-05
    %v2829 = vadd.f32 %v2828, 0.001143296
    %v2830 = vmul.f32 %v2816, %v2829
    %v2831 = vadd.f32 %v2830, 0.014752088
    %v2832 = vmul.f32 %v2816, %v2831
    %v2833 = vadd.f32 %v2832, 0.112945676
    %v2834 = vmul.f32 %v2816, %v2833
    %v2835 = vadd.f32 %v2834, 0.4994258
    %v2836 = vmul.f32 %v2816, %v2835
    %v2837 = vadd.f32 %v2836, 1.0
    %v2838 = vrcp.pop %v2837
    %v2839 = vmul.f32 %v2837, %v2838
    %v2840 = vsub.f32 1.0, %v2839
    %v2841 = vmul.f32 %v2838, %v2840
    %v2842 = vadd.f32 %v2838, %v2841
    %vm2843 = vweird.f32 %v2837
    %vm2844 = vweird.f32 %v2838
    %vm2845 = vmor %vm2843, %vm2844
    %v2846 = vsel %vm2845, %v2838, %v2842
    %v2847 = vand.u32 2147483647, %v2837
    %vm2848 = vcmp.eq.f32.partialorder %v2847, 8.507059e+37
    %v2849 = vand.u32 %v2837, 2147483648
    %v2850 = vor.u32 1.1754944e-38, %v2849
    %v2851 = vsel %vm2848, %v2850, %v2846
    %v2852 = vmul.f32 %v2827, %v2851
    %v2853 = vmin.f32 %v2852, 1.0
    %v2854 = vmax.f32 %v2853, -1.0
    %v2855 = vmul.f32 %v802, %v802
    %v2856 = vmin.f32 16.0, %v2855
    %v2857 = vmul.f32 %v2856, 2.1237322e-06
    %v2858 = vadd.f32 %v2857, 0.00028619796
    %v2859 = vmul.f32 %v2856, %v2858
    %v2860 = vadd.f32 %v2859, 0.0036580483
    %v2861 = vmul.f32 %v2856, %v2860
    %v2862 = vadd.f32 %v2861, 0.05243302
    %v2863 = vmul.f32 %v2856, %v2862
    %v2864 = vadd.f32 %v2863, 0.18741608
    %v2865 = vmul.f32 %v2856, %v2864
    %v2866 = vadd.f32 %v2865, 1.1283791
    %v2867 = vmul.f32 %v802, %v2866
    %v2868 = vmul.f32 %v2856, 3.8918573e-05
    %v2869 = vadd.f32 %v2868, 0.001143296
    %v2870 = vmul.f32 %v2856, %v2869
    %v2871 = vadd.f32 %v2870, 0.014752088
    %v2872 = vmul.f32 %v2856, %v2871
    %v2873 = vadd.f32 %v2872, 0.112945676
    %v2874 = vmul.f32 %v2856, %v2873
    %v2875 = vadd.f32 %v2874, 0.4994258
    %v2876 = vmul.f32 %v2856, %v2875
    %v2877 = vadd.f32 %v2876, 1.0
    %v2878 = vrcp.pop %v2877
    %v2879 = vmul.f32 %v2877, %v2878
    %v2880 = vsub.f32 1.0, %v2879
    %v2881 = vmul.f32 %v2878, %v2880
    %v2882 = vadd.f32 %v2878, %v2881
    %vm2883 = vweird.f32 %v2877
    %vm2884 = vweird.f32 %v2878
    %vm2885 = vmor %vm2883, %vm2884
    %v2886 = vsel %vm2885, %v2878, %v2882
    %v2887 = vand.u32 2147483647, %v2877
    %vm2888 = vcmp.eq.f32.partialorder %v2887, 8.507059e+37
    %v2889 = vand.u32 %v2877, 2147483648
    %v2890 = vor.u32 1.1754944e-38, %v2889
    %v2891 = vsel %vm2888, %v2890, %v2886
    %v2892 = vmul.f32 %v2867, %v2891
    %v2893 = vmin.f32 %v2892, 1.0
    %v2894 = vmax.f32 %v2893, -1.0
    %v2895 = vmul.f32 %v803, %v803
    %v2896 = vmin.f32 16.0, %v2895
    %v2897 = vmul.f32 %v2896, 2.1237322e-06
    %v2898 = vadd.f32 %v2897, 0.00028619796
    %v2899 = vmul.f32 %v2896, %v2898
    %v2900 = vadd.f32 %v2899, 0.0036580483
    %v2901 = vmul.f32 %v2896, %v2900
    %v2902 = vadd.f32 %v2901, 0.05243302
    %v2903 = vmul.f32 %v2896, %v2902
    %v2904 = vadd.f32 %v2903, 0.18741608
    %v2905 = vmul.f32 %v2896, %v2904
    %v2906 = vadd.f32 %v2905, 1.1283791
    %v2907 = vmul.f32 %v803, %v2906
    %v2908 = vmul.f32 %v2896, 3.8918573e-05
    %v2909 = vadd.f32 %v2908, 0.001143296
    %v2910 = vmul.f32 %v2896, %v2909
    %v2911 = vadd.f32 %v2910, 0.014752088
    %v2912 = vmul.f32 %v2896, %v2911
    %v2913 = vadd.f32 %v2912, 0.112945676
    %v2914 = vmul.f32 %v2896, %v2913
    %v2915 = vadd.f32 %v2914, 0.4994258
    %v2916 = vmul.f32 %v2896, %v2915
    %v2917 = vadd.f32 %v2916, 1.0
    %v2918 = vrcp.pop %v2917
    %v2919 = vmul.f32 %v2917, %v2918
    %v2920 = vsub.f32 1.0, %v2919
    %v2921 = vmul.f32 %v2918, %v2920
    %v2922 = vadd.f32 %v2918, %v2921
    %vm2923 = vweird.f32 %v2917
    %vm2924 = vweird.f32 %v2918
    %vm2925 = vmor %vm2923, %vm2924
    %v2926 = vsel %vm2925, %v2918, %v2922
    %v2927 = vand.u32 2147483647, %v2917
    %vm2928 = vcmp.eq.f32.partialorder %v2927, 8.507059e+37
    %v2929 = vand.u32 %v2917, 2147483648
    %v2930 = vor.u32 1.1754944e-38, %v2929
    %v2931 = vsel %vm2928, %v2930, %v2926
    %v2932 = vmul.f32 %v2907, %v2931
    %v2933 = vmin.f32 %v2932, 1.0
    %v2934 = vmax.f32 %v2933, -1.0
    %v2935 = vmul.f32 %v804, %v804
    %v2936 = vmin.f32 16.0, %v2935
    %v2937 = vmul.f32 %v2936, 2.1237322e-06
    %v2938 = vadd.f32 %v2937, 0.00028619796
    %v2939 = vmul.f32 %v2936, %v2938
    %v2940 = vadd.f32 %v2939, 0.0036580483
    %v2941 = vmul.f32 %v2936, %v2940
    %v2942 = vadd.f32 %v2941, 0.05243302
    %v2943 = vmul.f32 %v2936, %v2942
    %v2944 = vadd.f32 %v2943, 0.18741608
    %v2945 = vmul.f32 %v2936, %v2944
    %v2946 = vadd.f32 %v2945, 1.1283791
    %v2947 = vmul.f32 %v804, %v2946
    %v2948 = vmul.f32 %v2936, 3.8918573e-05
    %v2949 = vadd.f32 %v2948, 0.001143296
    %v2950 = vmul.f32 %v2936, %v2949
    %v2951 = vadd.f32 %v2950, 0.014752088
    %v2952 = vmul.f32 %v2936, %v2951
    %v2953 = vadd.f32 %v2952, 0.112945676
    %v2954 = vmul.f32 %v2936, %v2953
    %v2955 = vadd.f32 %v2954, 0.4994258
    %v2956 = vmul.f32 %v2936, %v2955
    %v2957 = vadd.f32 %v2956, 1.0
    %v2958 = vrcp.pop %v2957
    %v2959 = vmul.f32 %v2957, %v2958
    %v2960 = vsub.f32 1.0, %v2959
    %v2961 = vmul.f32 %v2958, %v2960
    %v2962 = vadd.f32 %v2958, %v2961
    %vm2963 = vweird.f32 %v2957
    %vm2964 = vweird.f32 %v2958
    %vm2965 = vmor %vm2963, %vm2964
    %v2966 = vsel %vm2965, %v2958, %v2962
    %v2967 = vand.u32 2147483647, %v2957
    %vm2968 = vcmp.eq.f32.partialorder %v2967, 8.507059e+37
    %v2969 = vand.u32 %v2957, 2147483648
    %v2970 = vor.u32 1.1754944e-38, %v2969
    %v2971 = vsel %vm2968, %v2970, %v2966
    %v2972 = vmul.f32 %v2947, %v2971
    %v2973 = vmin.f32 %v2972, 1.0
    %v2974 = vmax.f32 %v2973, -1.0
    %v2975 = vmul.f32 %v805, %v805
    %v2976 = vmin.f32 16.0, %v2975
    %v2977 = vmul.f32 %v2976, 2.1237322e-06
    %v2978 = vadd.f32 %v2977, 0.00028619796
    %v2979 = vmul.f32 %v2976, %v2978
    %v2980 = vadd.f32 %v2979, 0.0036580483
    %v2981 = vmul.f32 %v2976, %v2980
    %v2982 = vadd.f32 %v2981, 0.05243302
    %v2983 = vmul.f32 %v2976, %v2982
    %v2984 = vadd.f32 %v2983, 0.18741608
    %v2985 = vmul.f32 %v2976, %v2984
    %v2986 = vadd.f32 %v2985, 1.1283791
    %v2987 = vmul.f32 %v805, %v2986
    %v2988 = vmul.f32 %v2976, 3.8918573e-05
    %v2989 = vadd.f32 %v2988, 0.001143296
    %v2990 = vmul.f32 %v2976, %v2989
    %v2991 = vadd.f32 %v2990, 0.014752088
    %v2992 = vmul.f32 %v2976, %v2991
    %v2993 = vadd.f32 %v2992, 0.112945676
    %v2994 = vmul.f32 %v2976, %v2993
    %v2995 = vadd.f32 %v2994, 0.4994258
    %v2996 = vmul.f32 %v2976, %v2995
    %v2997 = vadd.f32 %v2996, 1.0
    %v2998 = vrcp.pop %v2997
    %v2999 = vmul.f32 %v2997, %v2998
    %v3000 = vsub.f32 1.0, %v2999
    %v3001 = vmul.f32 %v2998, %v3000
    %v3002 = vadd.f32 %v2998, %v3001
    %vm3003 = vweird.f32 %v2997
    %vm3004 = vweird.f32 %v2998
    %vm3005 = vmor %vm3003, %vm3004
    %v3006 = vsel %vm3005, %v2998, %v3002
    %v3007 = vand.u32 2147483647, %v2997
    %vm3008 = vcmp.eq.f32.partialorder %v3007, 8.507059e+37
    %v3009 = vand.u32 %v2997, 2147483648
    %v3010 = vor.u32 1.1754944e-38, %v3009
    %v3011 = vsel %vm3008, %v3010, %v3006
    %v3012 = vmul.f32 %v2987, %v3011
    %v3013 = vmin.f32 %v3012, 1.0
    %v3014 = vmax.f32 %v3013, -1.0
    %v3015 = vmul.f32 %v806, %v806
    %v3016 = vmin.f32 16.0, %v3015
    %v3017 = vmul.f32 %v3016, 2.1237322e-06
    %v3018 = vadd.f32 %v3017, 0.00028619796
    %v3019 = vmul.f32 %v3016, %v3018
    %v3020 = vadd.f32 %v3019, 0.0036580483
    %v3021 = vmul.f32 %v3016, %v3020
    %v3022 = vadd.f32 %v3021, 0.05243302
    %v3023 = vmul.f32 %v3016, %v3022
    %v3024 = vadd.f32 %v3023, 0.18741608
    %v3025 = vmul.f32 %v3016, %v3024
    %v3026 = vadd.f32 %v3025, 1.1283791
    %v3027 = vmul.f32 %v806, %v3026
    %v3028 = vmul.f32 %v3016, 3.8918573e-05
    %v3029 = vadd.f32 %v3028, 0.001143296
    %v3030 = vmul.f32 %v3016, %v3029
    %v3031 = vadd.f32 %v3030, 0.014752088
    %v3032 = vmul.f32 %v3016, %v3031
    %v3033 = vadd.f32 %v3032, 0.112945676
    %v3034 = vmul.f32 %v3016, %v3033
    %v3035 = vadd.f32 %v3034, 0.4994258
    %v3036 = vmul.f32 %v3016, %v3035
    %v3037 = vadd.f32 %v3036, 1.0
    %v3038 = vrcp.pop %v3037
    %v3039 = vmul.f32 %v3037, %v3038
    %v3040 = vsub.f32 1.0, %v3039
    %v3041 = vmul.f32 %v3038, %v3040
    %v3042 = vadd.f32 %v3038, %v3041
    %vm3043 = vweird.f32 %v3037
    %vm3044 = vweird.f32 %v3038
    %vm3045 = vmor %vm3043, %vm3044
    %v3046 = vsel %vm3045, %v3038, %v3042
    %v3047 = vand.u32 2147483647, %v3037
    %vm3048 = vcmp.eq.f32.partialorder %v3047, 8.507059e+37
    %v3049 = vand.u32 %v3037, 2147483648
    %v3050 = vor.u32 1.1754944e-38, %v3049
    %v3051 = vsel %vm3048, %v3050, %v3046
    %v3052 = vmul.f32 %v3027, %v3051
    %v3053 = vmin.f32 %v3052, 1.0
    %v3054 = vmax.f32 %v3053, -1.0
    %v3055 = vmul.f32 %v807, %v807
    %v3056 = vmin.f32 16.0, %v3055
    %v3057 = vmul.f32 %v3056, 2.1237322e-06
    %v3058 = vadd.f32 %v3057, 0.00028619796
    %v3059 = vmul.f32 %v3056, %v3058
    %v3060 = vadd.f32 %v3059, 0.0036580483
    %v3061 = vmul.f32 %v3056, %v3060
    %v3062 = vadd.f32 %v3061, 0.05243302
    %v3063 = vmul.f32 %v3056, %v3062
    %v3064 = vadd.f32 %v3063, 0.18741608
    %v3065 = vmul.f32 %v3056, %v3064
    %v3066 = vadd.f32 %v3065, 1.1283791
    %v3067 = vmul.f32 %v807, %v3066
    %v3068 = vmul.f32 %v3056, 3.8918573e-05
    %v3069 = vadd.f32 %v3068, 0.001143296
    %v3070 = vmul.f32 %v3056, %v3069
    %v3071 = vadd.f32 %v3070, 0.014752088
    %v3072 = vmul.f32 %v3056, %v3071
    %v3073 = vadd.f32 %v3072, 0.112945676
    %v3074 = vmul.f32 %v3056, %v3073
    %v3075 = vadd.f32 %v3074, 0.4994258
    %v3076 = vmul.f32 %v3056, %v3075
    %v3077 = vadd.f32 %v3076, 1.0
    %v3078 = vrcp.pop %v3077
    %v3079 = vmul.f32 %v3077, %v3078
    %v3080 = vsub.f32 1.0, %v3079
    %v3081 = vmul.f32 %v3078, %v3080
    %v3082 = vadd.f32 %v3078, %v3081
    %vm3083 = vweird.f32 %v3077
    %vm3084 = vweird.f32 %v3078
    %vm3085 = vmor %vm3083, %vm3084
    %v3086 = vsel %vm3085, %v3078, %v3082
    %v3087 = vand.u32 2147483647, %v3077
    %vm3088 = vcmp.eq.f32.partialorder %v3087, 8.507059e+37
    %v3089 = vand.u32 %v3077, 2147483648
    %v3090 = vor.u32 1.1754944e-38, %v3089
    %v3091 = vsel %vm3088, %v3090, %v3086
    %v3092 = vmul.f32 %v3067, %v3091
    %v3093 = vmin.f32 %v3092, 1.0
    %v3094 = vmax.f32 %v3093, -1.0
    %v3095 = vmul.f32 %v808, %v808
    %v3096 = vmin.f32 16.0, %v3095
    %v3097 = vmul.f32 %v3096, 2.1237322e-06
    %v3098 = vadd.f32 %v3097, 0.00028619796
    %v3099 = vmul.f32 %v3096, %v3098
    %v3100 = vadd.f32 %v3099, 0.0036580483
    %v3101 = vmul.f32 %v3096, %v3100
    %v3102 = vadd.f32 %v3101, 0.05243302
    %v3103 = vmul.f32 %v3096, %v3102
    %v3104 = vadd.f32 %v3103, 0.18741608
    %v3105 = vmul.f32 %v3096, %v3104
    %v3106 = vadd.f32 %v3105, 1.1283791
    %v3107 = vmul.f32 %v808, %v3106
    %v3108 = vmul.f32 %v3096, 3.8918573e-05
    %v3109 = vadd.f32 %v3108, 0.001143296
    %v3110 = vmul.f32 %v3096, %v3109
    %v3111 = vadd.f32 %v3110, 0.014752088
    %v3112 = vmul.f32 %v3096, %v3111
    %v3113 = vadd.f32 %v3112, 0.112945676
    %v3114 = vmul.f32 %v3096, %v3113
    %v3115 = vadd.f32 %v3114, 0.4994258
    %v3116 = vmul.f32 %v3096, %v3115
    %v3117 = vadd.f32 %v3116, 1.0
    %v3118 = vrcp.pop %v3117
    %v3119 = vmul.f32 %v3117, %v3118
    %v3120 = vsub.f32 1.0, %v3119
    %v3121 = vmul.f32 %v3118, %v3120
    %v3122 = vadd.f32 %v3118, %v3121
    %vm3123 = vweird.f32 %v3117
    %vm3124 = vweird.f32 %v3118
    %vm3125 = vmor %vm3123, %vm3124
    %v3126 = vsel %vm3125, %v3118, %v3122
    %v3127 = vand.u32 2147483647, %v3117
    %vm3128 = vcmp.eq.f32.partialorder %v3127, 8.507059e+37
    %v3129 = vand.u32 %v3117, 2147483648
    %v3130 = vor.u32 1.1754944e-38, %v3129
    %v3131 = vsel %vm3128, %v3130, %v3126
    %v3132 = vmul.f32 %v3107, %v3131
    %v3133 = vmin.f32 %v3132, 1.0
    %v3134 = vmax.f32 %v3133, -1.0
    %v3135 = vmul.f32 %v809, %v809
    %v3136 = vmin.f32 16.0, %v3135
    %v3137 = vmul.f32 %v3136, 2.1237322e-06
    %v3138 = vadd.f32 %v3137, 0.00028619796
    %v3139 = vmul.f32 %v3136, %v3138
    %v3140 = vadd.f32 %v3139, 0.0036580483
    %v3141 = vmul.f32 %v3136, %v3140
    %v3142 = vadd.f32 %v3141, 0.05243302
    %v3143 = vmul.f32 %v3136, %v3142
    %v3144 = vadd.f32 %v3143, 0.18741608
    %v3145 = vmul.f32 %v3136, %v3144
    %v3146 = vadd.f32 %v3145, 1.1283791
    %v3147 = vmul.f32 %v809, %v3146
    %v3148 = vmul.f32 %v3136, 3.8918573e-05
    %v3149 = vadd.f32 %v3148, 0.001143296
    %v3150 = vmul.f32 %v3136, %v3149
    %v3151 = vadd.f32 %v3150, 0.014752088
    %v3152 = vmul.f32 %v3136, %v3151
    %v3153 = vadd.f32 %v3152, 0.112945676
    %v3154 = vmul.f32 %v3136, %v3153
    %v3155 = vadd.f32 %v3154, 0.4994258
    %v3156 = vmul.f32 %v3136, %v3155
    %v3157 = vadd.f32 %v3156, 1.0
    %v3158 = vrcp.pop %v3157
    %v3159 = vmul.f32 %v3157, %v3158
    %v3160 = vsub.f32 1.0, %v3159
    %v3161 = vmul.f32 %v3158, %v3160
    %v3162 = vadd.f32 %v3158, %v3161
    %vm3163 = vweird.f32 %v3157
    %vm3164 = vweird.f32 %v3158
    %vm3165 = vmor %vm3163, %vm3164
    %v3166 = vsel %vm3165, %v3158, %v3162
    %v3167 = vand.u32 2147483647, %v3157
    %vm3168 = vcmp.eq.f32.partialorder %v3167, 8.507059e+37
    %v3169 = vand.u32 %v3157, 2147483648
    %v3170 = vor.u32 1.1754944e-38, %v3169
    %v3171 = vsel %vm3168, %v3170, %v3166
    %v3172 = vmul.f32 %v3147, %v3171
    %v3173 = vmin.f32 %v3172, 1.0
    %v3174 = vmax.f32 %v3173, -1.0
    %v3175 = vmul.f32 %v810, %v810
    %v3176 = vmin.f32 16.0, %v3175
    %v3177 = vmul.f32 %v3176, 2.1237322e-06
    %v3178 = vadd.f32 %v3177, 0.00028619796
    %v3179 = vmul.f32 %v3176, %v3178
    %v3180 = vadd.f32 %v3179, 0.0036580483
    %v3181 = vmul.f32 %v3176, %v3180
    %v3182 = vadd.f32 %v3181, 0.05243302
    %v3183 = vmul.f32 %v3176, %v3182
    %v3184 = vadd.f32 %v3183, 0.18741608
    %v3185 = vmul.f32 %v3176, %v3184
    %v3186 = vadd.f32 %v3185, 1.1283791
    %v3187 = vmul.f32 %v810, %v3186
    %v3188 = vmul.f32 %v3176, 3.8918573e-05
    %v3189 = vadd.f32 %v3188, 0.001143296
    %v3190 = vmul.f32 %v3176, %v3189
    %v3191 = vadd.f32 %v3190, 0.014752088
    %v3192 = vmul.f32 %v3176, %v3191
    %v3193 = vadd.f32 %v3192, 0.112945676
    %v3194 = vmul.f32 %v3176, %v3193
    %v3195 = vadd.f32 %v3194, 0.4994258
    %v3196 = vmul.f32 %v3176, %v3195
    %v3197 = vadd.f32 %v3196, 1.0
    %v3198 = vrcp.pop %v3197
    %v3199 = vmul.f32 %v3197, %v3198
    %v3200 = vsub.f32 1.0, %v3199
    %v3201 = vmul.f32 %v3198, %v3200
    %v3202 = vadd.f32 %v3198, %v3201
    %vm3203 = vweird.f32 %v3197
    %vm3204 = vweird.f32 %v3198
    %vm3205 = vmor %vm3203, %vm3204
    %v3206 = vsel %vm3205, %v3198, %v3202
    %v3207 = vand.u32 2147483647, %v3197
    %vm3208 = vcmp.eq.f32.partialorder %v3207, 8.507059e+37
    %v3209 = vand.u32 %v3197, 2147483648
    %v3210 = vor.u32 1.1754944e-38, %v3209
    %v3211 = vsel %vm3208, %v3210, %v3206
    %v3212 = vmul.f32 %v3187, %v3211
    %v3213 = vmin.f32 %v3212, 1.0
    %v3214 = vmax.f32 %v3213, -1.0
    %v3215 = vmul.f32 %v811, %v811
    %v3216 = vmin.f32 16.0, %v3215
    %v3217 = vmul.f32 %v3216, 2.1237322e-06
    %v3218 = vadd.f32 %v3217, 0.00028619796
    %v3219 = vmul.f32 %v3216, %v3218
    %v3220 = vadd.f32 %v3219, 0.0036580483
    %v3221 = vmul.f32 %v3216, %v3220
    %v3222 = vadd.f32 %v3221, 0.05243302
    %v3223 = vmul.f32 %v3216, %v3222
    %v3224 = vadd.f32 %v3223, 0.18741608
    %v3225 = vmul.f32 %v3216, %v3224
    %v3226 = vadd.f32 %v3225, 1.1283791
    %v3227 = vmul.f32 %v811, %v3226
    %v3228 = vmul.f32 %v3216, 3.8918573e-05
    %v3229 = vadd.f32 %v3228, 0.001143296
    %v3230 = vmul.f32 %v3216, %v3229
    %v3231 = vadd.f32 %v3230, 0.014752088
    %v3232 = vmul.f32 %v3216, %v3231
    %v3233 = vadd.f32 %v3232, 0.112945676
    %v3234 = vmul.f32 %v3216, %v3233
    %v3235 = vadd.f32 %v3234, 0.4994258
    %v3236 = vmul.f32 %v3216, %v3235
    %v3237 = vadd.f32 %v3236, 1.0
    %v3238 = vrcp.pop %v3237
    %v3239 = vmul.f32 %v3237, %v3238
    %v3240 = vsub.f32 1.0, %v3239
    %v3241 = vmul.f32 %v3238, %v3240
    %v3242 = vadd.f32 %v3238, %v3241
    %vm3243 = vweird.f32 %v3237
    %vm3244 = vweird.f32 %v3238
    %vm3245 = vmor %vm3243, %vm3244
    %v3246 = vsel %vm3245, %v3238, %v3242
    %v3247 = vand.u32 2147483647, %v3237
    %vm3248 = vcmp.eq.f32.partialorder %v3247, 8.507059e+37
    %v3249 = vand.u32 %v3237, 2147483648
    %v3250 = vor.u32 1.1754944e-38, %v3249
    %v3251 = vsel %vm3248, %v3250, %v3246
    %v3252 = vmul.f32 %v3227, %v3251
    %v3253 = vmin.f32 %v3252, 1.0
    %v3254 = vmax.f32 %v3253, -1.0
    %v3255 = vmul.f32 %v812, %v812
    %v3256 = vmin.f32 16.0, %v3255
    %v3257 = vmul.f32 %v3256, 2.1237322e-06
    %v3258 = vadd.f32 %v3257, 0.00028619796
    %v3259 = vmul.f32 %v3256, %v3258
    %v3260 = vadd.f32 %v3259, 0.0036580483
    %v3261 = vmul.f32 %v3256, %v3260
    %v3262 = vadd.f32 %v3261, 0.05243302
    %v3263 = vmul.f32 %v3256, %v3262
    %v3264 = vadd.f32 %v3263, 0.18741608
    %v3265 = vmul.f32 %v3256, %v3264
    %v3266 = vadd.f32 %v3265, 1.1283791
    %v3267 = vmul.f32 %v812, %v3266
    %v3268 = vmul.f32 %v3256, 3.8918573e-05
    %v3269 = vadd.f32 %v3268, 0.001143296
    %v3270 = vmul.f32 %v3256, %v3269
    %v3271 = vadd.f32 %v3270, 0.014752088
    %v3272 = vmul.f32 %v3256, %v3271
    %v3273 = vadd.f32 %v3272, 0.112945676
    %v3274 = vmul.f32 %v3256, %v3273
    %v3275 = vadd.f32 %v3274, 0.4994258
    %v3276 = vmul.f32 %v3256, %v3275
    %v3277 = vadd.f32 %v3276, 1.0
    %v3278 = vrcp.pop %v3277
    %v3279 = vmul.f32 %v3277, %v3278
    %v3280 = vsub.f32 1.0, %v3279
    %v3281 = vmul.f32 %v3278, %v3280
    %v3282 = vadd.f32 %v3278, %v3281
    %vm3283 = vweird.f32 %v3277
    %vm3284 = vweird.f32 %v3278
    %vm3285 = vmor %vm3283, %vm3284
    %v3286 = vsel %vm3285, %v3278, %v3282
    %v3287 = vand.u32 2147483647, %v3277
    %vm3288 = vcmp.eq.f32.partialorder %v3287, 8.507059e+37
    %v3289 = vand.u32 %v3277, 2147483648
    %v3290 = vor.u32 1.1754944e-38, %v3289
    %v3291 = vsel %vm3288, %v3290, %v3286
    %v3292 = vmul.f32 %v3267, %v3291
    %v3293 = vmin.f32 %v3292, 1.0
    %v3294 = vmax.f32 %v3293, -1.0
    %v3295 = vmul.f32 %v813, %v813
    %v3296 = vmin.f32 16.0, %v3295
    %v3297 = vmul.f32 %v3296, 2.1237322e-06
    %v3298 = vadd.f32 %v3297, 0.00028619796
    %v3299 = vmul.f32 %v3296, %v3298
    %v3300 = vadd.f32 %v3299, 0.0036580483
    %v3301 = vmul.f32 %v3296, %v3300
    %v3302 = vadd.f32 %v3301, 0.05243302
    %v3303 = vmul.f32 %v3296, %v3302
    %v3304 = vadd.f32 %v3303, 0.18741608
    %v3305 = vmul.f32 %v3296, %v3304
    %v3306 = vadd.f32 %v3305, 1.1283791
    %v3307 = vmul.f32 %v813, %v3306
    %v3308 = vmul.f32 %v3296, 3.8918573e-05
    %v3309 = vadd.f32 %v3308, 0.001143296
    %v3310 = vmul.f32 %v3296, %v3309
    %v3311 = vadd.f32 %v3310, 0.014752088
    %v3312 = vmul.f32 %v3296, %v3311
    %v3313 = vadd.f32 %v3312, 0.112945676
    %v3314 = vmul.f32 %v3296, %v3313
    %v3315 = vadd.f32 %v3314, 0.4994258
    %v3316 = vmul.f32 %v3296, %v3315
    %v3317 = vadd.f32 %v3316, 1.0
    %v3318 = vrcp.pop %v3317
    %v3319 = vmul.f32 %v3317, %v3318
    %v3320 = vsub.f32 1.0, %v3319
    %v3321 = vmul.f32 %v3318, %v3320
    %v3322 = vadd.f32 %v3318, %v3321
    %vm3323 = vweird.f32 %v3317
    %vm3324 = vweird.f32 %v3318
    %vm3325 = vmor %vm3323, %vm3324
    %v3326 = vsel %vm3325, %v3318, %v3322
    %v3327 = vand.u32 2147483647, %v3317
    %vm3328 = vcmp.eq.f32.partialorder %v3327, 8.507059e+37
    %v3329 = vand.u32 %v3317, 2147483648
    %v3330 = vor.u32 1.1754944e-38, %v3329
    %v3331 = vsel %vm3328, %v3330, %v3326
    %v3332 = vmul.f32 %v3307, %v3331
    %v3333 = vmin.f32 %v3332, 1.0
    %v3334 = vmax.f32 %v3333, -1.0
    %v3335 = vmul.f32 %v814, %v814
    %v3336 = vmin.f32 16.0, %v3335
    %v3337 = vmul.f32 %v3336, 2.1237322e-06
    %v3338 = vadd.f32 %v3337, 0.00028619796
    %v3339 = vmul.f32 %v3336, %v3338
    %v3340 = vadd.f32 %v3339, 0.0036580483
    %v3341 = vmul.f32 %v3336, %v3340
    %v3342 = vadd.f32 %v3341, 0.05243302
    %v3343 = vmul.f32 %v3336, %v3342
    %v3344 = vadd.f32 %v3343, 0.18741608
    %v3345 = vmul.f32 %v3336, %v3344
    %v3346 = vadd.f32 %v3345, 1.1283791
    %v3347 = vmul.f32 %v814, %v3346
    %v3348 = vmul.f32 %v3336, 3.8918573e-05
    %v3349 = vadd.f32 %v3348, 0.001143296
    %v3350 = vmul.f32 %v3336, %v3349
    %v3351 = vadd.f32 %v3350, 0.014752088
    %v3352 = vmul.f32 %v3336, %v3351
    %v3353 = vadd.f32 %v3352, 0.112945676
    %v3354 = vmul.f32 %v3336, %v3353
    %v3355 = vadd.f32 %v3354, 0.4994258
    %v3356 = vmul.f32 %v3336, %v3355
    %v3357 = vadd.f32 %v3356, 1.0
    %v3358 = vrcp.pop %v3357
    %v3359 = vmul.f32 %v3357, %v3358
    %v3360 = vsub.f32 1.0, %v3359
    %v3361 = vmul.f32 %v3358, %v3360
    %v3362 = vadd.f32 %v3358, %v3361
    %vm3363 = vweird.f32 %v3357
    %vm3364 = vweird.f32 %v3358
    %vm3365 = vmor %vm3363, %vm3364
    %v3366 = vsel %vm3365, %v3358, %v3362
    %v3367 = vand.u32 2147483647, %v3357
    %vm3368 = vcmp.eq.f32.partialorder %v3367, 8.507059e+37
    %v3369 = vand.u32 %v3357, 2147483648
    %v3370 = vor.u32 1.1754944e-38, %v3369
    %v3371 = vsel %vm3368, %v3370, %v3366
    %v3372 = vmul.f32 %v3347, %v3371
    %v3373 = vmin.f32 %v3372, 1.0
    %v3374 = vmax.f32 %v3373, -1.0
    %v3375 = vadd.f32 %v854, 1.0
    %v3376 = vadd.f32 %v894, 1.0
    %v3377 = vadd.f32 %v934, 1.0
    %v3378 = vadd.f32 %v974, 1.0
    %v3379 = vadd.f32 %v1014, 1.0
    %v3380 = vadd.f32 %v1054, 1.0
    %v3381 = vadd.f32 %v1094, 1.0
    %v3382 = vadd.f32 %v1134, 1.0
    %v3383 = vadd.f32 %v1174, 1.0
    %v3384 = vadd.f32 %v1214, 1.0
    %v3385 = vadd.f32 %v1254, 1.0
    %v3386 = vadd.f32 %v1294, 1.0
    %v3387 = vadd.f32 %v1334, 1.0
    %v3388 = vadd.f32 %v1374, 1.0
    %v3389 = vadd.f32 %v1414, 1.0
    %v3390 = vadd.f32 %v1454, 1.0
    %v3391 = vadd.f32 %v1494, 1.0
    %v3392 = vadd.f32 %v1534, 1.0
    %v3393 = vadd.f32 %v1574, 1.0
    %v3394 = vadd.f32 %v1614, 1.0
    %v3395 = vadd.f32 %v1654, 1.0
    %v3396 = vadd.f32 %v1694, 1.0
    %v3397 = vadd.f32 %v1734, 1.0
    %v3398 = vadd.f32 %v1774, 1.0
    %v3399 = vadd.f32 %v1814, 1.0
    %v3400 = vadd.f32 %v1854, 1.0
    %v3401 = vadd.f32 %v1894, 1.0
    %v3402 = vadd.f32 %v1934, 1.0
    %v3403 = vadd.f32 %v1974, 1.0
    %v3404 = vadd.f32 %v2014, 1.0
    %v3405 = vadd.f32 %v2054, 1.0
    %v3406 = vadd.f32 %v2094, 1.0
    %v3407 = vadd.f32 %v2134, 1.0
    %v3408 = vadd.f32 %v2174, 1.0
    %v3409 = vadd.f32 %v2214, 1.0
    %v3410 = vadd.f32 %v2254, 1.0
    %v3411 = vadd.f32 %v2294, 1.0
    %v3412 = vadd.f32 %v2334, 1.0
    %v3413 = vadd.f32 %v2374, 1.0
    %v3414 = vadd.f32 %v2414, 1.0
    %v3415 = vadd.f32 %v2454, 1.0
    %v3416 = vadd.f32 %v2494, 1.0
    %v3417 = vadd.f32 %v2534, 1.0
    %v3418 = vadd.f32 %v2574, 1.0
    %v3419 = vadd.f32 %v2614, 1.0
    %v3420 = vadd.f32 %v2654, 1.0
    %v3421 = vadd.f32 %v2694, 1.0
    %v3422 = vadd.f32 %v2734, 1.0
    %v3423 = vadd.f32 %v2774, 1.0
    %v3424 = vadd.f32 %v2814, 1.0
    %v3425 = vadd.f32 %v2854, 1.0
    %v3426 = vadd.f32 %v2894, 1.0
    %v3427 = vadd.f32 %v2934, 1.0
    %v3428 = vadd.f32 %v2974, 1.0
    %v3429 = vadd.f32 %v3014, 1.0
    %v3430 = vadd.f32 %v3054, 1.0
    %v3431 = vadd.f32 %v3094, 1.0
    %v3432 = vadd.f32 %v3134, 1.0
    %v3433 = vadd.f32 %v3174, 1.0
    %v3434 = vadd.f32 %v3214, 1.0
    %v3435 = vadd.f32 %v3254, 1.0
    %v3436 = vadd.f32 %v3294, 1.0
    %v3437 = vadd.f32 %v3334, 1.0
    %v3438 = vadd.f32 %v3374, 1.0
    %v3439 = vmul.f32 %v687, %v3375
    %v3440 = vmul.f32 %v688, %v3376
    %v3441 = vmul.f32 %v689, %v3377
    %v3442 = vmul.f32 %v690, %v3378
    %v3443 = vmul.f32 %v691, %v3379
    %v3444 = vmul.f32 %v692, %v3380
    %v3445 = vmul.f32 %v693, %v3381
    %v3446 = vmul.f32 %v694, %v3382
    %v3447 = vmul.f32 %v695, %v3383
    %v3448 = vmul.f32 %v696, %v3384
    %v3449 = vmul.f32 %v697, %v3385
    %v3450 = vmul.f32 %v698, %v3386
    %v3451 = vmul.f32 %v699, %v3387
    %v3452 = vmul.f32 %v700, %v3388
    %v3453 = vmul.f32 %v701, %v3389
    %v3454 = vmul.f32 %v702, %v3390
    %v3455 = vmul.f32 %v703, %v3391
    %v3456 = vmul.f32 %v704, %v3392
    %v3457 = vmul.f32 %v705, %v3393
    %v3458 = vmul.f32 %v706, %v3394
    %v3459 = vmul.f32 %v707, %v3395
    %v3460 = vmul.f32 %v708, %v3396
    %v3461 = vmul.f32 %v709, %v3397
    %v3462 = vmul.f32 %v710, %v3398
    %v3463 = vmul.f32 %v711, %v3399
    %v3464 = vmul.f32 %v712, %v3400
    %v3465 = vmul.f32 %v713, %v3401
    %v3466 = vmul.f32 %v714, %v3402
    %v3467 = vmul.f32 %v715, %v3403
    %v3468 = vmul.f32 %v716, %v3404
    %v3469 = vmul.f32 %v717, %v3405
    %v3470 = vmul.f32 %v718, %v3406
    %v3471 = vmul.f32 %v719, %v3407
    %v3472 = vmul.f32 %v720, %v3408
    %v3473 = vmul.f32 %v721, %v3409
    %v3474 = vmul.f32 %v722, %v3410
    %v3475 = vmul.f32 %v723, %v3411
    %v3476 = vmul.f32 %v724, %v3412
    %v3477 = vmul.f32 %v725, %v3413
    %v3478 = vmul.f32 %v726, %v3414
    %v3479 = vmul.f32 %v727, %v3415
    %v3480 = vmul.f32 %v728, %v3416
    %v3481 = vmul.f32 %v729, %v3417
    %v3482 = vmul.f32 %v730, %v3418
    %v3483 = vmul.f32 %v731, %v3419
    %v3484 = vmul.f32 %v732, %v3420
    %v3485 = vmul.f32 %v733, %v3421
    %v3486 = vmul.f32 %v734, %v3422
    %v3487 = vmul.f32 %v735, %v3423
    %v3488 = vmul.f32 %v736, %v3424
    %v3489 = vmul.f32 %v737, %v3425
    %v3490 = vmul.f32 %v738, %v3426
    %v3491 = vmul.f32 %v739, %v3427
    %v3492 = vmul.f32 %v740, %v3428
    %v3493 = vmul.f32 %v741, %v3429
    %v3494 = vmul.f32 %v742, %v3430
    %v3495 = vmul.f32 %v743, %v3431
    %v3496 = vmul.f32 %v744, %v3432
    %v3497 = vmul.f32 %v745, %v3433
    %v3498 = vmul.f32 %v746, %v3434
    %v3499 = vmul.f32 %v747, %v3435
    %v3500 = vmul.f32 %v748, %v3436
    %v3501 = vmul.f32 %v749, %v3437
    %v3502 = vmul.f32 %v750, %v3438
    %vm3503 = vcmask 261120
    %v3504 = vsel %vm3503, %v3439, 0.0
    %v3505 = vsel %vm3503, %v3471, 0.0
    %v3506 = vadd.f32 %v3504, %v3505
    %3507 = vadd.xlane.f32.xlu0 %v3506
    %v3508 = vpop.xlane.xlu0 %3507
    %v3509 = vsel %vm3503, %v3440, 0.0
    %v3510 = vsel %vm3503, %v3472, 0.0
    %v3511 = vadd.f32 %v3509, %v3510
    %3512 = vadd.xlane.f32.xlu0 %v3511
    %v3513 = vpop.xlane.xlu0 %3512
    %v3514 = vsel %vm3503, %v3441, 0.0
    %v3515 = vsel %vm3503, %v3473, 0.0
    %v3516 = vadd.f32 %v3514, %v3515
    %3517 = vadd.xlane.f32.xlu0 %v3516
    %v3518 = vpop.xlane.xlu0 %3517
    %v3519 = vsel %vm3503, %v3442, 0.0
    %v3520 = vsel %vm3503, %v3474, 0.0
    %v3521 = vadd.f32 %v3519, %v3520
    %3522 = vadd.xlane.f32.xlu0 %v3521
    %v3523 = vpop.xlane.xlu0 %3522
    %v3524 = vsel %vm3503, %v3443, 0.0
    %v3525 = vsel %vm3503, %v3475, 0.0
    %v3526 = vadd.f32 %v3524, %v3525
    %3527 = vadd.xlane.f32.xlu0 %v3526
    %v3528 = vpop.xlane.xlu0 %3527
    %v3529 = vsel %vm3503, %v3444, 0.0
    %v3530 = vsel %vm3503, %v3476, 0.0
    %v3531 = vadd.f32 %v3529, %v3530
    %3532 = vadd.xlane.f32.xlu0 %v3531
    %v3533 = vpop.xlane.xlu0 %3532
    %v3534 = vsel %vm3503, %v3445, 0.0
    %v3535 = vsel %vm3503, %v3477, 0.0
    %v3536 = vadd.f32 %v3534, %v3535
    %3537 = vadd.xlane.f32.xlu0 %v3536
    %v3538 = vpop.xlane.xlu0 %3537
    %v3539 = vsel %vm3503, %v3446, 0.0
    %v3540 = vsel %vm3503, %v3478, 0.0
    %v3541 = vadd.f32 %v3539, %v3540
    %3542 = vadd.xlane.f32.xlu0 %v3541
    %v3543 = vpop.xlane.xlu0 %3542
    %v3544 = vsel %vm3503, %v3447, 0.0
    %v3545 = vsel %vm3503, %v3479, 0.0
    %v3546 = vadd.f32 %v3544, %v3545
    %3547 = vadd.xlane.f32.xlu0 %v3546
    %v3548 = vpop.xlane.xlu0 %3547
    %v3549 = vsel %vm3503, %v3448, 0.0
    %v3550 = vsel %vm3503, %v3480, 0.0
    %v3551 = vadd.f32 %v3549, %v3550
    %3552 = vadd.xlane.f32.xlu0 %v3551
    %v3553 = vpop.xlane.xlu0 %3552
    %v3554 = vsel %vm3503, %v3449, 0.0
    %v3555 = vsel %vm3503, %v3481, 0.0
    %v3556 = vadd.f32 %v3554, %v3555
    %3557 = vadd.xlane.f32.xlu0 %v3556
    %v3558 = vpop.xlane.xlu0 %3557
    %v3559 = vsel %vm3503, %v3450, 0.0
    %v3560 = vsel %vm3503, %v3482, 0.0
    %v3561 = vadd.f32 %v3559, %v3560
    %3562 = vadd.xlane.f32.xlu0 %v3561
    %v3563 = vpop.xlane.xlu0 %3562
    %v3564 = vsel %vm3503, %v3451, 0.0
    %v3565 = vsel %vm3503, %v3483, 0.0
    %v3566 = vadd.f32 %v3564, %v3565
    %3567 = vadd.xlane.f32.xlu0 %v3566
    %v3568 = vpop.xlane.xlu0 %3567
    %v3569 = vsel %vm3503, %v3452, 0.0
    %v3570 = vsel %vm3503, %v3484, 0.0
    %v3571 = vadd.f32 %v3569, %v3570
    %3572 = vadd.xlane.f32.xlu0 %v3571
    %v3573 = vpop.xlane.xlu0 %3572
    %v3574 = vsel %vm3503, %v3453, 0.0
    %v3575 = vsel %vm3503, %v3485, 0.0
    %v3576 = vadd.f32 %v3574, %v3575
    %3577 = vadd.xlane.f32.xlu0 %v3576
    %v3578 = vpop.xlane.xlu0 %3577
    %v3579 = vsel %vm3503, %v3454, 0.0
    %v3580 = vsel %vm3503, %v3486, 0.0
    %v3581 = vadd.f32 %v3579, %v3580
    %3582 = vadd.xlane.f32.xlu0 %v3581
    %v3583 = vpop.xlane.xlu0 %3582
    %v3584 = vsel %vm3503, %v3455, 0.0
    %v3585 = vsel %vm3503, %v3487, 0.0
    %v3586 = vadd.f32 %v3584, %v3585
    %3587 = vadd.xlane.f32.xlu0 %v3586
    %v3588 = vpop.xlane.xlu0 %3587
    %v3589 = vsel %vm3503, %v3456, 0.0
    %v3590 = vsel %vm3503, %v3488, 0.0
    %v3591 = vadd.f32 %v3589, %v3590
    %3592 = vadd.xlane.f32.xlu0 %v3591
    %v3593 = vpop.xlane.xlu0 %3592
    %v3594 = vsel %vm3503, %v3457, 0.0
    %v3595 = vsel %vm3503, %v3489, 0.0
    %v3596 = vadd.f32 %v3594, %v3595
    %3597 = vadd.xlane.f32.xlu0 %v3596
    %v3598 = vpop.xlane.xlu0 %3597
    %v3599 = vsel %vm3503, %v3458, 0.0
    %v3600 = vsel %vm3503, %v3490, 0.0
    %v3601 = vadd.f32 %v3599, %v3600
    %3602 = vadd.xlane.f32.xlu0 %v3601
    %v3603 = vpop.xlane.xlu0 %3602
    %v3604 = vsel %vm3503, %v3459, 0.0
    %v3605 = vsel %vm3503, %v3491, 0.0
    %v3606 = vadd.f32 %v3604, %v3605
    %3607 = vadd.xlane.f32.xlu0 %v3606
    %v3608 = vpop.xlane.xlu0 %3607
    %v3609 = vsel %vm3503, %v3460, 0.0
    %v3610 = vsel %vm3503, %v3492, 0.0
    %v3611 = vadd.f32 %v3609, %v3610
    %3612 = vadd.xlane.f32.xlu0 %v3611
    %v3613 = vpop.xlane.xlu0 %3612
    %v3614 = vsel %vm3503, %v3461, 0.0
    %v3615 = vsel %vm3503, %v3493, 0.0
    %v3616 = vadd.f32 %v3614, %v3615
    %3617 = vadd.xlane.f32.xlu0 %v3616
    %v3618 = vpop.xlane.xlu0 %3617
    %v3619 = vsel %vm3503, %v3462, 0.0
    %v3620 = vsel %vm3503, %v3494, 0.0
    %v3621 = vadd.f32 %v3619, %v3620
    %3622 = vadd.xlane.f32.xlu0 %v3621
    %v3623 = vpop.xlane.xlu0 %3622
    %v3624 = vsel %vm3503, %v3463, 0.0
    %v3625 = vsel %vm3503, %v3495, 0.0
    %v3626 = vadd.f32 %v3624, %v3625
    %3627 = vadd.xlane.f32.xlu0 %v3626
    %v3628 = vpop.xlane.xlu0 %3627
    %v3629 = vsel %vm3503, %v3464, 0.0
    %v3630 = vsel %vm3503, %v3496, 0.0
    %v3631 = vadd.f32 %v3629, %v3630
    %3632 = vadd.xlane.f32.xlu0 %v3631
    %v3633 = vpop.xlane.xlu0 %3632
    %v3634 = vsel %vm3503, %v3465, 0.0
    %v3635 = vsel %vm3503, %v3497, 0.0
    %v3636 = vadd.f32 %v3634, %v3635
    %3637 = vadd.xlane.f32.xlu0 %v3636
    %v3638 = vpop.xlane.xlu0 %3637
    %v3639 = vsel %vm3503, %v3466, 0.0
    %v3640 = vsel %vm3503, %v3498, 0.0
    %v3641 = vadd.f32 %v3639, %v3640
    %3642 = vadd.xlane.f32.xlu0 %v3641
    %v3643 = vpop.xlane.xlu0 %3642
    %v3644 = vsel %vm3503, %v3467, 0.0
    %v3645 = vsel %vm3503, %v3499, 0.0
    %v3646 = vadd.f32 %v3644, %v3645
    %3647 = vadd.xlane.f32.xlu0 %v3646
    %v3648 = vpop.xlane.xlu0 %3647
    %v3649 = vsel %vm3503, %v3468, 0.0
    %v3650 = vsel %vm3503, %v3500, 0.0
    %v3651 = vadd.f32 %v3649, %v3650
    %3652 = vadd.xlane.f32.xlu0 %v3651
    %v3653 = vpop.xlane.xlu0 %3652
    %v3654 = vsel %vm3503, %v3469, 0.0
    %v3655 = vsel %vm3503, %v3501, 0.0
    %v3656 = vadd.f32 %v3654, %v3655
    %3657 = vadd.xlane.f32.xlu0 %v3656
    %v3658 = vpop.xlane.xlu0 %3657
    %v3659 = vsel %vm3503, %v3470, 0.0
    %v3660 = vsel %vm3503, %v3502, 0.0
    %v3661 = vadd.f32 %v3659, %v3660
    %3662 = vadd.xlane.f32.xlu0 %v3661
    %v3663 = vpop.xlane.xlu0 %3662
    %v3664 = vrcp.pop 64.0
    %v3665 = vmul.f32 64.0, %v3664
    %v3666 = vsub.f32 1.0, %v3665
    %v3667 = vmul.f32 %v3664, %v3666
    %v3668 = vadd.f32 %v3664, %v3667
    %vm3669 = vweird.f32 %v3664
    %v3670 = vsel %vm3669, %v3664, %v3668
    %v3671 = vmul.f32 %v3508, %v3670
    %v3672 = vmul.f32 %v3513, %v3670
    %v3673 = vmul.f32 %v3518, %v3670
    %v3674 = vmul.f32 %v3523, %v3670
    %v3675 = vmul.f32 %v3528, %v3670
    %v3676 = vmul.f32 %v3533, %v3670
    %v3677 = vmul.f32 %v3538, %v3670
    %v3678 = vmul.f32 %v3543, %v3670
    %v3679 = vmul.f32 %v3548, %v3670
    %v3680 = vmul.f32 %v3553, %v3670
    %v3681 = vmul.f32 %v3558, %v3670
    %v3682 = vmul.f32 %v3563, %v3670
    %v3683 = vmul.f32 %v3568, %v3670
    %v3684 = vmul.f32 %v3573, %v3670
    %v3685 = vmul.f32 %v3578, %v3670
    %v3686 = vmul.f32 %v3583, %v3670
    %v3687 = vmul.f32 %v3588, %v3670
    %v3688 = vmul.f32 %v3593, %v3670
    %v3689 = vmul.f32 %v3598, %v3670
    %v3690 = vmul.f32 %v3603, %v3670
    %v3691 = vmul.f32 %v3608, %v3670
    %v3692 = vmul.f32 %v3613, %v3670
    %v3693 = vmul.f32 %v3618, %v3670
    %v3694 = vmul.f32 %v3623, %v3670
    %v3695 = vmul.f32 %v3628, %v3670
    %v3696 = vmul.f32 %v3633, %v3670
    %v3697 = vmul.f32 %v3638, %v3670
    %v3698 = vmul.f32 %v3643, %v3670
    %v3699 = vmul.f32 %v3648, %v3670
    %v3700 = vmul.f32 %v3653, %v3670
    %v3701 = vmul.f32 %v3658, %v3670
    %v3702 = vmul.f32 %v3663, %v3670
    %v3703 = vmul.f32 %v3439, %v3439
    %v3704 = vmul.f32 %v3440, %v3440
    %v3705 = vmul.f32 %v3441, %v3441
    %v3706 = vmul.f32 %v3442, %v3442
    %v3707 = vmul.f32 %v3443, %v3443
    %v3708 = vmul.f32 %v3444, %v3444
    %v3709 = vmul.f32 %v3445, %v3445
    %v3710 = vmul.f32 %v3446, %v3446
    %v3711 = vmul.f32 %v3447, %v3447
    %v3712 = vmul.f32 %v3448, %v3448
    %v3713 = vmul.f32 %v3449, %v3449
    %v3714 = vmul.f32 %v3450, %v3450
    %v3715 = vmul.f32 %v3451, %v3451
    %v3716 = vmul.f32 %v3452, %v3452
    %v3717 = vmul.f32 %v3453, %v3453
    %v3718 = vmul.f32 %v3454, %v3454
    %v3719 = vmul.f32 %v3455, %v3455
    %v3720 = vmul.f32 %v3456, %v3456
    %v3721 = vmul.f32 %v3457, %v3457
    %v3722 = vmul.f32 %v3458, %v3458
    %v3723 = vmul.f32 %v3459, %v3459
    %v3724 = vmul.f32 %v3460, %v3460
    %v3725 = vmul.f32 %v3461, %v3461
    %v3726 = vmul.f32 %v3462, %v3462
    %v3727 = vmul.f32 %v3463, %v3463
    %v3728 = vmul.f32 %v3464, %v3464
    %v3729 = vmul.f32 %v3465, %v3465
    %v3730 = vmul.f32 %v3466, %v3466
    %v3731 = vmul.f32 %v3467, %v3467
    %v3732 = vmul.f32 %v3468, %v3468
    %v3733 = vmul.f32 %v3469, %v3469
    %v3734 = vmul.f32 %v3470, %v3470
    %v3735 = vmul.f32 %v3471, %v3471
    %v3736 = vmul.f32 %v3472, %v3472
    %v3737 = vmul.f32 %v3473, %v3473
    %v3738 = vmul.f32 %v3474, %v3474
    %v3739 = vmul.f32 %v3475, %v3475
    %v3740 = vmul.f32 %v3476, %v3476
    %v3741 = vmul.f32 %v3477, %v3477
    %v3742 = vmul.f32 %v3478, %v3478
    %v3743 = vmul.f32 %v3479, %v3479
    %v3744 = vmul.f32 %v3480, %v3480
    %v3745 = vmul.f32 %v3481, %v3481
    %v3746 = vmul.f32 %v3482, %v3482
    %v3747 = vmul.f32 %v3483, %v3483
    %v3748 = vmul.f32 %v3484, %v3484
    %v3749 = vmul.f32 %v3485, %v3485
    %v3750 = vmul.f32 %v3486, %v3486
    %v3751 = vmul.f32 %v3487, %v3487
    %v3752 = vmul.f32 %v3488, %v3488
    %v3753 = vmul.f32 %v3489, %v3489
    %v3754 = vmul.f32 %v3490, %v3490
    %v3755 = vmul.f32 %v3491, %v3491
    %v3756 = vmul.f32 %v3492, %v3492
    %v3757 = vmul.f32 %v3493, %v3493
    %v3758 = vmul.f32 %v3494, %v3494
    %v3759 = vmul.f32 %v3495, %v3495
    %v3760 = vmul.f32 %v3496, %v3496
    %v3761 = vmul.f32 %v3497, %v3497
    %v3762 = vmul.f32 %v3498, %v3498
    %v3763 = vmul.f32 %v3499, %v3499
    %v3764 = vmul.f32 %v3500, %v3500
    %v3765 = vmul.f32 %v3501, %v3501
    %v3766 = vmul.f32 %v3502, %v3502
    %v3767 = vsel %vm3503, %v3703, 0.0
    %v3768 = vsel %vm3503, %v3735, 0.0
    %v3769 = vadd.f32 %v3767, %v3768
    %3770 = vadd.xlane.f32.xlu0 %v3769
    %v3771 = vpop.xlane.xlu0 %3770
    %v3772 = vsel %vm3503, %v3704, 0.0
    %v3773 = vsel %vm3503, %v3736, 0.0
    %v3774 = vadd.f32 %v3772, %v3773
    %3775 = vadd.xlane.f32.xlu0 %v3774
    %v3776 = vpop.xlane.xlu0 %3775
    %v3777 = vsel %vm3503, %v3705, 0.0
    %v3778 = vsel %vm3503, %v3737, 0.0
    %v3779 = vadd.f32 %v3777, %v3778
    %3780 = vadd.xlane.f32.xlu0 %v3779
    %v3781 = vpop.xlane.xlu0 %3780
    %v3782 = vsel %vm3503, %v3706, 0.0
    %v3783 = vsel %vm3503, %v3738, 0.0
    %v3784 = vadd.f32 %v3782, %v3783
    %3785 = vadd.xlane.f32.xlu0 %v3784
    %v3786 = vpop.xlane.xlu0 %3785
    %v3787 = vsel %vm3503, %v3707, 0.0
    %v3788 = vsel %vm3503, %v3739, 0.0
    %v3789 = vadd.f32 %v3787, %v3788
    %3790 = vadd.xlane.f32.xlu0 %v3789
    %v3791 = vpop.xlane.xlu0 %3790
    %v3792 = vsel %vm3503, %v3708, 0.0
    %v3793 = vsel %vm3503, %v3740, 0.0
    %v3794 = vadd.f32 %v3792, %v3793
    %3795 = vadd.xlane.f32.xlu0 %v3794
    %v3796 = vpop.xlane.xlu0 %3795
    %v3797 = vsel %vm3503, %v3709, 0.0
    %v3798 = vsel %vm3503, %v3741, 0.0
    %v3799 = vadd.f32 %v3797, %v3798
    %3800 = vadd.xlane.f32.xlu0 %v3799
    %v3801 = vpop.xlane.xlu0 %3800
    %v3802 = vsel %vm3503, %v3710, 0.0
    %v3803 = vsel %vm3503, %v3742, 0.0
    %v3804 = vadd.f32 %v3802, %v3803
    %3805 = vadd.xlane.f32.xlu0 %v3804
    %v3806 = vpop.xlane.xlu0 %3805
    %v3807 = vsel %vm3503, %v3711, 0.0
    %v3808 = vsel %vm3503, %v3743, 0.0
    %v3809 = vadd.f32 %v3807, %v3808
    %3810 = vadd.xlane.f32.xlu0 %v3809
    %v3811 = vpop.xlane.xlu0 %3810
    %v3812 = vsel %vm3503, %v3712, 0.0
    %v3813 = vsel %vm3503, %v3744, 0.0
    %v3814 = vadd.f32 %v3812, %v3813
    %3815 = vadd.xlane.f32.xlu0 %v3814
    %v3816 = vpop.xlane.xlu0 %3815
    %v3817 = vsel %vm3503, %v3713, 0.0
    %v3818 = vsel %vm3503, %v3745, 0.0
    %v3819 = vadd.f32 %v3817, %v3818
    %3820 = vadd.xlane.f32.xlu0 %v3819
    %v3821 = vpop.xlane.xlu0 %3820
    %v3822 = vsel %vm3503, %v3714, 0.0
    %v3823 = vsel %vm3503, %v3746, 0.0
    %v3824 = vadd.f32 %v3822, %v3823
    %3825 = vadd.xlane.f32.xlu0 %v3824
    %v3826 = vpop.xlane.xlu0 %3825
    %v3827 = vsel %vm3503, %v3715, 0.0
    %v3828 = vsel %vm3503, %v3747, 0.0
    %v3829 = vadd.f32 %v3827, %v3828
    %3830 = vadd.xlane.f32.xlu0 %v3829
    %v3831 = vpop.xlane.xlu0 %3830
    %v3832 = vsel %vm3503, %v3716, 0.0
    %v3833 = vsel %vm3503, %v3748, 0.0
    %v3834 = vadd.f32 %v3832, %v3833
    %3835 = vadd.xlane.f32.xlu0 %v3834
    %v3836 = vpop.xlane.xlu0 %3835
    %v3837 = vsel %vm3503, %v3717, 0.0
    %v3838 = vsel %vm3503, %v3749, 0.0
    %v3839 = vadd.f32 %v3837, %v3838
    %3840 = vadd.xlane.f32.xlu0 %v3839
    %v3841 = vpop.xlane.xlu0 %3840
    %v3842 = vsel %vm3503, %v3718, 0.0
    %v3843 = vsel %vm3503, %v3750, 0.0
    %v3844 = vadd.f32 %v3842, %v3843
    %3845 = vadd.xlane.f32.xlu0 %v3844
    %v3846 = vpop.xlane.xlu0 %3845
    %v3847 = vsel %vm3503, %v3719, 0.0
    %v3848 = vsel %vm3503, %v3751, 0.0
    %v3849 = vadd.f32 %v3847, %v3848
    %3850 = vadd.xlane.f32.xlu0 %v3849
    %v3851 = vpop.xlane.xlu0 %3850
    %v3852 = vsel %vm3503, %v3720, 0.0
    %v3853 = vsel %vm3503, %v3752, 0.0
    %v3854 = vadd.f32 %v3852, %v3853
    %3855 = vadd.xlane.f32.xlu0 %v3854
    %v3856 = vpop.xlane.xlu0 %3855
    %v3857 = vsel %vm3503, %v3721, 0.0
    %v3858 = vsel %vm3503, %v3753, 0.0
    %v3859 = vadd.f32 %v3857, %v3858
    %3860 = vadd.xlane.f32.xlu0 %v3859
    %v3861 = vpop.xlane.xlu0 %3860
    %v3862 = vsel %vm3503, %v3722, 0.0
    %v3863 = vsel %vm3503, %v3754, 0.0
    %v3864 = vadd.f32 %v3862, %v3863
    %3865 = vadd.xlane.f32.xlu0 %v3864
    %v3866 = vpop.xlane.xlu0 %3865
    %v3867 = vsel %vm3503, %v3723, 0.0
    %v3868 = vsel %vm3503, %v3755, 0.0
    %v3869 = vadd.f32 %v3867, %v3868
    %3870 = vadd.xlane.f32.xlu0 %v3869
    %v3871 = vpop.xlane.xlu0 %3870
    %v3872 = vsel %vm3503, %v3724, 0.0
    %v3873 = vsel %vm3503, %v3756, 0.0
    %v3874 = vadd.f32 %v3872, %v3873
    %3875 = vadd.xlane.f32.xlu0 %v3874
    %v3876 = vpop.xlane.xlu0 %3875
    %v3877 = vsel %vm3503, %v3725, 0.0
    %v3878 = vsel %vm3503, %v3757, 0.0
    %v3879 = vadd.f32 %v3877, %v3878
    %3880 = vadd.xlane.f32.xlu0 %v3879
    %v3881 = vpop.xlane.xlu0 %3880
    %v3882 = vsel %vm3503, %v3726, 0.0
    %v3883 = vsel %vm3503, %v3758, 0.0
    %v3884 = vadd.f32 %v3882, %v3883
    %3885 = vadd.xlane.f32.xlu0 %v3884
    %v3886 = vpop.xlane.xlu0 %3885
    %v3887 = vsel %vm3503, %v3727, 0.0
    %v3888 = vsel %vm3503, %v3759, 0.0
    %v3889 = vadd.f32 %v3887, %v3888
    %3890 = vadd.xlane.f32.xlu0 %v3889
    %v3891 = vpop.xlane.xlu0 %3890
    %v3892 = vsel %vm3503, %v3728, 0.0
    %v3893 = vsel %vm3503, %v3760, 0.0
    %v3894 = vadd.f32 %v3892, %v3893
    %3895 = vadd.xlane.f32.xlu0 %v3894
    %v3896 = vpop.xlane.xlu0 %3895
    %v3897 = vsel %vm3503, %v3729, 0.0
    %v3898 = vsel %vm3503, %v3761, 0.0
    %v3899 = vadd.f32 %v3897, %v3898
    %3900 = vadd.xlane.f32.xlu0 %v3899
    %v3901 = vpop.xlane.xlu0 %3900
    %v3902 = vsel %vm3503, %v3730, 0.0
    %v3903 = vsel %vm3503, %v3762, 0.0
    %v3904 = vadd.f32 %v3902, %v3903
    %3905 = vadd.xlane.f32.xlu0 %v3904
    %v3906 = vpop.xlane.xlu0 %3905
    %v3907 = vsel %vm3503, %v3731, 0.0
    %v3908 = vsel %vm3503, %v3763, 0.0
    %v3909 = vadd.f32 %v3907, %v3908
    %3910 = vadd.xlane.f32.xlu0 %v3909
    %v3911 = vpop.xlane.xlu0 %3910
    %v3912 = vsel %vm3503, %v3732, 0.0
    %v3913 = vsel %vm3503, %v3764, 0.0
    %v3914 = vadd.f32 %v3912, %v3913
    %3915 = vadd.xlane.f32.xlu0 %v3914
    %v3916 = vpop.xlane.xlu0 %3915
    %v3917 = vsel %vm3503, %v3733, 0.0
    %v3918 = vsel %vm3503, %v3765, 0.0
    %v3919 = vadd.f32 %v3917, %v3918
    %3920 = vadd.xlane.f32.xlu0 %v3919
    %v3921 = vpop.xlane.xlu0 %3920
    %v3922 = vsel %vm3503, %v3734, 0.0
    %v3923 = vsel %vm3503, %v3766, 0.0
    %v3924 = vadd.f32 %v3922, %v3923
    %3925 = vadd.xlane.f32.xlu0 %v3924
    %v3926 = vpop.xlane.xlu0 %3925
    %v3927 = vmul.f32 %v3771, %v3670
    %v3928 = vmul.f32 %v3776, %v3670
    %v3929 = vmul.f32 %v3781, %v3670
    %v3930 = vmul.f32 %v3786, %v3670
    %v3931 = vmul.f32 %v3791, %v3670
    %v3932 = vmul.f32 %v3796, %v3670
    %v3933 = vmul.f32 %v3801, %v3670
    %v3934 = vmul.f32 %v3806, %v3670
    %v3935 = vmul.f32 %v3811, %v3670
    %v3936 = vmul.f32 %v3816, %v3670
    %v3937 = vmul.f32 %v3821, %v3670
    %v3938 = vmul.f32 %v3826, %v3670
    %v3939 = vmul.f32 %v3831, %v3670
    %v3940 = vmul.f32 %v3836, %v3670
    %v3941 = vmul.f32 %v3841, %v3670
    %v3942 = vmul.f32 %v3846, %v3670
    %v3943 = vmul.f32 %v3851, %v3670
    %v3944 = vmul.f32 %v3856, %v3670
    %v3945 = vmul.f32 %v3861, %v3670
    %v3946 = vmul.f32 %v3866, %v3670
    %v3947 = vmul.f32 %v3871, %v3670
    %v3948 = vmul.f32 %v3876, %v3670
    %v3949 = vmul.f32 %v3881, %v3670
    %v3950 = vmul.f32 %v3886, %v3670
    %v3951 = vmul.f32 %v3891, %v3670
    %v3952 = vmul.f32 %v3896, %v3670
    %v3953 = vmul.f32 %v3901, %v3670
    %v3954 = vmul.f32 %v3906, %v3670
    %v3955 = vmul.f32 %v3911, %v3670
    %v3956 = vmul.f32 %v3916, %v3670
    %v3957 = vmul.f32 %v3921, %v3670
    %v3958 = vmul.f32 %v3926, %v3670
    %v3959 = vmul.f32 %v3671, %v3671
    %v3960 = vmul.f32 %v3672, %v3672
    %v3961 = vmul.f32 %v3673, %v3673
    %v3962 = vmul.f32 %v3674, %v3674
    %v3963 = vmul.f32 %v3675, %v3675
    %v3964 = vmul.f32 %v3676, %v3676
    %v3965 = vmul.f32 %v3677, %v3677
    %v3966 = vmul.f32 %v3678, %v3678
    %v3967 = vmul.f32 %v3679, %v3679
    %v3968 = vmul.f32 %v3680, %v3680
    %v3969 = vmul.f32 %v3681, %v3681
    %v3970 = vmul.f32 %v3682, %v3682
    %v3971 = vmul.f32 %v3683, %v3683
    %v3972 = vmul.f32 %v3684, %v3684
    %v3973 = vmul.f32 %v3685, %v3685
    %v3974 = vmul.f32 %v3686, %v3686
    %v3975 = vmul.f32 %v3687, %v3687
    %v3976 = vmul.f32 %v3688, %v3688
    %v3977 = vmul.f32 %v3689, %v3689
    %v3978 = vmul.f32 %v3690, %v3690
    %v3979 = vmul.f32 %v3691, %v3691
    %v3980 = vmul.f32 %v3692, %v3692
    %v3981 = vmul.f32 %v3693, %v3693
    %v3982 = vmul.f32 %v3694, %v3694
    %v3983 = vmul.f32 %v3695, %v3695
    %v3984 = vmul.f32 %v3696, %v3696
    %v3985 = vmul.f32 %v3697, %v3697
    %v3986 = vmul.f32 %v3698, %v3698
    %v3987 = vmul.f32 %v3699, %v3699
    %v3988 = vmul.f32 %v3700, %v3700
    %v3989 = vmul.f32 %v3701, %v3701
    %v3990 = vmul.f32 %v3702, %v3702
    %v3991 = vsub.f32 %v3927, %v3959
    %v3992 = vsub.f32 %v3928, %v3960
    %v3993 = vsub.f32 %v3929, %v3961
    %v3994 = vsub.f32 %v3930, %v3962
    %v3995 = vsub.f32 %v3931, %v3963
    %v3996 = vsub.f32 %v3932, %v3964
    %v3997 = vsub.f32 %v3933, %v3965
    %v3998 = vsub.f32 %v3934, %v3966
    %v3999 = vsub.f32 %v3935, %v3967
    %v4000 = vsub.f32 %v3936, %v3968
    %v4001 = vsub.f32 %v3937, %v3969
    %v4002 = vsub.f32 %v3938, %v3970
    %v4003 = vsub.f32 %v3939, %v3971
    %v4004 = vsub.f32 %v3940, %v3972
    %v4005 = vsub.f32 %v3941, %v3973
    %v4006 = vsub.f32 %v3942, %v3974
    %v4007 = vsub.f32 %v3943, %v3975
    %v4008 = vsub.f32 %v3944, %v3976
    %v4009 = vsub.f32 %v3945, %v3977
    %v4010 = vsub.f32 %v3946, %v3978
    %v4011 = vsub.f32 %v3947, %v3979
    %v4012 = vsub.f32 %v3948, %v3980
    %v4013 = vsub.f32 %v3949, %v3981
    %v4014 = vsub.f32 %v3950, %v3982
    %v4015 = vsub.f32 %v3951, %v3983
    %v4016 = vsub.f32 %v3952, %v3984
    %v4017 = vsub.f32 %v3953, %v3985
    %v4018 = vsub.f32 %v3954, %v3986
    %v4019 = vsub.f32 %v3955, %v3987
    %v4020 = vsub.f32 %v3956, %v3988
    %v4021 = vsub.f32 %v3957, %v3989
    %v4022 = vsub.f32 %v3958, %v3990
    %v4023 = vsub.f32 %v3439, %v3671
    %v4024 = vsub.f32 %v3440, %v3672
    %v4025 = vsub.f32 %v3441, %v3673
    %v4026 = vsub.f32 %v3442, %v3674
    %v4027 = vsub.f32 %v3443, %v3675
    %v4028 = vsub.f32 %v3444, %v3676
    %v4029 = vsub.f32 %v3445, %v3677
    %v4030 = vsub.f32 %v3446, %v3678
    %v4031 = vsub.f32 %v3447, %v3679
    %v4032 = vsub.f32 %v3448, %v3680
    %v4033 = vsub.f32 %v3449, %v3681
    %v4034 = vsub.f32 %v3450, %v3682
    %v4035 = vsub.f32 %v3451, %v3683
    %v4036 = vsub.f32 %v3452, %v3684
    %v4037 = vsub.f32 %v3453, %v3685
    %v4038 = vsub.f32 %v3454, %v3686
    %v4039 = vsub.f32 %v3455, %v3687
    %v4040 = vsub.f32 %v3456, %v3688
    %v4041 = vsub.f32 %v3457, %v3689
    %v4042 = vsub.f32 %v3458, %v3690
    %v4043 = vsub.f32 %v3459, %v3691
    %v4044 = vsub.f32 %v3460, %v3692
    %v4045 = vsub.f32 %v3461, %v3693
    %v4046 = vsub.f32 %v3462, %v3694
    %v4047 = vsub.f32 %v3463, %v3695
    %v4048 = vsub.f32 %v3464, %v3696
    %v4049 = vsub.f32 %v3465, %v3697
    %v4050 = vsub.f32 %v3466, %v3698
    %v4051 = vsub.f32 %v3467, %v3699
    %v4052 = vsub.f32 %v3468, %v3700
    %v4053 = vsub.f32 %v3469, %v3701
    %v4054 = vsub.f32 %v3470, %v3702
    %v4055 = vsub.f32 %v3471, %v3671
    %v4056 = vsub.f32 %v3472, %v3672
    %v4057 = vsub.f32 %v3473, %v3673
    %v4058 = vsub.f32 %v3474, %v3674
    %v4059 = vsub.f32 %v3475, %v3675
    %v4060 = vsub.f32 %v3476, %v3676
    %v4061 = vsub.f32 %v3477, %v3677
    %v4062 = vsub.f32 %v3478, %v3678
    %v4063 = vsub.f32 %v3479, %v3679
    %v4064 = vsub.f32 %v3480, %v3680
    %v4065 = vsub.f32 %v3481, %v3681
    %v4066 = vsub.f32 %v3482, %v3682
    %v4067 = vsub.f32 %v3483, %v3683
    %v4068 = vsub.f32 %v3484, %v3684
    %v4069 = vsub.f32 %v3485, %v3685
    %v4070 = vsub.f32 %v3486, %v3686
    %v4071 = vsub.f32 %v3487, %v3687
    %v4072 = vsub.f32 %v3488, %v3688
    %v4073 = vsub.f32 %v3489, %v3689
    %v4074 = vsub.f32 %v3490, %v3690
    %v4075 = vsub.f32 %v3491, %v3691
    %v4076 = vsub.f32 %v3492, %v3692
    %v4077 = vsub.f32 %v3493, %v3693
    %v4078 = vsub.f32 %v3494, %v3694
    %v4079 = vsub.f32 %v3495, %v3695
    %v4080 = vsub.f32 %v3496, %v3696
    %v4081 = vsub.f32 %v3497, %v3697
    %v4082 = vsub.f32 %v3498, %v3698
    %v4083 = vsub.f32 %v3499, %v3699
    %v4084 = vsub.f32 %v3500, %v3700
    %v4085 = vsub.f32 %v3501, %v3701
    %v4086 = vsub.f32 %v3502, %v3702
    %v4087 = vadd.f32 %v3991, 32.0
    %v4088 = vadd.f32 %v3992, 32.0
    %v4089 = vadd.f32 %v3993, 32.0
    %v4090 = vadd.f32 %v3994, 32.0
    %v4091 = vadd.f32 %v3995, 32.0
    %v4092 = vadd.f32 %v3996, 32.0
    %v4093 = vadd.f32 %v3997, 32.0
    %v4094 = vadd.f32 %v3998, 32.0
    %v4095 = vadd.f32 %v3999, 32.0
    %v4096 = vadd.f32 %v4000, 32.0
    %v4097 = vadd.f32 %v4001, 32.0
    %v4098 = vadd.f32 %v4002, 32.0
    %v4099 = vadd.f32 %v4003, 32.0
    %v4100 = vadd.f32 %v4004, 32.0
    %v4101 = vadd.f32 %v4005, 32.0
    %v4102 = vadd.f32 %v4006, 32.0
    %v4103 = vadd.f32 %v4007, 32.0
    %v4104 = vadd.f32 %v4008, 32.0
    %v4105 = vadd.f32 %v4009, 32.0
    %v4106 = vadd.f32 %v4010, 32.0
    %v4107 = vadd.f32 %v4011, 32.0
    %v4108 = vadd.f32 %v4012, 32.0
    %v4109 = vadd.f32 %v4013, 32.0
    %v4110 = vadd.f32 %v4014, 32.0
    %v4111 = vadd.f32 %v4015, 32.0
    %v4112 = vadd.f32 %v4016, 32.0
    %v4113 = vadd.f32 %v4017, 32.0
    %v4114 = vadd.f32 %v4018, 32.0
    %v4115 = vadd.f32 %v4019, 32.0
    %v4116 = vadd.f32 %v4020, 32.0
    %v4117 = vadd.f32 %v4021, 32.0
    %v4118 = vadd.f32 %v4022, 32.0
    %v4119 = vrsqrt.pop %v4087
    %v4120 = vmul.f32 %v4119, %v4087
    %v4121 = vmul.f32 %v4120, %v4119
    %v4122 = vmul.f32 0.5, %v4121
    %v4123 = vsub.f32 1.5, %v4122
    %v4124 = vmul.f32 %v4119, %v4123
    %vm4125 = vweird.f32 %v4087
    %vm4126 = vweird.f32 %v4119
    %vm4127 = vmor %vm4125, %vm4126
    %v4128 = vsel %vm4127, %v4119, %v4124
    %v4129 = vrsqrt.pop %v4088
    %v4130 = vmul.f32 %v4129, %v4088
    %v4131 = vmul.f32 %v4130, %v4129
    %v4132 = vmul.f32 0.5, %v4131
    %v4133 = vsub.f32 1.5, %v4132
    %v4134 = vmul.f32 %v4129, %v4133
    %vm4135 = vweird.f32 %v4088
    %vm4136 = vweird.f32 %v4129
    %vm4137 = vmor %vm4135, %vm4136
    %v4138 = vsel %vm4137, %v4129, %v4134
    %v4139 = vrsqrt.pop %v4089
    %v4140 = vmul.f32 %v4139, %v4089
    %v4141 = vmul.f32 %v4140, %v4139
    %v4142 = vmul.f32 0.5, %v4141
    %v4143 = vsub.f32 1.5, %v4142
    %v4144 = vmul.f32 %v4139, %v4143
    %vm4145 = vweird.f32 %v4089
    %vm4146 = vweird.f32 %v4139
    %vm4147 = vmor %vm4145, %vm4146
    %v4148 = vsel %vm4147, %v4139, %v4144
    %v4149 = vrsqrt.pop %v4090
    %v4150 = vmul.f32 %v4149, %v4090
    %v4151 = vmul.f32 %v4150, %v4149
    %v4152 = vmul.f32 0.5, %v4151
    %v4153 = vsub.f32 1.5, %v4152
    %v4154 = vmul.f32 %v4149, %v4153
    %vm4155 = vweird.f32 %v4090
    %vm4156 = vweird.f32 %v4149
    %vm4157 = vmor %vm4155, %vm4156
    %v4158 = vsel %vm4157, %v4149, %v4154
    %v4159 = vrsqrt.pop %v4091
    %v4160 = vmul.f32 %v4159, %v4091
    %v4161 = vmul.f32 %v4160, %v4159
    %v4162 = vmul.f32 0.5, %v4161
    %v4163 = vsub.f32 1.5, %v4162
    %v4164 = vmul.f32 %v4159, %v4163
    %vm4165 = vweird.f32 %v4091
    %vm4166 = vweird.f32 %v4159
    %vm4167 = vmor %vm4165, %vm4166
    %v4168 = vsel %vm4167, %v4159, %v4164
    %v4169 = vrsqrt.pop %v4092
    %v4170 = vmul.f32 %v4169, %v4092
    %v4171 = vmul.f32 %v4170, %v4169
    %v4172 = vmul.f32 0.5, %v4171
    %v4173 = vsub.f32 1.5, %v4172
    %v4174 = vmul.f32 %v4169, %v4173
    %vm4175 = vweird.f32 %v4092
    %vm4176 = vweird.f32 %v4169
    %vm4177 = vmor %vm4175, %vm4176
    %v4178 = vsel %vm4177, %v4169, %v4174
    %v4179 = vrsqrt.pop %v4093
    %v4180 = vmul.f32 %v4179, %v4093
    %v4181 = vmul.f32 %v4180, %v4179
    %v4182 = vmul.f32 0.5, %v4181
    %v4183 = vsub.f32 1.5, %v4182
    %v4184 = vmul.f32 %v4179, %v4183
    %vm4185 = vweird.f32 %v4093
    %vm4186 = vweird.f32 %v4179
    %vm4187 = vmor %vm4185, %vm4186
    %v4188 = vsel %vm4187, %v4179, %v4184
    %v4189 = vrsqrt.pop %v4094
    %v4190 = vmul.f32 %v4189, %v4094
    %v4191 = vmul.f32 %v4190, %v4189
    %v4192 = vmul.f32 0.5, %v4191
    %v4193 = vsub.f32 1.5, %v4192
    %v4194 = vmul.f32 %v4189, %v4193
    %vm4195 = vweird.f32 %v4094
    %vm4196 = vweird.f32 %v4189
    %vm4197 = vmor %vm4195, %vm4196
    %v4198 = vsel %vm4197, %v4189, %v4194
    %v4199 = vrsqrt.pop %v4095
    %v4200 = vmul.f32 %v4199, %v4095
    %v4201 = vmul.f32 %v4200, %v4199
    %v4202 = vmul.f32 0.5, %v4201
    %v4203 = vsub.f32 1.5, %v4202
    %v4204 = vmul.f32 %v4199, %v4203
    %vm4205 = vweird.f32 %v4095
    %vm4206 = vweird.f32 %v4199
    %vm4207 = vmor %vm4205, %vm4206
    %v4208 = vsel %vm4207, %v4199, %v4204
    %v4209 = vrsqrt.pop %v4096
    %v4210 = vmul.f32 %v4209, %v4096
    %v4211 = vmul.f32 %v4210, %v4209
    %v4212 = vmul.f32 0.5, %v4211
    %v4213 = vsub.f32 1.5, %v4212
    %v4214 = vmul.f32 %v4209, %v4213
    %vm4215 = vweird.f32 %v4096
    %vm4216 = vweird.f32 %v4209
    %vm4217 = vmor %vm4215, %vm4216
    %v4218 = vsel %vm4217, %v4209, %v4214
    %v4219 = vrsqrt.pop %v4097
    %v4220 = vmul.f32 %v4219, %v4097
    %v4221 = vmul.f32 %v4220, %v4219
    %v4222 = vmul.f32 0.5, %v4221
    %v4223 = vsub.f32 1.5, %v4222
    %v4224 = vmul.f32 %v4219, %v4223
    %vm4225 = vweird.f32 %v4097
    %vm4226 = vweird.f32 %v4219
    %vm4227 = vmor %vm4225, %vm4226
    %v4228 = vsel %vm4227, %v4219, %v4224
    %v4229 = vrsqrt.pop %v4098
    %v4230 = vmul.f32 %v4229, %v4098
    %v4231 = vmul.f32 %v4230, %v4229
    %v4232 = vmul.f32 0.5, %v4231
    %v4233 = vsub.f32 1.5, %v4232
    %v4234 = vmul.f32 %v4229, %v4233
    %vm4235 = vweird.f32 %v4098
    %vm4236 = vweird.f32 %v4229
    %vm4237 = vmor %vm4235, %vm4236
    %v4238 = vsel %vm4237, %v4229, %v4234
    %v4239 = vrsqrt.pop %v4099
    %v4240 = vmul.f32 %v4239, %v4099
    %v4241 = vmul.f32 %v4240, %v4239
    %v4242 = vmul.f32 0.5, %v4241
    %v4243 = vsub.f32 1.5, %v4242
    %v4244 = vmul.f32 %v4239, %v4243
    %vm4245 = vweird.f32 %v4099
    %vm4246 = vweird.f32 %v4239
    %vm4247 = vmor %vm4245, %vm4246
    %v4248 = vsel %vm4247, %v4239, %v4244
    %v4249 = vrsqrt.pop %v4100
    %v4250 = vmul.f32 %v4249, %v4100
    %v4251 = vmul.f32 %v4250, %v4249
    %v4252 = vmul.f32 0.5, %v4251
    %v4253 = vsub.f32 1.5, %v4252
    %v4254 = vmul.f32 %v4249, %v4253
    %vm4255 = vweird.f32 %v4100
    %vm4256 = vweird.f32 %v4249
    %vm4257 = vmor %vm4255, %vm4256
    %v4258 = vsel %vm4257, %v4249, %v4254
    %v4259 = vrsqrt.pop %v4101
    %v4260 = vmul.f32 %v4259, %v4101
    %v4261 = vmul.f32 %v4260, %v4259
    %v4262 = vmul.f32 0.5, %v4261
    %v4263 = vsub.f32 1.5, %v4262
    %v4264 = vmul.f32 %v4259, %v4263
    %vm4265 = vweird.f32 %v4101
    %vm4266 = vweird.f32 %v4259
    %vm4267 = vmor %vm4265, %vm4266
    %v4268 = vsel %vm4267, %v4259, %v4264
    %v4269 = vrsqrt.pop %v4102
    %v4270 = vmul.f32 %v4269, %v4102
    %v4271 = vmul.f32 %v4270, %v4269
    %v4272 = vmul.f32 0.5, %v4271
    %v4273 = vsub.f32 1.5, %v4272
    %v4274 = vmul.f32 %v4269, %v4273
    %vm4275 = vweird.f32 %v4102
    %vm4276 = vweird.f32 %v4269
    %vm4277 = vmor %vm4275, %vm4276
    %v4278 = vsel %vm4277, %v4269, %v4274
    %v4279 = vrsqrt.pop %v4103
    %v4280 = vmul.f32 %v4279, %v4103
    %v4281 = vmul.f32 %v4280, %v4279
    %v4282 = vmul.f32 0.5, %v4281
    %v4283 = vsub.f32 1.5, %v4282
    %v4284 = vmul.f32 %v4279, %v4283
    %vm4285 = vweird.f32 %v4103
    %vm4286 = vweird.f32 %v4279
    %vm4287 = vmor %vm4285, %vm4286
    %v4288 = vsel %vm4287, %v4279, %v4284
    %v4289 = vrsqrt.pop %v4104
    %v4290 = vmul.f32 %v4289, %v4104
    %v4291 = vmul.f32 %v4290, %v4289
    %v4292 = vmul.f32 0.5, %v4291
    %v4293 = vsub.f32 1.5, %v4292
    %v4294 = vmul.f32 %v4289, %v4293
    %vm4295 = vweird.f32 %v4104
    %vm4296 = vweird.f32 %v4289
    %vm4297 = vmor %vm4295, %vm4296
    %v4298 = vsel %vm4297, %v4289, %v4294
    %v4299 = vrsqrt.pop %v4105
    %v4300 = vmul.f32 %v4299, %v4105
    %v4301 = vmul.f32 %v4300, %v4299
    %v4302 = vmul.f32 0.5, %v4301
    %v4303 = vsub.f32 1.5, %v4302
    %v4304 = vmul.f32 %v4299, %v4303
    %vm4305 = vweird.f32 %v4105
    %vm4306 = vweird.f32 %v4299
    %vm4307 = vmor %vm4305, %vm4306
    %v4308 = vsel %vm4307, %v4299, %v4304
    %v4309 = vrsqrt.pop %v4106
    %v4310 = vmul.f32 %v4309, %v4106
    %v4311 = vmul.f32 %v4310, %v4309
    %v4312 = vmul.f32 0.5, %v4311
    %v4313 = vsub.f32 1.5, %v4312
    %v4314 = vmul.f32 %v4309, %v4313
    %vm4315 = vweird.f32 %v4106
    %vm4316 = vweird.f32 %v4309
    %vm4317 = vmor %vm4315, %vm4316
    %v4318 = vsel %vm4317, %v4309, %v4314
    %v4319 = vrsqrt.pop %v4107
    %v4320 = vmul.f32 %v4319, %v4107
    %v4321 = vmul.f32 %v4320, %v4319
    %v4322 = vmul.f32 0.5, %v4321
    %v4323 = vsub.f32 1.5, %v4322
    %v4324 = vmul.f32 %v4319, %v4323
    %vm4325 = vweird.f32 %v4107
    %vm4326 = vweird.f32 %v4319
    %vm4327 = vmor %vm4325, %vm4326
    %v4328 = vsel %vm4327, %v4319, %v4324
    %v4329 = vrsqrt.pop %v4108
    %v4330 = vmul.f32 %v4329, %v4108
    %v4331 = vmul.f32 %v4330, %v4329
    %v4332 = vmul.f32 0.5, %v4331
    %v4333 = vsub.f32 1.5, %v4332
    %v4334 = vmul.f32 %v4329, %v4333
    %vm4335 = vweird.f32 %v4108
    %vm4336 = vweird.f32 %v4329
    %vm4337 = vmor %vm4335, %vm4336
    %v4338 = vsel %vm4337, %v4329, %v4334
    %v4339 = vrsqrt.pop %v4109
    %v4340 = vmul.f32 %v4339, %v4109
    %v4341 = vmul.f32 %v4340, %v4339
    %v4342 = vmul.f32 0.5, %v4341
    %v4343 = vsub.f32 1.5, %v4342
    %v4344 = vmul.f32 %v4339, %v4343
    %vm4345 = vweird.f32 %v4109
    %vm4346 = vweird.f32 %v4339
    %vm4347 = vmor %vm4345, %vm4346
    %v4348 = vsel %vm4347, %v4339, %v4344
    %v4349 = vrsqrt.pop %v4110
    %v4350 = vmul.f32 %v4349, %v4110
    %v4351 = vmul.f32 %v4350, %v4349
    %v4352 = vmul.f32 0.5, %v4351
    %v4353 = vsub.f32 1.5, %v4352
    %v4354 = vmul.f32 %v4349, %v4353
    %vm4355 = vweird.f32 %v4110
    %vm4356 = vweird.f32 %v4349
    %vm4357 = vmor %vm4355, %vm4356
    %v4358 = vsel %vm4357, %v4349, %v4354
    %v4359 = vrsqrt.pop %v4111
    %v4360 = vmul.f32 %v4359, %v4111
    %v4361 = vmul.f32 %v4360, %v4359
    %v4362 = vmul.f32 0.5, %v4361
    %v4363 = vsub.f32 1.5, %v4362
    %v4364 = vmul.f32 %v4359, %v4363
    %vm4365 = vweird.f32 %v4111
    %vm4366 = vweird.f32 %v4359
    %vm4367 = vmor %vm4365, %vm4366
    %v4368 = vsel %vm4367, %v4359, %v4364
    %v4369 = vrsqrt.pop %v4112
    %v4370 = vmul.f32 %v4369, %v4112
    %v4371 = vmul.f32 %v4370, %v4369
    %v4372 = vmul.f32 0.5, %v4371
    %v4373 = vsub.f32 1.5, %v4372
    %v4374 = vmul.f32 %v4369, %v4373
    %vm4375 = vweird.f32 %v4112
    %vm4376 = vweird.f32 %v4369
    %vm4377 = vmor %vm4375, %vm4376
    %v4378 = vsel %vm4377, %v4369, %v4374
    %v4379 = vrsqrt.pop %v4113
    %v4380 = vmul.f32 %v4379, %v4113
    %v4381 = vmul.f32 %v4380, %v4379
    %v4382 = vmul.f32 0.5, %v4381
    %v4383 = vsub.f32 1.5, %v4382
    %v4384 = vmul.f32 %v4379, %v4383
    %vm4385 = vweird.f32 %v4113
    %vm4386 = vweird.f32 %v4379
    %vm4387 = vmor %vm4385, %vm4386
    %v4388 = vsel %vm4387, %v4379, %v4384
    %v4389 = vrsqrt.pop %v4114
    %v4390 = vmul.f32 %v4389, %v4114
    %v4391 = vmul.f32 %v4390, %v4389
    %v4392 = vmul.f32 0.5, %v4391
    %v4393 = vsub.f32 1.5, %v4392
    %v4394 = vmul.f32 %v4389, %v4393
    %vm4395 = vweird.f32 %v4114
    %vm4396 = vweird.f32 %v4389
    %vm4397 = vmor %vm4395, %vm4396
    %v4398 = vsel %vm4397, %v4389, %v4394
    %v4399 = vrsqrt.pop %v4115
    %v4400 = vmul.f32 %v4399, %v4115
    %v4401 = vmul.f32 %v4400, %v4399
    %v4402 = vmul.f32 0.5, %v4401
    %v4403 = vsub.f32 1.5, %v4402
    %v4404 = vmul.f32 %v4399, %v4403
    %vm4405 = vweird.f32 %v4115
    %vm4406 = vweird.f32 %v4399
    %vm4407 = vmor %vm4405, %vm4406
    %v4408 = vsel %vm4407, %v4399, %v4404
    %v4409 = vrsqrt.pop %v4116
    %v4410 = vmul.f32 %v4409, %v4116
    %v4411 = vmul.f32 %v4410, %v4409
    %v4412 = vmul.f32 0.5, %v4411
    %v4413 = vsub.f32 1.5, %v4412
    %v4414 = vmul.f32 %v4409, %v4413
    %vm4415 = vweird.f32 %v4116
    %vm4416 = vweird.f32 %v4409
    %vm4417 = vmor %vm4415, %vm4416
    %v4418 = vsel %vm4417, %v4409, %v4414
    %v4419 = vrsqrt.pop %v4117
    %v4420 = vmul.f32 %v4419, %v4117
    %v4421 = vmul.f32 %v4420, %v4419
    %v4422 = vmul.f32 0.5, %v4421
    %v4423 = vsub.f32 1.5, %v4422
    %v4424 = vmul.f32 %v4419, %v4423
    %vm4425 = vweird.f32 %v4117
    %vm4426 = vweird.f32 %v4419
    %vm4427 = vmor %vm4425, %vm4426
    %v4428 = vsel %vm4427, %v4419, %v4424
    %v4429 = vrsqrt.pop %v4118
    %v4430 = vmul.f32 %v4429, %v4118
    %v4431 = vmul.f32 %v4430, %v4429
    %v4432 = vmul.f32 0.5, %v4431
    %v4433 = vsub.f32 1.5, %v4432
    %v4434 = vmul.f32 %v4429, %v4433
    %vm4435 = vweird.f32 %v4118
    %vm4436 = vweird.f32 %v4429
    %vm4437 = vmor %vm4435, %vm4436
    %v4438 = vsel %vm4437, %v4429, %v4434
    %v4439 = vld [vmem:[%s7] sm:$0xff]
    %v4440 = vld [vmem:[%s7 + $0x8] sm:$0xff]
    %v4441 = vld [vmem:[%s7 + $0x10] sm:$0xff]
    %v4442 = vld [vmem:[%s7 + $0x18] sm:$0xff]
    %v4443 = vld [vmem:[%s7 + $0x20] sm:$0xff]
    %v4444 = vld [vmem:[%s7 + $0x28] sm:$0xff]
    %v4445 = vld [vmem:[%s7 + $0x30] sm:$0xff]
    %v4446 = vld [vmem:[%s7 + $0x38] sm:$0xff]
    %v4447 = vld [vmem:[%s7 + $0x40] sm:$0xff]
    %v4448 = vld [vmem:[%s7 + $0x48] sm:$0xff]
    %v4449 = vld [vmem:[%s7 + $0x50] sm:$0xff]
    %v4450 = vld [vmem:[%s7 + $0x58] sm:$0xff]
    %v4451 = vld [vmem:[%s7 + $0x60] sm:$0xff]
    %v4452 = vld [vmem:[%s7 + $0x68] sm:$0xff]
    %v4453 = vld [vmem:[%s7 + $0x70] sm:$0xff]
    %v4454 = vld [vmem:[%s7 + $0x78] sm:$0xff]
    %v4455 = vld [vmem:[%s7 + $0x80] sm:$0xff]
    %v4456 = vld [vmem:[%s7 + $0x88] sm:$0xff]
    %v4457 = vld [vmem:[%s7 + $0x90] sm:$0xff]
    %v4458 = vld [vmem:[%s7 + $0x98] sm:$0xff]
    %v4459 = vld [vmem:[%s7 + $0xa0] sm:$0xff]
    %v4460 = vld [vmem:[%s7 + $0xa8] sm:$0xff]
    %v4461 = vld [vmem:[%s7 + $0xb0] sm:$0xff]
    %v4462 = vld [vmem:[%s7 + $0xb8] sm:$0xff]
    %v4463 = vld [vmem:[%s7 + $0xc0] sm:$0xff]
    %v4464 = vld [vmem:[%s7 + $0xc8] sm:$0xff]
    %v4465 = vld [vmem:[%s7 + $0xd0] sm:$0xff]
    %v4466 = vld [vmem:[%s7 + $0xd8] sm:$0xff]
    %v4467 = vld [vmem:[%s7 + $0xe0] sm:$0xff]
    %v4468 = vld [vmem:[%s7 + $0xe8] sm:$0xff]
    %v4469 = vld [vmem:[%s7 + $0xf0] sm:$0xff]
    %v4470 = vld [vmem:[%s7 + $0xf8] sm:$0xff]
    %v4471 = vmul.f32 %v4128, %v4439
    %v4472 = vmul.f32 %v4138, %v4440
    %v4473 = vmul.f32 %v4148, %v4441
    %v4474 = vmul.f32 %v4158, %v4442
    %v4475 = vmul.f32 %v4168, %v4443
    %v4476 = vmul.f32 %v4178, %v4444
    %v4477 = vmul.f32 %v4188, %v4445
    %v4478 = vmul.f32 %v4198, %v4446
    %v4479 = vmul.f32 %v4208, %v4447
    %v4480 = vmul.f32 %v4218, %v4448
    %v4481 = vmul.f32 %v4228, %v4449
    %v4482 = vmul.f32 %v4238, %v4450
    %v4483 = vmul.f32 %v4248, %v4451
    %v4484 = vmul.f32 %v4258, %v4452
    %v4485 = vmul.f32 %v4268, %v4453
    %v4486 = vmul.f32 %v4278, %v4454
    %v4487 = vmul.f32 %v4288, %v4455
    %v4488 = vmul.f32 %v4298, %v4456
    %v4489 = vmul.f32 %v4308, %v4457
    %v4490 = vmul.f32 %v4318, %v4458
    %v4491 = vmul.f32 %v4328, %v4459
    %v4492 = vmul.f32 %v4338, %v4460
    %v4493 = vmul.f32 %v4348, %v4461
    %v4494 = vmul.f32 %v4358, %v4462
    %v4495 = vmul.f32 %v4368, %v4463
    %v4496 = vmul.f32 %v4378, %v4464
    %v4497 = vmul.f32 %v4388, %v4465
    %v4498 = vmul.f32 %v4398, %v4466
    %v4499 = vmul.f32 %v4408, %v4467
    %v4500 = vmul.f32 %v4418, %v4468
    %v4501 = vmul.f32 %v4428, %v4469
    %v4502 = vmul.f32 %v4438, %v4470
    %4504 = vset.pattern.permute.xlu0 0
    %4505 = vperm.xlu0 %4504, %v4471
    %v4506 = vpop.permute.xlu0 %4505
    %4509 = vset.pattern.permute.xlu0 0
    %4510 = vperm.xlu0 %4509, %v4472
    %v4511 = vpop.permute.xlu0 %4510
    %4514 = vset.pattern.permute.xlu0 0
    %4515 = vperm.xlu0 %4514, %v4473
    %v4516 = vpop.permute.xlu0 %4515
    %4519 = vset.pattern.permute.xlu0 0
    %4520 = vperm.xlu0 %4519, %v4474
    %v4521 = vpop.permute.xlu0 %4520
    %4524 = vset.pattern.permute.xlu0 0
    %4525 = vperm.xlu0 %4524, %v4475
    %v4526 = vpop.permute.xlu0 %4525
    %4529 = vset.pattern.permute.xlu0 0
    %4530 = vperm.xlu0 %4529, %v4476
    %v4531 = vpop.permute.xlu0 %4530
    %4534 = vset.pattern.permute.xlu0 0
    %4535 = vperm.xlu0 %4534, %v4477
    %v4536 = vpop.permute.xlu0 %4535
    %4539 = vset.pattern.permute.xlu0 0
    %4540 = vperm.xlu0 %4539, %v4478
    %v4541 = vpop.permute.xlu0 %4540
    %4544 = vset.pattern.permute.xlu0 0
    %4545 = vperm.xlu0 %4544, %v4479
    %v4546 = vpop.permute.xlu0 %4545
    %4549 = vset.pattern.permute.xlu0 0
    %4550 = vperm.xlu0 %4549, %v4480
    %v4551 = vpop.permute.xlu0 %4550
    %4554 = vset.pattern.permute.xlu0 0
    %4555 = vperm.xlu0 %4554, %v4481
    %v4556 = vpop.permute.xlu0 %4555
    %4559 = vset.pattern.permute.xlu0 0
    %4560 = vperm.xlu0 %4559, %v4482
    %v4561 = vpop.permute.xlu0 %4560
    %4564 = vset.pattern.permute.xlu0 0
    %4565 = vperm.xlu0 %4564, %v4483
    %v4566 = vpop.permute.xlu0 %4565
    %4569 = vset.pattern.permute.xlu0 0
    %4570 = vperm.xlu0 %4569, %v4484
    %v4571 = vpop.permute.xlu0 %4570
    %4574 = vset.pattern.permute.xlu0 0
    %4575 = vperm.xlu0 %4574, %v4485
    %v4576 = vpop.permute.xlu0 %4575
    %4579 = vset.pattern.permute.xlu0 0
    %4580 = vperm.xlu0 %4579, %v4486
    %v4581 = vpop.permute.xlu0 %4580
    %4584 = vset.pattern.permute.xlu0 0
    %4585 = vperm.xlu0 %4584, %v4487
    %v4586 = vpop.permute.xlu0 %4585
    %4589 = vset.pattern.permute.xlu0 0
    %4590 = vperm.xlu0 %4589, %v4488
    %v4591 = vpop.permute.xlu0 %4590
    %4594 = vset.pattern.permute.xlu0 0
    %4595 = vperm.xlu0 %4594, %v4489
    %v4596 = vpop.permute.xlu0 %4595
    %4599 = vset.pattern.permute.xlu0 0
    %4600 = vperm.xlu0 %4599, %v4490
    %v4601 = vpop.permute.xlu0 %4600
    %4604 = vset.pattern.permute.xlu0 0
    %4605 = vperm.xlu0 %4604, %v4491
    %v4606 = vpop.permute.xlu0 %4605
    %4609 = vset.pattern.permute.xlu0 0
    %4610 = vperm.xlu0 %4609, %v4492
    %v4611 = vpop.permute.xlu0 %4610
    %4614 = vset.pattern.permute.xlu0 0
    %4615 = vperm.xlu0 %4614, %v4493
    %v4616 = vpop.permute.xlu0 %4615
    %4619 = vset.pattern.permute.xlu0 0
    %4620 = vperm.xlu0 %4619, %v4494
    %v4621 = vpop.permute.xlu0 %4620
    %4624 = vset.pattern.permute.xlu0 0
    %4625 = vperm.xlu0 %4624, %v4495
    %v4626 = vpop.permute.xlu0 %4625
    %4629 = vset.pattern.permute.xlu0 0
    %4630 = vperm.xlu0 %4629, %v4496
    %v4631 = vpop.permute.xlu0 %4630
    %4634 = vset.pattern.permute.xlu0 0
    %4635 = vperm.xlu0 %4634, %v4497
    %v4636 = vpop.permute.xlu0 %4635
    %4639 = vset.pattern.permute.xlu0 0
    %4640 = vperm.xlu0 %4639, %v4498
    %v4641 = vpop.permute.xlu0 %4640
    %4644 = vset.pattern.permute.xlu0 0
    %4645 = vperm.xlu0 %4644, %v4499
    %v4646 = vpop.permute.xlu0 %4645
    %4649 = vset.pattern.permute.xlu0 0
    %4650 = vperm.xlu0 %4649, %v4500
    %v4651 = vpop.permute.xlu0 %4650
    %4654 = vset.pattern.permute.xlu0 0
    %4655 = vperm.xlu0 %4654, %v4501
    %v4656 = vpop.permute.xlu0 %4655
    %4659 = vset.pattern.permute.xlu0 0
    %4660 = vperm.xlu0 %4659, %v4502
    %v4661 = vpop.permute.xlu0 %4660
    %v4663 = vmul.f32 %v4023, %v4506
    %v4664 = vmul.f32 %v4024, %v4511
    %v4665 = vmul.f32 %v4025, %v4516
    %v4666 = vmul.f32 %v4026, %v4521
    %v4667 = vmul.f32 %v4027, %v4526
    %v4668 = vmul.f32 %v4028, %v4531
    %v4669 = vmul.f32 %v4029, %v4536
    %v4670 = vmul.f32 %v4030, %v4541
    %v4671 = vmul.f32 %v4031, %v4546
    %v4672 = vmul.f32 %v4032, %v4551
    %v4673 = vmul.f32 %v4033, %v4556
    %v4674 = vmul.f32 %v4034, %v4561
    %v4675 = vmul.f32 %v4035, %v4566
    %v4676 = vmul.f32 %v4036, %v4571
    %v4677 = vmul.f32 %v4037, %v4576
    %v4678 = vmul.f32 %v4038, %v4581
    %v4679 = vmul.f32 %v4039, %v4586
    %v4680 = vmul.f32 %v4040, %v4591
    %v4681 = vmul.f32 %v4041, %v4596
    %v4682 = vmul.f32 %v4042, %v4601
    %v4683 = vmul.f32 %v4043, %v4606
    %v4684 = vmul.f32 %v4044, %v4611
    %v4685 = vmul.f32 %v4045, %v4616
    %v4686 = vmul.f32 %v4046, %v4621
    %v4687 = vmul.f32 %v4047, %v4626
    %v4688 = vmul.f32 %v4048, %v4631
    %v4689 = vmul.f32 %v4049, %v4636
    %v4690 = vmul.f32 %v4050, %v4641
    %v4691 = vmul.f32 %v4051, %v4646
    %v4692 = vmul.f32 %v4052, %v4651
    %v4693 = vmul.f32 %v4053, %v4656
    %v4694 = vmul.f32 %v4054, %v4661
    %v4695 = vmul.f32 %v4055, %v4506
    %v4696 = vmul.f32 %v4056, %v4511
    %v4697 = vmul.f32 %v4057, %v4516
    %v4698 = vmul.f32 %v4058, %v4521
    %v4699 = vmul.f32 %v4059, %v4526
    %v4700 = vmul.f32 %v4060, %v4531
    %v4701 = vmul.f32 %v4061, %v4536
    %v4702 = vmul.f32 %v4062, %v4541
    %v4703 = vmul.f32 %v4063, %v4546
    %v4704 = vmul.f32 %v4064, %v4551
    %v4705 = vmul.f32 %v4065, %v4556
    %v4706 = vmul.f32 %v4066, %v4561
    %v4707 = vmul.f32 %v4067, %v4566
    %v4708 = vmul.f32 %v4068, %v4571
    %v4709 = vmul.f32 %v4069, %v4576
    %v4710 = vmul.f32 %v4070, %v4581
    %v4711 = vmul.f32 %v4071, %v4586
    %v4712 = vmul.f32 %v4072, %v4591
    %v4713 = vmul.f32 %v4073, %v4596
    %v4714 = vmul.f32 %v4074, %v4601
    %v4715 = vmul.f32 %v4075, %v4606
    %v4716 = vmul.f32 %v4076, %v4611
    %v4717 = vmul.f32 %v4077, %v4616
    %v4718 = vmul.f32 %v4078, %v4621
    %v4719 = vmul.f32 %v4079, %v4626
    %v4720 = vmul.f32 %v4080, %v4631
    %v4721 = vmul.f32 %v4081, %v4636
    %v4722 = vmul.f32 %v4082, %v4641
    %v4723 = vmul.f32 %v4083, %v4646
    %v4724 = vmul.f32 %v4084, %v4651
    %v4725 = vmul.f32 %v4085, %v4656
    %v4726 = vmul.f32 %v4086, %v4661
    %v4727 = vld [vmem:[%s8] sm:$0xff]
    %v4728 = vld [vmem:[%s8 + $0x8] sm:$0xff]
    %v4729 = vld [vmem:[%s8 + $0x10] sm:$0xff]
    %v4730 = vld [vmem:[%s8 + $0x18] sm:$0xff]
    %v4731 = vld [vmem:[%s8 + $0x20] sm:$0xff]
    %v4732 = vld [vmem:[%s8 + $0x28] sm:$0xff]
    %v4733 = vld [vmem:[%s8 + $0x30] sm:$0xff]
    %v4734 = vld [vmem:[%s8 + $0x38] sm:$0xff]
    %v4735 = vld [vmem:[%s8 + $0x40] sm:$0xff]
    %v4736 = vld [vmem:[%s8 + $0x48] sm:$0xff]
    %v4737 = vld [vmem:[%s8 + $0x50] sm:$0xff]
    %v4738 = vld [vmem:[%s8 + $0x58] sm:$0xff]
    %v4739 = vld [vmem:[%s8 + $0x60] sm:$0xff]
    %v4740 = vld [vmem:[%s8 + $0x68] sm:$0xff]
    %v4741 = vld [vmem:[%s8 + $0x70] sm:$0xff]
    %v4742 = vld [vmem:[%s8 + $0x78] sm:$0xff]
    %v4743 = vld [vmem:[%s8 + $0x80] sm:$0xff]
    %v4744 = vld [vmem:[%s8 + $0x88] sm:$0xff]
    %v4745 = vld [vmem:[%s8 + $0x90] sm:$0xff]
    %v4746 = vld [vmem:[%s8 + $0x98] sm:$0xff]
    %v4747 = vld [vmem:[%s8 + $0xa0] sm:$0xff]
    %v4748 = vld [vmem:[%s8 + $0xa8] sm:$0xff]
    %v4749 = vld [vmem:[%s8 + $0xb0] sm:$0xff]
    %v4750 = vld [vmem:[%s8 + $0xb8] sm:$0xff]
    %v4751 = vld [vmem:[%s8 + $0xc0] sm:$0xff]
    %v4752 = vld [vmem:[%s8 + $0xc8] sm:$0xff]
    %v4753 = vld [vmem:[%s8 + $0xd0] sm:$0xff]
    %v4754 = vld [vmem:[%s8 + $0xd8] sm:$0xff]
    %v4755 = vld [vmem:[%s8 + $0xe0] sm:$0xff]
    %v4756 = vld [vmem:[%s8 + $0xe8] sm:$0xff]
    %v4757 = vld [vmem:[%s8 + $0xf0] sm:$0xff]
    %v4758 = vld [vmem:[%s8 + $0xf8] sm:$0xff]
    %4760 = vset.pattern.permute.xlu0 0
    %4761 = vperm.xlu0 %4760, %v4727
    %v4762 = vpop.permute.xlu0 %4761
    %4765 = vset.pattern.permute.xlu0 0
    %4766 = vperm.xlu0 %4765, %v4728
    %v4767 = vpop.permute.xlu0 %4766
    %4770 = vset.pattern.permute.xlu0 0
    %4771 = vperm.xlu0 %4770, %v4729
    %v4772 = vpop.permute.xlu0 %4771
    %4775 = vset.pattern.permute.xlu0 0
    %4776 = vperm.xlu0 %4775, %v4730
    %v4777 = vpop.permute.xlu0 %4776
    %4780 = vset.pattern.permute.xlu0 0
    %4781 = vperm.xlu0 %4780, %v4731
    %v4782 = vpop.permute.xlu0 %4781
    %4785 = vset.pattern.permute.xlu0 0
    %4786 = vperm.xlu0 %4785, %v4732
    %v4787 = vpop.permute.xlu0 %4786
    %4790 = vset.pattern.permute.xlu0 0
    %4791 = vperm.xlu0 %4790, %v4733
    %v4792 = vpop.permute.xlu0 %4791
    %4795 = vset.pattern.permute.xlu0 0
    %4796 = vperm.xlu0 %4795, %v4734
    %v4797 = vpop.permute.xlu0 %4796
    %4800 = vset.pattern.permute.xlu0 0
    %4801 = vperm.xlu0 %4800, %v4735
    %v4802 = vpop.permute.xlu0 %4801
    %4805 = vset.pattern.permute.xlu0 0
    %4806 = vperm.xlu0 %4805, %v4736
    %v4807 = vpop.permute.xlu0 %4806
    %4810 = vset.pattern.permute.xlu0 0
    %4811 = vperm.xlu0 %4810, %v4737
    %v4812 = vpop.permute.xlu0 %4811
    %4815 = vset.pattern.permute.xlu0 0
    %4816 = vperm.xlu0 %4815, %v4738
    %v4817 = vpop.permute.xlu0 %4816
    %4820 = vset.pattern.permute.xlu0 0
    %4821 = vperm.xlu0 %4820, %v4739
    %v4822 = vpop.permute.xlu0 %4821
    %4825 = vset.pattern.permute.xlu0 0
    %4826 = vperm.xlu0 %4825, %v4740
    %v4827 = vpop.permute.xlu0 %4826
    %4830 = vset.pattern.permute.xlu0 0
    %4831 = vperm.xlu0 %4830, %v4741
    %v4832 = vpop.permute.xlu0 %4831
    %4835 = vset.pattern.permute.xlu0 0
    %4836 = vperm.xlu0 %4835, %v4742
    %v4837 = vpop.permute.xlu0 %4836
    %4840 = vset.pattern.permute.xlu0 0
    %4841 = vperm.xlu0 %4840, %v4743
    %v4842 = vpop.permute.xlu0 %4841
    %4845 = vset.pattern.permute.xlu0 0
    %4846 = vperm.xlu0 %4845, %v4744
    %v4847 = vpop.permute.xlu0 %4846
    %4850 = vset.pattern.permute.xlu0 0
    %4851 = vperm.xlu0 %4850, %v4745
    %v4852 = vpop.permute.xlu0 %4851
    %4855 = vset.pattern.permute.xlu0 0
    %4856 = vperm.xlu0 %4855, %v4746
    %v4857 = vpop.permute.xlu0 %4856
    %4860 = vset.pattern.permute.xlu0 0
    %4861 = vperm.xlu0 %4860, %v4747
    %v4862 = vpop.permute.xlu0 %4861
    %4865 = vset.pattern.permute.xlu0 0
    %4866 = vperm.xlu0 %4865, %v4748
    %v4867 = vpop.permute.xlu0 %4866
    %4870 = vset.pattern.permute.xlu0 0
    %4871 = vperm.xlu0 %4870, %v4749
    %v4872 = vpop.permute.xlu0 %4871
    %4875 = vset.pattern.permute.xlu0 0
    %4876 = vperm.xlu0 %4875, %v4750
    %v4877 = vpop.permute.xlu0 %4876
    %4880 = vset.pattern.permute.xlu0 0
    %4881 = vperm.xlu0 %4880, %v4751
    %v4882 = vpop.permute.xlu0 %4881
    %4885 = vset.pattern.permute.xlu0 0
    %4886 = vperm.xlu0 %4885, %v4752
    %v4887 = vpop.permute.xlu0 %4886
    %4890 = vset.pattern.permute.xlu0 0
    %4891 = vperm.xlu0 %4890, %v4753
    %v4892 = vpop.permute.xlu0 %4891
    %4895 = vset.pattern.permute.xlu0 0
    %4896 = vperm.xlu0 %4895, %v4754
    %v4897 = vpop.permute.xlu0 %4896
    %4900 = vset.pattern.permute.xlu0 0
    %4901 = vperm.xlu0 %4900, %v4755
    %v4902 = vpop.permute.xlu0 %4901
    %4905 = vset.pattern.permute.xlu0 0
    %4906 = vperm.xlu0 %4905, %v4756
    %v4907 = vpop.permute.xlu0 %4906
    %4910 = vset.pattern.permute.xlu0 0
    %4911 = vperm.xlu0 %4910, %v4757
    %v4912 = vpop.permute.xlu0 %4911
    %4915 = vset.pattern.permute.xlu0 0
    %4916 = vperm.xlu0 %4915, %v4758
    %v4917 = vpop.permute.xlu0 %4916
    %v4919 = vadd.f32 %v4663, %v4762
    %v4920 = vadd.f32 %v4664, %v4767
    %v4921 = vadd.f32 %v4665, %v4772
    %v4922 = vadd.f32 %v4666, %v4777
    %v4923 = vadd.f32 %v4667, %v4782
    %v4924 = vadd.f32 %v4668, %v4787
    %v4925 = vadd.f32 %v4669, %v4792
    %v4926 = vadd.f32 %v4670, %v4797
    %v4927 = vadd.f32 %v4671, %v4802
    %v4928 = vadd.f32 %v4672, %v4807
    %v4929 = vadd.f32 %v4673, %v4812
    %v4930 = vadd.f32 %v4674, %v4817
    %v4931 = vadd.f32 %v4675, %v4822
    %v4932 = vadd.f32 %v4676, %v4827
    %v4933 = vadd.f32 %v4677, %v4832
    %v4934 = vadd.f32 %v4678, %v4837
    %v4935 = vadd.f32 %v4679, %v4842
    %v4936 = vadd.f32 %v4680, %v4847
    %v4937 = vadd.f32 %v4681, %v4852
    %v4938 = vadd.f32 %v4682, %v4857
    %v4939 = vadd.f32 %v4683, %v4862
    %v4940 = vadd.f32 %v4684, %v4867
    %v4941 = vadd.f32 %v4685, %v4872
    %v4942 = vadd.f32 %v4686, %v4877
    %v4943 = vadd.f32 %v4687, %v4882
    %v4944 = vadd.f32 %v4688, %v4887
    %v4945 = vadd.f32 %v4689, %v4892
    %v4946 = vadd.f32 %v4690, %v4897
    %v4947 = vadd.f32 %v4691, %v4902
    %v4948 = vadd.f32 %v4692, %v4907
    %v4949 = vadd.f32 %v4693, %v4912
    %v4950 = vadd.f32 %v4694, %v4917
    %v4951 = vadd.f32 %v4695, %v4762
    %v4952 = vadd.f32 %v4696, %v4767
    %v4953 = vadd.f32 %v4697, %v4772
    %v4954 = vadd.f32 %v4698, %v4777
    %v4955 = vadd.f32 %v4699, %v4782
    %v4956 = vadd.f32 %v4700, %v4787
    %v4957 = vadd.f32 %v4701, %v4792
    %v4958 = vadd.f32 %v4702, %v4797
    %v4959 = vadd.f32 %v4703, %v4802
    %v4960 = vadd.f32 %v4704, %v4807
    %v4961 = vadd.f32 %v4705, %v4812
    %v4962 = vadd.f32 %v4706, %v4817
    %v4963 = vadd.f32 %v4707, %v4822
    %v4964 = vadd.f32 %v4708, %v4827
    %v4965 = vadd.f32 %v4709, %v4832
    %v4966 = vadd.f32 %v4710, %v4837
    %v4967 = vadd.f32 %v4711, %v4842
    %v4968 = vadd.f32 %v4712, %v4847
    %v4969 = vadd.f32 %v4713, %v4852
    %v4970 = vadd.f32 %v4714, %v4857
    %v4971 = vadd.f32 %v4715, %v4862
    %v4972 = vadd.f32 %v4716, %v4867
    %v4973 = vadd.f32 %v4717, %v4872
    %v4974 = vadd.f32 %v4718, %v4877
    %v4975 = vadd.f32 %v4719, %v4882
    %v4976 = vadd.f32 %v4720, %v4887
    %v4977 = vadd.f32 %v4721, %v4892
    %v4978 = vadd.f32 %v4722, %v4897
    %v4979 = vadd.f32 %v4723, %v4902
    %v4980 = vadd.f32 %v4724, %v4907
    %v4981 = vadd.f32 %v4725, %v4912
    %v4982 = vadd.f32 %v4726, %v4917
    %v4983 = vpack.c.bf16 %v4919, %v4919
    %v4984 = vpack.c.bf16 %v4920, %v4920
    %v4985 = vpack.c.bf16 %v4921, %v4921
    %v4986 = vpack.c.bf16 %v4922, %v4922
    %v4987 = vpack.c.bf16 %v4923, %v4923
    %v4988 = vpack.c.bf16 %v4924, %v4924
    %v4989 = vpack.c.bf16 %v4925, %v4925
    %v4990 = vpack.c.bf16 %v4926, %v4926
    %v4991 = vpack.c.bf16 %v4927, %v4927
    %v4992 = vpack.c.bf16 %v4928, %v4928
    %v4993 = vpack.c.bf16 %v4929, %v4929
    %v4994 = vpack.c.bf16 %v4930, %v4930
    %v4995 = vpack.c.bf16 %v4931, %v4931
    %v4996 = vpack.c.bf16 %v4932, %v4932
    %v4997 = vpack.c.bf16 %v4933, %v4933
    %v4998 = vpack.c.bf16 %v4934, %v4934
    %v4999 = vpack.c.bf16 %v4935, %v4935
    %v5000 = vpack.c.bf16 %v4936, %v4936
    %v5001 = vpack.c.bf16 %v4937, %v4937
    %v5002 = vpack.c.bf16 %v4938, %v4938
    %v5003 = vpack.c.bf16 %v4939, %v4939
    %v5004 = vpack.c.bf16 %v4940, %v4940
    %v5005 = vpack.c.bf16 %v4941, %v4941
    %v5006 = vpack.c.bf16 %v4942, %v4942
    %v5007 = vpack.c.bf16 %v4943, %v4943
    %v5008 = vpack.c.bf16 %v4944, %v4944
    %v5009 = vpack.c.bf16 %v4945, %v4945
    %v5010 = vpack.c.bf16 %v4946, %v4946
    %v5011 = vpack.c.bf16 %v4947, %v4947
    %v5012 = vpack.c.bf16 %v4948, %v4948
    %v5013 = vpack.c.bf16 %v4949, %v4949
    %v5014 = vpack.c.bf16 %v4950, %v4950
    %v5015 = vpack.c.bf16 %v4951, %v4951
    %v5016 = vpack.c.bf16 %v4952, %v4952
    %v5017 = vpack.c.bf16 %v4953, %v4953
    %v5018 = vpack.c.bf16 %v4954, %v4954
    %v5019 = vpack.c.bf16 %v4955, %v4955
    %v5020 = vpack.c.bf16 %v4956, %v4956
    %v5021 = vpack.c.bf16 %v4957, %v4957
    %v5022 = vpack.c.bf16 %v4958, %v4958
    %v5023 = vpack.c.bf16 %v4959, %v4959
    %v5024 = vpack.c.bf16 %v4960, %v4960
    %v5025 = vpack.c.bf16 %v4961, %v4961
    %v5026 = vpack.c.bf16 %v4962, %v4962
    %v5027 = vpack.c.bf16 %v4963, %v4963
    %v5028 = vpack.c.bf16 %v4964, %v4964
    %v5029 = vpack.c.bf16 %v4965, %v4965
    %v5030 = vpack.c.bf16 %v4966, %v4966
    %v5031 = vpack.c.bf16 %v4967, %v4967
    %v5032 = vpack.c.bf16 %v4968, %v4968
    %v5033 = vpack.c.bf16 %v4969, %v4969
    %v5034 = vpack.c.bf16 %v4970, %v4970
    %v5035 = vpack.c.bf16 %v4971, %v4971
    %v5036 = vpack.c.bf16 %v4972, %v4972
    %v5037 = vpack.c.bf16 %v4973, %v4973
    %v5038 = vpack.c.bf16 %v4974, %v4974
    %v5039 = vpack.c.bf16 %v4975, %v4975
    %v5040 = vpack.c.bf16 %v4976, %v4976
    %v5041 = vpack.c.bf16 %v4977, %v4977
    %v5042 = vpack.c.bf16 %v4978, %v4978
    %v5043 = vpack.c.bf16 %v4979, %v4979
    %v5044 = vpack.c.bf16 %v4980, %v4980
    %v5045 = vpack.c.bf16 %v4981, %v4981
    %v5046 = vpack.c.bf16 %v4982, %v4982
    %v5047 = vld [vmem:[%s9] sm:$0xf]
    %v5048 = vld [vmem:[%s9 + $0x4] sm:$0xf]
    %v5049 = vld [vmem:[%s9 + $0x8] sm:$0xf]
    %v5050 = vld [vmem:[%s9 + $0xc] sm:$0xf]
    %v5051 = vld [vmem:[%s10] sm:$0x1]
    %v5053 = vperm.slane %v5051, 0
    %v5119 = vunpack.c.l.b16 %v4983
    %v5120 = vunpack.c.l.b16 %v4984
    %v5121 = vunpack.c.l.b16 %v4985
    %v5122 = vunpack.c.l.b16 %v4986
    %v5123 = vunpack.c.l.b16 %v4987
    %v5124 = vunpack.c.l.b16 %v4988
    %v5125 = vunpack.c.l.b16 %v4989
    %v5126 = vunpack.c.l.b16 %v4990
    %v5127 = vunpack.c.l.b16 %v4991
    %v5128 = vunpack.c.l.b16 %v4992
    %v5129 = vunpack.c.l.b16 %v4993
    %v5130 = vunpack.c.l.b16 %v4994
    %v5131 = vunpack.c.l.b16 %v4995
    %v5132 = vunpack.c.l.b16 %v4996
    %v5133 = vunpack.c.l.b16 %v4997
    %v5134 = vunpack.c.l.b16 %v4998
    %v5135 = vunpack.c.l.b16 %v4999
    %v5136 = vunpack.c.l.b16 %v5000
    %v5137 = vunpack.c.l.b16 %v5001
    %v5138 = vunpack.c.l.b16 %v5002
    %v5139 = vunpack.c.l.b16 %v5003
    %v5140 = vunpack.c.l.b16 %v5004
    %v5141 = vunpack.c.l.b16 %v5005
    %v5142 = vunpack.c.l.b16 %v5006
    %v5143 = vunpack.c.l.b16 %v5007
    %v5144 = vunpack.c.l.b16 %v5008
    %v5145 = vunpack.c.l.b16 %v5009
    %v5146 = vunpack.c.l.b16 %v5010
    %v5147 = vunpack.c.l.b16 %v5011
    %v5148 = vunpack.c.l.b16 %v5012
    %v5149 = vunpack.c.l.b16 %v5013
    %v5150 = vunpack.c.l.b16 %v5014
    %v5151 = vunpack.c.l.b16 %v5015
    %v5152 = vunpack.c.l.b16 %v5016
    %v5153 = vunpack.c.l.b16 %v5017
    %v5154 = vunpack.c.l.b16 %v5018
    %v5155 = vunpack.c.l.b16 %v5019
    %v5156 = vunpack.c.l.b16 %v5020
    %v5157 = vunpack.c.l.b16 %v5021
    %v5158 = vunpack.c.l.b16 %v5022
    %v5159 = vunpack.c.l.b16 %v5023
    %v5160 = vunpack.c.l.b16 %v5024
    %v5161 = vunpack.c.l.b16 %v5025
    %v5162 = vunpack.c.l.b16 %v5026
    %v5163 = vunpack.c.l.b16 %v5027
    %v5164 = vunpack.c.l.b16 %v5028
    %v5165 = vunpack.c.l.b16 %v5029
    %v5166 = vunpack.c.l.b16 %v5030
    %v5167 = vunpack.c.l.b16 %v5031
    %v5168 = vunpack.c.l.b16 %v5032
    %v5169 = vunpack.c.l.b16 %v5033
    %v5170 = vunpack.c.l.b16 %v5034
    %v5171 = vunpack.c.l.b16 %v5035
    %v5172 = vunpack.c.l.b16 %v5036
    %v5173 = vunpack.c.l.b16 %v5037
    %v5174 = vunpack.c.l.b16 %v5038
    %v5175 = vunpack.c.l.b16 %v5039
    %v5176 = vunpack.c.l.b16 %v5040
    %v5177 = vunpack.c.l.b16 %v5041
    %v5178 = vunpack.c.l.b16 %v5042
    %v5179 = vunpack.c.l.b16 %v5043
    %v5180 = vunpack.c.l.b16 %v5044
    %v5181 = vunpack.c.l.b16 %v5045
    %v5182 = vunpack.c.l.b16 %v5046
    %v5183 = vpack.c.b16 %v5120, %v5119
    %v5184 = vpack.c.b16 %v5122, %v5121
    %v5185 = vpack.c.b16 %v5124, %v5123
    %v5186 = vpack.c.b16 %v5126, %v5125
    %v5187 = vpack.c.b16 %v5128, %v5127
    %v5188 = vpack.c.b16 %v5130, %v5129
    %v5189 = vpack.c.b16 %v5132, %v5131
    %v5190 = vpack.c.b16 %v5134, %v5133
    %v5191 = vpack.c.b16 %v5136, %v5135
    %v5192 = vpack.c.b16 %v5138, %v5137
    %v5193 = vpack.c.b16 %v5140, %v5139
    %v5194 = vpack.c.b16 %v5142, %v5141
    %v5195 = vpack.c.b16 %v5144, %v5143
    %v5196 = vpack.c.b16 %v5146, %v5145
    %v5197 = vpack.c.b16 %v5148, %v5147
    %v5198 = vpack.c.b16 %v5150, %v5149
    %v5199 = vpack.c.b16 %v5152, %v5151
    %v5200 = vpack.c.b16 %v5154, %v5153
    %v5201 = vpack.c.b16 %v5156, %v5155
    %v5202 = vpack.c.b16 %v5158, %v5157
    %v5203 = vpack.c.b16 %v5160, %v5159
    %v5204 = vpack.c.b16 %v5162, %v5161
    %v5205 = vpack.c.b16 %v5164, %v5163
    %v5206 = vpack.c.b16 %v5166, %v5165
    %v5207 = vpack.c.b16 %v5168, %v5167
    %v5208 = vpack.c.b16 %v5170, %v5169
    %v5209 = vpack.c.b16 %v5172, %v5171
    %v5210 = vpack.c.b16 %v5174, %v5173
    %v5211 = vpack.c.b16 %v5176, %v5175
    %v5212 = vpack.c.b16 %v5178, %v5177
    %v5213 = vpack.c.b16 %v5180, %v5179
    %v5214 = vpack.c.b16 %v5182, %v5181
    %v5219 = vunpack.c.l.b16 %v5047
    %v5220 = vunpack.c.l.b16 %v5048
    %v5221 = vunpack.c.l.b16 %v5049
    %v5222 = vunpack.c.l.b16 %v5050
    %v5223 = vpack.c.b16 %v5220, %v5219
    %v5224 = vpack.c.b16 %v5222, %v5221
    %v5228 = vsel %vm3503, %v5183, 0
    %v5231 = vsel %vm3503, %v5184, 0
    %v5234 = vsel %vm3503, %v5185, 0
    %v5237 = vsel %vm3503, %v5186, 0
    %v5240 = vsel %vm3503, %v5187, 0
    %v5243 = vsel %vm3503, %v5188, 0
    %v5246 = vsel %vm3503, %v5189, 0
    %v5249 = vsel %vm3503, %v5190, 0
    %v5252 = vsel %vm3503, %v5191, 0
    %v5255 = vsel %vm3503, %v5192, 0
    %v5258 = vsel %vm3503, %v5193, 0
    %v5261 = vsel %vm3503, %v5194, 0
    %v5264 = vsel %vm3503, %v5195, 0
    %v5267 = vsel %vm3503, %v5196, 0
    %v5270 = vsel %vm3503, %v5197, 0
    %v5273 = vsel %vm3503, %v5198, 0
    %v5276 = vsel %vm3503, %v5199, 0
    %v5279 = vsel %vm3503, %v5200, 0
    %v5282 = vsel %vm3503, %v5201, 0
    %v5285 = vsel %vm3503, %v5202, 0
    %v5288 = vsel %vm3503, %v5203, 0
    %v5291 = vsel %vm3503, %v5204, 0
    %v5294 = vsel %vm3503, %v5205, 0
    %v5297 = vsel %vm3503, %v5206, 0
    %v5300 = vsel %vm3503, %v5207, 0
    %v5303 = vsel %vm3503, %v5208, 0
    %v5306 = vsel %vm3503, %v5209, 0
    %v5309 = vsel %vm3503, %v5210, 0
    %v5312 = vsel %vm3503, %v5211, 0
    %v5315 = vsel %vm3503, %v5212, 0
    %v5318 = vsel %vm3503, %v5213, 0
    %v5321 = vsel %vm3503, %v5214, 0
    %5323 = vmatpush.bf16.msra.mxu0 0
    %5324 = vmatpush.bf16.msra.mxu0 0
    %5325 = vmatpush.bf16.msra.mxu0 0
    %5326 = vmatpush.bf16.msra.mxu0 0
    %5327 = vmatpush.bf16.msra.mxu0 0
    %5328 = vmatpush.bf16.msra.mxu0 0
    %5329 = vmatpush.bf16.msra.mxu0 %v5224
    %5330 = vmatpush.bf16.msra.mxu0 %v5223
    %5331 = vmatmul.bf16.gmra.mxu0 %v5228
    %v5332 = vpop.f32.mrf.mxu0
    %v5333 = vadd.f32 %v5053, %v5332
    %v5334 = vpop.f32.mrf.mxu0
    %v5335 = vadd.f32 %v5053, %v5334
    %5336 = vmatmul.bf16.gmra.mxu0 %v5231
    %v5337 = vpop.f32.mrf.mxu0
    %v5338 = vadd.f32 %v5053, %v5337
    %v5339 = vpop.f32.mrf.mxu0
    %v5340 = vadd.f32 %v5053, %v5339
    %5341 = vmatmul.bf16.gmra.mxu0 %v5234
    %v5342 = vpop.f32.mrf.mxu0
    %v5343 = vadd.f32 %v5053, %v5342
    %v5344 = vpop.f32.mrf.mxu0
    %v5345 = vadd.f32 %v5053, %v5344
    %5346 = vmatmul.bf16.gmra.mxu0 %v5237
    %v5347 = vpop.f32.mrf.mxu0
    %v5348 = vadd.f32 %v5053, %v5347
    %v5349 = vpop.f32.mrf.mxu0
    %v5350 = vadd.f32 %v5053, %v5349
    %5351 = vmatmul.bf16.gmra.mxu0 %v5240
    %v5352 = vpop.f32.mrf.mxu0
    %v5353 = vadd.f32 %v5053, %v5352
    %v5354 = vpop.f32.mrf.mxu0
    %v5355 = vadd.f32 %v5053, %v5354
    %5356 = vmatmul.bf16.gmra.mxu0 %v5243
    %v5357 = vpop.f32.mrf.mxu0
    %v5358 = vadd.f32 %v5053, %v5357
    %v5359 = vpop.f32.mrf.mxu0
    %v5360 = vadd.f32 %v5053, %v5359
    %5361 = vmatmul.bf16.gmra.mxu0 %v5246
    %v5362 = vpop.f32.mrf.mxu0
    %v5363 = vadd.f32 %v5053, %v5362
    %v5364 = vpop.f32.mrf.mxu0
    %v5365 = vadd.f32 %v5053, %v5364
    %5366 = vmatmul.bf16.gmra.mxu0 %v5249
    %v5367 = vpop.f32.mrf.mxu0
    %v5368 = vadd.f32 %v5053, %v5367
    %v5369 = vpop.f32.mrf.mxu0
    %v5370 = vadd.f32 %v5053, %v5369
    %5371 = vmatmul.bf16.gmra.mxu0 %v5252
    %v5372 = vpop.f32.mrf.mxu0
    %v5373 = vadd.f32 %v5053, %v5372
    %v5374 = vpop.f32.mrf.mxu0
    %v5375 = vadd.f32 %v5053, %v5374
    %5376 = vmatmul.bf16.gmra.mxu0 %v5255
    %v5377 = vpop.f32.mrf.mxu0
    %v5378 = vadd.f32 %v5053, %v5377
    %v5379 = vpop.f32.mrf.mxu0
    %v5380 = vadd.f32 %v5053, %v5379
    %5381 = vmatmul.bf16.gmra.mxu0 %v5258
    %v5382 = vpop.f32.mrf.mxu0
    %v5383 = vadd.f32 %v5053, %v5382
    %v5384 = vpop.f32.mrf.mxu0
    %v5385 = vadd.f32 %v5053, %v5384
    %5386 = vmatmul.bf16.gmra.mxu0 %v5261
    %v5387 = vpop.f32.mrf.mxu0
    %v5388 = vadd.f32 %v5053, %v5387
    %v5389 = vpop.f32.mrf.mxu0
    %v5390 = vadd.f32 %v5053, %v5389
    %5391 = vmatmul.bf16.gmra.mxu0 %v5264
    %v5392 = vpop.f32.mrf.mxu0
    %v5393 = vadd.f32 %v5053, %v5392
    %v5394 = vpop.f32.mrf.mxu0
    %v5395 = vadd.f32 %v5053, %v5394
    %5396 = vmatmul.bf16.gmra.mxu0 %v5267
    %v5397 = vpop.f32.mrf.mxu0
    %v5398 = vadd.f32 %v5053, %v5397
    %v5399 = vpop.f32.mrf.mxu0
    %v5400 = vadd.f32 %v5053, %v5399
    %5401 = vmatmul.bf16.gmra.mxu0 %v5270
    %v5402 = vpop.f32.mrf.mxu0
    %v5403 = vadd.f32 %v5053, %v5402
    %v5404 = vpop.f32.mrf.mxu0
    %v5405 = vadd.f32 %v5053, %v5404
    %5406 = vmatmul.bf16.gmra.mxu0 %v5273
    %v5407 = vpop.f32.mrf.mxu0
    %v5408 = vadd.f32 %v5053, %v5407
    %v5409 = vpop.f32.mrf.mxu0
    %v5410 = vadd.f32 %v5053, %v5409
    %5411 = vmatmul.bf16.gmra.mxu0 %v5276
    %v5412 = vpop.f32.mrf.mxu0
    %v5413 = vadd.f32 %v5053, %v5412
    %v5414 = vpop.f32.mrf.mxu0
    %v5415 = vadd.f32 %v5053, %v5414
    %5416 = vmatmul.bf16.gmra.mxu0 %v5279
    %v5417 = vpop.f32.mrf.mxu0
    %v5418 = vadd.f32 %v5053, %v5417
    %v5419 = vpop.f32.mrf.mxu0
    %v5420 = vadd.f32 %v5053, %v5419
    %5421 = vmatmul.bf16.gmra.mxu0 %v5282
    %v5422 = vpop.f32.mrf.mxu0
    %v5423 = vadd.f32 %v5053, %v5422
    %v5424 = vpop.f32.mrf.mxu0
    %v5425 = vadd.f32 %v5053, %v5424
    %5426 = vmatmul.bf16.gmra.mxu0 %v5285
    %v5427 = vpop.f32.mrf.mxu0
    %v5428 = vadd.f32 %v5053, %v5427
    %v5429 = vpop.f32.mrf.mxu0
    %v5430 = vadd.f32 %v5053, %v5429
    %5431 = vmatmul.bf16.gmra.mxu0 %v5288
    %v5432 = vpop.f32.mrf.mxu0
    %v5433 = vadd.f32 %v5053, %v5432
    %v5434 = vpop.f32.mrf.mxu0
    %v5435 = vadd.f32 %v5053, %v5434
    %5436 = vmatmul.bf16.gmra.mxu0 %v5291
    %v5437 = vpop.f32.mrf.mxu0
    %v5438 = vadd.f32 %v5053, %v5437
    %v5439 = vpop.f32.mrf.mxu0
    %v5440 = vadd.f32 %v5053, %v5439
    %5441 = vmatmul.bf16.gmra.mxu0 %v5294
    %v5442 = vpop.f32.mrf.mxu0
    %v5443 = vadd.f32 %v5053, %v5442
    %v5444 = vpop.f32.mrf.mxu0
    %v5445 = vadd.f32 %v5053, %v5444
    %5446 = vmatmul.bf16.gmra.mxu0 %v5297
    %v5447 = vpop.f32.mrf.mxu0
    %v5448 = vadd.f32 %v5053, %v5447
    %v5449 = vpop.f32.mrf.mxu0
    %v5450 = vadd.f32 %v5053, %v5449
    %5451 = vmatmul.bf16.gmra.mxu0 %v5300
    %v5452 = vpop.f32.mrf.mxu0
    %v5453 = vadd.f32 %v5053, %v5452
    %v5454 = vpop.f32.mrf.mxu0
    %v5455 = vadd.f32 %v5053, %v5454
    %5456 = vmatmul.bf16.gmra.mxu0 %v5303
    %v5457 = vpop.f32.mrf.mxu0
    %v5458 = vadd.f32 %v5053, %v5457
    %v5459 = vpop.f32.mrf.mxu0
    %v5460 = vadd.f32 %v5053, %v5459
    %5461 = vmatmul.bf16.gmra.mxu0 %v5306
    %v5462 = vpop.f32.mrf.mxu0
    %v5463 = vadd.f32 %v5053, %v5462
    %v5464 = vpop.f32.mrf.mxu0
    %v5465 = vadd.f32 %v5053, %v5464
    %5466 = vmatmul.bf16.gmra.mxu0 %v5309
    %v5467 = vpop.f32.mrf.mxu0
    %v5468 = vadd.f32 %v5053, %v5467
    %v5469 = vpop.f32.mrf.mxu0
    %v5470 = vadd.f32 %v5053, %v5469
    %5471 = vmatmul.bf16.gmra.mxu0 %v5312
    %v5472 = vpop.f32.mrf.mxu0
    %v5473 = vadd.f32 %v5053, %v5472
    %v5474 = vpop.f32.mrf.mxu0
    %v5475 = vadd.f32 %v5053, %v5474
    %5476 = vmatmul.bf16.gmra.mxu0 %v5315
    %v5477 = vpop.f32.mrf.mxu0
    %v5478 = vadd.f32 %v5053, %v5477
    %v5479 = vpop.f32.mrf.mxu0
    %v5480 = vadd.f32 %v5053, %v5479
    %5481 = vmatmul.bf16.gmra.mxu0 %v5318
    %v5482 = vpop.f32.mrf.mxu0
    %v5483 = vadd.f32 %v5053, %v5482
    %v5484 = vpop.f32.mrf.mxu0
    %v5485 = vadd.f32 %v5053, %v5484
    %5486 = vmatmul.bf16.gmra.mxu0 %v5321
    %v5487 = vpop.f32.mrf.mxu0
    %v5488 = vadd.f32 %v5053, %v5487
    %v5489 = vpop.f32.mrf.mxu0
    %v5490 = vadd.f32 %v5053, %v5489
    %5491 = vdwg.mxu0
    %5492 = vxpose.xlu0.b32.start [1/16] %v5333, 128
    %5493 = vxpose.xlu0.b32.cont [2/16] %v5335, 128
    %5494 = vxpose.xlu0.b32.cont [3/16] %v5338, 128
    %5495 = vxpose.xlu0.b32.cont [4/16] %v5340, 128
    %5496 = vxpose.xlu0.b32.cont [5/16] %v5343, 128
    %5497 = vxpose.xlu0.b32.cont [6/16] %v5345, 128
    %5498 = vxpose.xlu0.b32.cont [7/16] %v5348, 128
    %5499 = vxpose.xlu0.b32.cont [8/16] %v5350, 128
    %5500 = vxpose.xlu0.b32.cont [9/16] %v5353, 128
    %5501 = vxpose.xlu0.b32.cont [10/16] %v5355, 128
    %5502 = vxpose.xlu0.b32.cont [11/16] %v5358, 128
    %5503 = vxpose.xlu0.b32.cont [12/16] %v5360, 128
    %5504 = vxpose.xlu0.b32.cont [13/16] %v5363, 128
    %5505 = vxpose.xlu0.b32.cont [14/16] %v5365, 128
    %5506 = vxpose.xlu0.b32.cont [15/16] %v5368, 128
    %5507 = vxpose.xlu0.b32.end [16/16] %v5370, 128
    %v5508 = vpop.trf.xlu0
    %v5509 = vpop.trf.xlu0
    %v5510 = vpop.trf.xlu0
    %v5511 = vpop.trf.xlu0
    %v5512 = vpop.trf.xlu0
    %v5513 = vpop.trf.xlu0
    %v5514 = vpop.trf.xlu0
    %v5515 = vpop.trf.xlu0
    %v5516 = vpop.trf.xlu0
    %v5517 = vpop.trf.xlu0
    %v5518 = vpop.trf.xlu0
    %v5519 = vpop.trf.xlu0
    %v5520 = vpop.trf.xlu0
    %v5521 = vpop.trf.xlu0
    %v5522 = vpop.trf.xlu0
    %v5523 = vpop.trf.xlu0
    %5524 = vxpose.xlu0.b32.start [1/16] %v5373, 128
    %5525 = vxpose.xlu0.b32.cont [2/16] %v5375, 128
    %5526 = vxpose.xlu0.b32.cont [3/16] %v5378, 128
    %5527 = vxpose.xlu0.b32.cont [4/16] %v5380, 128
    %5528 = vxpose.xlu0.b32.cont [5/16] %v5383, 128
    %5529 = vxpose.xlu0.b32.cont [6/16] %v5385, 128
    %5530 = vxpose.xlu0.b32.cont [7/16] %v5388, 128
    %5531 = vxpose.xlu0.b32.cont [8/16] %v5390, 128
    %5532 = vxpose.xlu0.b32.cont [9/16] %v5393, 128
    %5533 = vxpose.xlu0.b32.cont [10/16] %v5395, 128
    %5534 = vxpose.xlu0.b32.cont [11/16] %v5398, 128
    %5535 = vxpose.xlu0.b32.cont [12/16] %v5400, 128
    %5536 = vxpose.xlu0.b32.cont [13/16] %v5403, 128
    %5537 = vxpose.xlu0.b32.cont [14/16] %v5405, 128
    %5538 = vxpose.xlu0.b32.cont [15/16] %v5408, 128
    %5539 = vxpose.xlu0.b32.end [16/16] %v5410, 128
    %v5540 = vpop.trf.xlu0
    %v5541 = vpop.trf.xlu0
    %v5542 = vpop.trf.xlu0
    %v5543 = vpop.trf.xlu0
    %v5544 = vpop.trf.xlu0
    %v5545 = vpop.trf.xlu0
    %v5546 = vpop.trf.xlu0
    %v5547 = vpop.trf.xlu0
    %v5548 = vpop.trf.xlu0
    %v5549 = vpop.trf.xlu0
    %v5550 = vpop.trf.xlu0
    %v5551 = vpop.trf.xlu0
    %v5552 = vpop.trf.xlu0
    %v5553 = vpop.trf.xlu0
    %v5554 = vpop.trf.xlu0
    %v5555 = vpop.trf.xlu0
    %5556 = vxpose.xlu0.b32.start [1/16] %v5413, 128
    %5557 = vxpose.xlu0.b32.cont [2/16] %v5415, 128
    %5558 = vxpose.xlu0.b32.cont [3/16] %v5418, 128
    %5559 = vxpose.xlu0.b32.cont [4/16] %v5420, 128
    %5560 = vxpose.xlu0.b32.cont [5/16] %v5423, 128
    %5561 = vxpose.xlu0.b32.cont [6/16] %v5425, 128
    %5562 = vxpose.xlu0.b32.cont [7/16] %v5428, 128
    %5563 = vxpose.xlu0.b32.cont [8/16] %v5430, 128
    %5564 = vxpose.xlu0.b32.cont [9/16] %v5433, 128
    %5565 = vxpose.xlu0.b32.cont [10/16] %v5435, 128
    %5566 = vxpose.xlu0.b32.cont [11/16] %v5438, 128
    %5567 = vxpose.xlu0.b32.cont [12/16] %v5440, 128
    %5568 = vxpose.xlu0.b32.cont [13/16] %v5443, 128
    %5569 = vxpose.xlu0.b32.cont [14/16] %v5445, 128
    %5570 = vxpose.xlu0.b32.cont [15/16] %v5448, 128
    %5571 = vxpose.xlu0.b32.end [16/16] %v5450, 128
    %v5572 = vpop.trf.xlu0
    %v5573 = vpop.trf.xlu0
    %v5574 = vpop.trf.xlu0
    %v5575 = vpop.trf.xlu0
    %v5576 = vpop.trf.xlu0
    %v5577 = vpop.trf.xlu0
    %v5578 = vpop.trf.xlu0
    %v5579 = vpop.trf.xlu0
    %v5580 = vpop.trf.xlu0
    %v5581 = vpop.trf.xlu0
    %v5582 = vpop.trf.xlu0
    %v5583 = vpop.trf.xlu0
    %v5584 = vpop.trf.xlu0
    %v5585 = vpop.trf.xlu0
    %v5586 = vpop.trf.xlu0
    %v5587 = vpop.trf.xlu0
    %5588 = vxpose.xlu0.b32.start [1/16] %v5453, 128
    %5589 = vxpose.xlu0.b32.cont [2/16] %v5455, 128
    %5590 = vxpose.xlu0.b32.cont [3/16] %v5458, 128
    %5591 = vxpose.xlu0.b32.cont [4/16] %v5460, 128
    %5592 = vxpose.xlu0.b32.cont [5/16] %v5463, 128
    %5593 = vxpose.xlu0.b32.cont [6/16] %v5465, 128
    %5594 = vxpose.xlu0.b32.cont [7/16] %v5468, 128
    %5595 = vxpose.xlu0.b32.cont [8/16] %v5470, 128
    %5596 = vxpose.xlu0.b32.cont [9/16] %v5473, 128
    %5597 = vxpose.xlu0.b32.cont [10/16] %v5475, 128
    %5598 = vxpose.xlu0.b32.cont [11/16] %v5478, 128
    %5599 = vxpose.xlu0.b32.cont [12/16] %v5480, 128
    %5600 = vxpose.xlu0.b32.cont [13/16] %v5483, 128
    %5601 = vxpose.xlu0.b32.cont [14/16] %v5485, 128
    %5602 = vxpose.xlu0.b32.cont [15/16] %v5488, 128
    %5603 = vxpose.xlu0.b32.end [16/16] %v5490, 128
    %v5604 = vpop.trf.xlu0
    %v5605 = vpop.trf.xlu0
    %v5606 = vpop.trf.xlu0
    %v5607 = vpop.trf.xlu0
    %v5608 = vpop.trf.xlu0
    %v5609 = vpop.trf.xlu0
    %v5610 = vpop.trf.xlu0
    %v5611 = vpop.trf.xlu0
    %v5612 = vpop.trf.xlu0
    %v5613 = vpop.trf.xlu0
    %v5614 = vpop.trf.xlu0
    %v5615 = vpop.trf.xlu0
    %v5616 = vpop.trf.xlu0
    %v5617 = vpop.trf.xlu0
    %v5618 = vpop.trf.xlu0
    %v5619 = vpop.trf.xlu0
    %v5620 = vadd.f32 %v40, %v5508
    %v5621 = vadd.f32 %v41, %v5540
    %v5622 = vadd.f32 %v42, %v5509
    %v5623 = vadd.f32 %v43, %v5541
    %v5624 = vadd.f32 %v44, %v5572
    %v5625 = vadd.f32 %v45, %v5604
    %v5626 = vadd.f32 %v46, %v5573
    %v5627 = vadd.f32 %v47, %v5605
    %5628 = vst [vmem:[#allocation2] sm:$0xff] %v5620
    %5629 = vst [vmem:[#allocation2 + $0x8] sm:$0xff] %v5621
    %5630 = vst [vmem:[#allocation2 + $0x10] sm:$0xff] %v5622
    %5631 = vst [vmem:[#allocation2 + $0x18] sm:$0xff] %v5623
    %5632 = vst [vmem:[#allocation2 + $0x20] sm:$0xff] %v5624
    %5633 = vst [vmem:[#allocation2 + $0x28] sm:$0xff] %v5625
    %5634 = vst [vmem:[#allocation2 + $0x30] sm:$0xff] %v5626
    %5635 = vst [vmem:[#allocation2 + $0x38] sm:$0xff] %v5627
    // Predicated region
    $region46: #{mixer_block.4} parent=1 // pred_check
      _
    $region47: #{mixer_block.4} parent=1 // pred_check_branch
      %5637 = sbr.rel (0) target = $region49
    $region48: #{mixer_block.4} parent=1 // pred_region
      %5639 = vsyncadd [#allocation3], 0
      %s5640 = sshll.u32 [#allocation2], 4
      %s5641 = int_to_ptr.vmem [resolvable:$true] %s5640
      %s5642 = sshll.u32 %s11, 4
      %s5643 = int_to_ptr.hbm [resolvable:$true] %s5642
      %5648 = dma.vmem_to_hbm [thread:$0]  %s5641, 1024, %s5643, [#allocation3], 256, 256, 16
    $region49: #{mixer_block.4} parent=1 // pred_fallthru
      _
    // Predicated region
    $region50: #{mixer_block.4} parent=1 // pred_check
      _
    $region51: #{mixer_block.4} parent=1 // pred_check_branch
      %5650 = sbr.rel (0) target = $region53
    $region52: #{mixer_block.4} parent=1 // pred_region
      %5652 = dma.done [#allocation3], 1024
    $region53: #{mixer_block.4} parent=1 // pred_fallthru
      _
    %5653 = vsyncpa [#allocation3], 1

</llo_original>
